<compile_context>
chip_gen: v5e
topology: v5e:2x2
jax: 0.10.0
libtpu: 0.0.40
codegen_flags: <defaults>
</compile_context>

<pallas_src>
import functools

import jax
import jax.numpy as jnp
from jax.experimental import pallas as pl
from jax.experimental.pallas import tpu as pltpu

_VMEM_LIMIT = 32 * 1024 * 1024


def _mosaic_params():
    return pltpu.CompilerParams(dimension_semantics=("parallel",),
                                vmem_limit_bytes=_VMEM_LIMIT)


def _pick_tm(m, row_bytes, target_rows=1024, max_block_bytes=8 * 1024 * 1024,
             max_rows=None):
    """Row-tile size.

    Big tiles (amortize per-step overhead on single-TC v5e/v6e), but once
    there are enough rows, force >= 2 grid steps so v7x's second TensorCore
    gets work.  Per-block bytes stay far below v7x's 64 MiB VMEM.
    """
    bycap = max_block_bytes // max(row_bytes, 1)
    cap = min(target_rows, bycap)
    if max_rows is not None:
        cap = min(cap, max_rows)
    cap = max(16, (cap // 16) * 16)
    if m <= 32:
        return m
    half = (((m + 1) // 2) + 15) // 16 * 16          # ceil(m/2), 16-aligned
    return max(16, min(cap, half, m))


# ---------------------------- Pallas kernels ----------------------------

def _conv_stats_kernel(a_ref, b_ref, bias_ref, o_ref, s_ref, *, rows_total, tm):
    """bf16 matmul + bias (fp32 MXU acc); bf16 activation + partial BN stats."""
    acc = (jnp.dot(a_ref[...], b_ref[...], preferred_element_type=jnp.float32)
           + bias_ref[...])
    o_ref[...] = acc.astype(o_ref.dtype)
    x = acc
    if rows_total % tm != 0:          # static: only ragged-M pays for masking
        row = jax.lax.broadcasted_iota(jnp.int32, x.shape, 0)
        x = jnp.where(pl.program_id(0) * tm + row < rows_total, x, 0.0)
    s = jnp.concatenate([jnp.sum(x, axis=0, keepdims=True),
                         jnp.sum(x * x, axis=0, keepdims=True)], axis=0)
    s_ref[...] = s.reshape(1, 2, x.shape[1])


def _dynconv_stats_kernel(a_ref, b_ref, bias_ref, attn_ref, o_ref, s_ref, *,
                          nb, cout, rows_total, tm):
    """Conv matmul against the aggregate (nb*Cout) basis weight with the
    attention-weighted basis reduction fused in the epilogue, plus partial
    BN column stats of the combined output; bf16 activation writeback."""
    acc = (jnp.dot(a_ref[...], b_ref[...], preferred_element_type=jnp.float32)
           + bias_ref[...])
    attn = attn_ref[...]                                   # (tm, nb) fp32
    out = attn[:, 0:1] * acc[:, 0:cout]
    for k in range(1, nb):
        out = out + attn[:, k:k + 1] * acc[:, k * cout:(k + 1) * cout]
    o_ref[...] = out.astype(o_ref.dtype)
    x = out
    if rows_total % tm != 0:
        row = jax.lax.broadcasted_iota(jnp.int32, x.shape, 0)
        x = jnp.where(pl.program_id(0) * tm + row < rows_total, x, 0.0)
    s = jnp.concatenate([jnp.sum(x, axis=0, keepdims=True),
                         jnp.sum(x * x, axis=0, keepdims=True)], axis=0)
    s_ref[...] = s.reshape(1, 2, cout)


def _bn_relu_pool_kernel(x_ref, stats_ref, gamma_ref, beta_ref, o_ref, *,
                         pw, c, lf, relu, count, eps):
    """Finish-reduce fused BN partials -> scale/shift, then BN affine + ReLU +
    width avg-pool on lf row-groups folded into 128-lane-dense output cols."""
    s = jnp.sum(stats_ref[...], axis=0)                    # (2, C) fp32
    mean = s[0:1, :] * (1.0 / count)
    var = jnp.maximum(s[1:2, :] * (1.0 / count) - mean * mean, 0.0)
    scale = gamma_ref[...] * jax.lax.rsqrt(var + eps)      # (1, C)
    shift = beta_ref[...] - mean * scale
    x = x_ref[...].astype(jnp.float32)                     # (tm, lf*pw*C)
    outs = []
    for j in range(lf):
        acc = None
        for k in range(pw):
            col = (j * pw + k) * c
            y = x[:, col:col + c] * scale + shift
            if relu:
                y = jnp.maximum(y, 0.0)
            acc = y if acc is None else acc + y
        outs.append(acc * (1.0 / pw))
    out = outs[0] if lf == 1 else jnp.concatenate(outs, axis=1)
    o_ref[...] = out.astype(o_ref.dtype)


def _attention_kernel(x_ref, mask_ref, w1_ref, g_ref, b_ref, w2_ref, b2_ref,
                      o_ref, *, n_freq, c, inv_temp, eps):
    """Whole pool_dim='freq' attention branch in one grid=1 kernel:
    freq mean-pool -> Conv1d(k=3, pad=1) over time -> BatchNorm1d (batch
    stats) -> ReLU -> Conv1d(1x1) -> temperature softmax over the basis axis.
    All tensors (<= 32 x 1024) live in VMEM/vregs for the whole kernel."""
    x = x_ref[...].astype(jnp.float32)                     # (BT, F*C)
    xm = x[:, 0:c]
    for f in range(1, n_freq):
        xm = xm + x[:, f * c:(f + 1) * c]
    xm = xm * (1.0 / n_freq)                               # (BT, C) freq mean
    bt = xm.shape[0]
    masks = mask_ref[...]                                  # (BT, 2) fp32
    # Conv1d time taps via sublane rotation + zero masks at t==0 / t==T-1
    tap_l = pltpu.roll(xm, shift=1, axis=0) * masks[:, 0:1]        # x[b, t-1]
    tap_r = pltpu.roll(xm, shift=bt - 1, axis=0) * masks[:, 1:2]   # x[b, t+1]
    w1 = w1_ref[...]                                       # (3C, hid) fp32
    h = (jnp.dot(tap_l, w1[0:c, :], preferred_element_type=jnp.float32)
         + jnp.dot(xm, w1[c:2 * c, :], preferred_element_type=jnp.float32)
         + jnp.dot(tap_r, w1[2 * c:3 * c, :], preferred_element_type=jnp.float32))
    # BatchNorm1d with in-register batch stats (biased variance)
    inv_n = 1.0 / bt
    mean = jnp.sum(h, axis=0, keepdims=True) * inv_n
    var = jnp.maximum(jnp.sum(h * h, axis=0, keepdims=True) * inv_n
                      - mean * mean, 0.0)
    hn = (h - mean) * jax.lax.rsqrt(var + eps) * g_ref[...] + b_ref[...]
    hn = jnp.maximum(hn, 0.0)
    # fc2 (1x1 Conv1d) + temperature softmax over the n_basis lane axis
    z = (jnp.dot(hn, w2_ref[...], preferred_element_type=jnp.float32)
         + b2_ref[...]) * inv_temp
    z = z - jnp.max(z, axis=1, keepdims=True)
    e = jnp.exp(z)
    o_ref[...] = e / jnp.sum(e, axis=1, keepdims=True)


# ----------------------------- Pallas wrappers -----------------------------

def conv_matmul_stats(a, w, bias, max_rows=None, out_dtype=jnp.bfloat16):
    """(M, K) @ (K, N) + bias; returns (bf16 activations, (g, 2, N) BN partials)."""
    a = a.astype(jnp.bfloat16)
    w = w.astype(jnp.bfloat16)
    M, K = a.shape
    N = w.shape[1]
    if bias is None:
        bias = jnp.zeros((N,), jnp.float32)
    bias2 = bias.astype(jnp.float32).reshape(1, N)
    tm = _pick_tm(M, 2 * K + 6 * N, max_rows=max_rows)
    g = pl.cdiv(M, tm)
    return pl.pallas_call(
        functools.partial(_conv_stats_kernel, rows_total=M, tm=tm),
        out_shape=(jax.ShapeDtypeStruct((M, N), out_dtype),
                   jax.ShapeDtypeStruct((g, 2, N), jnp.float32)),
        grid=(g,),
        in_specs=[pl.BlockSpec((tm, K), lambda i: (i, 0)),
                  pl.BlockSpec((K, N), lambda i: (0, 0)),
                  pl.BlockSpec((1, N), lambda i: (0, 0))],
        out_specs=(pl.BlockSpec((tm, N), lambda i: (i, 0)),
                   pl.BlockSpec((1, 2, N), lambda i: (i, 0, 0))),
        compiler_params=_mosaic_params(),
    )(a, w, bias2)


def dynconv_matmul_stats(a, w, bias, attn_rep, nb, cout, max_rows=256,
                         out_dtype=jnp.bfloat16):
    a = a.astype(jnp.bfloat16)
    w = w.astype(jnp.bfloat16)
    M, K = a.shape
    N = nb * cout
    bias2 = bias.astype(jnp.float32).reshape(1, N)
    attn_rep = attn_rep.astype(jnp.float32)
    tm = _pick_tm(M, 2 * K + 4 * N + 4 * nb + 6 * cout, max_rows=max_rows)
    g = pl.cdiv(M, tm)
    return pl.pallas_call(
        functools.partial(_dynconv_stats_kernel, nb=nb, cout=cout,
                          rows_total=M, tm=tm),
        out_shape=(jax.ShapeDtypeStruct((M, cout), out_dtype),
                   jax.ShapeDtypeStruct((g, 2, cout), jnp.float32)),
        grid=(g,),
        in_specs=[pl.BlockSpec((tm, K), lambda i: (i, 0)),
                  pl.BlockSpec((K, N), lambda i: (0, 0)),
                  pl.BlockSpec((1, N), lambda i: (0, 0)),
                  pl.BlockSpec((tm, nb), lambda i: (i, 0))],
        out_specs=(pl.BlockSpec((tm, cout), lambda i: (i, 0)),
                   pl.BlockSpec((1, 2, cout), lambda i: (i, 0, 0))),
        compiler_params=_mosaic_params(),
    )(a, w, bias2, attn_rep)


def bn_relu_pool(x, stats_part, gamma, beta, count, eps, pw, relu=True,
                 out_dtype=jnp.bfloat16):
    """x: (M, C) conv activations; stats_part: (g, 2, C) fused BN partials.
    BN affine (batch stats) + ReLU + mean over groups of pw consecutive rows
    (width pool).  Output is presented 128-lane dense when C divides 128."""
    M, C = x.shape
    Mo = M // pw
    lf = 1
    if C < 128 and 128 % C == 0 and Mo % (128 // C) == 0:
        lf = 128 // C                           # lane-fold factor (C=64 -> 2)
    Mo2 = Mo // lf
    xg = x.reshape(Mo2, lf * pw * C)            # free row-major reshape
    g = stats_part.shape[0]
    gamma2 = gamma.astype(jnp.float32).reshape(1, C)
    beta2 = beta.astype(jnp.float32).reshape(1, C)
    tm = _pick_tm(Mo2, lf * pw * C * x.dtype.itemsize + lf * C * 4)
    out = pl.pallas_call(
        functools.partial(_bn_relu_pool_kernel, pw=pw, c=C, lf=lf, relu=relu,
                          count=float(count), eps=float(eps)),
        out_shape=jax.ShapeDtypeStruct((Mo2, lf * C), out_dtype),
        grid=(pl.cdiv(Mo2, tm),),
        in_specs=[pl.BlockSpec((tm, lf * pw * C), lambda i: (i, 0)),
                  pl.BlockSpec((g, 2, C), lambda i: (0, 0, 0)),
                  pl.BlockSpec((1, C), lambda i: (0, 0)),
                  pl.BlockSpec((1, C), lambda i: (0, 0))],
        out_specs=pl.BlockSpec((tm, lf * C), lambda i: (i, 0)),
        compiler_params=_mosaic_params(),
    )(xg, stats_part, gamma2, beta2)
    return out.reshape(Mo, C)                   # free row-major reshape back


def attention_branch(x_flat, B, T, F, C, p, n_basis, temperature):
    """pool_dim='freq' attention2d, fully fused in one grid=1 pallas_call."""
    BT = B * T
    hid = p['att_fc1_w'].shape[0]
    x2d = x_flat.reshape(BT, F * C)             # free reshape of (B*T*F, C)
    # zero-padding masks for the Conv1d time taps at t==0 / t==T-1
    t_idx = jnp.tile(jnp.arange(T, dtype=jnp.int32), B)
    masks = jnp.stack([(t_idx != 0).astype(jnp.float32),
                       (t_idx != T - 1).astype(jnp.float32)], axis=1)  # (BT, 2)
    w1mat = (p['att_fc1_w'].transpose(2, 1, 0)
             .reshape(3 * C, hid).astype(jnp.float32))                 # (3C, hid)
    gamma = p['att_bn_g'].astype(jnp.float32).reshape(1, hid)
    beta = p['att_bn_b'].astype(jnp.float32).reshape(1, hid)
    w2 = p['att_fc2_w'].reshape(n_basis, hid).T.astype(jnp.float32)    # (hid, nb)
    b2 = p['att_fc2_b'].astype(jnp.float32).reshape(1, n_basis)
    return pl.pallas_call(
        functools.partial(_attention_kernel, n_freq=F, c=C,
                          inv_temp=1.0 / float(temperature), eps=1e-5),
        out_shape=jax.ShapeDtypeStruct((BT, n_basis), jnp.float32),
        grid=(1,),
        in_specs=[pl.BlockSpec((BT, F * C), lambda i: (0, 0)),
                  pl.BlockSpec((BT, 2), lambda i: (0, 0)),
                  pl.BlockSpec((3 * C, hid), lambda i: (0, 0)),
                  pl.BlockSpec((1, hid), lambda i: (0, 0)),
                  pl.BlockSpec((1, hid), lambda i: (0, 0)),
                  pl.BlockSpec((hid, n_basis), lambda i: (0, 0)),
                  pl.BlockSpec((1, n_basis), lambda i: (0, 0))],
        out_specs=pl.BlockSpec((BT, n_basis), lambda i: (0, 0)),
        compiler_params=_mosaic_params(),
    )(x2d, masks, w1mat, gamma, beta, w2, b2)


# ----------------------- im2col glue (XLA, bf16) -----------------------

def _im2col2d_nhwc(x, k, pad, stride=1):
    """x: (B, H, W, C) bf16 -> patches (B*Ho*Wo, k*k*C), channel-fastest per tap."""
    B, H, W, C = x.shape
    xp = jnp.pad(x, ((0, 0), (pad, pad), (pad, pad), (0, 0)))
    Ho = (H + 2 * pad - k) // stride + 1
    Wo = (W + 2 * pad - k) // stride + 1
    cols = [xp[:, kh:kh + (Ho - 1) * stride + 1:stride,
               kw:kw + (Wo - 1) * stride + 1:stride, :]
            for kh in range(k) for kw in range(k)]
    patches = jnp.concatenate(cols, axis=-1)
    return patches.reshape(B * Ho * Wo, k * k * C), Ho, Wo


# --------------------------- model components ---------------------------

def conv2d_block(x_nhwc, w, b, k, pad):
    """Plain Conv2d (im2col + MXU matmul); returns activations + BN partials."""
    Cout = w.shape[0]
    patches, Ho, Wo = _im2col2d_nhwc(x_nhwc, k, pad)
    wmat = w.transpose(2, 3, 1, 0).reshape(-1, Cout)       # (k*k*Cin, Cout)
    y, stats = conv_matmul_stats(patches, wmat, b)
    return y, stats, Ho, Wo


def dynamic_conv_layer(x_flat, B, T, F, Cin, p, n_basis, temperature, k, pad):
    """Dynamic_conv2d (pool_dim='freq') on flat bf16 activations (B*T*F, Cin)."""
    attn = attention_branch(x_flat, B, T, F, Cin, p, n_basis, temperature)  # (BT, nb)
    x_nhwc = x_flat.reshape(B, T, F, Cin)
    patches, To, Fo = _im2col2d_nhwc(x_nhwc, k, pad)
    nb, Cout = p['dyn_w'].shape[0], p['dyn_w'].shape[1]
    wmat = (p['dyn_w'].reshape(nb * Cout, Cin, k, k)
            .transpose(2, 3, 1, 0).reshape(k * k * Cin, nb * Cout))
    bias = p['dyn_b'].reshape(nb * Cout)
    # TODO(synk): the per-(b,t) attention row-repeat is tiny XLA glue; replacing
    # it with a (tm//Fo, nb) BlockSpec + in-kernel sublane broadcast is a follow-up.
    attn_rep = jnp.repeat(attn, Fo, axis=0)                 # (B*To*Fo, nb)
    y, stats = dynconv_matmul_stats(patches, wmat, bias, attn_rep, nb, Cout)
    return y, stats, To, Fo


def _bn_relu_avgpool(y_flat, stats, gamma, beta, eps, B, H, W, pw, out_dtype):
    """BN (fused batch stats) + ReLU + AvgPool2d((1, pw)) on flat activations."""
    M, C = y_flat.shape
    count = float(M)                 # BN stats were taken over all M positions
    if W % pw != 0:                  # AvgPool floor behavior: drop trailing cols
        Wt = (W // pw) * pw
        y_flat = y_flat.reshape(B, H, W, C)[:, :, :Wt, :].reshape(B * H * Wt, C)
        W = Wt
    y = bn_relu_pool(y_flat, stats, gamma, beta, count, eps, pw, relu=True,
                     out_dtype=out_dtype)
    return y, W // pw


def init_params(key, n_input_ch=1, n_filt=(64, 64, 64), n_basis=4, k=3):
    params = {}
    keys = jax.random.split(key, 16)
    ki = iter(keys)

    def kaiming(kk, shape, fan):
        return jax.random.normal(kk, shape, jnp.float32) * jnp.sqrt(2.0 / fan)

    # layer 0: plain Conv2d (DY_layers[0] == 0)
    cin, cout = n_input_ch, n_filt[0]
    params['layer0'] = dict(
        w=kaiming(next(ki), (cout, cin, k, k), cin * k * k),
        b=jnp.zeros((cout,), jnp.float32),
        bn_g=jnp.ones((cout,), jnp.float32),
        bn_b=jnp.zeros((cout,), jnp.float32),
    )
    # layers 1, 2: Dynamic_conv2d (pool_dim='freq')
    for i in (1, 2):
        cin, cout = n_filt[i - 1], n_filt[i]
        hid = max(cin // 4, 4)
        params[f'layer{i}'] = dict(
            att_fc1_w=kaiming(next(ki), (hid, cin, k), cin * k),
            att_bn_g=jnp.ones((hid,), jnp.float32),
            att_bn_b=jnp.zeros((hid,), jnp.float32),
            att_fc2_w=kaiming(next(ki), (n_basis, hid, 1), hid),
            att_fc2_b=jnp.zeros((n_basis,), jnp.float32),
            dyn_w=kaiming(next(ki), (n_basis, cout, cin, k, k), cin * k * k),
            dyn_b=jnp.zeros((n_basis, cout), jnp.float32),  # uninit torch.Tensor -> 0
            bn_g=jnp.ones((cout,), jnp.float32),
            bn_b=jnp.zeros((cout,), jnp.float32),
        )
    return params


def cnn_forward(x_nchw, params, n_basis=4, temperature=31.0,
                pooling=(4, 4, 4), kernel=(3, 3, 3), pad=(1, 1, 1)):
    B, _, T, F = x_nchw.shape
    # NCHW -> NHWC once at the boundary; HBM-resident activations are bf16.
    x = jnp.transpose(x_nchw, (0, 2, 3, 1)).astype(jnp.bfloat16)

    # layer 0: Conv2d -> BatchNorm2d(eps=1e-3) -> ReLU -> AvgPool2d((1, pw))
    p = params['layer0']
    y, stats, H, W = conv2d_block(x, p['w'], p['b'], kernel[0], pad[0])
    y, W = _bn_relu_avgpool(y, stats, p['bn_g'], p['bn_b'], 1e-3, B, H, W,
                            pooling[0], jnp.bfloat16)
    cprev = p['w'].shape[0]

    # layers 1, 2: Dynamic_conv2d -> BatchNorm2d -> ReLU -> AvgPool2d((1, pw))
    for i in (1, 2):
        p = params[f'layer{i}']
        cout = p['dyn_w'].shape[1]
        y, stats, H, W = dynamic_conv_layer(y, B, H, W, cprev, p, n_basis,
                                            temperature, kernel[i], pad[i])
        out_dt = jnp.float32 if i == 2 else jnp.bfloat16
        y, W = _bn_relu_avgpool(y, stats, p['bn_g'], p['bn_b'], 1e-3, B, H, W,
                                pooling[i], out_dt)
        cprev = cout

    # back to NCHW at the module boundary
    return y.reshape(B, H, W, cprev).transpose(0, 3, 1, 2)


if __name__ == "__main__":
    key = jax.random.PRNGKey(0)
    kx, kp = jax.random.split(key)
    # NCHW: (batch, n_input_ch, time, freq); freq=64 survives three (1,4) pools.
    B, C, T, F_ = 2, 1, 16, 64
    x = jax.random.normal(kx, (B, C, T, F_), jnp.float32)
    params = init_params(kp, n_input_ch=C)
    out = jax.jit(cnn_forward)(x, params)
    out = jax.block_until_ready(out)
    assert out.shape == (B, 64, T, 1), out.shape
    assert bool(jnp.all(jnp.isfinite(out)))
    print("KERNEL_OK")
</pallas_src>

<mosaic_0001>
module attributes {stable_mosaic.version = 11 : i64} {
  func.func @_conv_stats_kernel(%arg0: i32, %arg1: memref<1024x9xbf16, #tpu.memory_space<vmem>>, %arg2: memref<9x64xbf16, #tpu.memory_space<vmem>>, %arg3: memref<1x64xf32, #tpu.memory_space<vmem>>, %arg4: memref<1024x64xbf16, #tpu.memory_space<vmem>>, %arg5: memref<1x2x64xf32, #tpu.memory_space<vmem>>) attributes {dimension_semantics = [#tpu.dimension_semantics<parallel>], iteration_bounds = array<i64: 2>, scalar_prefetch = 0 : i64, scratch_operands = 0 : i64, tpu.core_type = #tpu.core_type<tc>, window_params = [{transform_indices = @transform_0, window_bounds = array<i64: 1024, 9>}, {pipeline_mode = #tpu.pipeline_mode<synchronous>, transform_indices = @transform_1, window_bounds = array<i64: 9, 64>}, {pipeline_mode = #tpu.pipeline_mode<synchronous>, transform_indices = @transform_2, window_bounds = array<i64: 1, 64>}, {transform_indices = @transform_3, window_bounds = array<i64: 1024, 64>}, {transform_indices = @transform_4, window_bounds = array<i64: 1, 2, 64>}]} {
    %c0 = arith.constant 0 : index
    %c0_0 = arith.constant 0 : index
    %0 = vector.load %arg1[%c0, %c0_0] : memref<1024x9xbf16, #tpu.memory_space<vmem>>, vector<1024x9xbf16>
    %c0_1 = arith.constant 0 : index
    %c0_2 = arith.constant 0 : index
    %1 = vector.load %arg2[%c0_1, %c0_2] : memref<9x64xbf16, #tpu.memory_space<vmem>>, vector<9x64xbf16>
    %cst = arith.constant dense<0.000000e+00> : vector<1024x64xf32>
    %2 = tpu.matmul %0, %1, %cst {dimension_numbers = #tpu.dot_dimension_numbers<[1], [0], [0], [1], [0, 0, 1, 1], [], []>} : vector<1024x9xbf16>, vector<9x64xbf16>, vector<1024x64xf32> -> vector<1024x64xf32>
    %c0_3 = arith.constant 0 : index
    %c0_4 = arith.constant 0 : index
    %3 = vector.load %arg3[%c0_3, %c0_4] : memref<1x64xf32, #tpu.memory_space<vmem>>, vector<1x64xf32>
    %4 = vector.broadcast %3 : vector<1x64xf32> to vector<1024x64xf32>
    %5 = arith.addf %2, %4 : vector<1024x64xf32>
    %6 = arith.truncf %5 : vector<1024x64xf32> to vector<1024x64xbf16>
    %c0_5 = arith.constant 0 : index
    %c0_6 = arith.constant 0 : index
    %7 = vector.load %arg4[%c0_5, %c0_6] : memref<1024x64xbf16, #tpu.memory_space<vmem>>, vector<1024x64xbf16>
    tpu.vector_store %arg4[%c0_5, %c0_6], %6 {strides = array<i32>} : memref<1024x64xbf16, #tpu.memory_space<vmem>>, vector<1024x64xbf16>,
    %cst_7 = arith.constant dense<0.000000e+00> : vector<64xf32>
    %8 = vector.multi_reduction <add>, %5, %cst_7 [0] : vector<1024x64xf32> to vector<64xf32>
    %9 = vector.shape_cast %8 : vector<64xf32> to vector<1x64xf32>
    %10 = arith.mulf %5, %5 : vector<1024x64xf32>
    %cst_8 = arith.constant dense<0.000000e+00> : vector<64xf32>
    %11 = vector.multi_reduction <add>, %10, %cst_8 [0] : vector<1024x64xf32> to vector<64xf32>
    %12 = vector.shape_cast %11 : vector<64xf32> to vector<1x64xf32>
    %13 = tpu.concatenate %9, %12 in 0 : vector<1x64xf32>, vector<1x64xf32> -> vector<2x64xf32>
    %14 = vector.shape_cast %13 : vector<2x64xf32> to vector<1x2x64xf32>
    %c0_9 = arith.constant 0 : index
    %c0_10 = arith.constant 0 : index
    %c0_11 = arith.constant 0 : index
    %15 = vector.load %arg5[%c0_9, %c0_10, %c0_11] : memref<1x2x64xf32, #tpu.memory_space<vmem>>, vector<1x2x64xf32>
    tpu.vector_store %arg5[%c0_9, %c0_10, %c0_11], %14 {strides = array<i32>} : memref<1x2x64xf32, #tpu.memory_space<vmem>>, vector<1x2x64xf32>,
    return
  }
  func.func @transform_0(%arg0: i32) -> (i32, i32) {
    %c0_i32 = arith.constant 0 : i32
    %c0_i32_0 = arith.constant 0 : i32
    return %arg0, %c0_i32 : i32, i32
  }
  func.func @transform_1(%arg0: i32) -> (i32, i32) {
    %c0_i32 = arith.constant 0 : i32
    %c0_i32_0 = arith.constant 0 : i32
    %c0_i32_1 = arith.constant 0 : i32
    return %c0_i32, %c0_i32_0 : i32, i32
  }
  func.func @transform_2(%arg0: i32) -> (i32, i32) {
    %c0_i32 = arith.constant 0 : i32
    %c0_i32_0 = arith.constant 0 : i32
    %c0_i32_1 = arith.constant 0 : i32
    return %c0_i32, %c0_i32_0 : i32, i32
  }
  func.func @transform_3(%arg0: i32) -> (i32, i32) {
    %c0_i32 = arith.constant 0 : i32
    %c0_i32_0 = arith.constant 0 : i32
    return %arg0, %c0_i32 : i32, i32
  }
  func.func @transform_4(%arg0: i32) -> (i32, i32, i32) {
    %c0_i32 = arith.constant 0 : i32
    %c0_i32_0 = arith.constant 0 : i32
    %c0_i32_1 = arith.constant 0 : i32
    return %arg0, %c0_i32, %c0_i32_0 : i32, i32, i32
  }
}

module attributes {stable_mosaic.version = 11 : i64} {
  func.func @_bn_relu_pool_kernel(%arg0: i32, %arg1: memref<128x512xbf16, #tpu.memory_space<vmem>>, %arg2: memref<2x2x64xf32, #tpu.memory_space<vmem>>, %arg3: memref<1x64xf32, #tpu.memory_space<vmem>>, %arg4: memref<1x64xf32, #tpu.memory_space<vmem>>, %arg5: memref<128x128xbf16, #tpu.memory_space<vmem>>) attributes {dimension_semantics = [#tpu.dimension_semantics<parallel>], iteration_bounds = array<i64: 2>, scalar_prefetch = 0 : i64, scratch_operands = 0 : i64, tpu.core_type = #tpu.core_type<tc>, window_params = [{transform_indices = @transform_0, window_bounds = array<i64: 128, 512>}, {pipeline_mode = #tpu.pipeline_mode<synchronous>, transform_indices = @transform_1, window_bounds = array<i64: 2, 2, 64>}, {pipeline_mode = #tpu.pipeline_mode<synchronous>, transform_indices = @transform_2, window_bounds = array<i64: 1, 64>}, {pipeline_mode = #tpu.pipeline_mode<synchronous>, transform_indices = @transform_3, window_bounds = array<i64: 1, 64>}, {transform_indices = @transform_4, window_bounds = array<i64: 128, 128>}]} {
    %c0 = arith.constant 0 : index
    %c0_0 = arith.constant 0 : index
    %c0_1 = arith.constant 0 : index
    %0 = vector.load %arg2[%c0, %c0_0, %c0_1] : memref<2x2x64xf32, #tpu.memory_space<vmem>>, vector<2x2x64xf32>
    %cst = arith.constant dense<0.000000e+00> : vector<2x64xf32>
    %1 = vector.multi_reduction <add>, %0, %cst [0] : vector<2x2x64xf32> to vector<2x64xf32>
    %2 = vector.extract_strided_slice %1 {offsets = [0, 0], sizes = [1, 64], strides = [1, 1]} : vector<2x64xf32> to vector<1x64xf32>
    %cst_2 = arith.constant 4.8828125E-4 : f32
    %3 = vector.broadcast %cst_2 : f32 to vector<1x64xf32>
    %4 = arith.mulf %2, %3 : vector<1x64xf32>
    %5 = vector.extract_strided_slice %1 {offsets = [1, 0], sizes = [1, 64], strides = [1, 1]} : vector<2x64xf32> to vector<1x64xf32>
    %cst_3 = arith.constant 4.8828125E-4 : f32
    %6 = vector.broadcast %cst_3 : f32 to vector<1x64xf32>
    %7 = arith.mulf %5, %6 : vector<1x64xf32>
    %8 = arith.mulf %4, %4 : vector<1x64xf32>
    %9 = arith.subf %7, %8 : vector<1x64xf32>
    %cst_4 = arith.constant 0.000000e+00 : f32
    %10 = vector.broadcast %cst_4 : f32 to vector<1x64xf32>
    %11 = arith.maximumf %9, %10 : vector<1x64xf32>
    %c0_5 = arith.constant 0 : index
    %c0_6 = arith.constant 0 : index
    %12 = vector.load %arg3[%c0_5, %c0_6] : memref<1x64xf32, #tpu.memory_space<vmem>>, vector<1x64xf32>
    %cst_7 = arith.constant 1.000000e-03 : f32
    %13 = vector.broadcast %cst_7 : f32 to vector<1x64xf32>
    %14 = arith.addf %11, %13 : vector<1x64xf32>
    %15 = math.rsqrt %14 : vector<1x64xf32>
    %16 = arith.mulf %12, %15 : vector<1x64xf32>
    %c0_8 = arith.constant 0 : index
    %c0_9 = arith.constant 0 : index
    %17 = vector.load %arg4[%c0_8, %c0_9] : memref<1x64xf32, #tpu.memory_space<vmem>>, vector<1x64xf32>
    %18 = arith.mulf %4, %16 : vector<1x64xf32>
    %19 = arith.subf %17, %18 : vector<1x64xf32>
    %c0_10 = arith.constant 0 : index
    %c0_11 = arith.constant 0 : index
    %20 = vector.load %arg1[%c0_10, %c0_11] : memref<128x512xbf16, #tpu.memory_space<vmem>>, vector<128x512xbf16>
    %21 = arith.extf %20 : vector<128x512xbf16> to vector<128x512xf32>
    %22 = vector.extract_strided_slice %21 {offsets = [0, 0], sizes = [128, 64], strides = [1, 1]} : vector<128x512xf32> to vector<128x64xf32>
    %23 = vector.broadcast %16 : vector<1x64xf32> to vector<128x64xf32>
    %24 = arith.mulf %22, %23 : vector<128x64xf32>
    %25 = vector.broadcast %19 : vector<1x64xf32> to vector<128x64xf32>
    %26 = arith.addf %24, %25 : vector<128x64xf32>
    %cst_12 = arith.constant 0.000000e+00 : f32
    %27 = vector.broadcast %cst_12 : f32 to vector<128x64xf32>
    %28 = arith.maximumf %26, %27 : vector<128x64xf32>
    %29 = vector.extract_strided_slice %21 {offsets = [0, 64], sizes = [128, 64], strides = [1, 1]} : vector<128x512xf32> to vector<128x64xf32>
    %30 = vector.broadcast %16 : vector<1x64xf32> to vector<128x64xf32>
    %31 = arith.mulf %29, %30 : vector<128x64xf32>
    %32 = vector.broadcast %19 : vector<1x64xf32> to vector<128x64xf32>
    %33 = arith.addf %31, %32 : vector<128x64xf32>
    %cst_13 = arith.constant 0.000000e+00 : f32
    %34 = vector.broadcast %cst_13 : f32 to vector<128x64xf32>
    %35 = arith.maximumf %33, %34 : vector<128x64xf32>
    %36 = arith.addf %28, %35 : vector<128x64xf32>
    %37 = vector.extract_strided_slice %21 {offsets = [0, 128], sizes = [128, 64], strides = [1, 1]} : vector<128x512xf32> to vector<128x64xf32>
    %38 = vector.broadcast %16 : vector<1x64xf32> to vector<128x64xf32>
    %39 = arith.mulf %37, %38 : vector<128x64xf32>
    %40 = vector.broadcast %19 : vector<1x64xf32> to vector<128x64xf32>
    %41 = arith.addf %39, %40 : vector<128x64xf32>
    %cst_14 = arith.constant 0.000000e+00 : f32
    %42 = vector.broadcast %cst_14 : f32 to vector<128x64xf32>
    %43 = arith.maximumf %41, %42 : vector<128x64xf32>
    %44 = arith.addf %36, %43 : vector<128x64xf32>
    %45 = vector.extract_strided_slice %21 {offsets = [0, 192], sizes = [128, 64], strides = [1, 1]} : vector<128x512xf32> to vector<128x64xf32>
    %46 = vector.broadcast %16 : vector<1x64xf32> to vector<128x64xf32>
    %47 = arith.mulf %45, %46 : vector<128x64xf32>
    %48 = vector.broadcast %19 : vector<1x64xf32> to vector<128x64xf32>
    %49 = arith.addf %47, %48 : vector<128x64xf32>
    %cst_15 = arith.constant 0.000000e+00 : f32
    %50 = vector.broadcast %cst_15 : f32 to vector<128x64xf32>
    %51 = arith.maximumf %49, %50 : vector<128x64xf32>
    %52 = arith.addf %44, %51 : vector<128x64xf32>
    %cst_16 = arith.constant 2.500000e-01 : f32
    %53 = vector.broadcast %cst_16 : f32 to vector<128x64xf32>
    %54 = arith.mulf %52, %53 : vector<128x64xf32>
    %55 = vector.extract_strided_slice %21 {offsets = [0, 256], sizes = [128, 64], strides = [1, 1]} : vector<128x512xf32> to vector<128x64xf32>
    %56 = vector.broadcast %16 : vector<1x64xf32> to vector<128x64xf32>
    %57 = arith.mulf %55, %56 : vector<128x64xf32>
    %58 = vector.broadcast %19 : vector<1x64xf32> to vector<128x64xf32>
    %59 = arith.addf %57, %58 : vector<128x64xf32>
    %cst_17 = arith.constant 0.000000e+00 : f32
    %60 = vector.broadcast %cst_17 : f32 to vector<128x64xf32>
    %61 = arith.maximumf %59, %60 : vector<128x64xf32>
    %62 = vector.extract_strided_slice %21 {offsets = [0, 320], sizes = [128, 64], strides = [1, 1]} : vector<128x512xf32> to vector<128x64xf32>
    %63 = vector.broadcast %16 : vector<1x64xf32> to vector<128x64xf32>
    %64 = arith.mulf %62, %63 : vector<128x64xf32>
    %65 = vector.broadcast %19 : vector<1x64xf32> to vector<128x64xf32>
    %66 = arith.addf %64, %65 : vector<128x64xf32>
    %cst_18 = arith.constant 0.000000e+00 : f32
    %67 = vector.broadcast %cst_18 : f32 to vector<128x64xf32>
    %68 = arith.maximumf %66, %67 : vector<128x64xf32>
    %69 = arith.addf %61, %68 : vector<128x64xf32>
    %70 = vector.extract_strided_slice %21 {offsets = [0, 384], sizes = [128, 64], strides = [1, 1]} : vector<128x512xf32> to vector<128x64xf32>
    %71 = vector.broadcast %16 : vector<1x64xf32> to vector<128x64xf32>
    %72 = arith.mulf %70, %71 : vector<128x64xf32>
    %73 = vector.broadcast %19 : vector<1x64xf32> to vector<128x64xf32>
    %74 = arith.addf %72, %73 : vector<128x64xf32>
    %cst_19 = arith.constant 0.000000e+00 : f32
    %75 = vector.broadcast %cst_19 : f32 to vector<128x64xf32>
    %76 = arith.maximumf %74, %75 : vector<128x64xf32>
    %77 = arith.addf %69, %76 : vector<128x64xf32>
    %78 = vector.extract_strided_slice %21 {offsets = [0, 448], sizes = [128, 64], strides = [1, 1]} : vector<128x512xf32> to vector<128x64xf32>
    %79 = vector.broadcast %16 : vector<1x64xf32> to vector<128x64xf32>
    %80 = arith.mulf %78, %79 : vector<128x64xf32>
    %81 = vector.broadcast %19 : vector<1x64xf32> to vector<128x64xf32>
    %82 = arith.addf %80, %81 : vector<128x64xf32>
    %cst_20 = arith.constant 0.000000e+00 : f32
    %83 = vector.broadcast %cst_20 : f32 to vector<128x64xf32>
    %84 = arith.maximumf %82, %83 : vector<128x64xf32>
    %85 = arith.addf %77, %84 : vector<128x64xf32>
    %cst_21 = arith.constant 2.500000e-01 : f32
    %86 = vector.broadcast %cst_21 : f32 to vector<128x64xf32>
    %87 = arith.mulf %85, %86 : vector<128x64xf32>
    %88 = tpu.concatenate %54, %87 in 1 : vector<128x64xf32>, vector<128x64xf32> -> vector<128x128xf32>
    %89 = arith.truncf %88 : vector<128x128xf32> to vector<128x128xbf16>
    %c0_22 = arith.constant 0 : index
    %c0_23 = arith.constant 0 : index
    %90 = vector.load %arg5[%c0_22, %c0_23] : memref<128x128xbf16, #tpu.memory_space<vmem>>, vector<128x128xbf16>
    tpu.vector_store %arg5[%c0_22, %c0_23], %89 {strides = array<i32>} : memref<128x128xbf16, #tpu.memory_space<vmem>>, vector<128x128xbf16>,
    return
  }
  func.func @transform_0(%arg0: i32) -> (i32, i32) {
    %c0_i32 = arith.constant 0 : i32
    %c0_i32_0 = arith.constant 0 : i32
    return %arg0, %c0_i32 : i32, i32
  }
  func.func @transform_1(%arg0: i32) -> (i32, i32, i32) {
    %c0_i32 = arith.constant 0 : i32
    %c0_i32_0 = arith.constant 0 : i32
    %c0_i32_1 = arith.constant 0 : i32
    %c0_i32_2 = arith.constant 0 : i32
    return %c0_i32, %c0_i32_0, %c0_i32_1 : i32, i32, i32
  }
  func.func @transform_2(%arg0: i32) -> (i32, i32) {
    %c0_i32 = arith.constant 0 : i32
    %c0_i32_0 = arith.constant 0 : i32
    %c0_i32_1 = arith.constant 0 : i32
    return %c0_i32, %c0_i32_0 : i32, i32
  }
  func.func @transform_3(%arg0: i32) -> (i32, i32) {
    %c0_i32 = arith.constant 0 : i32
    %c0_i32_0 = arith.constant 0 : i32
    %c0_i32_1 = arith.constant 0 : i32
    return %c0_i32, %c0_i32_0 : i32, i32
  }
  func.func @transform_4(%arg0: i32) -> (i32, i32) {
    %c0_i32 = arith.constant 0 : i32
    %c0_i32_0 = arith.constant 0 : i32
    return %arg0, %c0_i32 : i32, i32
  }
}

module attributes {stable_mosaic.version = 11 : i64} {
  func.func @_attention_kernel(%arg0: i32, %arg1: memref<32x1024xbf16, #tpu.memory_space<vmem>>, %arg2: memref<32x2xf32, #tpu.memory_space<vmem>>, %arg3: memref<192x16xf32, #tpu.memory_space<vmem>>, %arg4: memref<1x16xf32, #tpu.memory_space<vmem>>, %arg5: memref<1x16xf32, #tpu.memory_space<vmem>>, %arg6: memref<16x4xf32, #tpu.memory_space<vmem>>, %arg7: memref<1x4xf32, #tpu.memory_space<vmem>>, %arg8: memref<32x4xf32, #tpu.memory_space<vmem>>) attributes {dimension_semantics = [#tpu.dimension_semantics<parallel>], iteration_bounds = array<i64: 1>, scalar_prefetch = 0 : i64, scratch_operands = 0 : i64, tpu.core_type = #tpu.core_type<tc>, window_params = [{pipeline_mode = #tpu.pipeline_mode<synchronous>, transform_indices = @transform_0, window_bounds = array<i64: 32, 1024>}, {pipeline_mode = #tpu.pipeline_mode<synchronous>, transform_indices = @transform_1, window_bounds = array<i64: 32, 2>}, {pipeline_mode = #tpu.pipeline_mode<synchronous>, transform_indices = @transform_2, window_bounds = array<i64: 192, 16>}, {pipeline_mode = #tpu.pipeline_mode<synchronous>, transform_indices = @transform_3, window_bounds = array<i64: 1, 16>}, {pipeline_mode = #tpu.pipeline_mode<synchronous>, transform_indices = @transform_4, window_bounds = array<i64: 1, 16>}, {pipeline_mode = #tpu.pipeline_mode<synchronous>, transform_indices = @transform_5, window_bounds = array<i64: 16, 4>}, {pipeline_mode = #tpu.pipeline_mode<synchronous>, transform_indices = @transform_6, window_bounds = array<i64: 1, 4>}, {pipeline_mode = #tpu.pipeline_mode<synchronous>, transform_indices = @transform_7, window_bounds = array<i64: 32, 4>}]} {
    %c0 = arith.constant 0 : index
    %c0_0 = arith.constant 0 : index
    %0 = vector.load %arg1[%c0, %c0_0] : memref<32x1024xbf16, #tpu.memory_space<vmem>>, vector<32x1024xbf16>
    %1 = arith.extf %0 : vector<32x1024xbf16> to vector<32x1024xf32>
    %2 = vector.extract_strided_slice %1 {offsets = [0, 0], sizes = [32, 64], strides = [1, 1]} : vector<32x1024xf32> to vector<32x64xf32>
    %3 = vector.extract_strided_slice %1 {offsets = [0, 64], sizes = [32, 64], strides = [1, 1]} : vector<32x1024xf32> to vector<32x64xf32>
    %4 = arith.addf %2, %3 : vector<32x64xf32>
    %5 = vector.extract_strided_slice %1 {offsets = [0, 128], sizes = [32, 64], strides = [1, 1]} : vector<32x1024xf32> to vector<32x64xf32>
    %6 = arith.addf %4, %5 : vector<32x64xf32>
    %7 = vector.extract_strided_slice %1 {offsets = [0, 192], sizes = [32, 64], strides = [1, 1]} : vector<32x1024xf32> to vector<32x64xf32>
    %8 = arith.addf %6, %7 : vector<32x64xf32>
    %9 = vector.extract_strided_slice %1 {offsets = [0, 256], sizes = [32, 64], strides = [1, 1]} : vector<32x1024xf32> to vector<32x64xf32>
    %10 = arith.addf %8, %9 : vector<32x64xf32>
    %11 = vector.extract_strided_slice %1 {offsets = [0, 320], sizes = [32, 64], strides = [1, 1]} : vector<32x1024xf32> to vector<32x64xf32>
    %12 = arith.addf %10, %11 : vector<32x64xf32>
    %13 = vector.extract_strided_slice %1 {offsets = [0, 384], sizes = [32, 64], strides = [1, 1]} : vector<32x1024xf32> to vector<32x64xf32>
    %14 = arith.addf %12, %13 : vector<32x64xf32>
    %15 = vector.extract_strided_slice %1 {offsets = [0, 448], sizes = [32, 64], strides = [1, 1]} : vector<32x1024xf32> to vector<32x64xf32>
    %16 = arith.addf %14, %15 : vector<32x64xf32>
    %17 = vector.extract_strided_slice %1 {offsets = [0, 512], sizes = [32, 64], strides = [1, 1]} : vector<32x1024xf32> to vector<32x64xf32>
    %18 = arith.addf %16, %17 : vector<32x64xf32>
    %19 = vector.extract_strided_slice %1 {offsets = [0, 576], sizes = [32, 64], strides = [1, 1]} : vector<32x1024xf32> to vector<32x64xf32>
    %20 = arith.addf %18, %19 : vector<32x64xf32>
    %21 = vector.extract_strided_slice %1 {offsets = [0, 640], sizes = [32, 64], strides = [1, 1]} : vector<32x1024xf32> to vector<32x64xf32>
    %22 = arith.addf %20, %21 : vector<32x64xf32>
    %23 = vector.extract_strided_slice %1 {offsets = [0, 704], sizes = [32, 64], strides = [1, 1]} : vector<32x1024xf32> to vector<32x64xf32>
    %24 = arith.addf %22, %23 : vector<32x64xf32>
    %25 = vector.extract_strided_slice %1 {offsets = [0, 768], sizes = [32, 64], strides = [1, 1]} : vector<32x1024xf32> to vector<32x64xf32>
    %26 = arith.addf %24, %25 : vector<32x64xf32>
    %27 = vector.extract_strided_slice %1 {offsets = [0, 832], sizes = [32, 64], strides = [1, 1]} : vector<32x1024xf32> to vector<32x64xf32>
    %28 = arith.addf %26, %27 : vector<32x64xf32>
    %29 = vector.extract_strided_slice %1 {offsets = [0, 896], sizes = [32, 64], strides = [1, 1]} : vector<32x1024xf32> to vector<32x64xf32>
    %30 = arith.addf %28, %29 : vector<32x64xf32>
    %31 = vector.extract_strided_slice %1 {offsets = [0, 960], sizes = [32, 64], strides = [1, 1]} : vector<32x1024xf32> to vector<32x64xf32>
    %32 = arith.addf %30, %31 : vector<32x64xf32>
    %cst = arith.constant 6.250000e-02 : f32
    %33 = vector.broadcast %cst : f32 to vector<32x64xf32>
    %34 = arith.mulf %32, %33 : vector<32x64xf32>
    %c0_1 = arith.constant 0 : index
    %c0_2 = arith.constant 0 : index
    %35 = vector.load %arg2[%c0_1, %c0_2] : memref<32x2xf32, #tpu.memory_space<vmem>>, vector<32x2xf32>
    %c1_i32 = arith.constant 1 : i32
    %36 = tpu.dynamic_rotate %34 by %c1_i32 dim 0 : vector<32x64xf32>, i32 -> vector<32x64xf32>
    %37 = vector.extract_strided_slice %35 {offsets = [0, 0], sizes = [32, 1], strides = [1, 1]} : vector<32x2xf32> to vector<32x1xf32>
    %38 = vector.broadcast %37 : vector<32x1xf32> to vector<32x64xf32>
    %39 = arith.mulf %36, %38 : vector<32x64xf32>
    %c31_i32 = arith.constant 31 : i32
    %40 = tpu.dynamic_rotate %34 by %c31_i32 dim 0 : vector<32x64xf32>, i32 -> vector<32x64xf32>
    %41 = vector.extract_strided_slice %35 {offsets = [0, 1], sizes = [32, 1], strides = [1, 1]} : vector<32x2xf32> to vector<32x1xf32>
    %42 = vector.broadcast %41 : vector<32x1xf32> to vector<32x64xf32>
    %43 = arith.mulf %40, %42 : vector<32x64xf32>
    %c0_3 = arith.constant 0 : index
    %c0_4 = arith.constant 0 : index
    %44 = vector.load %arg3[%c0_3, %c0_4] : memref<192x16xf32, #tpu.memory_space<vmem>>, vector<192x16xf32>
    %45 = vector.extract_strided_slice %44 {offsets = [0, 0], sizes = [64, 16], strides = [1, 1]} : vector<192x16xf32> to vector<64x16xf32>
    %cst_5 = arith.constant dense<0.000000e+00> : vector<32x16xf32>
    %46 = tpu.matmul %39, %45, %cst_5 {dimension_numbers = #tpu.dot_dimension_numbers<[1], [0], [0], [1], [0, 0, 1, 1], [], []>} : vector<32x64xf32>, vector<64x16xf32>, vector<32x16xf32> -> vector<32x16xf32>
    %47 = vector.extract_strided_slice %44 {offsets = [64, 0], sizes = [64, 16], strides = [1, 1]} : vector<192x16xf32> to vector<64x16xf32>
    %cst_6 = arith.constant dense<0.000000e+00> : vector<32x16xf32>
    %48 = tpu.matmul %34, %47, %cst_6 {dimension_numbers = #tpu.dot_dimension_numbers<[1], [0], [0], [1], [0, 0, 1, 1], [], []>} : vector<32x64xf32>, vector<64x16xf32>, vector<32x16xf32> -> vector<32x16xf32>
    %49 = arith.addf %46, %48 : vector<32x16xf32>
    %50 = vector.extract_strided_slice %44 {offsets = [128, 0], sizes = [64, 16], strides = [1, 1]} : vector<192x16xf32> to vector<64x16xf32>
    %cst_7 = arith.constant dense<0.000000e+00> : vector<32x16xf32>
    %51 = tpu.matmul %43, %50, %cst_7 {dimension_numbers = #tpu.dot_dimension_numbers<[1], [0], [0], [1], [0, 0, 1, 1], [], []>} : vector<32x64xf32>, vector<64x16xf32>, vector<32x16xf32> -> vector<32x16xf32>
    %52 = arith.addf %49, %51 : vector<32x16xf32>
    %cst_8 = arith.constant dense<0.000000e+00> : vector<16xf32>
    %53 = vector.multi_reduction <add>, %52, %cst_8 [0] : vector<32x16xf32> to vector<16xf32>
    %54 = vector.shape_cast %53 : vector<16xf32> to vector<1x16xf32>
    %cst_9 = arith.constant 3.125000e-02 : f32
    %55 = vector.broadcast %cst_9 : f32 to vector<1x16xf32>
    %56 = arith.mulf %54, %55 : vector<1x16xf32>
    %57 = arith.mulf %52, %52 : vector<32x16xf32>
    %cst_10 = arith.constant dense<0.000000e+00> : vector<16xf32>
    %58 = vector.multi_reduction <add>, %57, %cst_10 [0] : vector<32x16xf32> to vector<16xf32>
    %59 = vector.shape_cast %58 : vector<16xf32> to vector<1x16xf32>
    %cst_11 = arith.constant 3.125000e-02 : f32
    %60 = vector.broadcast %cst_11 : f32 to vector<1x16xf32>
    %61 = arith.mulf %59, %60 : vector<1x16xf32>
    %62 = arith.mulf %56, %56 : vector<1x16xf32>
    %63 = arith.subf %61, %62 : vector<1x16xf32>
    %cst_12 = arith.constant 0.000000e+00 : f32
    %64 = vector.broadcast %cst_12 : f32 to vector<1x16xf32>
    %65 = arith.maximumf %63, %64 : vector<1x16xf32>
    %66 = vector.broadcast %56 : vector<1x16xf32> to vector<32x16xf32>
    %67 = arith.subf %52, %66 : vector<32x16xf32>
    %cst_13 = arith.constant 9.99999974E-6 : f32
    %68 = vector.broadcast %cst_13 : f32 to vector<1x16xf32>
    %69 = arith.addf %65, %68 : vector<1x16xf32>
    %70 = math.rsqrt %69 : vector<1x16xf32>
    %71 = vector.broadcast %70 : vector<1x16xf32> to vector<32x16xf32>
    %72 = arith.mulf %67, %71 : vector<32x16xf32>
    %c0_14 = arith.constant 0 : index
    %c0_15 = arith.constant 0 : index
    %73 = vector.load %arg4[%c0_14, %c0_15] : memref<1x16xf32, #tpu.memory_space<vmem>>, vector<1x16xf32>
    %74 = vector.broadcast %73 : vector<1x16xf32> to vector<32x16xf32>
    %75 = arith.mulf %72, %74 : vector<32x16xf32>
    %c0_16 = arith.constant 0 : index
    %c0_17 = arith.constant 0 : index
    %76 = vector.load %arg5[%c0_16, %c0_17] : memref<1x16xf32, #tpu.memory_space<vmem>>, vector<1x16xf32>
    %77 = vector.broadcast %76 : vector<1x16xf32> to vector<32x16xf32>
    %78 = arith.addf %75, %77 : vector<32x16xf32>
    %cst_18 = arith.constant 0.000000e+00 : f32
    %79 = vector.broadcast %cst_18 : f32 to vector<32x16xf32>
    %80 = arith.maximumf %78, %79 : vector<32x16xf32>
    %c0_19 = arith.constant 0 : index
    %c0_20 = arith.constant 0 : index
    %81 = vector.load %arg6[%c0_19, %c0_20] : memref<16x4xf32, #tpu.memory_space<vmem>>, vector<16x4xf32>
    %cst_21 = arith.constant dense<0.000000e+00> : vector<32x4xf32>
    %82 = tpu.matmul %80, %81, %cst_21 {dimension_numbers = #tpu.dot_dimension_numbers<[1], [0], [0], [1], [0, 0, 1, 1], [], []>} : vector<32x16xf32>, vector<16x4xf32>, vector<32x4xf32> -> vector<32x4xf32>
    %c0_22 = arith.constant 0 : index
    %c0_23 = arith.constant 0 : index
    %83 = vector.load %arg7[%c0_22, %c0_23] : memref<1x4xf32, #tpu.memory_space<vmem>>, vector<1x4xf32>
    %84 = vector.broadcast %83 : vector<1x4xf32> to vector<32x4xf32>
    %85 = arith.addf %82, %84 : vector<32x4xf32>
    %cst_24 = arith.constant 0.0322580636 : f32
    %86 = vector.broadcast %cst_24 : f32 to vector<32x4xf32>
    %87 = arith.mulf %85, %86 : vector<32x4xf32>
    %cst_25 = arith.constant dense<0xFF800000> : vector<32xf32>
    %88 = vector.multi_reduction <maximumf>, %87, %cst_25 [1] : vector<32x4xf32> to vector<32xf32>
    %89 = vector.shape_cast %88 : vector<32xf32> to vector<32x1xf32>
    %90 = vector.broadcast %89 : vector<32x1xf32> to vector<32x4xf32>
    %91 = arith.subf %87, %90 : vector<32x4xf32>
    %92 = math.exp %91 : vector<32x4xf32>
    %cst_26 = arith.constant dense<0.000000e+00> : vector<32xf32>
    %93 = vector.multi_reduction <add>, %92, %cst_26 [1] : vector<32x4xf32> to vector<32xf32>
    %94 = vector.shape_cast %93 : vector<32xf32> to vector<32x1xf32>
    %95 = vector.broadcast %94 : vector<32x1xf32> to vector<32x4xf32>
    %96 = arith.divf %92, %95 : vector<32x4xf32>
    %c0_27 = arith.constant 0 : index
    %c0_28 = arith.constant 0 : index
    %97 = vector.load %arg8[%c0_27, %c0_28] : memref<32x4xf32, #tpu.memory_space<vmem>>, vector<32x4xf32>
    tpu.vector_store %arg8[%c0_27, %c0_28], %96 {strides = array<i32>} : memref<32x4xf32, #tpu.memory_space<vmem>>, vector<32x4xf32>,
    return
  }
  func.func @transform_0(%arg0: i32) -> (i32, i32) {
    %c0_i32 = arith.constant 0 : i32
    %c0_i32_0 = arith.constant 0 : i32
    %c0_i32_1 = arith.constant 0 : i32
    return %c0_i32, %c0_i32_0 : i32, i32
  }
  func.func @transform_1(%arg0: i32) -> (i32, i32) {
    %c0_i32 = arith.constant 0 : i32
    %c0_i32_0 = arith.constant 0 : i32
    %c0_i32_1 = arith.constant 0 : i32
    return %c0_i32, %c0_i32_0 : i32, i32
  }
  func.func @transform_2(%arg0: i32) -> (i32, i32) {
    %c0_i32 = arith.constant 0 : i32
    %c0_i32_0 = arith.constant 0 : i32
    %c0_i32_1 = arith.constant 0 : i32
    return %c0_i32, %c0_i32_0 : i32, i32
  }
  func.func @transform_3(%arg0: i32) -> (i32, i32) {
    %c0_i32 = arith.constant 0 : i32
    %c0_i32_0 = arith.constant 0 : i32
    %c0_i32_1 = arith.constant 0 : i32
    return %c0_i32, %c0_i32_0 : i32, i32
  }
  func.func @transform_4(%arg0: i32) -> (i32, i32) {
    %c0_i32 = arith.constant 0 : i32
    %c0_i32_0 = arith.constant 0 : i32
    %c0_i32_1 = arith.constant 0 : i32
    return %c0_i32, %c0_i32_0 : i32, i32
  }
  func.func @transform_5(%arg0: i32) -> (i32, i32) {
    %c0_i32 = arith.constant 0 : i32
    %c0_i32_0 = arith.constant 0 : i32
    %c0_i32_1 = arith.constant 0 : i32
    return %c0_i32, %c0_i32_0 : i32, i32
  }
  func.func @transform_6(%arg0: i32) -> (i32, i32) {
    %c0_i32 = arith.constant 0 : i32
    %c0_i32_0 = arith.constant 0 : i32
    %c0_i32_1 = arith.constant 0 : i32
    return %c0_i32, %c0_i32_0 : i32, i32
  }
  func.func @transform_7(%arg0: i32) -> (i32, i32) {
    %c0_i32 = arith.constant 0 : i32
    %c0_i32_0 = arith.constant 0 : i32
    %c0_i32_1 = arith.constant 0 : i32
    return %c0_i32, %c0_i32_0 : i32, i32
  }
}

module attributes {stable_mosaic.version = 11 : i64} {
  func.func @_dynconv_stats_kernel(%arg0: i32, %arg1: memref<256x576xbf16, #tpu.memory_space<vmem>>, %arg2: memref<576x256xbf16, #tpu.memory_space<vmem>>, %arg3: memref<1x256xf32, #tpu.memory_space<vmem>>, %arg4: memref<256x4xf32, #tpu.memory_space<vmem>>, %arg5: memref<256x64xbf16, #tpu.memory_space<vmem>>, %arg6: memref<1x2x64xf32, #tpu.memory_space<vmem>>) attributes {dimension_semantics = [#tpu.dimension_semantics<parallel>], iteration_bounds = array<i64: 2>, scalar_prefetch = 0 : i64, scratch_operands = 0 : i64, tpu.core_type = #tpu.core_type<tc>, window_params = [{transform_indices = @transform_0, window_bounds = array<i64: 256, 576>}, {pipeline_mode = #tpu.pipeline_mode<synchronous>, transform_indices = @transform_1, window_bounds = array<i64: 576, 256>}, {pipeline_mode = #tpu.pipeline_mode<synchronous>, transform_indices = @transform_2, window_bounds = array<i64: 1, 256>}, {transform_indices = @transform_3, window_bounds = array<i64: 256, 4>}, {transform_indices = @transform_4, window_bounds = array<i64: 256, 64>}, {transform_indices = @transform_5, window_bounds = array<i64: 1, 2, 64>}]} {
    %c0 = arith.constant 0 : index
    %c0_0 = arith.constant 0 : index
    %0 = vector.load %arg1[%c0, %c0_0] : memref<256x576xbf16, #tpu.memory_space<vmem>>, vector<256x576xbf16>
    %c0_1 = arith.constant 0 : index
    %c0_2 = arith.constant 0 : index
    %1 = vector.load %arg2[%c0_1, %c0_2] : memref<576x256xbf16, #tpu.memory_space<vmem>>, vector<576x256xbf16>
    %cst = arith.constant dense<0.000000e+00> : vector<256x256xf32>
    %2 = tpu.matmul %0, %1, %cst {dimension_numbers = #tpu.dot_dimension_numbers<[1], [0], [0], [1], [0, 0, 1, 1], [], []>} : vector<256x576xbf16>, vector<576x256xbf16>, vector<256x256xf32> -> vector<256x256xf32>
    %c0_3 = arith.constant 0 : index
    %c0_4 = arith.constant 0 : index
    %3 = vector.load %arg3[%c0_3, %c0_4] : memref<1x256xf32, #tpu.memory_space<vmem>>, vector<1x256xf32>
    %4 = vector.broadcast %3 : vector<1x256xf32> to vector<256x256xf32>
    %5 = arith.addf %2, %4 : vector<256x256xf32>
    %c0_5 = arith.constant 0 : index
    %c0_6 = arith.constant 0 : index
    %6 = vector.load %arg4[%c0_5, %c0_6] : memref<256x4xf32, #tpu.memory_space<vmem>>, vector<256x4xf32>
    %7 = vector.extract_strided_slice %6 {offsets = [0, 0], sizes = [256, 1], strides = [1, 1]} : vector<256x4xf32> to vector<256x1xf32>
    %8 = vector.extract_strided_slice %5 {offsets = [0, 0], sizes = [256, 64], strides = [1, 1]} : vector<256x256xf32> to vector<256x64xf32>
    %9 = vector.broadcast %7 : vector<256x1xf32> to vector<256x64xf32>
    %10 = arith.mulf %9, %8 : vector<256x64xf32>
    %11 = vector.extract_strided_slice %6 {offsets = [0, 1], sizes = [256, 1], strides = [1, 1]} : vector<256x4xf32> to vector<256x1xf32>
    %12 = vector.extract_strided_slice %5 {offsets = [0, 64], sizes = [256, 64], strides = [1, 1]} : vector<256x256xf32> to vector<256x64xf32>
    %13 = vector.broadcast %11 : vector<256x1xf32> to vector<256x64xf32>
    %14 = arith.mulf %13, %12 : vector<256x64xf32>
    %15 = arith.addf %10, %14 : vector<256x64xf32>
    %16 = vector.extract_strided_slice %6 {offsets = [0, 2], sizes = [256, 1], strides = [1, 1]} : vector<256x4xf32> to vector<256x1xf32>
    %17 = vector.extract_strided_slice %5 {offsets = [0, 128], sizes = [256, 64], strides = [1, 1]} : vector<256x256xf32> to vector<256x64xf32>
    %18 = vector.broadcast %16 : vector<256x1xf32> to vector<256x64xf32>
    %19 = arith.mulf %18, %17 : vector<256x64xf32>
    %20 = arith.addf %15, %19 : vector<256x64xf32>
    %21 = vector.extract_strided_slice %6 {offsets = [0, 3], sizes = [256, 1], strides = [1, 1]} : vector<256x4xf32> to vector<256x1xf32>
    %22 = vector.extract_strided_slice %5 {offsets = [0, 192], sizes = [256, 64], strides = [1, 1]} : vector<256x256xf32> to vector<256x64xf32>
    %23 = vector.broadcast %21 : vector<256x1xf32> to vector<256x64xf32>
    %24 = arith.mulf %23, %22 : vector<256x64xf32>
    %25 = arith.addf %20, %24 : vector<256x64xf32>
    %26 = arith.truncf %25 : vector<256x64xf32> to vector<256x64xbf16>
    %c0_7 = arith.constant 0 : index
    %c0_8 = arith.constant 0 : index
    %27 = vector.load %arg5[%c0_7, %c0_8] : memref<256x64xbf16, #tpu.memory_space<vmem>>, vector<256x64xbf16>
    tpu.vector_store %arg5[%c0_7, %c0_8], %26 {strides = array<i32>} : memref<256x64xbf16, #tpu.memory_space<vmem>>, vector<256x64xbf16>,
    %cst_9 = arith.constant dense<0.000000e+00> : vector<64xf32>
    %28 = vector.multi_reduction <add>, %25, %cst_9 [0] : vector<256x64xf32> to vector<64xf32>
    %29 = vector.shape_cast %28 : vector<64xf32> to vector<1x64xf32>
    %30 = arith.mulf %25, %25 : vector<256x64xf32>
    %cst_10 = arith.constant dense<0.000000e+00> : vector<64xf32>
    %31 = vector.multi_reduction <add>, %30, %cst_10 [0] : vector<256x64xf32> to vector<64xf32>
    %32 = vector.shape_cast %31 : vector<64xf32> to vector<1x64xf32>
    %33 = tpu.concatenate %29, %32 in 0 : vector<1x64xf32>, vector<1x64xf32> -> vector<2x64xf32>
    %34 = vector.shape_cast %33 : vector<2x64xf32> to vector<1x2x64xf32>
    %c0_11 = arith.constant 0 : index
    %c0_12 = arith.constant 0 : index
    %c0_13 = arith.constant 0 : index
    %35 = vector.load %arg6[%c0_11, %c0_12, %c0_13] : memref<1x2x64xf32, #tpu.memory_space<vmem>>, vector<1x2x64xf32>
    tpu.vector_store %arg6[%c0_11, %c0_12, %c0_13], %34 {strides = array<i32>} : memref<1x2x64xf32, #tpu.memory_space<vmem>>, vector<1x2x64xf32>,
    return
  }
  func.func @transform_0(%arg0: i32) -> (i32, i32) {
    %c0_i32 = arith.constant 0 : i32
    %c0_i32_0 = arith.constant 0 : i32
    return %arg0, %c0_i32 : i32, i32
  }
  func.func @transform_1(%arg0: i32) -> (i32, i32) {
    %c0_i32 = arith.constant 0 : i32
    %c0_i32_0 = arith.constant 0 : i32
    %c0_i32_1 = arith.constant 0 : i32
    return %c0_i32, %c0_i32_0 : i32, i32
  }
  func.func @transform_2(%arg0: i32) -> (i32, i32) {
    %c0_i32 = arith.constant 0 : i32
    %c0_i32_0 = arith.constant 0 : i32
    %c0_i32_1 = arith.constant 0 : i32
    return %c0_i32, %c0_i32_0 : i32, i32
  }
  func.func @transform_3(%arg0: i32) -> (i32, i32) {
    %c0_i32 = arith.constant 0 : i32
    %c0_i32_0 = arith.constant 0 : i32
    return %arg0, %c0_i32 : i32, i32
  }
  func.func @transform_4(%arg0: i32) -> (i32, i32) {
    %c0_i32 = arith.constant 0 : i32
    %c0_i32_0 = arith.constant 0 : i32
    return %arg0, %c0_i32 : i32, i32
  }
  func.func @transform_5(%arg0: i32) -> (i32, i32, i32) {
    %c0_i32 = arith.constant 0 : i32
    %c0_i32_0 = arith.constant 0 : i32
    %c0_i32_1 = arith.constant 0 : i32
    return %arg0, %c0_i32, %c0_i32_0 : i32, i32, i32
  }
}

module attributes {stable_mosaic.version = 11 : i64} {
  func.func @_bn_relu_pool_kernel(%arg0: i32, %arg1: memref<32x512xbf16, #tpu.memory_space<vmem>>, %arg2: memref<2x2x64xf32, #tpu.memory_space<vmem>>, %arg3: memref<1x64xf32, #tpu.memory_space<vmem>>, %arg4: memref<1x64xf32, #tpu.memory_space<vmem>>, %arg5: memref<32x128xbf16, #tpu.memory_space<vmem>>) attributes {dimension_semantics = [#tpu.dimension_semantics<parallel>], iteration_bounds = array<i64: 2>, scalar_prefetch = 0 : i64, scratch_operands = 0 : i64, tpu.core_type = #tpu.core_type<tc>, window_params = [{transform_indices = @transform_0, window_bounds = array<i64: 32, 512>}, {pipeline_mode = #tpu.pipeline_mode<synchronous>, transform_indices = @transform_1, window_bounds = array<i64: 2, 2, 64>}, {pipeline_mode = #tpu.pipeline_mode<synchronous>, transform_indices = @transform_2, window_bounds = array<i64: 1, 64>}, {pipeline_mode = #tpu.pipeline_mode<synchronous>, transform_indices = @transform_3, window_bounds = array<i64: 1, 64>}, {transform_indices = @transform_4, window_bounds = array<i64: 32, 128>}]} {
    %c0 = arith.constant 0 : index
    %c0_0 = arith.constant 0 : index
    %c0_1 = arith.constant 0 : index
    %0 = vector.load %arg2[%c0, %c0_0, %c0_1] : memref<2x2x64xf32, #tpu.memory_space<vmem>>, vector<2x2x64xf32>
    %cst = arith.constant dense<0.000000e+00> : vector<2x64xf32>
    %1 = vector.multi_reduction <add>, %0, %cst [0] : vector<2x2x64xf32> to vector<2x64xf32>
    %2 = vector.extract_strided_slice %1 {offsets = [0, 0], sizes = [1, 64], strides = [1, 1]} : vector<2x64xf32> to vector<1x64xf32>
    %cst_2 = arith.constant 0.001953125 : f32
    %3 = vector.broadcast %cst_2 : f32 to vector<1x64xf32>
    %4 = arith.mulf %2, %3 : vector<1x64xf32>
    %5 = vector.extract_strided_slice %1 {offsets = [1, 0], sizes = [1, 64], strides = [1, 1]} : vector<2x64xf32> to vector<1x64xf32>
    %cst_3 = arith.constant 0.001953125 : f32
    %6 = vector.broadcast %cst_3 : f32 to vector<1x64xf32>
    %7 = arith.mulf %5, %6 : vector<1x64xf32>
    %8 = arith.mulf %4, %4 : vector<1x64xf32>
    %9 = arith.subf %7, %8 : vector<1x64xf32>
    %cst_4 = arith.constant 0.000000e+00 : f32
    %10 = vector.broadcast %cst_4 : f32 to vector<1x64xf32>
    %11 = arith.maximumf %9, %10 : vector<1x64xf32>
    %c0_5 = arith.constant 0 : index
    %c0_6 = arith.constant 0 : index
    %12 = vector.load %arg3[%c0_5, %c0_6] : memref<1x64xf32, #tpu.memory_space<vmem>>, vector<1x64xf32>
    %cst_7 = arith.constant 1.000000e-03 : f32
    %13 = vector.broadcast %cst_7 : f32 to vector<1x64xf32>
    %14 = arith.addf %11, %13 : vector<1x64xf32>
    %15 = math.rsqrt %14 : vector<1x64xf32>
    %16 = arith.mulf %12, %15 : vector<1x64xf32>
    %c0_8 = arith.constant 0 : index
    %c0_9 = arith.constant 0 : index
    %17 = vector.load %arg4[%c0_8, %c0_9] : memref<1x64xf32, #tpu.memory_space<vmem>>, vector<1x64xf32>
    %18 = arith.mulf %4, %16 : vector<1x64xf32>
    %19 = arith.subf %17, %18 : vector<1x64xf32>
    %c0_10 = arith.constant 0 : index
    %c0_11 = arith.constant 0 : index
    %20 = vector.load %arg1[%c0_10, %c0_11] : memref<32x512xbf16, #tpu.memory_space<vmem>>, vector<32x512xbf16>
    %21 = arith.extf %20 : vector<32x512xbf16> to vector<32x512xf32>
    %22 = vector.extract_strided_slice %21 {offsets = [0, 0], sizes = [32, 64], strides = [1, 1]} : vector<32x512xf32> to vector<32x64xf32>
    %23 = vector.broadcast %16 : vector<1x64xf32> to vector<32x64xf32>
    %24 = arith.mulf %22, %23 : vector<32x64xf32>
    %25 = vector.broadcast %19 : vector<1x64xf32> to vector<32x64xf32>
    %26 = arith.addf %24, %25 : vector<32x64xf32>
    %cst_12 = arith.constant 0.000000e+00 : f32
    %27 = vector.broadcast %cst_12 : f32 to vector<32x64xf32>
    %28 = arith.maximumf %26, %27 : vector<32x64xf32>
    %29 = vector.extract_strided_slice %21 {offsets = [0, 64], sizes = [32, 64], strides = [1, 1]} : vector<32x512xf32> to vector<32x64xf32>
    %30 = vector.broadcast %16 : vector<1x64xf32> to vector<32x64xf32>
    %31 = arith.mulf %29, %30 : vector<32x64xf32>
    %32 = vector.broadcast %19 : vector<1x64xf32> to vector<32x64xf32>
    %33 = arith.addf %31, %32 : vector<32x64xf32>
    %cst_13 = arith.constant 0.000000e+00 : f32
    %34 = vector.broadcast %cst_13 : f32 to vector<32x64xf32>
    %35 = arith.maximumf %33, %34 : vector<32x64xf32>
    %36 = arith.addf %28, %35 : vector<32x64xf32>
    %37 = vector.extract_strided_slice %21 {offsets = [0, 128], sizes = [32, 64], strides = [1, 1]} : vector<32x512xf32> to vector<32x64xf32>
    %38 = vector.broadcast %16 : vector<1x64xf32> to vector<32x64xf32>
    %39 = arith.mulf %37, %38 : vector<32x64xf32>
    %40 = vector.broadcast %19 : vector<1x64xf32> to vector<32x64xf32>
    %41 = arith.addf %39, %40 : vector<32x64xf32>
    %cst_14 = arith.constant 0.000000e+00 : f32
    %42 = vector.broadcast %cst_14 : f32 to vector<32x64xf32>
    %43 = arith.maximumf %41, %42 : vector<32x64xf32>
    %44 = arith.addf %36, %43 : vector<32x64xf32>
    %45 = vector.extract_strided_slice %21 {offsets = [0, 192], sizes = [32, 64], strides = [1, 1]} : vector<32x512xf32> to vector<32x64xf32>
    %46 = vector.broadcast %16 : vector<1x64xf32> to vector<32x64xf32>
    %47 = arith.mulf %45, %46 : vector<32x64xf32>
    %48 = vector.broadcast %19 : vector<1x64xf32> to vector<32x64xf32>
    %49 = arith.addf %47, %48 : vector<32x64xf32>
    %cst_15 = arith.constant 0.000000e+00 : f32
    %50 = vector.broadcast %cst_15 : f32 to vector<32x64xf32>
    %51 = arith.maximumf %49, %50 : vector<32x64xf32>
    %52 = arith.addf %44, %51 : vector<32x64xf32>
    %cst_16 = arith.constant 2.500000e-01 : f32
    %53 = vector.broadcast %cst_16 : f32 to vector<32x64xf32>
    %54 = arith.mulf %52, %53 : vector<32x64xf32>
    %55 = vector.extract_strided_slice %21 {offsets = [0, 256], sizes = [32, 64], strides = [1, 1]} : vector<32x512xf32> to vector<32x64xf32>
    %56 = vector.broadcast %16 : vector<1x64xf32> to vector<32x64xf32>
    %57 = arith.mulf %55, %56 : vector<32x64xf32>
    %58 = vector.broadcast %19 : vector<1x64xf32> to vector<32x64xf32>
    %59 = arith.addf %57, %58 : vector<32x64xf32>
    %cst_17 = arith.constant 0.000000e+00 : f32
    %60 = vector.broadcast %cst_17 : f32 to vector<32x64xf32>
    %61 = arith.maximumf %59, %60 : vector<32x64xf32>
    %62 = vector.extract_strided_slice %21 {offsets = [0, 320], sizes = [32, 64], strides = [1, 1]} : vector<32x512xf32> to vector<32x64xf32>
    %63 = vector.broadcast %16 : vector<1x64xf32> to vector<32x64xf32>
    %64 = arith.mulf %62, %63 : vector<32x64xf32>
    %65 = vector.broadcast %19 : vector<1x64xf32> to vector<32x64xf32>
    %66 = arith.addf %64, %65 : vector<32x64xf32>
    %cst_18 = arith.constant 0.000000e+00 : f32
    %67 = vector.broadcast %cst_18 : f32 to vector<32x64xf32>
    %68 = arith.maximumf %66, %67 : vector<32x64xf32>
    %69 = arith.addf %61, %68 : vector<32x64xf32>
    %70 = vector.extract_strided_slice %21 {offsets = [0, 384], sizes = [32, 64], strides = [1, 1]} : vector<32x512xf32> to vector<32x64xf32>
    %71 = vector.broadcast %16 : vector<1x64xf32> to vector<32x64xf32>
    %72 = arith.mulf %70, %71 : vector<32x64xf32>
    %73 = vector.broadcast %19 : vector<1x64xf32> to vector<32x64xf32>
    %74 = arith.addf %72, %73 : vector<32x64xf32>
    %cst_19 = arith.constant 0.000000e+00 : f32
    %75 = vector.broadcast %cst_19 : f32 to vector<32x64xf32>
    %76 = arith.maximumf %74, %75 : vector<32x64xf32>
    %77 = arith.addf %69, %76 : vector<32x64xf32>
    %78 = vector.extract_strided_slice %21 {offsets = [0, 448], sizes = [32, 64], strides = [1, 1]} : vector<32x512xf32> to vector<32x64xf32>
    %79 = vector.broadcast %16 : vector<1x64xf32> to vector<32x64xf32>
    %80 = arith.mulf %78, %79 : vector<32x64xf32>
    %81 = vector.broadcast %19 : vector<1x64xf32> to vector<32x64xf32>
    %82 = arith.addf %80, %81 : vector<32x64xf32>
    %cst_20 = arith.constant 0.000000e+00 : f32
    %83 = vector.broadcast %cst_20 : f32 to vector<32x64xf32>
    %84 = arith.maximumf %82, %83 : vector<32x64xf32>
    %85 = arith.addf %77, %84 : vector<32x64xf32>
    %cst_21 = arith.constant 2.500000e-01 : f32
    %86 = vector.broadcast %cst_21 : f32 to vector<32x64xf32>
    %87 = arith.mulf %85, %86 : vector<32x64xf32>
    %88 = tpu.concatenate %54, %87 in 1 : vector<32x64xf32>, vector<32x64xf32> -> vector<32x128xf32>
    %89 = arith.truncf %88 : vector<32x128xf32> to vector<32x128xbf16>
    %c0_22 = arith.constant 0 : index
    %c0_23 = arith.constant 0 : index
    %90 = vector.load %arg5[%c0_22, %c0_23] : memref<32x128xbf16, #tpu.memory_space<vmem>>, vector<32x128xbf16>
    tpu.vector_store %arg5[%c0_22, %c0_23], %89 {strides = array<i32>} : memref<32x128xbf16, #tpu.memory_space<vmem>>, vector<32x128xbf16>,
    return
  }
  func.func @transform_0(%arg0: i32) -> (i32, i32) {
    %c0_i32 = arith.constant 0 : i32
    %c0_i32_0 = arith.constant 0 : i32
    return %arg0, %c0_i32 : i32, i32
  }
  func.func @transform_1(%arg0: i32) -> (i32, i32, i32) {
    %c0_i32 = arith.constant 0 : i32
    %c0_i32_0 = arith.constant 0 : i32
    %c0_i32_1 = arith.constant 0 : i32
    %c0_i32_2 = arith.constant 0 : i32
    return %c0_i32, %c0_i32_0, %c0_i32_1 : i32, i32, i32
  }
  func.func @transform_2(%arg0: i32) -> (i32, i32) {
    %c0_i32 = arith.constant 0 : i32
    %c0_i32_0 = arith.constant 0 : i32
    %c0_i32_1 = arith.constant 0 : i32
    return %c0_i32, %c0_i32_0 : i32, i32
  }
  func.func @transform_3(%arg0: i32) -> (i32, i32) {
    %c0_i32 = arith.constant 0 : i32
    %c0_i32_0 = arith.constant 0 : i32
    %c0_i32_1 = arith.constant 0 : i32
    return %c0_i32, %c0_i32_0 : i32, i32
  }
  func.func @transform_4(%arg0: i32) -> (i32, i32) {
    %c0_i32 = arith.constant 0 : i32
    %c0_i32_0 = arith.constant 0 : i32
    return %arg0, %c0_i32 : i32, i32
  }
}

module attributes {stable_mosaic.version = 11 : i64} {
  func.func @_dynconv_stats_kernel(%arg0: i32, %arg1: memref<64x576xbf16, #tpu.memory_space<vmem>>, %arg2: memref<576x256xbf16, #tpu.memory_space<vmem>>, %arg3: memref<1x256xf32, #tpu.memory_space<vmem>>, %arg4: memref<64x4xf32, #tpu.memory_space<vmem>>, %arg5: memref<64x64xbf16, #tpu.memory_space<vmem>>, %arg6: memref<1x2x64xf32, #tpu.memory_space<vmem>>) attributes {dimension_semantics = [#tpu.dimension_semantics<parallel>], iteration_bounds = array<i64: 2>, scalar_prefetch = 0 : i64, scratch_operands = 0 : i64, tpu.core_type = #tpu.core_type<tc>, window_params = [{transform_indices = @transform_0, window_bounds = array<i64: 64, 576>}, {pipeline_mode = #tpu.pipeline_mode<synchronous>, transform_indices = @transform_1, window_bounds = array<i64: 576, 256>}, {pipeline_mode = #tpu.pipeline_mode<synchronous>, transform_indices = @transform_2, window_bounds = array<i64: 1, 256>}, {transform_indices = @transform_3, window_bounds = array<i64: 64, 4>}, {transform_indices = @transform_4, window_bounds = array<i64: 64, 64>}, {transform_indices = @transform_5, window_bounds = array<i64: 1, 2, 64>}]} {
    %c0 = arith.constant 0 : index
    %c0_0 = arith.constant 0 : index
    %0 = vector.load %arg1[%c0, %c0_0] : memref<64x576xbf16, #tpu.memory_space<vmem>>, vector<64x576xbf16>
    %c0_1 = arith.constant 0 : index
    %c0_2 = arith.constant 0 : index
    %1 = vector.load %arg2[%c0_1, %c0_2] : memref<576x256xbf16, #tpu.memory_space<vmem>>, vector<576x256xbf16>
    %cst = arith.constant dense<0.000000e+00> : vector<64x256xf32>
    %2 = tpu.matmul %0, %1, %cst {dimension_numbers = #tpu.dot_dimension_numbers<[1], [0], [0], [1], [0, 0, 1, 1], [], []>} : vector<64x576xbf16>, vector<576x256xbf16>, vector<64x256xf32> -> vector<64x256xf32>
    %c0_3 = arith.constant 0 : index
    %c0_4 = arith.constant 0 : index
    %3 = vector.load %arg3[%c0_3, %c0_4] : memref<1x256xf32, #tpu.memory_space<vmem>>, vector<1x256xf32>
    %4 = vector.broadcast %3 : vector<1x256xf32> to vector<64x256xf32>
    %5 = arith.addf %2, %4 : vector<64x256xf32>
    %c0_5 = arith.constant 0 : index
    %c0_6 = arith.constant 0 : index
    %6 = vector.load %arg4[%c0_5, %c0_6] : memref<64x4xf32, #tpu.memory_space<vmem>>, vector<64x4xf32>
    %7 = vector.extract_strided_slice %6 {offsets = [0, 0], sizes = [64, 1], strides = [1, 1]} : vector<64x4xf32> to vector<64x1xf32>
    %8 = vector.extract_strided_slice %5 {offsets = [0, 0], sizes = [64, 64], strides = [1, 1]} : vector<64x256xf32> to vector<64x64xf32>
    %9 = vector.broadcast %7 : vector<64x1xf32> to vector<64x64xf32>
    %10 = arith.mulf %9, %8 : vector<64x64xf32>
    %11 = vector.extract_strided_slice %6 {offsets = [0, 1], sizes = [64, 1], strides = [1, 1]} : vector<64x4xf32> to vector<64x1xf32>
    %12 = vector.extract_strided_slice %5 {offsets = [0, 64], sizes = [64, 64], strides = [1, 1]} : vector<64x256xf32> to vector<64x64xf32>
    %13 = vector.broadcast %11 : vector<64x1xf32> to vector<64x64xf32>
    %14 = arith.mulf %13, %12 : vector<64x64xf32>
    %15 = arith.addf %10, %14 : vector<64x64xf32>
    %16 = vector.extract_strided_slice %6 {offsets = [0, 2], sizes = [64, 1], strides = [1, 1]} : vector<64x4xf32> to vector<64x1xf32>
    %17 = vector.extract_strided_slice %5 {offsets = [0, 128], sizes = [64, 64], strides = [1, 1]} : vector<64x256xf32> to vector<64x64xf32>
    %18 = vector.broadcast %16 : vector<64x1xf32> to vector<64x64xf32>
    %19 = arith.mulf %18, %17 : vector<64x64xf32>
    %20 = arith.addf %15, %19 : vector<64x64xf32>
    %21 = vector.extract_strided_slice %6 {offsets = [0, 3], sizes = [64, 1], strides = [1, 1]} : vector<64x4xf32> to vector<64x1xf32>
    %22 = vector.extract_strided_slice %5 {offsets = [0, 192], sizes = [64, 64], strides = [1, 1]} : vector<64x256xf32> to vector<64x64xf32>
    %23 = vector.broadcast %21 : vector<64x1xf32> to vector<64x64xf32>
    %24 = arith.mulf %23, %22 : vector<64x64xf32>
    %25 = arith.addf %20, %24 : vector<64x64xf32>
    %26 = arith.truncf %25 : vector<64x64xf32> to vector<64x64xbf16>
    %c0_7 = arith.constant 0 : index
    %c0_8 = arith.constant 0 : index
    %27 = vector.load %arg5[%c0_7, %c0_8] : memref<64x64xbf16, #tpu.memory_space<vmem>>, vector<64x64xbf16>
    tpu.vector_store %arg5[%c0_7, %c0_8], %26 {strides = array<i32>} : memref<64x64xbf16, #tpu.memory_space<vmem>>, vector<64x64xbf16>,
    %cst_9 = arith.constant dense<0.000000e+00> : vector<64xf32>
    %28 = vector.multi_reduction <add>, %25, %cst_9 [0] : vector<64x64xf32> to vector<64xf32>
    %29 = vector.shape_cast %28 : vector<64xf32> to vector<1x64xf32>
    %30 = arith.mulf %25, %25 : vector<64x64xf32>
    %cst_10 = arith.constant dense<0.000000e+00> : vector<64xf32>
    %31 = vector.multi_reduction <add>, %30, %cst_10 [0] : vector<64x64xf32> to vector<64xf32>
    %32 = vector.shape_cast %31 : vector<64xf32> to vector<1x64xf32>
    %33 = tpu.concatenate %29, %32 in 0 : vector<1x64xf32>, vector<1x64xf32> -> vector<2x64xf32>
    %34 = vector.shape_cast %33 : vector<2x64xf32> to vector<1x2x64xf32>
    %c0_11 = arith.constant 0 : index
    %c0_12 = arith.constant 0 : index
    %c0_13 = arith.constant 0 : index
    %35 = vector.load %arg6[%c0_11, %c0_12, %c0_13] : memref<1x2x64xf32, #tpu.memory_space<vmem>>, vector<1x2x64xf32>
    tpu.vector_store %arg6[%c0_11, %c0_12, %c0_13], %34 {strides = array<i32>} : memref<1x2x64xf32, #tpu.memory_space<vmem>>, vector<1x2x64xf32>,
    return
  }
  func.func @transform_0(%arg0: i32) -> (i32, i32) {
    %c0_i32 = arith.constant 0 : i32
    %c0_i32_0 = arith.constant 0 : i32
    return %arg0, %c0_i32 : i32, i32
  }
  func.func @transform_1(%arg0: i32) -> (i32, i32) {
    %c0_i32 = arith.constant 0 : i32
    %c0_i32_0 = arith.constant 0 : i32
    %c0_i32_1 = arith.constant 0 : i32
    return %c0_i32, %c0_i32_0 : i32, i32
  }
  func.func @transform_2(%arg0: i32) -> (i32, i32) {
    %c0_i32 = arith.constant 0 : i32
    %c0_i32_0 = arith.constant 0 : i32
    %c0_i32_1 = arith.constant 0 : i32
    return %c0_i32, %c0_i32_0 : i32, i32
  }
  func.func @transform_3(%arg0: i32) -> (i32, i32) {
    %c0_i32 = arith.constant 0 : i32
    %c0_i32_0 = arith.constant 0 : i32
    return %arg0, %c0_i32 : i32, i32
  }
  func.func @transform_4(%arg0: i32) -> (i32, i32) {
    %c0_i32 = arith.constant 0 : i32
    %c0_i32_0 = arith.constant 0 : i32
    return %arg0, %c0_i32 : i32, i32
  }
  func.func @transform_5(%arg0: i32) -> (i32, i32, i32) {
    %c0_i32 = arith.constant 0 : i32
    %c0_i32_0 = arith.constant 0 : i32
    %c0_i32_1 = arith.constant 0 : i32
    return %arg0, %c0_i32, %c0_i32_0 : i32, i32, i32
  }
}

module attributes {stable_mosaic.version = 11 : i64} {
  func.func @_attention_kernel(%arg0: i32, %arg1: memref<32x256xbf16, #tpu.memory_space<vmem>>, %arg2: memref<32x2xf32, #tpu.memory_space<vmem>>, %arg3: memref<192x16xf32, #tpu.memory_space<vmem>>, %arg4: memref<1x16xf32, #tpu.memory_space<vmem>>, %arg5: memref<1x16xf32, #tpu.memory_space<vmem>>, %arg6: memref<16x4xf32, #tpu.memory_space<vmem>>, %arg7: memref<1x4xf32, #tpu.memory_space<vmem>>, %arg8: memref<32x4xf32, #tpu.memory_space<vmem>>) attributes {dimension_semantics = [#tpu.dimension_semantics<parallel>], iteration_bounds = array<i64: 1>, scalar_prefetch = 0 : i64, scratch_operands = 0 : i64, tpu.core_type = #tpu.core_type<tc>, window_params = [{pipeline_mode = #tpu.pipeline_mode<synchronous>, transform_indices = @transform_0, window_bounds = array<i64: 32, 256>}, {pipeline_mode = #tpu.pipeline_mode<synchronous>, transform_indices = @transform_1, window_bounds = array<i64: 32, 2>}, {pipeline_mode = #tpu.pipeline_mode<synchronous>, transform_indices = @transform_2, window_bounds = array<i64: 192, 16>}, {pipeline_mode = #tpu.pipeline_mode<synchronous>, transform_indices = @transform_3, window_bounds = array<i64: 1, 16>}, {pipeline_mode = #tpu.pipeline_mode<synchronous>, transform_indices = @transform_4, window_bounds = array<i64: 1, 16>}, {pipeline_mode = #tpu.pipeline_mode<synchronous>, transform_indices = @transform_5, window_bounds = array<i64: 16, 4>}, {pipeline_mode = #tpu.pipeline_mode<synchronous>, transform_indices = @transform_6, window_bounds = array<i64: 1, 4>}, {pipeline_mode = #tpu.pipeline_mode<synchronous>, transform_indices = @transform_7, window_bounds = array<i64: 32, 4>}]} {
    %c0 = arith.constant 0 : index
    %c0_0 = arith.constant 0 : index
    %0 = vector.load %arg1[%c0, %c0_0] : memref<32x256xbf16, #tpu.memory_space<vmem>>, vector<32x256xbf16>
    %1 = arith.extf %0 : vector<32x256xbf16> to vector<32x256xf32>
    %2 = vector.extract_strided_slice %1 {offsets = [0, 0], sizes = [32, 64], strides = [1, 1]} : vector<32x256xf32> to vector<32x64xf32>
    %3 = vector.extract_strided_slice %1 {offsets = [0, 64], sizes = [32, 64], strides = [1, 1]} : vector<32x256xf32> to vector<32x64xf32>
    %4 = arith.addf %2, %3 : vector<32x64xf32>
    %5 = vector.extract_strided_slice %1 {offsets = [0, 128], sizes = [32, 64], strides = [1, 1]} : vector<32x256xf32> to vector<32x64xf32>
    %6 = arith.addf %4, %5 : vector<32x64xf32>
    %7 = vector.extract_strided_slice %1 {offsets = [0, 192], sizes = [32, 64], strides = [1, 1]} : vector<32x256xf32> to vector<32x64xf32>
    %8 = arith.addf %6, %7 : vector<32x64xf32>
    %cst = arith.constant 2.500000e-01 : f32
    %9 = vector.broadcast %cst : f32 to vector<32x64xf32>
    %10 = arith.mulf %8, %9 : vector<32x64xf32>
    %c0_1 = arith.constant 0 : index
    %c0_2 = arith.constant 0 : index
    %11 = vector.load %arg2[%c0_1, %c0_2] : memref<32x2xf32, #tpu.memory_space<vmem>>, vector<32x2xf32>
    %c1_i32 = arith.constant 1 : i32
    %12 = tpu.dynamic_rotate %10 by %c1_i32 dim 0 : vector<32x64xf32>, i32 -> vector<32x64xf32>
    %13 = vector.extract_strided_slice %11 {offsets = [0, 0], sizes = [32, 1], strides = [1, 1]} : vector<32x2xf32> to vector<32x1xf32>
    %14 = vector.broadcast %13 : vector<32x1xf32> to vector<32x64xf32>
    %15 = arith.mulf %12, %14 : vector<32x64xf32>
    %c31_i32 = arith.constant 31 : i32
    %16 = tpu.dynamic_rotate %10 by %c31_i32 dim 0 : vector<32x64xf32>, i32 -> vector<32x64xf32>
    %17 = vector.extract_strided_slice %11 {offsets = [0, 1], sizes = [32, 1], strides = [1, 1]} : vector<32x2xf32> to vector<32x1xf32>
    %18 = vector.broadcast %17 : vector<32x1xf32> to vector<32x64xf32>
    %19 = arith.mulf %16, %18 : vector<32x64xf32>
    %c0_3 = arith.constant 0 : index
    %c0_4 = arith.constant 0 : index
    %20 = vector.load %arg3[%c0_3, %c0_4] : memref<192x16xf32, #tpu.memory_space<vmem>>, vector<192x16xf32>
    %21 = vector.extract_strided_slice %20 {offsets = [0, 0], sizes = [64, 16], strides = [1, 1]} : vector<192x16xf32> to vector<64x16xf32>
    %cst_5 = arith.constant dense<0.000000e+00> : vector<32x16xf32>
    %22 = tpu.matmul %15, %21, %cst_5 {dimension_numbers = #tpu.dot_dimension_numbers<[1], [0], [0], [1], [0, 0, 1, 1], [], []>} : vector<32x64xf32>, vector<64x16xf32>, vector<32x16xf32> -> vector<32x16xf32>
    %23 = vector.extract_strided_slice %20 {offsets = [64, 0], sizes = [64, 16], strides = [1, 1]} : vector<192x16xf32> to vector<64x16xf32>
    %cst_6 = arith.constant dense<0.000000e+00> : vector<32x16xf32>
    %24 = tpu.matmul %10, %23, %cst_6 {dimension_numbers = #tpu.dot_dimension_numbers<[1], [0], [0], [1], [0, 0, 1, 1], [], []>} : vector<32x64xf32>, vector<64x16xf32>, vector<32x16xf32> -> vector<32x16xf32>
    %25 = arith.addf %22, %24 : vector<32x16xf32>
    %26 = vector.extract_strided_slice %20 {offsets = [128, 0], sizes = [64, 16], strides = [1, 1]} : vector<192x16xf32> to vector<64x16xf32>
    %cst_7 = arith.constant dense<0.000000e+00> : vector<32x16xf32>
    %27 = tpu.matmul %19, %26, %cst_7 {dimension_numbers = #tpu.dot_dimension_numbers<[1], [0], [0], [1], [0, 0, 1, 1], [], []>} : vector<32x64xf32>, vector<64x16xf32>, vector<32x16xf32> -> vector<32x16xf32>
    %28 = arith.addf %25, %27 : vector<32x16xf32>
    %cst_8 = arith.constant dense<0.000000e+00> : vector<16xf32>
    %29 = vector.multi_reduction <add>, %28, %cst_8 [0] : vector<32x16xf32> to vector<16xf32>
    %30 = vector.shape_cast %29 : vector<16xf32> to vector<1x16xf32>
    %cst_9 = arith.constant 3.125000e-02 : f32
    %31 = vector.broadcast %cst_9 : f32 to vector<1x16xf32>
    %32 = arith.mulf %30, %31 : vector<1x16xf32>
    %33 = arith.mulf %28, %28 : vector<32x16xf32>
    %cst_10 = arith.constant dense<0.000000e+00> : vector<16xf32>
    %34 = vector.multi_reduction <add>, %33, %cst_10 [0] : vector<32x16xf32> to vector<16xf32>
    %35 = vector.shape_cast %34 : vector<16xf32> to vector<1x16xf32>
    %cst_11 = arith.constant 3.125000e-02 : f32
    %36 = vector.broadcast %cst_11 : f32 to vector<1x16xf32>
    %37 = arith.mulf %35, %36 : vector<1x16xf32>
    %38 = arith.mulf %32, %32 : vector<1x16xf32>
    %39 = arith.subf %37, %38 : vector<1x16xf32>
    %cst_12 = arith.constant 0.000000e+00 : f32
    %40 = vector.broadcast %cst_12 : f32 to vector<1x16xf32>
    %41 = arith.maximumf %39, %40 : vector<1x16xf32>
    %42 = vector.broadcast %32 : vector<1x16xf32> to vector<32x16xf32>
    %43 = arith.subf %28, %42 : vector<32x16xf32>
    %cst_13 = arith.constant 9.99999974E-6 : f32
    %44 = vector.broadcast %cst_13 : f32 to vector<1x16xf32>
    %45 = arith.addf %41, %44 : vector<1x16xf32>
    %46 = math.rsqrt %45 : vector<1x16xf32>
    %47 = vector.broadcast %46 : vector<1x16xf32> to vector<32x16xf32>
    %48 = arith.mulf %43, %47 : vector<32x16xf32>
    %c0_14 = arith.constant 0 : index
    %c0_15 = arith.constant 0 : index
    %49 = vector.load %arg4[%c0_14, %c0_15] : memref<1x16xf32, #tpu.memory_space<vmem>>, vector<1x16xf32>
    %50 = vector.broadcast %49 : vector<1x16xf32> to vector<32x16xf32>
    %51 = arith.mulf %48, %50 : vector<32x16xf32>
    %c0_16 = arith.constant 0 : index
    %c0_17 = arith.constant 0 : index
    %52 = vector.load %arg5[%c0_16, %c0_17] : memref<1x16xf32, #tpu.memory_space<vmem>>, vector<1x16xf32>
    %53 = vector.broadcast %52 : vector<1x16xf32> to vector<32x16xf32>
    %54 = arith.addf %51, %53 : vector<32x16xf32>
    %cst_18 = arith.constant 0.000000e+00 : f32
    %55 = vector.broadcast %cst_18 : f32 to vector<32x16xf32>
    %56 = arith.maximumf %54, %55 : vector<32x16xf32>
    %c0_19 = arith.constant 0 : index
    %c0_20 = arith.constant 0 : index
    %57 = vector.load %arg6[%c0_19, %c0_20] : memref<16x4xf32, #tpu.memory_space<vmem>>, vector<16x4xf32>
    %cst_21 = arith.constant dense<0.000000e+00> : vector<32x4xf32>
    %58 = tpu.matmul %56, %57, %cst_21 {dimension_numbers = #tpu.dot_dimension_numbers<[1], [0], [0], [1], [0, 0, 1, 1], [], []>} : vector<32x16xf32>, vector<16x4xf32>, vector<32x4xf32> -> vector<32x4xf32>
    %c0_22 = arith.constant 0 : index
    %c0_23 = arith.constant 0 : index
    %59 = vector.load %arg7[%c0_22, %c0_23] : memref<1x4xf32, #tpu.memory_space<vmem>>, vector<1x4xf32>
    %60 = vector.broadcast %59 : vector<1x4xf32> to vector<32x4xf32>
    %61 = arith.addf %58, %60 : vector<32x4xf32>
    %cst_24 = arith.constant 0.0322580636 : f32
    %62 = vector.broadcast %cst_24 : f32 to vector<32x4xf32>
    %63 = arith.mulf %61, %62 : vector<32x4xf32>
    %cst_25 = arith.constant dense<0xFF800000> : vector<32xf32>
    %64 = vector.multi_reduction <maximumf>, %63, %cst_25 [1] : vector<32x4xf32> to vector<32xf32>
    %65 = vector.shape_cast %64 : vector<32xf32> to vector<32x1xf32>
    %66 = vector.broadcast %65 : vector<32x1xf32> to vector<32x4xf32>
    %67 = arith.subf %63, %66 : vector<32x4xf32>
    %68 = math.exp %67 : vector<32x4xf32>
    %cst_26 = arith.constant dense<0.000000e+00> : vector<32xf32>
    %69 = vector.multi_reduction <add>, %68, %cst_26 [1] : vector<32x4xf32> to vector<32xf32>
    %70 = vector.shape_cast %69 : vector<32xf32> to vector<32x1xf32>
    %71 = vector.broadcast %70 : vector<32x1xf32> to vector<32x4xf32>
    %72 = arith.divf %68, %71 : vector<32x4xf32>
    %c0_27 = arith.constant 0 : index
    %c0_28 = arith.constant 0 : index
    %73 = vector.load %arg8[%c0_27, %c0_28] : memref<32x4xf32, #tpu.memory_space<vmem>>, vector<32x4xf32>
    tpu.vector_store %arg8[%c0_27, %c0_28], %72 {strides = array<i32>} : memref<32x4xf32, #tpu.memory_space<vmem>>, vector<32x4xf32>,
    return
  }
  func.func @transform_0(%arg0: i32) -> (i32, i32) {
    %c0_i32 = arith.constant 0 : i32
    %c0_i32_0 = arith.constant 0 : i32
    %c0_i32_1 = arith.constant 0 : i32
    return %c0_i32, %c0_i32_0 : i32, i32
  }
  func.func @transform_1(%arg0: i32) -> (i32, i32) {
    %c0_i32 = arith.constant 0 : i32
    %c0_i32_0 = arith.constant 0 : i32
    %c0_i32_1 = arith.constant 0 : i32
    return %c0_i32, %c0_i32_0 : i32, i32
  }
  func.func @transform_2(%arg0: i32) -> (i32, i32) {
    %c0_i32 = arith.constant 0 : i32
    %c0_i32_0 = arith.constant 0 : i32
    %c0_i32_1 = arith.constant 0 : i32
    return %c0_i32, %c0_i32_0 : i32, i32
  }
  func.func @transform_3(%arg0: i32) -> (i32, i32) {
    %c0_i32 = arith.constant 0 : i32
    %c0_i32_0 = arith.constant 0 : i32
    %c0_i32_1 = arith.constant 0 : i32
    return %c0_i32, %c0_i32_0 : i32, i32
  }
  func.func @transform_4(%arg0: i32) -> (i32, i32) {
    %c0_i32 = arith.constant 0 : i32
    %c0_i32_0 = arith.constant 0 : i32
    %c0_i32_1 = arith.constant 0 : i32
    return %c0_i32, %c0_i32_0 : i32, i32
  }
  func.func @transform_5(%arg0: i32) -> (i32, i32) {
    %c0_i32 = arith.constant 0 : i32
    %c0_i32_0 = arith.constant 0 : i32
    %c0_i32_1 = arith.constant 0 : i32
    return %c0_i32, %c0_i32_0 : i32, i32
  }
  func.func @transform_6(%arg0: i32) -> (i32, i32) {
    %c0_i32 = arith.constant 0 : i32
    %c0_i32_0 = arith.constant 0 : i32
    %c0_i32_1 = arith.constant 0 : i32
    return %c0_i32, %c0_i32_0 : i32, i32
  }
  func.func @transform_7(%arg0: i32) -> (i32, i32) {
    %c0_i32 = arith.constant 0 : i32
    %c0_i32_0 = arith.constant 0 : i32
    %c0_i32_1 = arith.constant 0 : i32
    return %c0_i32, %c0_i32_0 : i32, i32
  }
}

module attributes {stable_mosaic.version = 11 : i64} {
  func.func @_bn_relu_pool_kernel(%arg0: i32, %arg1: memref<16x512xbf16, #tpu.memory_space<vmem>>, %arg2: memref<2x2x64xf32, #tpu.memory_space<vmem>>, %arg3: memref<1x64xf32, #tpu.memory_space<vmem>>, %arg4: memref<1x64xf32, #tpu.memory_space<vmem>>, %arg5: memref<16x128xf32, #tpu.memory_space<vmem>>) attributes {dimension_semantics = [#tpu.dimension_semantics<parallel>], iteration_bounds = array<i64: 1>, scalar_prefetch = 0 : i64, scratch_operands = 0 : i64, tpu.core_type = #tpu.core_type<tc>, window_params = [{transform_indices = @transform_0, window_bounds = array<i64: 16, 512>}, {pipeline_mode = #tpu.pipeline_mode<synchronous>, transform_indices = @transform_1, window_bounds = array<i64: 2, 2, 64>}, {pipeline_mode = #tpu.pipeline_mode<synchronous>, transform_indices = @transform_2, window_bounds = array<i64: 1, 64>}, {pipeline_mode = #tpu.pipeline_mode<synchronous>, transform_indices = @transform_3, window_bounds = array<i64: 1, 64>}, {transform_indices = @transform_4, window_bounds = array<i64: 16, 128>}]} {
    %c0 = arith.constant 0 : index
    %c0_0 = arith.constant 0 : index
    %c0_1 = arith.constant 0 : index
    %0 = vector.load %arg2[%c0, %c0_0, %c0_1] : memref<2x2x64xf32, #tpu.memory_space<vmem>>, vector<2x2x64xf32>
    %cst = arith.constant dense<0.000000e+00> : vector<2x64xf32>
    %1 = vector.multi_reduction <add>, %0, %cst [0] : vector<2x2x64xf32> to vector<2x64xf32>
    %2 = vector.extract_strided_slice %1 {offsets = [0, 0], sizes = [1, 64], strides = [1, 1]} : vector<2x64xf32> to vector<1x64xf32>
    %cst_2 = arith.constant 7.812500e-03 : f32
    %3 = vector.broadcast %cst_2 : f32 to vector<1x64xf32>
    %4 = arith.mulf %2, %3 : vector<1x64xf32>
    %5 = vector.extract_strided_slice %1 {offsets = [1, 0], sizes = [1, 64], strides = [1, 1]} : vector<2x64xf32> to vector<1x64xf32>
    %cst_3 = arith.constant 7.812500e-03 : f32
    %6 = vector.broadcast %cst_3 : f32 to vector<1x64xf32>
    %7 = arith.mulf %5, %6 : vector<1x64xf32>
    %8 = arith.mulf %4, %4 : vector<1x64xf32>
    %9 = arith.subf %7, %8 : vector<1x64xf32>
    %cst_4 = arith.constant 0.000000e+00 : f32
    %10 = vector.broadcast %cst_4 : f32 to vector<1x64xf32>
    %11 = arith.maximumf %9, %10 : vector<1x64xf32>
    %c0_5 = arith.constant 0 : index
    %c0_6 = arith.constant 0 : index
    %12 = vector.load %arg3[%c0_5, %c0_6] : memref<1x64xf32, #tpu.memory_space<vmem>>, vector<1x64xf32>
    %cst_7 = arith.constant 1.000000e-03 : f32
    %13 = vector.broadcast %cst_7 : f32 to vector<1x64xf32>
    %14 = arith.addf %11, %13 : vector<1x64xf32>
    %15 = math.rsqrt %14 : vector<1x64xf32>
    %16 = arith.mulf %12, %15 : vector<1x64xf32>
    %c0_8 = arith.constant 0 : index
    %c0_9 = arith.constant 0 : index
    %17 = vector.load %arg4[%c0_8, %c0_9] : memref<1x64xf32, #tpu.memory_space<vmem>>, vector<1x64xf32>
    %18 = arith.mulf %4, %16 : vector<1x64xf32>
    %19 = arith.subf %17, %18 : vector<1x64xf32>
    %c0_10 = arith.constant 0 : index
    %c0_11 = arith.constant 0 : index
    %20 = vector.load %arg1[%c0_10, %c0_11] : memref<16x512xbf16, #tpu.memory_space<vmem>>, vector<16x512xbf16>
    %21 = arith.extf %20 : vector<16x512xbf16> to vector<16x512xf32>
    %22 = vector.extract_strided_slice %21 {offsets = [0, 0], sizes = [16, 64], strides = [1, 1]} : vector<16x512xf32> to vector<16x64xf32>
    %23 = vector.broadcast %16 : vector<1x64xf32> to vector<16x64xf32>
    %24 = arith.mulf %22, %23 : vector<16x64xf32>
    %25 = vector.broadcast %19 : vector<1x64xf32> to vector<16x64xf32>
    %26 = arith.addf %24, %25 : vector<16x64xf32>
    %cst_12 = arith.constant 0.000000e+00 : f32
    %27 = vector.broadcast %cst_12 : f32 to vector<16x64xf32>
    %28 = arith.maximumf %26, %27 : vector<16x64xf32>
    %29 = vector.extract_strided_slice %21 {offsets = [0, 64], sizes = [16, 64], strides = [1, 1]} : vector<16x512xf32> to vector<16x64xf32>
    %30 = vector.broadcast %16 : vector<1x64xf32> to vector<16x64xf32>
    %31 = arith.mulf %29, %30 : vector<16x64xf32>
    %32 = vector.broadcast %19 : vector<1x64xf32> to vector<16x64xf32>
    %33 = arith.addf %31, %32 : vector<16x64xf32>
    %cst_13 = arith.constant 0.000000e+00 : f32
    %34 = vector.broadcast %cst_13 : f32 to vector<16x64xf32>
    %35 = arith.maximumf %33, %34 : vector<16x64xf32>
    %36 = arith.addf %28, %35 : vector<16x64xf32>
    %37 = vector.extract_strided_slice %21 {offsets = [0, 128], sizes = [16, 64], strides = [1, 1]} : vector<16x512xf32> to vector<16x64xf32>
    %38 = vector.broadcast %16 : vector<1x64xf32> to vector<16x64xf32>
    %39 = arith.mulf %37, %38 : vector<16x64xf32>
    %40 = vector.broadcast %19 : vector<1x64xf32> to vector<16x64xf32>
    %41 = arith.addf %39, %40 : vector<16x64xf32>
    %cst_14 = arith.constant 0.000000e+00 : f32
    %42 = vector.broadcast %cst_14 : f32 to vector<16x64xf32>
    %43 = arith.maximumf %41, %42 : vector<16x64xf32>
    %44 = arith.addf %36, %43 : vector<16x64xf32>
    %45 = vector.extract_strided_slice %21 {offsets = [0, 192], sizes = [16, 64], strides = [1, 1]} : vector<16x512xf32> to vector<16x64xf32>
    %46 = vector.broadcast %16 : vector<1x64xf32> to vector<16x64xf32>
    %47 = arith.mulf %45, %46 : vector<16x64xf32>
    %48 = vector.broadcast %19 : vector<1x64xf32> to vector<16x64xf32>
    %49 = arith.addf %47, %48 : vector<16x64xf32>
    %cst_15 = arith.constant 0.000000e+00 : f32
    %50 = vector.broadcast %cst_15 : f32 to vector<16x64xf32>
    %51 = arith.maximumf %49, %50 : vector<16x64xf32>
    %52 = arith.addf %44, %51 : vector<16x64xf32>
    %cst_16 = arith.constant 2.500000e-01 : f32
    %53 = vector.broadcast %cst_16 : f32 to vector<16x64xf32>
    %54 = arith.mulf %52, %53 : vector<16x64xf32>
    %55 = vector.extract_strided_slice %21 {offsets = [0, 256], sizes = [16, 64], strides = [1, 1]} : vector<16x512xf32> to vector<16x64xf32>
    %56 = vector.broadcast %16 : vector<1x64xf32> to vector<16x64xf32>
    %57 = arith.mulf %55, %56 : vector<16x64xf32>
    %58 = vector.broadcast %19 : vector<1x64xf32> to vector<16x64xf32>
    %59 = arith.addf %57, %58 : vector<16x64xf32>
    %cst_17 = arith.constant 0.000000e+00 : f32
    %60 = vector.broadcast %cst_17 : f32 to vector<16x64xf32>
    %61 = arith.maximumf %59, %60 : vector<16x64xf32>
    %62 = vector.extract_strided_slice %21 {offsets = [0, 320], sizes = [16, 64], strides = [1, 1]} : vector<16x512xf32> to vector<16x64xf32>
    %63 = vector.broadcast %16 : vector<1x64xf32> to vector<16x64xf32>
    %64 = arith.mulf %62, %63 : vector<16x64xf32>
    %65 = vector.broadcast %19 : vector<1x64xf32> to vector<16x64xf32>
    %66 = arith.addf %64, %65 : vector<16x64xf32>
    %cst_18 = arith.constant 0.000000e+00 : f32
    %67 = vector.broadcast %cst_18 : f32 to vector<16x64xf32>
    %68 = arith.maximumf %66, %67 : vector<16x64xf32>
    %69 = arith.addf %61, %68 : vector<16x64xf32>
    %70 = vector.extract_strided_slice %21 {offsets = [0, 384], sizes = [16, 64], strides = [1, 1]} : vector<16x512xf32> to vector<16x64xf32>
    %71 = vector.broadcast %16 : vector<1x64xf32> to vector<16x64xf32>
    %72 = arith.mulf %70, %71 : vector<16x64xf32>
    %73 = vector.broadcast %19 : vector<1x64xf32> to vector<16x64xf32>
    %74 = arith.addf %72, %73 : vector<16x64xf32>
    %cst_19 = arith.constant 0.000000e+00 : f32
    %75 = vector.broadcast %cst_19 : f32 to vector<16x64xf32>
    %76 = arith.maximumf %74, %75 : vector<16x64xf32>
    %77 = arith.addf %69, %76 : vector<16x64xf32>
    %78 = vector.extract_strided_slice %21 {offsets = [0, 448], sizes = [16, 64], strides = [1, 1]} : vector<16x512xf32> to vector<16x64xf32>
    %79 = vector.broadcast %16 : vector<1x64xf32> to vector<16x64xf32>
    %80 = arith.mulf %78, %79 : vector<16x64xf32>
    %81 = vector.broadcast %19 : vector<1x64xf32> to vector<16x64xf32>
    %82 = arith.addf %80, %81 : vector<16x64xf32>
    %cst_20 = arith.constant 0.000000e+00 : f32
    %83 = vector.broadcast %cst_20 : f32 to vector<16x64xf32>
    %84 = arith.maximumf %82, %83 : vector<16x64xf32>
    %85 = arith.addf %77, %84 : vector<16x64xf32>
    %cst_21 = arith.constant 2.500000e-01 : f32
    %86 = vector.broadcast %cst_21 : f32 to vector<16x64xf32>
    %87 = arith.mulf %85, %86 : vector<16x64xf32>
    %88 = tpu.concatenate %54, %87 in 1 : vector<16x64xf32>, vector<16x64xf32> -> vector<16x128xf32>
    %c0_22 = arith.constant 0 : index
    %c0_23 = arith.constant 0 : index
    %89 = vector.load %arg5[%c0_22, %c0_23] : memref<16x128xf32, #tpu.memory_space<vmem>>, vector<16x128xf32>
    tpu.vector_store %arg5[%c0_22, %c0_23], %88 {strides = array<i32>} : memref<16x128xf32, #tpu.memory_space<vmem>>, vector<16x128xf32>,
    return
  }
  func.func @transform_0(%arg0: i32) -> (i32, i32) {
    %c0_i32 = arith.constant 0 : i32
    %c0_i32_0 = arith.constant 0 : i32
    return %arg0, %c0_i32 : i32, i32
  }
  func.func @transform_1(%arg0: i32) -> (i32, i32, i32) {
    %c0_i32 = arith.constant 0 : i32
    %c0_i32_0 = arith.constant 0 : i32
    %c0_i32_1 = arith.constant 0 : i32
    %c0_i32_2 = arith.constant 0 : i32
    return %c0_i32, %c0_i32_0, %c0_i32_1 : i32, i32, i32
  }
  func.func @transform_2(%arg0: i32) -> (i32, i32) {
    %c0_i32 = arith.constant 0 : i32
    %c0_i32_0 = arith.constant 0 : i32
    %c0_i32_1 = arith.constant 0 : i32
    return %c0_i32, %c0_i32_0 : i32, i32
  }
  func.func @transform_3(%arg0: i32) -> (i32, i32) {
    %c0_i32 = arith.constant 0 : i32
    %c0_i32_0 = arith.constant 0 : i32
    %c0_i32_1 = arith.constant 0 : i32
    return %c0_i32, %c0_i32_0 : i32, i32
  }
  func.func @transform_4(%arg0: i32) -> (i32, i32) {
    %c0_i32 = arith.constant 0 : i32
    %c0_i32_0 = arith.constant 0 : i32
    return %arg0, %c0_i32 : i32, i32
  }
}

</mosaic_0001>

<llo_original>
// kernel: cnn_forward.9
$region0: #{cnn_forward.9}
  #allocation0 [shape = 'u32[]', space=smem, size = 0x4, offset = 0x4, fixed_abs, tag = 'smem constant byte address 0x4 - core index']
  #allocation1 [shape = 'u32[72,128]{1,0:T(1,128)}', space=vmem, size = 0x9000, scoped, tag = 'internal scratch']
  %s0 = inlined_call_operand.vmem [shape: bf16[256,512], index: 0, kind: input, shape index: {}]
  %s1 = inlined_call_operand.vmem [shape: f32[2,2,64], index: 1, kind: input, shape index: {}]
  %s2 = inlined_call_operand.vmem [shape: f32[1,64], index: 2, kind: input, shape index: {}]
  %s3 = inlined_call_operand.vmem [shape: f32[1,64], index: 3, kind: input, shape index: {}]
  %s4 = inlined_call_operand.vmem [shape: bf16[256,128], index: 4, kind: output, shape index: {}]
  %s5 = sld [smem:[#allocation0]]
  $region49: #{cnn_forward.9} parent=0
    _
  %s7 = ssub.s32 1, %s5
  %s8 = scalar_select 0, %s7, %s5
  loop: start=0, step=1, limit=4
  $region2: #{cnn_forward.9} parent=0 // loop_pre_header
    _
  $region3: #{cnn_forward.9} parent=0 // loop_header
    %s10 = sphi 0, %s14
    %p11 = scmp.ge.s32.totalorder %s10, 4
    %s20 = sphi 0, %s22
    %s23 = sphi 0, %s20
    %s24 = sphi 0, %s23
    %s40 = sphi 0, %s24
    %s44 = sphi 0, %s44
    %s46 = sphi 0, %s44
    %s47 = sphi 0, %s46
    %s61 = sphi 0, %s47
    %s65 = sphi 0, %s65
    %s67 = sphi 0, %s65
    %s68 = sphi 0, %s67
    %s82 = sphi 0, %s68
    %s86 = sphi 0, %s86
    %s88 = sphi 0, %s86
    %s89 = sphi 0, %s88
    %s103 = sphi 0, %s89
    %s109 = sphi 0, %s111
    %s112 = sphi 0, %s109
    %s113 = sphi 0, %s112
    %s129 = sphi 0, %s113
  $region4: #{cnn_forward.9} parent=0 // loop_header_branch
    %13 = sbr.rel (%p11) target = $region8
  $region5: #{cnn_forward.9} parent=0 // loop_body
    %s15 = ssub.s32 %s10, 1
    %s16 = ssub.s32 %s10, 2
    %s17 = sadd.s32 %s10, 1
    %s18 = ssub.s32 %s10, %s17
    %p19 = scmp.eq.s32.totalorder %s18, 0
    %s21 = sadd.s32 %s20, 1
    %s22 = scalar_select %p19, %s20, %s21
    %p25 = pneg %p19
    %p26 = scmp.eq.s32.totalorder %s10, 1
    %p27 = por %p25, %p26
    %p28 = scmp.ne.s32.totalorder %s20, %s23
    %p29 = scmp.eq.s32.totalorder %s10, 0
    %p30 = por %p28, %p29
    %p31 = scmp.ne.s32.totalorder %s20, %s23
    %p32 = scmp.eq.s32.totalorder %s15, 1
    %p33 = por %p31, %p32
    %p34 = scmp.ne.s32.totalorder %s23, %s24
    %p35 = scmp.eq.s32.totalorder %s15, 0
    %p36 = por %p34, %p35
    %p37 = scmp.ne.s32.totalorder %s23, %s24
    %p38 = scmp.eq.s32.totalorder %s16, 1
    %p39 = por %p37, %p38
    %p41 = scmp.ne.s32.totalorder %s24, %s40
    %p42 = scmp.eq.s32.totalorder %s16, 0
    %p43 = por %p41, %p42
    %s45 = sadd.s32 %s44, 1
    %p48 = scmp.eq.s32.totalorder %s10, 1
    %p49 = scmp.ne.s32.totalorder %s44, %s46
    %p50 = scmp.eq.s32.totalorder %s10, 0
    %p51 = por %p49, %p50
    %p52 = scmp.ne.s32.totalorder %s44, %s46
    %p53 = scmp.eq.s32.totalorder %s15, 1
    %p54 = por %p52, %p53
    %p55 = scmp.ne.s32.totalorder %s46, %s47
    %p56 = scmp.eq.s32.totalorder %s15, 0
    %p57 = por %p55, %p56
    %p58 = scmp.ne.s32.totalorder %s46, %s47
    %p59 = scmp.eq.s32.totalorder %s16, 1
    %p60 = por %p58, %p59
    %p62 = scmp.ne.s32.totalorder %s47, %s61
    %p63 = scmp.eq.s32.totalorder %s16, 0
    %p64 = por %p62, %p63
    %s66 = sadd.s32 %s65, 1
    %p69 = scmp.eq.s32.totalorder %s10, 1
    %p70 = scmp.ne.s32.totalorder %s65, %s67
    %p71 = scmp.eq.s32.totalorder %s10, 0
    %p72 = por %p70, %p71
    %p73 = scmp.ne.s32.totalorder %s65, %s67
    %p74 = scmp.eq.s32.totalorder %s15, 1
    %p75 = por %p73, %p74
    %p76 = scmp.ne.s32.totalorder %s67, %s68
    %p77 = scmp.eq.s32.totalorder %s15, 0
    %p78 = por %p76, %p77
    %p79 = scmp.ne.s32.totalorder %s67, %s68
    %p80 = scmp.eq.s32.totalorder %s16, 1
    %p81 = por %p79, %p80
    %p83 = scmp.ne.s32.totalorder %s68, %s82
    %p84 = scmp.eq.s32.totalorder %s16, 0
    %p85 = por %p83, %p84
    %s87 = sadd.s32 %s86, 1
    %p90 = scmp.eq.s32.totalorder %s10, 1
    %p91 = scmp.ne.s32.totalorder %s86, %s88
    %p92 = scmp.eq.s32.totalorder %s10, 0
    %p93 = por %p91, %p92
    %p94 = scmp.ne.s32.totalorder %s86, %s88
    %p95 = scmp.eq.s32.totalorder %s15, 1
    %p96 = por %p94, %p95
    %p97 = scmp.ne.s32.totalorder %s88, %s89
    %p98 = scmp.eq.s32.totalorder %s15, 0
    %p99 = por %p97, %p98
    %p100 = scmp.ne.s32.totalorder %s88, %s89
    %p101 = scmp.eq.s32.totalorder %s16, 1
    %p102 = por %p100, %p101
    %p104 = scmp.ne.s32.totalorder %s89, %s103
    %p105 = scmp.eq.s32.totalorder %s16, 0
    %p106 = por %p104, %p105
    %s107 = ssub.s32 %s10, %s17
    %p108 = scmp.eq.s32.totalorder %s107, 0
    %s110 = sadd.s32 %s109, 1
    %s111 = scalar_select %p108, %s109, %s110
    %p114 = pneg %p108
    %p115 = scmp.eq.s32.totalorder %s10, 1
    %p116 = por %p114, %p115
    %p117 = scmp.ne.s32.totalorder %s109, %s112
    %p118 = scmp.eq.s32.totalorder %s10, 0
    %p119 = por %p117, %p118
    %p120 = scmp.ne.s32.totalorder %s109, %s112
    %p121 = scmp.eq.s32.totalorder %s15, 1
    %p122 = por %p120, %p121
    %p123 = scmp.ne.s32.totalorder %s112, %s113
    %p124 = scmp.eq.s32.totalorder %s15, 0
    %p125 = por %p123, %p124
    %p126 = scmp.ne.s32.totalorder %s112, %s113
    %p127 = scmp.eq.s32.totalorder %s16, 1
    %p128 = por %p126, %p127
    %p130 = scmp.ne.s32.totalorder %s113, %s129
    %p131 = scmp.eq.s32.totalorder %s16, 0
    %p132 = por %p130, %p131
    %p133 = scmp.le.s32.totalorder 1, %s10
    %p134 = scmp.lt.s32.totalorder %s10, 3
    %p135 = pnand %p133, %p134
    %p136 = pneg %p135
    // Predicated region
    $region9: #{cnn_forward.9} parent=5 // pred_check
      _
    $region10: #{cnn_forward.9} parent=5 // pred_check_branch
      %138 = sbr.rel (%p135) target = $region12
    $region11: #{cnn_forward.9} parent=5 // pred_region
      %s139 = ssub.s32 %s10, 1
      // Predicated region
      $region13: #{cnn_forward.9} parent=11 // pred_check
        %p140 = pneg %p57
      $region14: #{cnn_forward.9} parent=11 // pred_check_branch
        %142 = sbr.rel (%p140) target = $region16
      $region15: #{cnn_forward.9} parent=11 // pred_region
        _
      $region16: #{cnn_forward.9} parent=11 // pred_fallthru
        _
      // Predicated region
      $region17: #{cnn_forward.9} parent=11 // pred_check
        %p143 = pneg %p78
      $region18: #{cnn_forward.9} parent=11 // pred_check_branch
        %145 = sbr.rel (%p143) target = $region20
      $region19: #{cnn_forward.9} parent=11 // pred_region
        _
      $region20: #{cnn_forward.9} parent=11 // pred_fallthru
        _
      // Predicated region
      $region21: #{cnn_forward.9} parent=11 // pred_check
        %p146 = pneg %p99
      $region22: #{cnn_forward.9} parent=11 // pred_check_branch
        %148 = sbr.rel (%p146) target = $region24
      $region23: #{cnn_forward.9} parent=11 // pred_region
        _
      $region24: #{cnn_forward.9} parent=11 // pred_fallthru
        _
    $region12: #{cnn_forward.9} parent=5 // pred_fallthru
      _
    %p149 = scmp.lt.s32.totalorder %s10, 2
    // Predicated region
    $region25: #{cnn_forward.9} parent=5 // pred_check
      %p150 = pneg %p149
    $region26: #{cnn_forward.9} parent=5 // pred_check_branch
      %152 = sbr.rel (%p150) target = $region28
    $region27: #{cnn_forward.9} parent=5 // pred_region
      // Predicated region
      $region29: #{cnn_forward.9} parent=27 // pred_check
        %p153 = pneg %p30
      $region30: #{cnn_forward.9} parent=27 // pred_check_branch
        %155 = sbr.rel (%p153) target = $region32
      $region31: #{cnn_forward.9} parent=27 // pred_region
        %s156 = smul.u32 16, %s10
        %p157 = scmp.lt.s32.totalorder %s156, 31
        %s158 = scalar_select %p157, %s156, 31
        %s159 = smul.addr %s158, 4
        %s160 = smul.addr %s159, 4
        %s161 = scalar_lea.vmem %s0, %s160
        %s162 = smul.u32 16, %s10
      $region32: #{cnn_forward.9} parent=27 // pred_fallthru
        _
    $region28: #{cnn_forward.9} parent=5 // pred_fallthru
      _
    %p163 = scmp.le.s32.totalorder 1, %s10
    %p164 = scmp.lt.s32.totalorder %s10, 3
    %p165 = pnand %p163, %p164
    %p166 = pneg %p165
    // Predicated region
    $region33: #{cnn_forward.9} parent=5 // pred_check
      _
    $region34: #{cnn_forward.9} parent=5 // pred_check_branch
      %168 = sbr.rel (%p165) target = $region36
    $region35: #{cnn_forward.9} parent=5 // pred_region
      %s169 = ssub.s32 %s10, 1
      %s170 = smul.u32 16, %s15
      %p171 = scmp.lt.s32.totalorder %s170, 31
      %s172 = scalar_select %p171, %s170, 31
      %s173 = smul.addr %s172, 4
      %s174 = smul.addr %s173, 4
      %s175 = scalar_lea.vmem %s0, %s174
      %p176 = pneg %p36
      %p177 = pneg %p33
      %p178 = pneg %p57
      %p179 = pneg %p54
      %p180 = pneg %p78
      %p181 = pneg %p75
      %p182 = pneg %p99
      %p183 = pneg %p96
      %p184 = pneg %p125
      %p185 = pneg %p122
      %s186 = smul.u32 16, %s15
      %p187 = scmp.lt.s32.totalorder %s186, 31
      %s188 = scalar_select %p187, %s186, 31
      %s189 = smul.addr %s188, 4
      %s190 = scalar_lea.vmem %s4, %s189
      %s191 = smul.u32 16, %s15
      %p192 = scmp.lt.s32.totalorder %s191, 31
      %s193 = scalar_select %p192, %s191, 31
      %s194 = smul.addr %s193, 4
      %s195 = smul.addr %s194, 4
      %s196 = scalar_lea.vmem %s0, %s195
      %s197 = smul.u32 16, %s15
      %s198 = smul.u32 16, %s15
      %p199 = scmp.lt.s32.totalorder %s198, 31
      %s200 = scalar_select %p199, %s198, 31
      %s201 = smul.addr %s200, 4
      %s202 = scalar_lea.vmem %s4, %s201
      %s203 = smul.u32 16, %s15
      %v204 = vld [vmem:[%s1] sm:$0x3]
      %v205 = vld [vmem:[%s1 + $0x2] sm:$0x3]
      %vm206 = vcmask 517120
      %v207 = vsel %vm206, %v204, 0.0
      %v208 = vsel %vm206, %v205, 0.0
      %v209 = vadd.f32 %v207, %v208
      %v210 = vmul.f32 %v209, 0.00048828125
      %v211 = vmul.f32 %v210, %v210
      %v213 = vrot.slane %v211, 7
      %v215 = vsub.f32 %v210, %v213
      %v216 = vmax.f32 %v215, 0.0
      %v217 = vld [vmem:[%s2] sm:$0x1]
      %v218 = vadd.f32 %v216, 0.001
      %v219 = vrsqrt.pop %v218
      %v220 = vmul.f32 %v219, %v218
      %v221 = vmul.f32 %v220, %v219
      %v222 = vmul.f32 0.5, %v221
      %v223 = vsub.f32 1.5, %v222
      %v224 = vmul.f32 %v219, %v223
      %vm225 = vweird.f32 %v218
      %vm226 = vweird.f32 %v219
      %vm227 = vmor %vm225, %vm226
      %v228 = vsel %vm227, %v219, %v224
      %230 = vst [vmem:[#allocation1] sm:$0xff] %v228
      %s231 = scalar_lea.vmem [#allocation1], 1
      %v232 = vld [vmem:[%s231] ss:$9 sm:$0xff]
      %v234 = vmul.f32 %v217, %v232
      %v235 = vld [vmem:[%s3] sm:$0x1]
      %v236 = vmul.f32 %v210, %v234
      %v237 = vsub.f32 %v235, %v236
      %v238 = vld [vmem:[%s196] sm:$0xff]
      %v239 = vld [vmem:[%s196 + $0x8] sm:$0xff]
      %v240 = vld [vmem:[%s196 + $0x10] sm:$0xff]
      %v241 = vld [vmem:[%s196 + $0x18] sm:$0xff]
      %v242 = vld [vmem:[%s196 + $0x20] sm:$0xff]
      %v243 = vld [vmem:[%s196 + $0x28] sm:$0xff]
      %v244 = vld [vmem:[%s196 + $0x30] sm:$0xff]
      %v245 = vld [vmem:[%s196 + $0x38] sm:$0xff]
      %v246 = vld [vmem:[%s196 + $0x40] sm:$0xff]
      %v247 = vld [vmem:[%s196 + $0x48] sm:$0xff]
      %v248 = vld [vmem:[%s196 + $0x50] sm:$0xff]
      %v249 = vld [vmem:[%s196 + $0x58] sm:$0xff]
      %v250 = vld [vmem:[%s196 + $0x60] sm:$0xff]
      %v251 = vld [vmem:[%s196 + $0x68] sm:$0xff]
      %v252 = vld [vmem:[%s196 + $0x70] sm:$0xff]
      %v253 = vld [vmem:[%s196 + $0x78] sm:$0xff]
      %v254 = vld [vmem:[%s196 + $0x80] sm:$0xff]
      %v255 = vld [vmem:[%s196 + $0x88] sm:$0xff]
      %v256 = vld [vmem:[%s196 + $0x90] sm:$0xff]
      %v257 = vld [vmem:[%s196 + $0x98] sm:$0xff]
      %v258 = vld [vmem:[%s196 + $0xa0] sm:$0xff]
      %v259 = vld [vmem:[%s196 + $0xa8] sm:$0xff]
      %v260 = vld [vmem:[%s196 + $0xb0] sm:$0xff]
      %v261 = vld [vmem:[%s196 + $0xb8] sm:$0xff]
      %v262 = vld [vmem:[%s196 + $0xc0] sm:$0xff]
      %v263 = vld [vmem:[%s196 + $0xc8] sm:$0xff]
      %v264 = vld [vmem:[%s196 + $0xd0] sm:$0xff]
      %v265 = vld [vmem:[%s196 + $0xd8] sm:$0xff]
      %v266 = vld [vmem:[%s196 + $0xe0] sm:$0xff]
      %v267 = vld [vmem:[%s196 + $0xe8] sm:$0xff]
      %v268 = vld [vmem:[%s196 + $0xf0] sm:$0xff]
      %v269 = vld [vmem:[%s196 + $0xf8] sm:$0xff]
      %v270 = vunpack.c.l.bf16 %v238
      %v271 = vunpack.c.h.bf16 %v238
      %v272 = vunpack.c.l.bf16 %v239
      %v273 = vunpack.c.h.bf16 %v239
      %v274 = vunpack.c.l.bf16 %v240
      %v275 = vunpack.c.h.bf16 %v240
      %v276 = vunpack.c.l.bf16 %v241
      %v277 = vunpack.c.h.bf16 %v241
      %v278 = vunpack.c.l.bf16 %v242
      %v279 = vunpack.c.h.bf16 %v242
      %v280 = vunpack.c.l.bf16 %v243
      %v281 = vunpack.c.h.bf16 %v243
      %v282 = vunpack.c.l.bf16 %v244
      %v283 = vunpack.c.h.bf16 %v244
      %v284 = vunpack.c.l.bf16 %v245
      %v285 = vunpack.c.h.bf16 %v245
      %v286 = vunpack.c.l.bf16 %v246
      %v287 = vunpack.c.h.bf16 %v246
      %v288 = vunpack.c.l.bf16 %v247
      %v289 = vunpack.c.h.bf16 %v247
      %v290 = vunpack.c.l.bf16 %v248
      %v291 = vunpack.c.h.bf16 %v248
      %v292 = vunpack.c.l.bf16 %v249
      %v293 = vunpack.c.h.bf16 %v249
      %v294 = vunpack.c.l.bf16 %v250
      %v295 = vunpack.c.h.bf16 %v250
      %v296 = vunpack.c.l.bf16 %v251
      %v297 = vunpack.c.h.bf16 %v251
      %v298 = vunpack.c.l.bf16 %v252
      %v299 = vunpack.c.h.bf16 %v252
      %v300 = vunpack.c.l.bf16 %v253
      %v301 = vunpack.c.h.bf16 %v253
      %v302 = vunpack.c.l.bf16 %v254
      %v303 = vunpack.c.h.bf16 %v254
      %v304 = vunpack.c.l.bf16 %v255
      %v305 = vunpack.c.h.bf16 %v255
      %v306 = vunpack.c.l.bf16 %v256
      %v307 = vunpack.c.h.bf16 %v256
      %v308 = vunpack.c.l.bf16 %v257
      %v309 = vunpack.c.h.bf16 %v257
      %v310 = vunpack.c.l.bf16 %v258
      %v311 = vunpack.c.h.bf16 %v258
      %v312 = vunpack.c.l.bf16 %v259
      %v313 = vunpack.c.h.bf16 %v259
      %v314 = vunpack.c.l.bf16 %v260
      %v315 = vunpack.c.h.bf16 %v260
      %v316 = vunpack.c.l.bf16 %v261
      %v317 = vunpack.c.h.bf16 %v261
      %v318 = vunpack.c.l.bf16 %v262
      %v319 = vunpack.c.h.bf16 %v262
      %v320 = vunpack.c.l.bf16 %v263
      %v321 = vunpack.c.h.bf16 %v263
      %v322 = vunpack.c.l.bf16 %v264
      %v323 = vunpack.c.h.bf16 %v264
      %v324 = vunpack.c.l.bf16 %v265
      %v325 = vunpack.c.h.bf16 %v265
      %v326 = vunpack.c.l.bf16 %v266
      %v327 = vunpack.c.h.bf16 %v266
      %v328 = vunpack.c.l.bf16 %v267
      %v329 = vunpack.c.h.bf16 %v267
      %v330 = vunpack.c.l.bf16 %v268
      %v331 = vunpack.c.h.bf16 %v268
      %v332 = vunpack.c.l.bf16 %v269
      %v333 = vunpack.c.h.bf16 %v269
      %v335 = vperm.slane %v234, 0
      %v337 = vmul.f32 %v270, %v335
      %v338 = vmul.f32 %v274, %v335
      %v339 = vmul.f32 %v278, %v335
      %v340 = vmul.f32 %v282, %v335
      %v341 = vmul.f32 %v286, %v335
      %v342 = vmul.f32 %v290, %v335
      %v343 = vmul.f32 %v294, %v335
      %v344 = vmul.f32 %v298, %v335
      %v345 = vmul.f32 %v302, %v335
      %v346 = vmul.f32 %v306, %v335
      %v347 = vmul.f32 %v310, %v335
      %v348 = vmul.f32 %v314, %v335
      %v349 = vmul.f32 %v318, %v335
      %v350 = vmul.f32 %v322, %v335
      %v351 = vmul.f32 %v326, %v335
      %v352 = vmul.f32 %v330, %v335
      %v354 = vperm.slane %v237, 0
      %v356 = vadd.f32 %v337, %v354
      %v357 = vadd.f32 %v338, %v354
      %v358 = vadd.f32 %v339, %v354
      %v359 = vadd.f32 %v340, %v354
      %v360 = vadd.f32 %v341, %v354
      %v361 = vadd.f32 %v342, %v354
      %v362 = vadd.f32 %v343, %v354
      %v363 = vadd.f32 %v344, %v354
      %v364 = vadd.f32 %v345, %v354
      %v365 = vadd.f32 %v346, %v354
      %v366 = vadd.f32 %v347, %v354
      %v367 = vadd.f32 %v348, %v354
      %v368 = vadd.f32 %v349, %v354
      %v369 = vadd.f32 %v350, %v354
      %v370 = vadd.f32 %v351, %v354
      %v371 = vadd.f32 %v352, %v354
      %v372 = vmax.f32 %v356, 0.0
      %v373 = vmax.f32 %v357, 0.0
      %v374 = vmax.f32 %v358, 0.0
      %v375 = vmax.f32 %v359, 0.0
      %v376 = vmax.f32 %v360, 0.0
      %v377 = vmax.f32 %v361, 0.0
      %v378 = vmax.f32 %v362, 0.0
      %v379 = vmax.f32 %v363, 0.0
      %v380 = vmax.f32 %v364, 0.0
      %v381 = vmax.f32 %v365, 0.0
      %v382 = vmax.f32 %v366, 0.0
      %v383 = vmax.f32 %v367, 0.0
      %v384 = vmax.f32 %v368, 0.0
      %v385 = vmax.f32 %v369, 0.0
      %v386 = vmax.f32 %v370, 0.0
      %v387 = vmax.f32 %v371, 0.0
      %388 = vrot.lane.b32.xlu0 %v335, 64
      %v389 = vpop.permute.xlu0 %388
      %v391 = vmul.f32 %v270, %v389
      %v392 = vmul.f32 %v274, %v389
      %v393 = vmul.f32 %v278, %v389
      %v394 = vmul.f32 %v282, %v389
      %v395 = vmul.f32 %v286, %v389
      %v396 = vmul.f32 %v290, %v389
      %v397 = vmul.f32 %v294, %v389
      %v398 = vmul.f32 %v298, %v389
      %v399 = vmul.f32 %v302, %v389
      %v400 = vmul.f32 %v306, %v389
      %v401 = vmul.f32 %v310, %v389
      %v402 = vmul.f32 %v314, %v389
      %v403 = vmul.f32 %v318, %v389
      %v404 = vmul.f32 %v322, %v389
      %v405 = vmul.f32 %v326, %v389
      %v406 = vmul.f32 %v330, %v389
      %407 = vrot.lane.b32.xlu0 %v354, 64
      %v408 = vpop.permute.xlu0 %407
      %v410 = vadd.f32 %v391, %v408
      %v411 = vadd.f32 %v392, %v408
      %v412 = vadd.f32 %v393, %v408
      %v413 = vadd.f32 %v394, %v408
      %v414 = vadd.f32 %v395, %v408
      %v415 = vadd.f32 %v396, %v408
      %v416 = vadd.f32 %v397, %v408
      %v417 = vadd.f32 %v398, %v408
      %v418 = vadd.f32 %v399, %v408
      %v419 = vadd.f32 %v400, %v408
      %v420 = vadd.f32 %v401, %v408
      %v421 = vadd.f32 %v402, %v408
      %v422 = vadd.f32 %v403, %v408
      %v423 = vadd.f32 %v404, %v408
      %v424 = vadd.f32 %v405, %v408
      %v425 = vadd.f32 %v406, %v408
      %v426 = vmax.f32 %v410, 0.0
      %v427 = vmax.f32 %v411, 0.0
      %v428 = vmax.f32 %v412, 0.0
      %v429 = vmax.f32 %v413, 0.0
      %v430 = vmax.f32 %v414, 0.0
      %v431 = vmax.f32 %v415, 0.0
      %v432 = vmax.f32 %v416, 0.0
      %v433 = vmax.f32 %v417, 0.0
      %v434 = vmax.f32 %v418, 0.0
      %v435 = vmax.f32 %v419, 0.0
      %v436 = vmax.f32 %v420, 0.0
      %v437 = vmax.f32 %v421, 0.0
      %v438 = vmax.f32 %v422, 0.0
      %v439 = vmax.f32 %v423, 0.0
      %v440 = vmax.f32 %v424, 0.0
      %v441 = vmax.f32 %v425, 0.0
      %458 = vrot.lane.b32.xlu0 %v426, 64
      %v459 = vpop.permute.xlu0 %458
      %460 = vrot.lane.b32.xlu0 %v427, 64
      %v461 = vpop.permute.xlu0 %460
      %462 = vrot.lane.b32.xlu0 %v428, 64
      %v463 = vpop.permute.xlu0 %462
      %464 = vrot.lane.b32.xlu0 %v429, 64
      %v465 = vpop.permute.xlu0 %464
      %466 = vrot.lane.b32.xlu0 %v430, 64
      %v467 = vpop.permute.xlu0 %466
      %468 = vrot.lane.b32.xlu0 %v431, 64
      %v469 = vpop.permute.xlu0 %468
      %470 = vrot.lane.b32.xlu0 %v432, 64
      %v471 = vpop.permute.xlu0 %470
      %472 = vrot.lane.b32.xlu0 %v433, 64
      %v473 = vpop.permute.xlu0 %472
      %474 = vrot.lane.b32.xlu0 %v434, 64
      %v475 = vpop.permute.xlu0 %474
      %476 = vrot.lane.b32.xlu0 %v435, 64
      %v477 = vpop.permute.xlu0 %476
      %478 = vrot.lane.b32.xlu0 %v436, 64
      %v479 = vpop.permute.xlu0 %478
      %480 = vrot.lane.b32.xlu0 %v437, 64
      %v481 = vpop.permute.xlu0 %480
      %482 = vrot.lane.b32.xlu0 %v438, 64
      %v483 = vpop.permute.xlu0 %482
      %484 = vrot.lane.b32.xlu0 %v439, 64
      %v485 = vpop.permute.xlu0 %484
      %486 = vrot.lane.b32.xlu0 %v440, 64
      %v487 = vpop.permute.xlu0 %486
      %488 = vrot.lane.b32.xlu0 %v441, 64
      %v489 = vpop.permute.xlu0 %488
      %v506 = vadd.f32 %v372, %v459
      %v507 = vadd.f32 %v373, %v461
      %v508 = vadd.f32 %v374, %v463
      %v509 = vadd.f32 %v375, %v465
      %v510 = vadd.f32 %v376, %v467
      %v511 = vadd.f32 %v377, %v469
      %v512 = vadd.f32 %v378, %v471
      %v513 = vadd.f32 %v379, %v473
      %v514 = vadd.f32 %v380, %v475
      %v515 = vadd.f32 %v381, %v477
      %v516 = vadd.f32 %v382, %v479
      %v517 = vadd.f32 %v383, %v481
      %v518 = vadd.f32 %v384, %v483
      %v519 = vadd.f32 %v385, %v485
      %v520 = vadd.f32 %v386, %v487
      %v521 = vadd.f32 %v387, %v489
      %v522 = vmul.f32 %v271, %v335
      %v523 = vmul.f32 %v275, %v335
      %v524 = vmul.f32 %v279, %v335
      %v525 = vmul.f32 %v283, %v335
      %v526 = vmul.f32 %v287, %v335
      %v527 = vmul.f32 %v291, %v335
      %v528 = vmul.f32 %v295, %v335
      %v529 = vmul.f32 %v299, %v335
      %v530 = vmul.f32 %v303, %v335
      %v531 = vmul.f32 %v307, %v335
      %v532 = vmul.f32 %v311, %v335
      %v533 = vmul.f32 %v315, %v335
      %v534 = vmul.f32 %v319, %v335
      %v535 = vmul.f32 %v323, %v335
      %v536 = vmul.f32 %v327, %v335
      %v537 = vmul.f32 %v331, %v335
      %v538 = vadd.f32 %v522, %v354
      %v539 = vadd.f32 %v523, %v354
      %v540 = vadd.f32 %v524, %v354
      %v541 = vadd.f32 %v525, %v354
      %v542 = vadd.f32 %v526, %v354
      %v543 = vadd.f32 %v527, %v354
      %v544 = vadd.f32 %v528, %v354
      %v545 = vadd.f32 %v529, %v354
      %v546 = vadd.f32 %v530, %v354
      %v547 = vadd.f32 %v531, %v354
      %v548 = vadd.f32 %v532, %v354
      %v549 = vadd.f32 %v533, %v354
      %v550 = vadd.f32 %v534, %v354
      %v551 = vadd.f32 %v535, %v354
      %v552 = vadd.f32 %v536, %v354
      %v553 = vadd.f32 %v537, %v354
      %v554 = vmax.f32 %v538, 0.0
      %v555 = vmax.f32 %v539, 0.0
      %v556 = vmax.f32 %v540, 0.0
      %v557 = vmax.f32 %v541, 0.0
      %v558 = vmax.f32 %v542, 0.0
      %v559 = vmax.f32 %v543, 0.0
      %v560 = vmax.f32 %v544, 0.0
      %v561 = vmax.f32 %v545, 0.0
      %v562 = vmax.f32 %v546, 0.0
      %v563 = vmax.f32 %v547, 0.0
      %v564 = vmax.f32 %v548, 0.0
      %v565 = vmax.f32 %v549, 0.0
      %v566 = vmax.f32 %v550, 0.0
      %v567 = vmax.f32 %v551, 0.0
      %v568 = vmax.f32 %v552, 0.0
      %v569 = vmax.f32 %v553, 0.0
      %v570 = vadd.f32 %v506, %v554
      %v571 = vadd.f32 %v507, %v555
      %v572 = vadd.f32 %v508, %v556
      %v573 = vadd.f32 %v509, %v557
      %v574 = vadd.f32 %v510, %v558
      %v575 = vadd.f32 %v511, %v559
      %v576 = vadd.f32 %v512, %v560
      %v577 = vadd.f32 %v513, %v561
      %v578 = vadd.f32 %v514, %v562
      %v579 = vadd.f32 %v515, %v563
      %v580 = vadd.f32 %v516, %v564
      %v581 = vadd.f32 %v517, %v565
      %v582 = vadd.f32 %v518, %v566
      %v583 = vadd.f32 %v519, %v567
      %v584 = vadd.f32 %v520, %v568
      %v585 = vadd.f32 %v521, %v569
      %v586 = vmul.f32 %v271, %v389
      %v587 = vmul.f32 %v275, %v389
      %v588 = vmul.f32 %v279, %v389
      %v589 = vmul.f32 %v283, %v389
      %v590 = vmul.f32 %v287, %v389
      %v591 = vmul.f32 %v291, %v389
      %v592 = vmul.f32 %v295, %v389
      %v593 = vmul.f32 %v299, %v389
      %v594 = vmul.f32 %v303, %v389
      %v595 = vmul.f32 %v307, %v389
      %v596 = vmul.f32 %v311, %v389
      %v597 = vmul.f32 %v315, %v389
      %v598 = vmul.f32 %v319, %v389
      %v599 = vmul.f32 %v323, %v389
      %v600 = vmul.f32 %v327, %v389
      %v601 = vmul.f32 %v331, %v389
      %v602 = vadd.f32 %v586, %v408
      %v603 = vadd.f32 %v587, %v408
      %v604 = vadd.f32 %v588, %v408
      %v605 = vadd.f32 %v589, %v408
      %v606 = vadd.f32 %v590, %v408
      %v607 = vadd.f32 %v591, %v408
      %v608 = vadd.f32 %v592, %v408
      %v609 = vadd.f32 %v593, %v408
      %v610 = vadd.f32 %v594, %v408
      %v611 = vadd.f32 %v595, %v408
      %v612 = vadd.f32 %v596, %v408
      %v613 = vadd.f32 %v597, %v408
      %v614 = vadd.f32 %v598, %v408
      %v615 = vadd.f32 %v599, %v408
      %v616 = vadd.f32 %v600, %v408
      %v617 = vadd.f32 %v601, %v408
      %v618 = vmax.f32 %v602, 0.0
      %v619 = vmax.f32 %v603, 0.0
      %v620 = vmax.f32 %v604, 0.0
      %v621 = vmax.f32 %v605, 0.0
      %v622 = vmax.f32 %v606, 0.0
      %v623 = vmax.f32 %v607, 0.0
      %v624 = vmax.f32 %v608, 0.0
      %v625 = vmax.f32 %v609, 0.0
      %v626 = vmax.f32 %v610, 0.0
      %v627 = vmax.f32 %v611, 0.0
      %v628 = vmax.f32 %v612, 0.0
      %v629 = vmax.f32 %v613, 0.0
      %v630 = vmax.f32 %v614, 0.0
      %v631 = vmax.f32 %v615, 0.0
      %v632 = vmax.f32 %v616, 0.0
      %v633 = vmax.f32 %v617, 0.0
      %650 = vrot.lane.b32.xlu0 %v618, 64
      %v651 = vpop.permute.xlu0 %650
      %652 = vrot.lane.b32.xlu0 %v619, 64
      %v653 = vpop.permute.xlu0 %652
      %654 = vrot.lane.b32.xlu0 %v620, 64
      %v655 = vpop.permute.xlu0 %654
      %656 = vrot.lane.b32.xlu0 %v621, 64
      %v657 = vpop.permute.xlu0 %656
      %658 = vrot.lane.b32.xlu0 %v622, 64
      %v659 = vpop.permute.xlu0 %658
      %660 = vrot.lane.b32.xlu0 %v623, 64
      %v661 = vpop.permute.xlu0 %660
      %662 = vrot.lane.b32.xlu0 %v624, 64
      %v663 = vpop.permute.xlu0 %662
      %664 = vrot.lane.b32.xlu0 %v625, 64
      %v665 = vpop.permute.xlu0 %664
      %666 = vrot.lane.b32.xlu0 %v626, 64
      %v667 = vpop.permute.xlu0 %666
      %668 = vrot.lane.b32.xlu0 %v627, 64
      %v669 = vpop.permute.xlu0 %668
      %670 = vrot.lane.b32.xlu0 %v628, 64
      %v671 = vpop.permute.xlu0 %670
      %672 = vrot.lane.b32.xlu0 %v629, 64
      %v673 = vpop.permute.xlu0 %672
      %674 = vrot.lane.b32.xlu0 %v630, 64
      %v675 = vpop.permute.xlu0 %674
      %676 = vrot.lane.b32.xlu0 %v631, 64
      %v677 = vpop.permute.xlu0 %676
      %678 = vrot.lane.b32.xlu0 %v632, 64
      %v679 = vpop.permute.xlu0 %678
      %680 = vrot.lane.b32.xlu0 %v633, 64
      %v681 = vpop.permute.xlu0 %680
      %v698 = vadd.f32 %v570, %v651
      %v699 = vadd.f32 %v571, %v653
      %v700 = vadd.f32 %v572, %v655
      %v701 = vadd.f32 %v573, %v657
      %v702 = vadd.f32 %v574, %v659
      %v703 = vadd.f32 %v575, %v661
      %v704 = vadd.f32 %v576, %v663
      %v705 = vadd.f32 %v577, %v665
      %v706 = vadd.f32 %v578, %v667
      %v707 = vadd.f32 %v579, %v669
      %v708 = vadd.f32 %v580, %v671
      %v709 = vadd.f32 %v581, %v673
      %v710 = vadd.f32 %v582, %v675
      %v711 = vadd.f32 %v583, %v677
      %v712 = vadd.f32 %v584, %v679
      %v713 = vadd.f32 %v585, %v681
      %v714 = vmul.f32 %v698, 0.25
      %v715 = vmul.f32 %v699, 0.25
      %v716 = vmul.f32 %v700, 0.25
      %v717 = vmul.f32 %v701, 0.25
      %v718 = vmul.f32 %v702, 0.25
      %v719 = vmul.f32 %v703, 0.25
      %v720 = vmul.f32 %v704, 0.25
      %v721 = vmul.f32 %v705, 0.25
      %v722 = vmul.f32 %v706, 0.25
      %v723 = vmul.f32 %v707, 0.25
      %v724 = vmul.f32 %v708, 0.25
      %v725 = vmul.f32 %v709, 0.25
      %v726 = vmul.f32 %v710, 0.25
      %v727 = vmul.f32 %v711, 0.25
      %v728 = vmul.f32 %v712, 0.25
      %v729 = vmul.f32 %v713, 0.25
      %v730 = vmul.f32 %v272, %v335
      %v731 = vmul.f32 %v276, %v335
      %v732 = vmul.f32 %v280, %v335
      %v733 = vmul.f32 %v284, %v335
      %v734 = vmul.f32 %v288, %v335
      %v735 = vmul.f32 %v292, %v335
      %v736 = vmul.f32 %v296, %v335
      %v737 = vmul.f32 %v300, %v335
      %v738 = vmul.f32 %v304, %v335
      %v739 = vmul.f32 %v308, %v335
      %v740 = vmul.f32 %v312, %v335
      %v741 = vmul.f32 %v316, %v335
      %v742 = vmul.f32 %v320, %v335
      %v743 = vmul.f32 %v324, %v335
      %v744 = vmul.f32 %v328, %v335
      %v745 = vmul.f32 %v332, %v335
      %v746 = vadd.f32 %v730, %v354
      %v747 = vadd.f32 %v731, %v354
      %v748 = vadd.f32 %v732, %v354
      %v749 = vadd.f32 %v733, %v354
      %v750 = vadd.f32 %v734, %v354
      %v751 = vadd.f32 %v735, %v354
      %v752 = vadd.f32 %v736, %v354
      %v753 = vadd.f32 %v737, %v354
      %v754 = vadd.f32 %v738, %v354
      %v755 = vadd.f32 %v739, %v354
      %v756 = vadd.f32 %v740, %v354
      %v757 = vadd.f32 %v741, %v354
      %v758 = vadd.f32 %v742, %v354
      %v759 = vadd.f32 %v743, %v354
      %v760 = vadd.f32 %v744, %v354
      %v761 = vadd.f32 %v745, %v354
      %v762 = vmax.f32 %v746, 0.0
      %v763 = vmax.f32 %v747, 0.0
      %v764 = vmax.f32 %v748, 0.0
      %v765 = vmax.f32 %v749, 0.0
      %v766 = vmax.f32 %v750, 0.0
      %v767 = vmax.f32 %v751, 0.0
      %v768 = vmax.f32 %v752, 0.0
      %v769 = vmax.f32 %v753, 0.0
      %v770 = vmax.f32 %v754, 0.0
      %v771 = vmax.f32 %v755, 0.0
      %v772 = vmax.f32 %v756, 0.0
      %v773 = vmax.f32 %v757, 0.0
      %v774 = vmax.f32 %v758, 0.0
      %v775 = vmax.f32 %v759, 0.0
      %v776 = vmax.f32 %v760, 0.0
      %v777 = vmax.f32 %v761, 0.0
      %v778 = vmul.f32 %v272, %v389
      %v779 = vmul.f32 %v276, %v389
      %v780 = vmul.f32 %v280, %v389
      %v781 = vmul.f32 %v284, %v389
      %v782 = vmul.f32 %v288, %v389
      %v783 = vmul.f32 %v292, %v389
      %v784 = vmul.f32 %v296, %v389
      %v785 = vmul.f32 %v300, %v389
      %v786 = vmul.f32 %v304, %v389
      %v787 = vmul.f32 %v308, %v389
      %v788 = vmul.f32 %v312, %v389
      %v789 = vmul.f32 %v316, %v389
      %v790 = vmul.f32 %v320, %v389
      %v791 = vmul.f32 %v324, %v389
      %v792 = vmul.f32 %v328, %v389
      %v793 = vmul.f32 %v332, %v389
      %v794 = vadd.f32 %v778, %v408
      %v795 = vadd.f32 %v779, %v408
      %v796 = vadd.f32 %v780, %v408
      %v797 = vadd.f32 %v781, %v408
      %v798 = vadd.f32 %v782, %v408
      %v799 = vadd.f32 %v783, %v408
      %v800 = vadd.f32 %v784, %v408
      %v801 = vadd.f32 %v785, %v408
      %v802 = vadd.f32 %v786, %v408
      %v803 = vadd.f32 %v787, %v408
      %v804 = vadd.f32 %v788, %v408
      %v805 = vadd.f32 %v789, %v408
      %v806 = vadd.f32 %v790, %v408
      %v807 = vadd.f32 %v791, %v408
      %v808 = vadd.f32 %v792, %v408
      %v809 = vadd.f32 %v793, %v408
      %v810 = vmax.f32 %v794, 0.0
      %v811 = vmax.f32 %v795, 0.0
      %v812 = vmax.f32 %v796, 0.0
      %v813 = vmax.f32 %v797, 0.0
      %v814 = vmax.f32 %v798, 0.0
      %v815 = vmax.f32 %v799, 0.0
      %v816 = vmax.f32 %v800, 0.0
      %v817 = vmax.f32 %v801, 0.0
      %v818 = vmax.f32 %v802, 0.0
      %v819 = vmax.f32 %v803, 0.0
      %v820 = vmax.f32 %v804, 0.0
      %v821 = vmax.f32 %v805, 0.0
      %v822 = vmax.f32 %v806, 0.0
      %v823 = vmax.f32 %v807, 0.0
      %v824 = vmax.f32 %v808, 0.0
      %v825 = vmax.f32 %v809, 0.0
      %842 = vrot.lane.b32.xlu0 %v810, 64
      %v843 = vpop.permute.xlu0 %842
      %844 = vrot.lane.b32.xlu0 %v811, 64
      %v845 = vpop.permute.xlu0 %844
      %846 = vrot.lane.b32.xlu0 %v812, 64
      %v847 = vpop.permute.xlu0 %846
      %848 = vrot.lane.b32.xlu0 %v813, 64
      %v849 = vpop.permute.xlu0 %848
      %850 = vrot.lane.b32.xlu0 %v814, 64
      %v851 = vpop.permute.xlu0 %850
      %852 = vrot.lane.b32.xlu0 %v815, 64
      %v853 = vpop.permute.xlu0 %852
      %854 = vrot.lane.b32.xlu0 %v816, 64
      %v855 = vpop.permute.xlu0 %854
      %856 = vrot.lane.b32.xlu0 %v817, 64
      %v857 = vpop.permute.xlu0 %856
      %858 = vrot.lane.b32.xlu0 %v818, 64
      %v859 = vpop.permute.xlu0 %858
      %860 = vrot.lane.b32.xlu0 %v819, 64
      %v861 = vpop.permute.xlu0 %860
      %862 = vrot.lane.b32.xlu0 %v820, 64
      %v863 = vpop.permute.xlu0 %862
      %864 = vrot.lane.b32.xlu0 %v821, 64
      %v865 = vpop.permute.xlu0 %864
      %866 = vrot.lane.b32.xlu0 %v822, 64
      %v867 = vpop.permute.xlu0 %866
      %868 = vrot.lane.b32.xlu0 %v823, 64
      %v869 = vpop.permute.xlu0 %868
      %870 = vrot.lane.b32.xlu0 %v824, 64
      %v871 = vpop.permute.xlu0 %870
      %872 = vrot.lane.b32.xlu0 %v825, 64
      %v873 = vpop.permute.xlu0 %872
      %v890 = vadd.f32 %v762, %v843
      %v891 = vadd.f32 %v763, %v845
      %v892 = vadd.f32 %v764, %v847
      %v893 = vadd.f32 %v765, %v849
      %v894 = vadd.f32 %v766, %v851
      %v895 = vadd.f32 %v767, %v853
      %v896 = vadd.f32 %v768, %v855
      %v897 = vadd.f32 %v769, %v857
      %v898 = vadd.f32 %v770, %v859
      %v899 = vadd.f32 %v771, %v861
      %v900 = vadd.f32 %v772, %v863
      %v901 = vadd.f32 %v773, %v865
      %v902 = vadd.f32 %v774, %v867
      %v903 = vadd.f32 %v775, %v869
      %v904 = vadd.f32 %v776, %v871
      %v905 = vadd.f32 %v777, %v873
      %v906 = vmul.f32 %v273, %v335
      %v907 = vmul.f32 %v277, %v335
      %v908 = vmul.f32 %v281, %v335
      %v909 = vmul.f32 %v285, %v335
      %v910 = vmul.f32 %v289, %v335
      %v911 = vmul.f32 %v293, %v335
      %v912 = vmul.f32 %v297, %v335
      %v913 = vmul.f32 %v301, %v335
      %v914 = vmul.f32 %v305, %v335
      %v915 = vmul.f32 %v309, %v335
      %v916 = vmul.f32 %v313, %v335
      %v917 = vmul.f32 %v317, %v335
      %v918 = vmul.f32 %v321, %v335
      %v919 = vmul.f32 %v325, %v335
      %v920 = vmul.f32 %v329, %v335
      %v921 = vmul.f32 %v333, %v335
      %v922 = vadd.f32 %v906, %v354
      %v923 = vadd.f32 %v907, %v354
      %v924 = vadd.f32 %v908, %v354
      %v925 = vadd.f32 %v909, %v354
      %v926 = vadd.f32 %v910, %v354
      %v927 = vadd.f32 %v911, %v354
      %v928 = vadd.f32 %v912, %v354
      %v929 = vadd.f32 %v913, %v354
      %v930 = vadd.f32 %v914, %v354
      %v931 = vadd.f32 %v915, %v354
      %v932 = vadd.f32 %v916, %v354
      %v933 = vadd.f32 %v917, %v354
      %v934 = vadd.f32 %v918, %v354
      %v935 = vadd.f32 %v919, %v354
      %v936 = vadd.f32 %v920, %v354
      %v937 = vadd.f32 %v921, %v354
      %v938 = vmax.f32 %v922, 0.0
      %v939 = vmax.f32 %v923, 0.0
      %v940 = vmax.f32 %v924, 0.0
      %v941 = vmax.f32 %v925, 0.0
      %v942 = vmax.f32 %v926, 0.0
      %v943 = vmax.f32 %v927, 0.0
      %v944 = vmax.f32 %v928, 0.0
      %v945 = vmax.f32 %v929, 0.0
      %v946 = vmax.f32 %v930, 0.0
      %v947 = vmax.f32 %v931, 0.0
      %v948 = vmax.f32 %v932, 0.0
      %v949 = vmax.f32 %v933, 0.0
      %v950 = vmax.f32 %v934, 0.0
      %v951 = vmax.f32 %v935, 0.0
      %v952 = vmax.f32 %v936, 0.0
      %v953 = vmax.f32 %v937, 0.0
      %v954 = vadd.f32 %v890, %v938
      %v955 = vadd.f32 %v891, %v939
      %v956 = vadd.f32 %v892, %v940
      %v957 = vadd.f32 %v893, %v941
      %v958 = vadd.f32 %v894, %v942
      %v959 = vadd.f32 %v895, %v943
      %v960 = vadd.f32 %v896, %v944
      %v961 = vadd.f32 %v897, %v945
      %v962 = vadd.f32 %v898, %v946
      %v963 = vadd.f32 %v899, %v947
      %v964 = vadd.f32 %v900, %v948
      %v965 = vadd.f32 %v901, %v949
      %v966 = vadd.f32 %v902, %v950
      %v967 = vadd.f32 %v903, %v951
      %v968 = vadd.f32 %v904, %v952
      %v969 = vadd.f32 %v905, %v953
      %v970 = vmul.f32 %v273, %v389
      %v971 = vmul.f32 %v277, %v389
      %v972 = vmul.f32 %v281, %v389
      %v973 = vmul.f32 %v285, %v389
      %v974 = vmul.f32 %v289, %v389
      %v975 = vmul.f32 %v293, %v389
      %v976 = vmul.f32 %v297, %v389
      %v977 = vmul.f32 %v301, %v389
      %v978 = vmul.f32 %v305, %v389
      %v979 = vmul.f32 %v309, %v389
      %v980 = vmul.f32 %v313, %v389
      %v981 = vmul.f32 %v317, %v389
      %v982 = vmul.f32 %v321, %v389
      %v983 = vmul.f32 %v325, %v389
      %v984 = vmul.f32 %v329, %v389
      %v985 = vmul.f32 %v333, %v389
      %v986 = vadd.f32 %v970, %v408
      %v987 = vadd.f32 %v971, %v408
      %v988 = vadd.f32 %v972, %v408
      %v989 = vadd.f32 %v973, %v408
      %v990 = vadd.f32 %v974, %v408
      %v991 = vadd.f32 %v975, %v408
      %v992 = vadd.f32 %v976, %v408
      %v993 = vadd.f32 %v977, %v408
      %v994 = vadd.f32 %v978, %v408
      %v995 = vadd.f32 %v979, %v408
      %v996 = vadd.f32 %v980, %v408
      %v997 = vadd.f32 %v981, %v408
      %v998 = vadd.f32 %v982, %v408
      %v999 = vadd.f32 %v983, %v408
      %v1000 = vadd.f32 %v984, %v408
      %v1001 = vadd.f32 %v985, %v408
      %v1002 = vmax.f32 %v986, 0.0
      %v1003 = vmax.f32 %v987, 0.0
      %v1004 = vmax.f32 %v988, 0.0
      %v1005 = vmax.f32 %v989, 0.0
      %v1006 = vmax.f32 %v990, 0.0
      %v1007 = vmax.f32 %v991, 0.0
      %v1008 = vmax.f32 %v992, 0.0
      %v1009 = vmax.f32 %v993, 0.0
      %v1010 = vmax.f32 %v994, 0.0
      %v1011 = vmax.f32 %v995, 0.0
      %v1012 = vmax.f32 %v996, 0.0
      %v1013 = vmax.f32 %v997, 0.0
      %v1014 = vmax.f32 %v998, 0.0
      %v1015 = vmax.f32 %v999, 0.0
      %v1016 = vmax.f32 %v1000, 0.0
      %v1017 = vmax.f32 %v1001, 0.0
      %1034 = vrot.lane.b32.xlu0 %v1002, 64
      %v1035 = vpop.permute.xlu0 %1034
      %1036 = vrot.lane.b32.xlu0 %v1003, 64
      %v1037 = vpop.permute.xlu0 %1036
      %1038 = vrot.lane.b32.xlu0 %v1004, 64
      %v1039 = vpop.permute.xlu0 %1038
      %1040 = vrot.lane.b32.xlu0 %v1005, 64
      %v1041 = vpop.permute.xlu0 %1040
      %1042 = vrot.lane.b32.xlu0 %v1006, 64
      %v1043 = vpop.permute.xlu0 %1042
      %1044 = vrot.lane.b32.xlu0 %v1007, 64
      %v1045 = vpop.permute.xlu0 %1044
      %1046 = vrot.lane.b32.xlu0 %v1008, 64
      %v1047 = vpop.permute.xlu0 %1046
      %1048 = vrot.lane.b32.xlu0 %v1009, 64
      %v1049 = vpop.permute.xlu0 %1048
      %1050 = vrot.lane.b32.xlu0 %v1010, 64
      %v1051 = vpop.permute.xlu0 %1050
      %1052 = vrot.lane.b32.xlu0 %v1011, 64
      %v1053 = vpop.permute.xlu0 %1052
      %1054 = vrot.lane.b32.xlu0 %v1012, 64
      %v1055 = vpop.permute.xlu0 %1054
      %1056 = vrot.lane.b32.xlu0 %v1013, 64
      %v1057 = vpop.permute.xlu0 %1056
      %1058 = vrot.lane.b32.xlu0 %v1014, 64
      %v1059 = vpop.permute.xlu0 %1058
      %1060 = vrot.lane.b32.xlu0 %v1015, 64
      %v1061 = vpop.permute.xlu0 %1060
      %1062 = vrot.lane.b32.xlu0 %v1016, 64
      %v1063 = vpop.permute.xlu0 %1062
      %1064 = vrot.lane.b32.xlu0 %v1017, 64
      %v1065 = vpop.permute.xlu0 %1064
      %v1082 = vadd.f32 %v954, %v1035
      %v1083 = vadd.f32 %v955, %v1037
      %v1084 = vadd.f32 %v956, %v1039
      %v1085 = vadd.f32 %v957, %v1041
      %v1086 = vadd.f32 %v958, %v1043
      %v1087 = vadd.f32 %v959, %v1045
      %v1088 = vadd.f32 %v960, %v1047
      %v1089 = vadd.f32 %v961, %v1049
      %v1090 = vadd.f32 %v962, %v1051
      %v1091 = vadd.f32 %v963, %v1053
      %v1092 = vadd.f32 %v964, %v1055
      %v1093 = vadd.f32 %v965, %v1057
      %v1094 = vadd.f32 %v966, %v1059
      %v1095 = vadd.f32 %v967, %v1061
      %v1096 = vadd.f32 %v968, %v1063
      %v1097 = vadd.f32 %v969, %v1065
      %v1098 = vmul.f32 %v1082, 0.25
      %v1099 = vmul.f32 %v1083, 0.25
      %v1100 = vmul.f32 %v1084, 0.25
      %v1101 = vmul.f32 %v1085, 0.25
      %v1102 = vmul.f32 %v1086, 0.25
      %v1103 = vmul.f32 %v1087, 0.25
      %v1104 = vmul.f32 %v1088, 0.25
      %v1105 = vmul.f32 %v1089, 0.25
      %v1106 = vmul.f32 %v1090, 0.25
      %v1107 = vmul.f32 %v1091, 0.25
      %v1108 = vmul.f32 %v1092, 0.25
      %v1109 = vmul.f32 %v1093, 0.25
      %v1110 = vmul.f32 %v1094, 0.25
      %v1111 = vmul.f32 %v1095, 0.25
      %v1112 = vmul.f32 %v1096, 0.25
      %v1113 = vmul.f32 %v1097, 0.25
      %1130 = vrot.lane.b32.xlu0 %v1098, 64
      %v1131 = vpop.permute.xlu0 %1130
      %1132 = vrot.lane.b32.xlu0 %v1099, 64
      %v1133 = vpop.permute.xlu0 %1132
      %1134 = vrot.lane.b32.xlu0 %v1100, 64
      %v1135 = vpop.permute.xlu0 %1134
      %1136 = vrot.lane.b32.xlu0 %v1101, 64
      %v1137 = vpop.permute.xlu0 %1136
      %1138 = vrot.lane.b32.xlu0 %v1102, 64
      %v1139 = vpop.permute.xlu0 %1138
      %1140 = vrot.lane.b32.xlu0 %v1103, 64
      %v1141 = vpop.permute.xlu0 %1140
      %1142 = vrot.lane.b32.xlu0 %v1104, 64
      %v1143 = vpop.permute.xlu0 %1142
      %1144 = vrot.lane.b32.xlu0 %v1105, 64
      %v1145 = vpop.permute.xlu0 %1144
      %1146 = vrot.lane.b32.xlu0 %v1106, 64
      %v1147 = vpop.permute.xlu0 %1146
      %1148 = vrot.lane.b32.xlu0 %v1107, 64
      %v1149 = vpop.permute.xlu0 %1148
      %1150 = vrot.lane.b32.xlu0 %v1108, 64
      %v1151 = vpop.permute.xlu0 %1150
      %1152 = vrot.lane.b32.xlu0 %v1109, 64
      %v1153 = vpop.permute.xlu0 %1152
      %1154 = vrot.lane.b32.xlu0 %v1110, 64
      %v1155 = vpop.permute.xlu0 %1154
      %1156 = vrot.lane.b32.xlu0 %v1111, 64
      %v1157 = vpop.permute.xlu0 %1156
      %1158 = vrot.lane.b32.xlu0 %v1112, 64
      %v1159 = vpop.permute.xlu0 %1158
      %1160 = vrot.lane.b32.xlu0 %v1113, 64
      %v1161 = vpop.permute.xlu0 %1160
      %vm1178 = vcmask 523264
      %v1179 = vsel %vm1178, %v714, %v1131
      %v1180 = vsel %vm1178, %v715, %v1133
      %v1181 = vsel %vm1178, %v716, %v1135
      %v1182 = vsel %vm1178, %v717, %v1137
      %v1183 = vsel %vm1178, %v718, %v1139
      %v1184 = vsel %vm1178, %v719, %v1141
      %v1185 = vsel %vm1178, %v720, %v1143
      %v1186 = vsel %vm1178, %v721, %v1145
      %v1187 = vsel %vm1178, %v722, %v1147
      %v1188 = vsel %vm1178, %v723, %v1149
      %v1189 = vsel %vm1178, %v724, %v1151
      %v1190 = vsel %vm1178, %v725, %v1153
      %v1191 = vsel %vm1178, %v726, %v1155
      %v1192 = vsel %vm1178, %v727, %v1157
      %v1193 = vsel %vm1178, %v728, %v1159
      %v1194 = vsel %vm1178, %v729, %v1161
      %v1195 = vpack.c.bf16 %v1179, %v1179
      %v1196 = vpack.c.bf16 %v1180, %v1180
      %v1197 = vpack.c.bf16 %v1181, %v1181
      %v1198 = vpack.c.bf16 %v1182, %v1182
      %v1199 = vpack.c.bf16 %v1183, %v1183
      %v1200 = vpack.c.bf16 %v1184, %v1184
      %v1201 = vpack.c.bf16 %v1185, %v1185
      %v1202 = vpack.c.bf16 %v1186, %v1186
      %v1203 = vpack.c.bf16 %v1187, %v1187
      %v1204 = vpack.c.bf16 %v1188, %v1188
      %v1205 = vpack.c.bf16 %v1189, %v1189
      %v1206 = vpack.c.bf16 %v1190, %v1190
      %v1207 = vpack.c.bf16 %v1191, %v1191
      %v1208 = vpack.c.bf16 %v1192, %v1192
      %v1209 = vpack.c.bf16 %v1193, %v1193
      %v1210 = vpack.c.bf16 %v1194, %v1194
      %1211 = vst [vmem:[%s202] sm:$0xf] %v1195
      %1212 = vst [vmem:[%s202 + $0x4] sm:$0xf] %v1196
      %1213 = vst [vmem:[%s202 + $0x8] sm:$0xf] %v1197
      %1214 = vst [vmem:[%s202 + $0xc] sm:$0xf] %v1198
      %1215 = vst [vmem:[%s202 + $0x10] sm:$0xf] %v1199
      %1216 = vst [vmem:[%s202 + $0x14] sm:$0xf] %v1200
      %1217 = vst [vmem:[%s202 + $0x18] sm:$0xf] %v1201
      %1218 = vst [vmem:[%s202 + $0x1c] sm:$0xf] %v1202
      %1219 = vst [vmem:[%s202 + $0x20] sm:$0xf] %v1203
      %1220 = vst [vmem:[%s202 + $0x24] sm:$0xf] %v1204
      %1221 = vst [vmem:[%s202 + $0x28] sm:$0xf] %v1205
      %1222 = vst [vmem:[%s202 + $0x2c] sm:$0xf] %v1206
      %1223 = vst [vmem:[%s202 + $0x30] sm:$0xf] %v1207
      %1224 = vst [vmem:[%s202 + $0x34] sm:$0xf] %v1208
      %1225 = vst [vmem:[%s202 + $0x38] sm:$0xf] %v1209
      %1226 = vst [vmem:[%s202 + $0x3c] sm:$0xf] %v1210
      %s1227 = smul.u32 16, %s15
      %p1228 = scmp.lt.s32.totalorder %s1227, 31
      %s1229 = scalar_select %p1228, %s1227, 31
      %s1230 = smul.addr %s1229, 4
      %s1231 = scalar_lea.vmem %s4, %s1230
      // Predicated region
      $region37: #{cnn_forward.9} parent=35 // pred_check
        %p1232 = pneg %p122
      $region38: #{cnn_forward.9} parent=35 // pred_check_branch
        %1234 = sbr.rel (%p1232) target = $region40
      $region39: #{cnn_forward.9} parent=35 // pred_region
        %s1235 = smul.u32 16, %s15
      $region40: #{cnn_forward.9} parent=35 // pred_fallthru
        _
    $region36: #{cnn_forward.9} parent=5 // pred_fallthru
      _
    %p1236 = scmp.le.s32.totalorder 2, %s10
    // Predicated region
    $region41: #{cnn_forward.9} parent=5 // pred_check
      %p1237 = pneg %p1236
    $region42: #{cnn_forward.9} parent=5 // pred_check_branch
      %1239 = sbr.rel (%p1237) target = $region44
    $region43: #{cnn_forward.9} parent=5 // pred_region
      %s1240 = ssub.s32 %s10, 2
      // Predicated region
      $region45: #{cnn_forward.9} parent=43 // pred_check
        %p1241 = pneg %p128
      $region46: #{cnn_forward.9} parent=43 // pred_check_branch
        %1243 = sbr.rel (%p1241) target = $region48
      $region47: #{cnn_forward.9} parent=43 // pred_region
        %s1244 = smul.u32 16, %s16
        %p1245 = scmp.lt.s32.totalorder %s1244, 31
        %s1246 = scalar_select %p1245, %s1244, 31
        %s1247 = smul.addr %s1246, 4
        %s1248 = scalar_lea.vmem %s4, %s1247
      $region48: #{cnn_forward.9} parent=43 // pred_fallthru
        _
    $region44: #{cnn_forward.9} parent=5 // pred_fallthru
      _
  $region6: #{cnn_forward.9} parent=0 // loop_footer
    %s14 = sadd.s32 1, %s10
  $region7: #{cnn_forward.9} parent=0 // loop_footer_branch
    %9 = sbr.rel target = $region3
  $region8: #{cnn_forward.9} parent=0 // loop_exit
    _

// kernel: cnn_forward.8
$region0: #{cnn_forward.8}
  #allocation0 [shape = 'u32[]', space=smem, size = 0x4, offset = 0x4, fixed_abs, tag = 'smem constant byte address 0x4 - core index']
  #allocation1 [shape = 'u32[72,128]{1,0:T(1,128)}', space=vmem, size = 0x9000, scoped, tag = 'internal scratch']
  %s0 = inlined_call_operand.vmem [shape: bf16[2048,9], index: 0, kind: input, shape index: {}]
  %s1 = inlined_call_operand.vmem [shape: bf16[9,64], index: 1, kind: input, shape index: {}]
  %s2 = inlined_call_operand.hbm [shape: f32[1,64], index: 2, kind: input, shape index: {}]
  %s3 = inlined_call_operand.vmem [shape: bf16[2048,64], index: 3, kind: output, shape index: {0}]
  %s4 = inlined_call_operand.vmem [shape: f32[2,2,64], index: 4, kind: output, shape index: {1}]
  %5 = xla_tuple %s3, %s4
  %s6 = sld [smem:[#allocation0]]
  $region57: #{cnn_forward.8} parent=0
    _
  %s8 = ssub.s32 1, %s6
  %s9 = scalar_select 0, %s8, %s6
  $region1: #{cnn_forward.8} parent=0
    #allocation2 [shape = 'u8[512]{0}', space=vmem, size = 0x400, scoped, tag = 'input window, operand 2, single buffered']
    #allocation3 [shape = 's32[2]{0}', space=sflag, size = 0x8, scoped, tag = 'scoped memory for cnn_forward.8']
    %10 = vsyncpa [#allocation3], 0
    loop: start=0, step=1, limit=4
    $region2: #{cnn_forward.8} parent=1 // loop_pre_header
      _
    $region3: #{cnn_forward.8} parent=1 // loop_header
      %s12 = sphi 0, %s16
      %p13 = scmp.ge.s32.totalorder %s12, 4
      %s22 = sphi 0, %s24
      %s25 = sphi 0, %s22
      %s26 = sphi 0, %s25
      %s42 = sphi 0, %s26
      %s46 = sphi 0, %s46
      %s48 = sphi 0, %s46
      %s49 = sphi 0, %s48
      %s63 = sphi 0, %s49
      %s67 = sphi 0, %s67
      %s69 = sphi 0, %s67
      %s70 = sphi 0, %s69
      %s84 = sphi 0, %s70
      %s90 = sphi 0, %s92
      %s93 = sphi 0, %s90
      %s94 = sphi 0, %s93
      %s110 = sphi 0, %s94
      %s116 = sphi 0, %s118
      %s119 = sphi 0, %s116
      %s120 = sphi 0, %s119
      %s136 = sphi 0, %s120
    $region4: #{cnn_forward.8} parent=1 // loop_header_branch
      %15 = sbr.rel (%p13) target = $region8
    $region5: #{cnn_forward.8} parent=1 // loop_body
      %s17 = ssub.s32 %s12, 1
      %s18 = ssub.s32 %s12, 2
      %s19 = sadd.s32 %s12, 1
      %s20 = ssub.s32 %s12, %s19
      %p21 = scmp.eq.s32.totalorder %s20, 0
      %s23 = sadd.s32 %s22, 1
      %s24 = scalar_select %p21, %s22, %s23
      %p27 = pneg %p21
      %p28 = scmp.eq.s32.totalorder %s12, 1
      %p29 = por %p27, %p28
      %p30 = scmp.ne.s32.totalorder %s22, %s25
      %p31 = scmp.eq.s32.totalorder %s12, 0
      %p32 = por %p30, %p31
      %p33 = scmp.ne.s32.totalorder %s22, %s25
      %p34 = scmp.eq.s32.totalorder %s17, 1
      %p35 = por %p33, %p34
      %p36 = scmp.ne.s32.totalorder %s25, %s26
      %p37 = scmp.eq.s32.totalorder %s17, 0
      %p38 = por %p36, %p37
      %p39 = scmp.ne.s32.totalorder %s25, %s26
      %p40 = scmp.eq.s32.totalorder %s18, 1
      %p41 = por %p39, %p40
      %p43 = scmp.ne.s32.totalorder %s26, %s42
      %p44 = scmp.eq.s32.totalorder %s18, 0
      %p45 = por %p43, %p44
      %s47 = sadd.s32 %s46, 1
      %p50 = scmp.eq.s32.totalorder %s12, 1
      %p51 = scmp.ne.s32.totalorder %s46, %s48
      %p52 = scmp.eq.s32.totalorder %s12, 0
      %p53 = por %p51, %p52
      %p54 = scmp.ne.s32.totalorder %s46, %s48
      %p55 = scmp.eq.s32.totalorder %s17, 1
      %p56 = por %p54, %p55
      %p57 = scmp.ne.s32.totalorder %s48, %s49
      %p58 = scmp.eq.s32.totalorder %s17, 0
      %p59 = por %p57, %p58
      %p60 = scmp.ne.s32.totalorder %s48, %s49
      %p61 = scmp.eq.s32.totalorder %s18, 1
      %p62 = por %p60, %p61
      %p64 = scmp.ne.s32.totalorder %s49, %s63
      %p65 = scmp.eq.s32.totalorder %s18, 0
      %p66 = por %p64, %p65
      %s68 = sadd.s32 %s67, 1
      %p71 = scmp.eq.s32.totalorder %s12, 1
      %p72 = scmp.ne.s32.totalorder %s67, %s69
      %p73 = scmp.eq.s32.totalorder %s12, 0
      %p74 = por %p72, %p73
      %p75 = scmp.ne.s32.totalorder %s67, %s69
      %p76 = scmp.eq.s32.totalorder %s17, 1
      %p77 = por %p75, %p76
      %p78 = scmp.ne.s32.totalorder %s69, %s70
      %p79 = scmp.eq.s32.totalorder %s17, 0
      %p80 = por %p78, %p79
      %p81 = scmp.ne.s32.totalorder %s69, %s70
      %p82 = scmp.eq.s32.totalorder %s18, 1
      %p83 = por %p81, %p82
      %p85 = scmp.ne.s32.totalorder %s70, %s84
      %p86 = scmp.eq.s32.totalorder %s18, 0
      %p87 = por %p85, %p86
      %s88 = ssub.s32 %s12, %s19
      %p89 = scmp.eq.s32.totalorder %s88, 0
      %s91 = sadd.s32 %s90, 1
      %s92 = scalar_select %p89, %s90, %s91
      %p95 = pneg %p89
      %p96 = scmp.eq.s32.totalorder %s12, 1
      %p97 = por %p95, %p96
      %p98 = scmp.ne.s32.totalorder %s90, %s93
      %p99 = scmp.eq.s32.totalorder %s12, 0
      %p100 = por %p98, %p99
      %p101 = scmp.ne.s32.totalorder %s90, %s93
      %p102 = scmp.eq.s32.totalorder %s17, 1
      %p103 = por %p101, %p102
      %p104 = scmp.ne.s32.totalorder %s93, %s94
      %p105 = scmp.eq.s32.totalorder %s17, 0
      %p106 = por %p104, %p105
      %p107 = scmp.ne.s32.totalorder %s93, %s94
      %p108 = scmp.eq.s32.totalorder %s18, 1
      %p109 = por %p107, %p108
      %p111 = scmp.ne.s32.totalorder %s94, %s110
      %p112 = scmp.eq.s32.totalorder %s18, 0
      %p113 = por %p111, %p112
      %s114 = ssub.s32 %s12, %s19
      %p115 = scmp.eq.s32.totalorder %s114, 0
      %s117 = sadd.s32 %s116, 1
      %s118 = scalar_select %p115, %s116, %s117
      %p121 = pneg %p115
      %p122 = scmp.eq.s32.totalorder %s12, 1
      %p123 = por %p121, %p122
      %p124 = scmp.ne.s32.totalorder %s116, %s119
      %p125 = scmp.eq.s32.totalorder %s12, 0
      %p126 = por %p124, %p125
      %p127 = scmp.ne.s32.totalorder %s116, %s119
      %p128 = scmp.eq.s32.totalorder %s17, 1
      %p129 = por %p127, %p128
      %p130 = scmp.ne.s32.totalorder %s119, %s120
      %p131 = scmp.eq.s32.totalorder %s17, 0
      %p132 = por %p130, %p131
      %p133 = scmp.ne.s32.totalorder %s119, %s120
      %p134 = scmp.eq.s32.totalorder %s18, 1
      %p135 = por %p133, %p134
      %p137 = scmp.ne.s32.totalorder %s120, %s136
      %p138 = scmp.eq.s32.totalorder %s18, 0
      %p139 = por %p137, %p138
      %p140 = scmp.le.s32.totalorder 1, %s12
      %p141 = scmp.lt.s32.totalorder %s12, 3
      %p142 = pnand %p140, %p141
      %p143 = pneg %p142
      // Predicated region
      $region9: #{cnn_forward.8} parent=5 // pred_check
        _
      $region10: #{cnn_forward.8} parent=5 // pred_check_branch
        %145 = sbr.rel (%p142) target = $region12
      $region11: #{cnn_forward.8} parent=5 // pred_region
        %s146 = ssub.s32 %s12, 1
        // Predicated region
        $region13: #{cnn_forward.8} parent=11 // pred_check
          %p147 = pneg %p59
        $region14: #{cnn_forward.8} parent=11 // pred_check_branch
          %149 = sbr.rel (%p147) target = $region16
        $region15: #{cnn_forward.8} parent=11 // pred_region
          _
        $region16: #{cnn_forward.8} parent=11 // pred_fallthru
          _
        // Predicated region
        $region17: #{cnn_forward.8} parent=11 // pred_check
          %p150 = pneg %p80
        $region18: #{cnn_forward.8} parent=11 // pred_check_branch
          %152 = sbr.rel (%p150) target = $region20
        $region19: #{cnn_forward.8} parent=11 // pred_region
          %154 = vsyncadd [#allocation3], 0
          %s156 = sshll.u32 %s2, 4
          %s157 = int_to_ptr.hbm [resolvable:$true] %s156
          %s158 = sshll.u32 [#allocation2], 4
          %s159 = int_to_ptr.vmem [resolvable:$true] %s158
          %161 = dma.hbm_to_vmem [thread:$0]  %s157, 16, %s159, [#allocation3]
        $region20: #{cnn_forward.8} parent=11 // pred_fallthru
          _
      $region12: #{cnn_forward.8} parent=5 // pred_fallthru
        _
      %p162 = scmp.lt.s32.totalorder %s12, 2
      // Predicated region
      $region21: #{cnn_forward.8} parent=5 // pred_check
        %p163 = pneg %p162
      $region22: #{cnn_forward.8} parent=5 // pred_check_branch
        %165 = sbr.rel (%p163) target = $region24
      $region23: #{cnn_forward.8} parent=5 // pred_region
        // Predicated region
        $region25: #{cnn_forward.8} parent=23 // pred_check
          %p166 = pneg %p32
        $region26: #{cnn_forward.8} parent=23 // pred_check_branch
          %168 = sbr.rel (%p166) target = $region28
        $region27: #{cnn_forward.8} parent=23 // pred_region
          %s169 = smul.u32 128, %s12
          %p170 = scmp.lt.s32.totalorder %s169, 255
          %s171 = scalar_select %p170, %s169, 255
          %s172 = smul.addr %s171, 4
          %s173 = scalar_lea.vmem %s0, %s172
          %s174 = smul.u32 128, %s12
        $region28: #{cnn_forward.8} parent=23 // pred_fallthru
          _
      $region24: #{cnn_forward.8} parent=5 // pred_fallthru
        _
      %p175 = scmp.le.s32.totalorder 1, %s12
      %p176 = scmp.lt.s32.totalorder %s12, 3
      %p177 = pnand %p175, %p176
      %p178 = pneg %p177
      // Predicated region
      $region29: #{cnn_forward.8} parent=5 // pred_check
        _
      $region30: #{cnn_forward.8} parent=5 // pred_check_branch
        %180 = sbr.rel (%p177) target = $region32
      $region31: #{cnn_forward.8} parent=5 // pred_region
        %s181 = ssub.s32 %s12, 1
        // Predicated region
        $region33: #{cnn_forward.8} parent=31 // pred_check
          %p182 = pneg %p80
        $region34: #{cnn_forward.8} parent=31 // pred_check_branch
          %184 = sbr.rel (%p182) target = $region36
        $region35: #{cnn_forward.8} parent=31 // pred_region
          %186 = dma.done [#allocation3], 16
        $region36: #{cnn_forward.8} parent=31 // pred_fallthru
          _
        %s187 = smul.u32 128, %s17
        %p188 = scmp.lt.s32.totalorder %s187, 255
        %s189 = scalar_select %p188, %s187, 255
        %s190 = smul.addr %s189, 4
        %s191 = scalar_lea.vmem %s0, %s190
        %p192 = pneg %p38
        %p193 = pneg %p35
        %p194 = pneg %p59
        %p195 = pneg %p56
        %p196 = pneg %p80
        %p197 = pneg %p77
        %p198 = pneg %p106
        %p199 = pneg %p103
        %s200 = smul.u32 128, %s17
        %p201 = scmp.lt.s32.totalorder %s200, 255
        %s202 = scalar_select %p201, %s200, 255
        %s203 = smul.addr %s202, 4
        %s204 = scalar_lea.vmem %s3, %s203
        %p205 = pneg %p132
        %p206 = pneg %p129
        %p207 = scmp.lt.s32.totalorder %s17, 1
        %s208 = scalar_select %p207, %s17, 1
        %s209 = smul.addr %s208, 2
        %s210 = scalar_lea.vmem %s4, %s209
        %s211 = smul.u32 128, %s17
        %p212 = scmp.lt.s32.totalorder %s211, 255
        %s213 = scalar_select %p212, %s211, 255
        %s214 = smul.addr %s213, 4
        %s215 = scalar_lea.vmem %s0, %s214
        %s216 = smul.u32 128, %s17
        %s217 = smul.u32 128, %s17
        %p218 = scmp.lt.s32.totalorder %s217, 255
        %s219 = scalar_select %p218, %s217, 255
        %s220 = smul.addr %s219, 4
        %s221 = scalar_lea.vmem %s3, %s220
        %s222 = smul.u32 128, %s17
        %p223 = scmp.lt.s32.totalorder %s17, 1
        %s224 = scalar_select %p223, %s17, 1
        %s225 = smul.addr %s224, 2
        %s226 = scalar_lea.vmem %s4, %s225
        %v228 = vld [vmem:[%s215] sm:$0xf]
        %v229 = vld [vmem:[%s215 + $0x4] sm:$0xf]
        %v230 = vld [vmem:[%s215 + $0x8] sm:$0xf]
        %v231 = vld [vmem:[%s215 + $0xc] sm:$0xf]
        %v232 = vld [vmem:[%s215 + $0x10] sm:$0xf]
        %v233 = vld [vmem:[%s215 + $0x14] sm:$0xf]
        %v234 = vld [vmem:[%s215 + $0x18] sm:$0xf]
        %v235 = vld [vmem:[%s215 + $0x1c] sm:$0xf]
        %v236 = vld [vmem:[%s215 + $0x20] sm:$0xf]
        %v237 = vld [vmem:[%s215 + $0x24] sm:$0xf]
        %v238 = vld [vmem:[%s215 + $0x28] sm:$0xf]
        %v239 = vld [vmem:[%s215 + $0x2c] sm:$0xf]
        %v240 = vld [vmem:[%s215 + $0x30] sm:$0xf]
        %v241 = vld [vmem:[%s215 + $0x34] sm:$0xf]
        %v242 = vld [vmem:[%s215 + $0x38] sm:$0xf]
        %v243 = vld [vmem:[%s215 + $0x3c] sm:$0xf]
        %v244 = vld [vmem:[%s215 + $0x40] sm:$0xf]
        %v245 = vld [vmem:[%s215 + $0x44] sm:$0xf]
        %v246 = vld [vmem:[%s215 + $0x48] sm:$0xf]
        %v247 = vld [vmem:[%s215 + $0x4c] sm:$0xf]
        %v248 = vld [vmem:[%s215 + $0x50] sm:$0xf]
        %v249 = vld [vmem:[%s215 + $0x54] sm:$0xf]
        %v250 = vld [vmem:[%s215 + $0x58] sm:$0xf]
        %v251 = vld [vmem:[%s215 + $0x5c] sm:$0xf]
        %v252 = vld [vmem:[%s215 + $0x60] sm:$0xf]
        %v253 = vld [vmem:[%s215 + $0x64] sm:$0xf]
        %v254 = vld [vmem:[%s215 + $0x68] sm:$0xf]
        %v255 = vld [vmem:[%s215 + $0x6c] sm:$0xf]
        %v256 = vld [vmem:[%s215 + $0x70] sm:$0xf]
        %v257 = vld [vmem:[%s215 + $0x74] sm:$0xf]
        %v258 = vld [vmem:[%s215 + $0x78] sm:$0xf]
        %v259 = vld [vmem:[%s215 + $0x7c] sm:$0xf]
        %v260 = vld [vmem:[%s215 + $0x80] sm:$0xf]
        %v261 = vld [vmem:[%s215 + $0x84] sm:$0xf]
        %v262 = vld [vmem:[%s215 + $0x88] sm:$0xf]
        %v263 = vld [vmem:[%s215 + $0x8c] sm:$0xf]
        %v264 = vld [vmem:[%s215 + $0x90] sm:$0xf]
        %v265 = vld [vmem:[%s215 + $0x94] sm:$0xf]
        %v266 = vld [vmem:[%s215 + $0x98] sm:$0xf]
        %v267 = vld [vmem:[%s215 + $0x9c] sm:$0xf]
        %v268 = vld [vmem:[%s215 + $0xa0] sm:$0xf]
        %v269 = vld [vmem:[%s215 + $0xa4] sm:$0xf]
        %v270 = vld [vmem:[%s215 + $0xa8] sm:$0xf]
        %v271 = vld [vmem:[%s215 + $0xac] sm:$0xf]
        %v272 = vld [vmem:[%s215 + $0xb0] sm:$0xf]
        %v273 = vld [vmem:[%s215 + $0xb4] sm:$0xf]
        %v274 = vld [vmem:[%s215 + $0xb8] sm:$0xf]
        %v275 = vld [vmem:[%s215 + $0xbc] sm:$0xf]
        %v276 = vld [vmem:[%s215 + $0xc0] sm:$0xf]
        %v277 = vld [vmem:[%s215 + $0xc4] sm:$0xf]
        %v278 = vld [vmem:[%s215 + $0xc8] sm:$0xf]
        %v279 = vld [vmem:[%s215 + $0xcc] sm:$0xf]
        %v280 = vld [vmem:[%s215 + $0xd0] sm:$0xf]
        %v281 = vld [vmem:[%s215 + $0xd4] sm:$0xf]
        %v282 = vld [vmem:[%s215 + $0xd8] sm:$0xf]
        %v283 = vld [vmem:[%s215 + $0xdc] sm:$0xf]
        %v284 = vld [vmem:[%s215 + $0xe0] sm:$0xf]
        %v285 = vld [vmem:[%s215 + $0xe4] sm:$0xf]
        %v286 = vld [vmem:[%s215 + $0xe8] sm:$0xf]
        %v287 = vld [vmem:[%s215 + $0xec] sm:$0xf]
        %v288 = vld [vmem:[%s215 + $0xf0] sm:$0xf]
        %v289 = vld [vmem:[%s215 + $0xf4] sm:$0xf]
        %v290 = vld [vmem:[%s215 + $0xf8] sm:$0xf]
        %v291 = vld [vmem:[%s215 + $0xfc] sm:$0xf]
        %v292 = vld [vmem:[%s215 + $0x100] sm:$0xf]
        %v293 = vld [vmem:[%s215 + $0x104] sm:$0xf]
        %v294 = vld [vmem:[%s215 + $0x108] sm:$0xf]
        %v295 = vld [vmem:[%s215 + $0x10c] sm:$0xf]
        %v296 = vld [vmem:[%s215 + $0x110] sm:$0xf]
        %v297 = vld [vmem:[%s215 + $0x114] sm:$0xf]
        %v298 = vld [vmem:[%s215 + $0x118] sm:$0xf]
        %v299 = vld [vmem:[%s215 + $0x11c] sm:$0xf]
        %v300 = vld [vmem:[%s215 + $0x120] sm:$0xf]
        %v301 = vld [vmem:[%s215 + $0x124] sm:$0xf]
        %v302 = vld [vmem:[%s215 + $0x128] sm:$0xf]
        %v303 = vld [vmem:[%s215 + $0x12c] sm:$0xf]
        %v304 = vld [vmem:[%s215 + $0x130] sm:$0xf]
        %v305 = vld [vmem:[%s215 + $0x134] sm:$0xf]
        %v306 = vld [vmem:[%s215 + $0x138] sm:$0xf]
        %v307 = vld [vmem:[%s215 + $0x13c] sm:$0xf]
        %v308 = vld [vmem:[%s215 + $0x140] sm:$0xf]
        %v309 = vld [vmem:[%s215 + $0x144] sm:$0xf]
        %v310 = vld [vmem:[%s215 + $0x148] sm:$0xf]
        %v311 = vld [vmem:[%s215 + $0x14c] sm:$0xf]
        %v312 = vld [vmem:[%s215 + $0x150] sm:$0xf]
        %v313 = vld [vmem:[%s215 + $0x154] sm:$0xf]
        %v314 = vld [vmem:[%s215 + $0x158] sm:$0xf]
        %v315 = vld [vmem:[%s215 + $0x15c] sm:$0xf]
        %v316 = vld [vmem:[%s215 + $0x160] sm:$0xf]
        %v317 = vld [vmem:[%s215 + $0x164] sm:$0xf]
        %v318 = vld [vmem:[%s215 + $0x168] sm:$0xf]
        %v319 = vld [vmem:[%s215 + $0x16c] sm:$0xf]
        %v320 = vld [vmem:[%s215 + $0x170] sm:$0xf]
        %v321 = vld [vmem:[%s215 + $0x174] sm:$0xf]
        %v322 = vld [vmem:[%s215 + $0x178] sm:$0xf]
        %v323 = vld [vmem:[%s215 + $0x17c] sm:$0xf]
        %v324 = vld [vmem:[%s215 + $0x180] sm:$0xf]
        %v325 = vld [vmem:[%s215 + $0x184] sm:$0xf]
        %v326 = vld [vmem:[%s215 + $0x188] sm:$0xf]
        %v327 = vld [vmem:[%s215 + $0x18c] sm:$0xf]
        %v328 = vld [vmem:[%s215 + $0x190] sm:$0xf]
        %v329 = vld [vmem:[%s215 + $0x194] sm:$0xf]
        %v330 = vld [vmem:[%s215 + $0x198] sm:$0xf]
        %v331 = vld [vmem:[%s215 + $0x19c] sm:$0xf]
        %v332 = vld [vmem:[%s215 + $0x1a0] sm:$0xf]
        %v333 = vld [vmem:[%s215 + $0x1a4] sm:$0xf]
        %v334 = vld [vmem:[%s215 + $0x1a8] sm:$0xf]
        %v335 = vld [vmem:[%s215 + $0x1ac] sm:$0xf]
        %v336 = vld [vmem:[%s215 + $0x1b0] sm:$0xf]
        %v337 = vld [vmem:[%s215 + $0x1b4] sm:$0xf]
        %v338 = vld [vmem:[%s215 + $0x1b8] sm:$0xf]
        %v339 = vld [vmem:[%s215 + $0x1bc] sm:$0xf]
        %v340 = vld [vmem:[%s215 + $0x1c0] sm:$0xf]
        %v341 = vld [vmem:[%s215 + $0x1c4] sm:$0xf]
        %v342 = vld [vmem:[%s215 + $0x1c8] sm:$0xf]
        %v343 = vld [vmem:[%s215 + $0x1cc] sm:$0xf]
        %v344 = vld [vmem:[%s215 + $0x1d0] sm:$0xf]
        %v345 = vld [vmem:[%s215 + $0x1d4] sm:$0xf]
        %v346 = vld [vmem:[%s215 + $0x1d8] sm:$0xf]
        %v347 = vld [vmem:[%s215 + $0x1dc] sm:$0xf]
        %v348 = vld [vmem:[%s215 + $0x1e0] sm:$0xf]
        %v349 = vld [vmem:[%s215 + $0x1e4] sm:$0xf]
        %v350 = vld [vmem:[%s215 + $0x1e8] sm:$0xf]
        %v351 = vld [vmem:[%s215 + $0x1ec] sm:$0xf]
        %v352 = vld [vmem:[%s215 + $0x1f0] sm:$0xf]
        %v353 = vld [vmem:[%s215 + $0x1f4] sm:$0xf]
        %v354 = vld [vmem:[%s215 + $0x1f8] sm:$0xf]
        %v355 = vld [vmem:[%s215 + $0x1fc] sm:$0xf]
        %v356 = vld [vmem:[%s1] sm:$0xf]
        %v357 = vld [vmem:[%s1 + $0x4] sm:$0x1]
        %v358 = vld [vmem:[#allocation2] sm:$0x1]
        %v360 = vperm.slane %v358, 0
        %v490 = vunpack.c.l.b16 %v228
        %v491 = vunpack.c.l.b16 %v229
        %v492 = vunpack.c.l.b16 %v230
        %v493 = vunpack.c.l.b16 %v231
        %v494 = vunpack.c.l.b16 %v232
        %v495 = vunpack.c.l.b16 %v233
        %v496 = vunpack.c.l.b16 %v234
        %v497 = vunpack.c.l.b16 %v235
        %v498 = vunpack.c.l.b16 %v236
        %v499 = vunpack.c.l.b16 %v237
        %v500 = vunpack.c.l.b16 %v238
        %v501 = vunpack.c.l.b16 %v239
        %v502 = vunpack.c.l.b16 %v240
        %v503 = vunpack.c.l.b16 %v241
        %v504 = vunpack.c.l.b16 %v242
        %v505 = vunpack.c.l.b16 %v243
        %v506 = vunpack.c.l.b16 %v244
        %v507 = vunpack.c.l.b16 %v245
        %v508 = vunpack.c.l.b16 %v246
        %v509 = vunpack.c.l.b16 %v247
        %v510 = vunpack.c.l.b16 %v248
        %v511 = vunpack.c.l.b16 %v249
        %v512 = vunpack.c.l.b16 %v250
        %v513 = vunpack.c.l.b16 %v251
        %v514 = vunpack.c.l.b16 %v252
        %v515 = vunpack.c.l.b16 %v253
        %v516 = vunpack.c.l.b16 %v254
        %v517 = vunpack.c.l.b16 %v255
        %v518 = vunpack.c.l.b16 %v256
        %v519 = vunpack.c.l.b16 %v257
        %v520 = vunpack.c.l.b16 %v258
        %v521 = vunpack.c.l.b16 %v259
        %v522 = vunpack.c.l.b16 %v260
        %v523 = vunpack.c.l.b16 %v261
        %v524 = vunpack.c.l.b16 %v262
        %v525 = vunpack.c.l.b16 %v263
        %v526 = vunpack.c.l.b16 %v264
        %v527 = vunpack.c.l.b16 %v265
        %v528 = vunpack.c.l.b16 %v266
        %v529 = vunpack.c.l.b16 %v267
        %v530 = vunpack.c.l.b16 %v268
        %v531 = vunpack.c.l.b16 %v269
        %v532 = vunpack.c.l.b16 %v270
        %v533 = vunpack.c.l.b16 %v271
        %v534 = vunpack.c.l.b16 %v272
        %v535 = vunpack.c.l.b16 %v273
        %v536 = vunpack.c.l.b16 %v274
        %v537 = vunpack.c.l.b16 %v275
        %v538 = vunpack.c.l.b16 %v276
        %v539 = vunpack.c.l.b16 %v277
        %v540 = vunpack.c.l.b16 %v278
        %v541 = vunpack.c.l.b16 %v279
        %v542 = vunpack.c.l.b16 %v280
        %v543 = vunpack.c.l.b16 %v281
        %v544 = vunpack.c.l.b16 %v282
        %v545 = vunpack.c.l.b16 %v283
        %v546 = vunpack.c.l.b16 %v284
        %v547 = vunpack.c.l.b16 %v285
        %v548 = vunpack.c.l.b16 %v286
        %v549 = vunpack.c.l.b16 %v287
        %v550 = vunpack.c.l.b16 %v288
        %v551 = vunpack.c.l.b16 %v289
        %v552 = vunpack.c.l.b16 %v290
        %v553 = vunpack.c.l.b16 %v291
        %v554 = vunpack.c.l.b16 %v292
        %v555 = vunpack.c.l.b16 %v293
        %v556 = vunpack.c.l.b16 %v294
        %v557 = vunpack.c.l.b16 %v295
        %v558 = vunpack.c.l.b16 %v296
        %v559 = vunpack.c.l.b16 %v297
        %v560 = vunpack.c.l.b16 %v298
        %v561 = vunpack.c.l.b16 %v299
        %v562 = vunpack.c.l.b16 %v300
        %v563 = vunpack.c.l.b16 %v301
        %v564 = vunpack.c.l.b16 %v302
        %v565 = vunpack.c.l.b16 %v303
        %v566 = vunpack.c.l.b16 %v304
        %v567 = vunpack.c.l.b16 %v305
        %v568 = vunpack.c.l.b16 %v306
        %v569 = vunpack.c.l.b16 %v307
        %v570 = vunpack.c.l.b16 %v308
        %v571 = vunpack.c.l.b16 %v309
        %v572 = vunpack.c.l.b16 %v310
        %v573 = vunpack.c.l.b16 %v311
        %v574 = vunpack.c.l.b16 %v312
        %v575 = vunpack.c.l.b16 %v313
        %v576 = vunpack.c.l.b16 %v314
        %v577 = vunpack.c.l.b16 %v315
        %v578 = vunpack.c.l.b16 %v316
        %v579 = vunpack.c.l.b16 %v317
        %v580 = vunpack.c.l.b16 %v318
        %v581 = vunpack.c.l.b16 %v319
        %v582 = vunpack.c.l.b16 %v320
        %v583 = vunpack.c.l.b16 %v321
        %v584 = vunpack.c.l.b16 %v322
        %v585 = vunpack.c.l.b16 %v323
        %v586 = vunpack.c.l.b16 %v324
        %v587 = vunpack.c.l.b16 %v325
        %v588 = vunpack.c.l.b16 %v326
        %v589 = vunpack.c.l.b16 %v327
        %v590 = vunpack.c.l.b16 %v328
        %v591 = vunpack.c.l.b16 %v329
        %v592 = vunpack.c.l.b16 %v330
        %v593 = vunpack.c.l.b16 %v331
        %v594 = vunpack.c.l.b16 %v332
        %v595 = vunpack.c.l.b16 %v333
        %v596 = vunpack.c.l.b16 %v334
        %v597 = vunpack.c.l.b16 %v335
        %v598 = vunpack.c.l.b16 %v336
        %v599 = vunpack.c.l.b16 %v337
        %v600 = vunpack.c.l.b16 %v338
        %v601 = vunpack.c.l.b16 %v339
        %v602 = vunpack.c.l.b16 %v340
        %v603 = vunpack.c.l.b16 %v341
        %v604 = vunpack.c.l.b16 %v342
        %v605 = vunpack.c.l.b16 %v343
        %v606 = vunpack.c.l.b16 %v344
        %v607 = vunpack.c.l.b16 %v345
        %v608 = vunpack.c.l.b16 %v346
        %v609 = vunpack.c.l.b16 %v347
        %v610 = vunpack.c.l.b16 %v348
        %v611 = vunpack.c.l.b16 %v349
        %v612 = vunpack.c.l.b16 %v350
        %v613 = vunpack.c.l.b16 %v351
        %v614 = vunpack.c.l.b16 %v352
        %v615 = vunpack.c.l.b16 %v353
        %v616 = vunpack.c.l.b16 %v354
        %v617 = vunpack.c.l.b16 %v355
        %v618 = vpack.c.b16 %v491, %v490
        %v619 = vpack.c.b16 %v493, %v492
        %v620 = vpack.c.b16 %v495, %v494
        %v621 = vpack.c.b16 %v497, %v496
        %v622 = vpack.c.b16 %v499, %v498
        %v623 = vpack.c.b16 %v501, %v500
        %v624 = vpack.c.b16 %v503, %v502
        %v625 = vpack.c.b16 %v505, %v504
        %v626 = vpack.c.b16 %v507, %v506
        %v627 = vpack.c.b16 %v509, %v508
        %v628 = vpack.c.b16 %v511, %v510
        %v629 = vpack.c.b16 %v513, %v512
        %v630 = vpack.c.b16 %v515, %v514
        %v631 = vpack.c.b16 %v517, %v516
        %v632 = vpack.c.b16 %v519, %v518
        %v633 = vpack.c.b16 %v521, %v520
        %v634 = vpack.c.b16 %v523, %v522
        %v635 = vpack.c.b16 %v525, %v524
        %v636 = vpack.c.b16 %v527, %v526
        %v637 = vpack.c.b16 %v529, %v528
        %v638 = vpack.c.b16 %v531, %v530
        %v639 = vpack.c.b16 %v533, %v532
        %v640 = vpack.c.b16 %v535, %v534
        %v641 = vpack.c.b16 %v537, %v536
        %v642 = vpack.c.b16 %v539, %v538
        %v643 = vpack.c.b16 %v541, %v540
        %v644 = vpack.c.b16 %v543, %v542
        %v645 = vpack.c.b16 %v545, %v544
        %v646 = vpack.c.b16 %v547, %v546
        %v647 = vpack.c.b16 %v549, %v548
        %v648 = vpack.c.b16 %v551, %v550
        %v649 = vpack.c.b16 %v553, %v552
        %v650 = vpack.c.b16 %v555, %v554
        %v651 = vpack.c.b16 %v557, %v556
        %v652 = vpack.c.b16 %v559, %v558
        %v653 = vpack.c.b16 %v561, %v560
        %v654 = vpack.c.b16 %v563, %v562
        %v655 = vpack.c.b16 %v565, %v564
        %v656 = vpack.c.b16 %v567, %v566
        %v657 = vpack.c.b16 %v569, %v568
        %v658 = vpack.c.b16 %v571, %v570
        %v659 = vpack.c.b16 %v573, %v572
        %v660 = vpack.c.b16 %v575, %v574
        %v661 = vpack.c.b16 %v577, %v576
        %v662 = vpack.c.b16 %v579, %v578
        %v663 = vpack.c.b16 %v581, %v580
        %v664 = vpack.c.b16 %v583, %v582
        %v665 = vpack.c.b16 %v585, %v584
        %v666 = vpack.c.b16 %v587, %v586
        %v667 = vpack.c.b16 %v589, %v588
        %v668 = vpack.c.b16 %v591, %v590
        %v669 = vpack.c.b16 %v593, %v592
        %v670 = vpack.c.b16 %v595, %v594
        %v671 = vpack.c.b16 %v597, %v596
        %v672 = vpack.c.b16 %v599, %v598
        %v673 = vpack.c.b16 %v601, %v600
        %v674 = vpack.c.b16 %v603, %v602
        %v675 = vpack.c.b16 %v605, %v604
        %v676 = vpack.c.b16 %v607, %v606
        %v677 = vpack.c.b16 %v609, %v608
        %v678 = vpack.c.b16 %v611, %v610
        %v679 = vpack.c.b16 %v613, %v612
        %v680 = vpack.c.b16 %v615, %v614
        %v681 = vpack.c.b16 %v617, %v616
        %v684 = vunpack.c.l.b16 %v356
        %v685 = vunpack.c.l.b16 %v357
        %v686 = vpack.c.b16 %v685, %v684
        %vm687 = vcmask 72704
        %v689 = vsel %vm687, %v618, 0
        %v692 = vsel %vm687, %v619, 0
        %v695 = vsel %vm687, %v620, 0
        %v698 = vsel %vm687, %v621, 0
        %v701 = vsel %vm687, %v622, 0
        %v704 = vsel %vm687, %v623, 0
        %v707 = vsel %vm687, %v624, 0
        %v710 = vsel %vm687, %v625, 0
        %v713 = vsel %vm687, %v626, 0
        %v716 = vsel %vm687, %v627, 0
        %v719 = vsel %vm687, %v628, 0
        %v722 = vsel %vm687, %v629, 0
        %v725 = vsel %vm687, %v630, 0
        %v728 = vsel %vm687, %v631, 0
        %v731 = vsel %vm687, %v632, 0
        %v734 = vsel %vm687, %v633, 0
        %v737 = vsel %vm687, %v634, 0
        %v740 = vsel %vm687, %v635, 0
        %v743 = vsel %vm687, %v636, 0
        %v746 = vsel %vm687, %v637, 0
        %v749 = vsel %vm687, %v638, 0
        %v752 = vsel %vm687, %v639, 0
        %v755 = vsel %vm687, %v640, 0
        %v758 = vsel %vm687, %v641, 0
        %v761 = vsel %vm687, %v642, 0
        %v764 = vsel %vm687, %v643, 0
        %v767 = vsel %vm687, %v644, 0
        %v770 = vsel %vm687, %v645, 0
        %v773 = vsel %vm687, %v646, 0
        %v776 = vsel %vm687, %v647, 0
        %v779 = vsel %vm687, %v648, 0
        %v782 = vsel %vm687, %v649, 0
        %v785 = vsel %vm687, %v650, 0
        %v788 = vsel %vm687, %v651, 0
        %v791 = vsel %vm687, %v652, 0
        %v794 = vsel %vm687, %v653, 0
        %v797 = vsel %vm687, %v654, 0
        %v800 = vsel %vm687, %v655, 0
        %v803 = vsel %vm687, %v656, 0
        %v806 = vsel %vm687, %v657, 0
        %v809 = vsel %vm687, %v658, 0
        %v812 = vsel %vm687, %v659, 0
        %v815 = vsel %vm687, %v660, 0
        %v818 = vsel %vm687, %v661, 0
        %v821 = vsel %vm687, %v662, 0
        %v824 = vsel %vm687, %v663, 0
        %v827 = vsel %vm687, %v664, 0
        %v830 = vsel %vm687, %v665, 0
        %v833 = vsel %vm687, %v666, 0
        %v836 = vsel %vm687, %v667, 0
        %v839 = vsel %vm687, %v668, 0
        %v842 = vsel %vm687, %v669, 0
        %v845 = vsel %vm687, %v670, 0
        %v848 = vsel %vm687, %v671, 0
        %v851 = vsel %vm687, %v672, 0
        %v854 = vsel %vm687, %v673, 0
        %v857 = vsel %vm687, %v674, 0
        %v860 = vsel %vm687, %v675, 0
        %v863 = vsel %vm687, %v676, 0
        %v866 = vsel %vm687, %v677, 0
        %v869 = vsel %vm687, %v678, 0
        %v872 = vsel %vm687, %v679, 0
        %v875 = vsel %vm687, %v680, 0
        %v878 = vsel %vm687, %v681, 0
        %vm880 = vcmask 1043456
        %vm881 = vcmask 1044480
        %v882 = vsel %vm880, 4294967295, 65535
        %v883 = vsel %vm881, %v882, 0
        %v885 = vand.u32 %v686, %v883
        %887 = vmatpush.bf16.msra.mxu0 0
        %888 = vmatpush.bf16.msra.mxu0 0
        %889 = vmatpush.bf16.msra.mxu0 0
        %890 = vmatpush.bf16.msra.mxu0 0
        %891 = vmatpush.bf16.msra.mxu0 0
        %892 = vmatpush.bf16.msra.mxu0 0
        %893 = vmatpush.bf16.msra.mxu0 0
        %894 = vmatpush.bf16.msra.mxu0 %v885
        %895 = vmatmul.bf16.gmra.mxu0 %v689
        %v896 = vpop.f32.mrf.mxu0
        %v897 = vadd.f32 %v360, %v896
        %v898 = vpop.f32.mrf.mxu0
        %v899 = vadd.f32 %v360, %v898
        %900 = vmatmul.bf16.gmra.mxu0 %v692
        %v901 = vpop.f32.mrf.mxu0
        %v902 = vadd.f32 %v360, %v901
        %v903 = vpop.f32.mrf.mxu0
        %v904 = vadd.f32 %v360, %v903
        %905 = vmatmul.bf16.gmra.mxu0 %v695
        %v906 = vpop.f32.mrf.mxu0
        %v907 = vadd.f32 %v360, %v906
        %v908 = vpop.f32.mrf.mxu0
        %v909 = vadd.f32 %v360, %v908
        %910 = vmatmul.bf16.gmra.mxu0 %v698
        %v911 = vpop.f32.mrf.mxu0
        %v912 = vadd.f32 %v360, %v911
        %v913 = vpop.f32.mrf.mxu0
        %v914 = vadd.f32 %v360, %v913
        %915 = vmatmul.bf16.gmra.mxu0 %v701
        %v916 = vpop.f32.mrf.mxu0
        %v917 = vadd.f32 %v360, %v916
        %v918 = vpop.f32.mrf.mxu0
        %v919 = vadd.f32 %v360, %v918
        %920 = vmatmul.bf16.gmra.mxu0 %v704
        %v921 = vpop.f32.mrf.mxu0
        %v922 = vadd.f32 %v360, %v921
        %v923 = vpop.f32.mrf.mxu0
        %v924 = vadd.f32 %v360, %v923
        %925 = vmatmul.bf16.gmra.mxu0 %v707
        %v926 = vpop.f32.mrf.mxu0
        %v927 = vadd.f32 %v360, %v926
        %v928 = vpop.f32.mrf.mxu0
        %v929 = vadd.f32 %v360, %v928
        %930 = vmatmul.bf16.gmra.mxu0 %v710
        %v931 = vpop.f32.mrf.mxu0
        %v932 = vadd.f32 %v360, %v931
        %v933 = vpop.f32.mrf.mxu0
        %v934 = vadd.f32 %v360, %v933
        %935 = vmatmul.bf16.gmra.mxu0 %v713
        %v936 = vpop.f32.mrf.mxu0
        %v937 = vadd.f32 %v360, %v936
        %v938 = vpop.f32.mrf.mxu0
        %v939 = vadd.f32 %v360, %v938
        %940 = vmatmul.bf16.gmra.mxu0 %v716
        %v941 = vpop.f32.mrf.mxu0
        %v942 = vadd.f32 %v360, %v941
        %v943 = vpop.f32.mrf.mxu0
        %v944 = vadd.f32 %v360, %v943
        %945 = vmatmul.bf16.gmra.mxu0 %v719
        %v946 = vpop.f32.mrf.mxu0
        %v947 = vadd.f32 %v360, %v946
        %v948 = vpop.f32.mrf.mxu0
        %v949 = vadd.f32 %v360, %v948
        %950 = vmatmul.bf16.gmra.mxu0 %v722
        %v951 = vpop.f32.mrf.mxu0
        %v952 = vadd.f32 %v360, %v951
        %v953 = vpop.f32.mrf.mxu0
        %v954 = vadd.f32 %v360, %v953
        %955 = vmatmul.bf16.gmra.mxu0 %v725
        %v956 = vpop.f32.mrf.mxu0
        %v957 = vadd.f32 %v360, %v956
        %v958 = vpop.f32.mrf.mxu0
        %v959 = vadd.f32 %v360, %v958
        %960 = vmatmul.bf16.gmra.mxu0 %v728
        %v961 = vpop.f32.mrf.mxu0
        %v962 = vadd.f32 %v360, %v961
        %v963 = vpop.f32.mrf.mxu0
        %v964 = vadd.f32 %v360, %v963
        %965 = vmatmul.bf16.gmra.mxu0 %v731
        %v966 = vpop.f32.mrf.mxu0
        %v967 = vadd.f32 %v360, %v966
        %v968 = vpop.f32.mrf.mxu0
        %v969 = vadd.f32 %v360, %v968
        %970 = vmatmul.bf16.gmra.mxu0 %v734
        %v971 = vpop.f32.mrf.mxu0
        %v972 = vadd.f32 %v360, %v971
        %v973 = vpop.f32.mrf.mxu0
        %v974 = vadd.f32 %v360, %v973
        %975 = vmatmul.bf16.gmra.mxu0 %v737
        %v976 = vpop.f32.mrf.mxu0
        %v977 = vadd.f32 %v360, %v976
        %v978 = vpop.f32.mrf.mxu0
        %v979 = vadd.f32 %v360, %v978
        %980 = vmatmul.bf16.gmra.mxu0 %v740
        %v981 = vpop.f32.mrf.mxu0
        %v982 = vadd.f32 %v360, %v981
        %v983 = vpop.f32.mrf.mxu0
        %v984 = vadd.f32 %v360, %v983
        %985 = vmatmul.bf16.gmra.mxu0 %v743
        %v986 = vpop.f32.mrf.mxu0
        %v987 = vadd.f32 %v360, %v986
        %v988 = vpop.f32.mrf.mxu0
        %v989 = vadd.f32 %v360, %v988
        %990 = vmatmul.bf16.gmra.mxu0 %v746
        %v991 = vpop.f32.mrf.mxu0
        %v992 = vadd.f32 %v360, %v991
        %v993 = vpop.f32.mrf.mxu0
        %v994 = vadd.f32 %v360, %v993
        %995 = vmatmul.bf16.gmra.mxu0 %v749
        %v996 = vpop.f32.mrf.mxu0
        %v997 = vadd.f32 %v360, %v996
        %v998 = vpop.f32.mrf.mxu0
        %v999 = vadd.f32 %v360, %v998
        %1000 = vmatmul.bf16.gmra.mxu0 %v752
        %v1001 = vpop.f32.mrf.mxu0
        %v1002 = vadd.f32 %v360, %v1001
        %v1003 = vpop.f32.mrf.mxu0
        %v1004 = vadd.f32 %v360, %v1003
        %1005 = vmatmul.bf16.gmra.mxu0 %v755
        %v1006 = vpop.f32.mrf.mxu0
        %v1007 = vadd.f32 %v360, %v1006
        %v1008 = vpop.f32.mrf.mxu0
        %v1009 = vadd.f32 %v360, %v1008
        %1010 = vmatmul.bf16.gmra.mxu0 %v758
        %v1011 = vpop.f32.mrf.mxu0
        %v1012 = vadd.f32 %v360, %v1011
        %v1013 = vpop.f32.mrf.mxu0
        %v1014 = vadd.f32 %v360, %v1013
        %1015 = vmatmul.bf16.gmra.mxu0 %v761
        %v1016 = vpop.f32.mrf.mxu0
        %v1017 = vadd.f32 %v360, %v1016
        %v1018 = vpop.f32.mrf.mxu0
        %v1019 = vadd.f32 %v360, %v1018
        %1020 = vmatmul.bf16.gmra.mxu0 %v764
        %v1021 = vpop.f32.mrf.mxu0
        %v1022 = vadd.f32 %v360, %v1021
        %v1023 = vpop.f32.mrf.mxu0
        %v1024 = vadd.f32 %v360, %v1023
        %1025 = vmatmul.bf16.gmra.mxu0 %v767
        %v1026 = vpop.f32.mrf.mxu0
        %v1027 = vadd.f32 %v360, %v1026
        %v1028 = vpop.f32.mrf.mxu0
        %v1029 = vadd.f32 %v360, %v1028
        %1030 = vmatmul.bf16.gmra.mxu0 %v770
        %v1031 = vpop.f32.mrf.mxu0
        %v1032 = vadd.f32 %v360, %v1031
        %v1033 = vpop.f32.mrf.mxu0
        %v1034 = vadd.f32 %v360, %v1033
        %1035 = vmatmul.bf16.gmra.mxu0 %v773
        %v1036 = vpop.f32.mrf.mxu0
        %v1037 = vadd.f32 %v360, %v1036
        %v1038 = vpop.f32.mrf.mxu0
        %v1039 = vadd.f32 %v360, %v1038
        %1040 = vmatmul.bf16.gmra.mxu0 %v776
        %v1041 = vpop.f32.mrf.mxu0
        %v1042 = vadd.f32 %v360, %v1041
        %v1043 = vpop.f32.mrf.mxu0
        %v1044 = vadd.f32 %v360, %v1043
        %1045 = vmatmul.bf16.gmra.mxu0 %v779
        %v1046 = vpop.f32.mrf.mxu0
        %v1047 = vadd.f32 %v360, %v1046
        %v1048 = vpop.f32.mrf.mxu0
        %v1049 = vadd.f32 %v360, %v1048
        %1050 = vmatmul.bf16.gmra.mxu0 %v782
        %v1051 = vpop.f32.mrf.mxu0
        %v1052 = vadd.f32 %v360, %v1051
        %v1053 = vpop.f32.mrf.mxu0
        %v1054 = vadd.f32 %v360, %v1053
        %1055 = vmatmul.bf16.gmra.mxu0 %v785
        %v1056 = vpop.f32.mrf.mxu0
        %v1057 = vadd.f32 %v360, %v1056
        %v1058 = vpop.f32.mrf.mxu0
        %v1059 = vadd.f32 %v360, %v1058
        %1060 = vmatmul.bf16.gmra.mxu0 %v788
        %v1061 = vpop.f32.mrf.mxu0
        %v1062 = vadd.f32 %v360, %v1061
        %v1063 = vpop.f32.mrf.mxu0
        %v1064 = vadd.f32 %v360, %v1063
        %1065 = vmatmul.bf16.gmra.mxu0 %v791
        %v1066 = vpop.f32.mrf.mxu0
        %v1067 = vadd.f32 %v360, %v1066
        %v1068 = vpop.f32.mrf.mxu0
        %v1069 = vadd.f32 %v360, %v1068
        %1070 = vmatmul.bf16.gmra.mxu0 %v794
        %v1071 = vpop.f32.mrf.mxu0
        %v1072 = vadd.f32 %v360, %v1071
        %v1073 = vpop.f32.mrf.mxu0
        %v1074 = vadd.f32 %v360, %v1073
        %1075 = vmatmul.bf16.gmra.mxu0 %v797
        %v1076 = vpop.f32.mrf.mxu0
        %v1077 = vadd.f32 %v360, %v1076
        %v1078 = vpop.f32.mrf.mxu0
        %v1079 = vadd.f32 %v360, %v1078
        %1080 = vmatmul.bf16.gmra.mxu0 %v800
        %v1081 = vpop.f32.mrf.mxu0
        %v1082 = vadd.f32 %v360, %v1081
        %v1083 = vpop.f32.mrf.mxu0
        %v1084 = vadd.f32 %v360, %v1083
        %1085 = vmatmul.bf16.gmra.mxu0 %v803
        %v1086 = vpop.f32.mrf.mxu0
        %v1087 = vadd.f32 %v360, %v1086
        %v1088 = vpop.f32.mrf.mxu0
        %v1089 = vadd.f32 %v360, %v1088
        %1090 = vmatmul.bf16.gmra.mxu0 %v806
        %v1091 = vpop.f32.mrf.mxu0
        %v1092 = vadd.f32 %v360, %v1091
        %v1093 = vpop.f32.mrf.mxu0
        %v1094 = vadd.f32 %v360, %v1093
        %1095 = vmatmul.bf16.gmra.mxu0 %v809
        %v1096 = vpop.f32.mrf.mxu0
        %v1097 = vadd.f32 %v360, %v1096
        %v1098 = vpop.f32.mrf.mxu0
        %v1099 = vadd.f32 %v360, %v1098
        %1100 = vmatmul.bf16.gmra.mxu0 %v812
        %v1101 = vpop.f32.mrf.mxu0
        %v1102 = vadd.f32 %v360, %v1101
        %v1103 = vpop.f32.mrf.mxu0
        %v1104 = vadd.f32 %v360, %v1103
        %1105 = vmatmul.bf16.gmra.mxu0 %v815
        %v1106 = vpop.f32.mrf.mxu0
        %v1107 = vadd.f32 %v360, %v1106
        %v1108 = vpop.f32.mrf.mxu0
        %v1109 = vadd.f32 %v360, %v1108
        %1110 = vmatmul.bf16.gmra.mxu0 %v818
        %v1111 = vpop.f32.mrf.mxu0
        %v1112 = vadd.f32 %v360, %v1111
        %v1113 = vpop.f32.mrf.mxu0
        %v1114 = vadd.f32 %v360, %v1113
        %1115 = vmatmul.bf16.gmra.mxu0 %v821
        %v1116 = vpop.f32.mrf.mxu0
        %v1117 = vadd.f32 %v360, %v1116
        %v1118 = vpop.f32.mrf.mxu0
        %v1119 = vadd.f32 %v360, %v1118
        %1120 = vmatmul.bf16.gmra.mxu0 %v824
        %v1121 = vpop.f32.mrf.mxu0
        %v1122 = vadd.f32 %v360, %v1121
        %v1123 = vpop.f32.mrf.mxu0
        %v1124 = vadd.f32 %v360, %v1123
        %1125 = vmatmul.bf16.gmra.mxu0 %v827
        %v1126 = vpop.f32.mrf.mxu0
        %v1127 = vadd.f32 %v360, %v1126
        %v1128 = vpop.f32.mrf.mxu0
        %v1129 = vadd.f32 %v360, %v1128
        %1130 = vmatmul.bf16.gmra.mxu0 %v830
        %v1131 = vpop.f32.mrf.mxu0
        %v1132 = vadd.f32 %v360, %v1131
        %v1133 = vpop.f32.mrf.mxu0
        %v1134 = vadd.f32 %v360, %v1133
        %1135 = vmatmul.bf16.gmra.mxu0 %v833
        %v1136 = vpop.f32.mrf.mxu0
        %v1137 = vadd.f32 %v360, %v1136
        %v1138 = vpop.f32.mrf.mxu0
        %v1139 = vadd.f32 %v360, %v1138
        %1140 = vmatmul.bf16.gmra.mxu0 %v836
        %v1141 = vpop.f32.mrf.mxu0
        %v1142 = vadd.f32 %v360, %v1141
        %v1143 = vpop.f32.mrf.mxu0
        %v1144 = vadd.f32 %v360, %v1143
        %1145 = vmatmul.bf16.gmra.mxu0 %v839
        %v1146 = vpop.f32.mrf.mxu0
        %v1147 = vadd.f32 %v360, %v1146
        %v1148 = vpop.f32.mrf.mxu0
        %v1149 = vadd.f32 %v360, %v1148
        %1150 = vmatmul.bf16.gmra.mxu0 %v842
        %v1151 = vpop.f32.mrf.mxu0
        %v1152 = vadd.f32 %v360, %v1151
        %v1153 = vpop.f32.mrf.mxu0
        %v1154 = vadd.f32 %v360, %v1153
        %1155 = vmatmul.bf16.gmra.mxu0 %v845
        %v1156 = vpop.f32.mrf.mxu0
        %v1157 = vadd.f32 %v360, %v1156
        %v1158 = vpop.f32.mrf.mxu0
        %v1159 = vadd.f32 %v360, %v1158
        %1160 = vmatmul.bf16.gmra.mxu0 %v848
        %v1161 = vpop.f32.mrf.mxu0
        %v1162 = vadd.f32 %v360, %v1161
        %v1163 = vpop.f32.mrf.mxu0
        %v1164 = vadd.f32 %v360, %v1163
        %1165 = vmatmul.bf16.gmra.mxu0 %v851
        %v1166 = vpop.f32.mrf.mxu0
        %v1167 = vadd.f32 %v360, %v1166
        %v1168 = vpop.f32.mrf.mxu0
        %v1169 = vadd.f32 %v360, %v1168
        %1170 = vmatmul.bf16.gmra.mxu0 %v854
        %v1171 = vpop.f32.mrf.mxu0
        %v1172 = vadd.f32 %v360, %v1171
        %v1173 = vpop.f32.mrf.mxu0
        %v1174 = vadd.f32 %v360, %v1173
        %1175 = vmatmul.bf16.gmra.mxu0 %v857
        %v1176 = vpop.f32.mrf.mxu0
        %v1177 = vadd.f32 %v360, %v1176
        %v1178 = vpop.f32.mrf.mxu0
        %v1179 = vadd.f32 %v360, %v1178
        %1180 = vmatmul.bf16.gmra.mxu0 %v860
        %v1181 = vpop.f32.mrf.mxu0
        %v1182 = vadd.f32 %v360, %v1181
        %v1183 = vpop.f32.mrf.mxu0
        %v1184 = vadd.f32 %v360, %v1183
        %1185 = vmatmul.bf16.gmra.mxu0 %v863
        %v1186 = vpop.f32.mrf.mxu0
        %v1187 = vadd.f32 %v360, %v1186
        %v1188 = vpop.f32.mrf.mxu0
        %v1189 = vadd.f32 %v360, %v1188
        %1190 = vmatmul.bf16.gmra.mxu0 %v866
        %v1191 = vpop.f32.mrf.mxu0
        %v1192 = vadd.f32 %v360, %v1191
        %v1193 = vpop.f32.mrf.mxu0
        %v1194 = vadd.f32 %v360, %v1193
        %1195 = vmatmul.bf16.gmra.mxu0 %v869
        %v1196 = vpop.f32.mrf.mxu0
        %v1197 = vadd.f32 %v360, %v1196
        %v1198 = vpop.f32.mrf.mxu0
        %v1199 = vadd.f32 %v360, %v1198
        %1200 = vmatmul.bf16.gmra.mxu0 %v872
        %v1201 = vpop.f32.mrf.mxu0
        %v1202 = vadd.f32 %v360, %v1201
        %v1203 = vpop.f32.mrf.mxu0
        %v1204 = vadd.f32 %v360, %v1203
        %1205 = vmatmul.bf16.gmra.mxu0 %v875
        %v1206 = vpop.f32.mrf.mxu0
        %v1207 = vadd.f32 %v360, %v1206
        %v1208 = vpop.f32.mrf.mxu0
        %v1209 = vadd.f32 %v360, %v1208
        %1210 = vmatmul.bf16.gmra.mxu0 %v878
        %v1211 = vpop.f32.mrf.mxu0
        %v1212 = vadd.f32 %v360, %v1211
        %v1213 = vpop.f32.mrf.mxu0
        %v1214 = vadd.f32 %v360, %v1213
        %1215 = vdwg.mxu0
        %v1216 = vpack.c.bf16 %v897, %v897
        %v1217 = vpack.c.bf16 %v899, %v899
        %v1218 = vpack.c.bf16 %v902, %v902
        %v1219 = vpack.c.bf16 %v904, %v904
        %v1220 = vpack.c.bf16 %v907, %v907
        %v1221 = vpack.c.bf16 %v909, %v909
        %v1222 = vpack.c.bf16 %v912, %v912
        %v1223 = vpack.c.bf16 %v914, %v914
        %v1224 = vpack.c.bf16 %v917, %v917
        %v1225 = vpack.c.bf16 %v919, %v919
        %v1226 = vpack.c.bf16 %v922, %v922
        %v1227 = vpack.c.bf16 %v924, %v924
        %v1228 = vpack.c.bf16 %v927, %v927
        %v1229 = vpack.c.bf16 %v929, %v929
        %v1230 = vpack.c.bf16 %v932, %v932
        %v1231 = vpack.c.bf16 %v934, %v934
        %v1232 = vpack.c.bf16 %v937, %v937
        %v1233 = vpack.c.bf16 %v939, %v939
        %v1234 = vpack.c.bf16 %v942, %v942
        %v1235 = vpack.c.bf16 %v944, %v944
        %v1236 = vpack.c.bf16 %v947, %v947
        %v1237 = vpack.c.bf16 %v949, %v949
        %v1238 = vpack.c.bf16 %v952, %v952
        %v1239 = vpack.c.bf16 %v954, %v954
        %v1240 = vpack.c.bf16 %v957, %v957
        %v1241 = vpack.c.bf16 %v959, %v959
        %v1242 = vpack.c.bf16 %v962, %v962
        %v1243 = vpack.c.bf16 %v964, %v964
        %v1244 = vpack.c.bf16 %v967, %v967
        %v1245 = vpack.c.bf16 %v969, %v969
        %v1246 = vpack.c.bf16 %v972, %v972
        %v1247 = vpack.c.bf16 %v974, %v974
        %v1248 = vpack.c.bf16 %v977, %v977
        %v1249 = vpack.c.bf16 %v979, %v979
        %v1250 = vpack.c.bf16 %v982, %v982
        %v1251 = vpack.c.bf16 %v984, %v984
        %v1252 = vpack.c.bf16 %v987, %v987
        %v1253 = vpack.c.bf16 %v989, %v989
        %v1254 = vpack.c.bf16 %v992, %v992
        %v1255 = vpack.c.bf16 %v994, %v994
        %v1256 = vpack.c.bf16 %v997, %v997
        %v1257 = vpack.c.bf16 %v999, %v999
        %v1258 = vpack.c.bf16 %v1002, %v1002
        %v1259 = vpack.c.bf16 %v1004, %v1004
        %v1260 = vpack.c.bf16 %v1007, %v1007
        %v1261 = vpack.c.bf16 %v1009, %v1009
        %v1262 = vpack.c.bf16 %v1012, %v1012
        %v1263 = vpack.c.bf16 %v1014, %v1014
        %v1264 = vpack.c.bf16 %v1017, %v1017
        %v1265 = vpack.c.bf16 %v1019, %v1019
        %v1266 = vpack.c.bf16 %v1022, %v1022
        %v1267 = vpack.c.bf16 %v1024, %v1024
        %v1268 = vpack.c.bf16 %v1027, %v1027
        %v1269 = vpack.c.bf16 %v1029, %v1029
        %v1270 = vpack.c.bf16 %v1032, %v1032
        %v1271 = vpack.c.bf16 %v1034, %v1034
        %v1272 = vpack.c.bf16 %v1037, %v1037
        %v1273 = vpack.c.bf16 %v1039, %v1039
        %v1274 = vpack.c.bf16 %v1042, %v1042
        %v1275 = vpack.c.bf16 %v1044, %v1044
        %v1276 = vpack.c.bf16 %v1047, %v1047
        %v1277 = vpack.c.bf16 %v1049, %v1049
        %v1278 = vpack.c.bf16 %v1052, %v1052
        %v1279 = vpack.c.bf16 %v1054, %v1054
        %v1280 = vpack.c.bf16 %v1057, %v1057
        %v1281 = vpack.c.bf16 %v1059, %v1059
        %v1282 = vpack.c.bf16 %v1062, %v1062
        %v1283 = vpack.c.bf16 %v1064, %v1064
        %v1284 = vpack.c.bf16 %v1067, %v1067
        %v1285 = vpack.c.bf16 %v1069, %v1069
        %v1286 = vpack.c.bf16 %v1072, %v1072
        %v1287 = vpack.c.bf16 %v1074, %v1074
        %v1288 = vpack.c.bf16 %v1077, %v1077
        %v1289 = vpack.c.bf16 %v1079, %v1079
        %v1290 = vpack.c.bf16 %v1082, %v1082
        %v1291 = vpack.c.bf16 %v1084, %v1084
        %v1292 = vpack.c.bf16 %v1087, %v1087
        %v1293 = vpack.c.bf16 %v1089, %v1089
        %v1294 = vpack.c.bf16 %v1092, %v1092
        %v1295 = vpack.c.bf16 %v1094, %v1094
        %v1296 = vpack.c.bf16 %v1097, %v1097
        %v1297 = vpack.c.bf16 %v1099, %v1099
        %v1298 = vpack.c.bf16 %v1102, %v1102
        %v1299 = vpack.c.bf16 %v1104, %v1104
        %v1300 = vpack.c.bf16 %v1107, %v1107
        %v1301 = vpack.c.bf16 %v1109, %v1109
        %v1302 = vpack.c.bf16 %v1112, %v1112
        %v1303 = vpack.c.bf16 %v1114, %v1114
        %v1304 = vpack.c.bf16 %v1117, %v1117
        %v1305 = vpack.c.bf16 %v1119, %v1119
        %v1306 = vpack.c.bf16 %v1122, %v1122
        %v1307 = vpack.c.bf16 %v1124, %v1124
        %v1308 = vpack.c.bf16 %v1127, %v1127
        %v1309 = vpack.c.bf16 %v1129, %v1129
        %v1310 = vpack.c.bf16 %v1132, %v1132
        %v1311 = vpack.c.bf16 %v1134, %v1134
        %v1312 = vpack.c.bf16 %v1137, %v1137
        %v1313 = vpack.c.bf16 %v1139, %v1139
        %v1314 = vpack.c.bf16 %v1142, %v1142
        %v1315 = vpack.c.bf16 %v1144, %v1144
        %v1316 = vpack.c.bf16 %v1147, %v1147
        %v1317 = vpack.c.bf16 %v1149, %v1149
        %v1318 = vpack.c.bf16 %v1152, %v1152
        %v1319 = vpack.c.bf16 %v1154, %v1154
        %v1320 = vpack.c.bf16 %v1157, %v1157
        %v1321 = vpack.c.bf16 %v1159, %v1159
        %v1322 = vpack.c.bf16 %v1162, %v1162
        %v1323 = vpack.c.bf16 %v1164, %v1164
        %v1324 = vpack.c.bf16 %v1167, %v1167
        %v1325 = vpack.c.bf16 %v1169, %v1169
        %v1326 = vpack.c.bf16 %v1172, %v1172
        %v1327 = vpack.c.bf16 %v1174, %v1174
        %v1328 = vpack.c.bf16 %v1177, %v1177
        %v1329 = vpack.c.bf16 %v1179, %v1179
        %v1330 = vpack.c.bf16 %v1182, %v1182
        %v1331 = vpack.c.bf16 %v1184, %v1184
        %v1332 = vpack.c.bf16 %v1187, %v1187
        %v1333 = vpack.c.bf16 %v1189, %v1189
        %v1334 = vpack.c.bf16 %v1192, %v1192
        %v1335 = vpack.c.bf16 %v1194, %v1194
        %v1336 = vpack.c.bf16 %v1197, %v1197
        %v1337 = vpack.c.bf16 %v1199, %v1199
        %v1338 = vpack.c.bf16 %v1202, %v1202
        %v1339 = vpack.c.bf16 %v1204, %v1204
        %v1340 = vpack.c.bf16 %v1207, %v1207
        %v1341 = vpack.c.bf16 %v1209, %v1209
        %v1342 = vpack.c.bf16 %v1212, %v1212
        %v1343 = vpack.c.bf16 %v1214, %v1214
        %vm1344 = vcmask 519168
        %1345 = vst.msk [vmem:[%s221] sm:$0xf] %vm1344, %v1216
        %1346 = vst.msk [vmem:[%s221 + $0x4] sm:$0xf] %vm1344, %v1217
        %1347 = vst.msk [vmem:[%s221 + $0x8] sm:$0xf] %vm1344, %v1218
        %1348 = vst.msk [vmem:[%s221 + $0xc] sm:$0xf] %vm1344, %v1219
        %1349 = vst.msk [vmem:[%s221 + $0x10] sm:$0xf] %vm1344, %v1220
        %1350 = vst.msk [vmem:[%s221 + $0x14] sm:$0xf] %vm1344, %v1221
        %1351 = vst.msk [vmem:[%s221 + $0x18] sm:$0xf] %vm1344, %v1222
        %1352 = vst.msk [vmem:[%s221 + $0x1c] sm:$0xf] %vm1344, %v1223
        %1353 = vst.msk [vmem:[%s221 + $0x20] sm:$0xf] %vm1344, %v1224
        %1354 = vst.msk [vmem:[%s221 + $0x24] sm:$0xf] %vm1344, %v1225
        %1355 = vst.msk [vmem:[%s221 + $0x28] sm:$0xf] %vm1344, %v1226
        %1356 = vst.msk [vmem:[%s221 + $0x2c] sm:$0xf] %vm1344, %v1227
        %1357 = vst.msk [vmem:[%s221 + $0x30] sm:$0xf] %vm1344, %v1228
        %1358 = vst.msk [vmem:[%s221 + $0x34] sm:$0xf] %vm1344, %v1229
        %1359 = vst.msk [vmem:[%s221 + $0x38] sm:$0xf] %vm1344, %v1230
        %1360 = vst.msk [vmem:[%s221 + $0x3c] sm:$0xf] %vm1344, %v1231
        %1361 = vst.msk [vmem:[%s221 + $0x40] sm:$0xf] %vm1344, %v1232
        %1362 = vst.msk [vmem:[%s221 + $0x44] sm:$0xf] %vm1344, %v1233
        %1363 = vst.msk [vmem:[%s221 + $0x48] sm:$0xf] %vm1344, %v1234
        %1364 = vst.msk [vmem:[%s221 + $0x4c] sm:$0xf] %vm1344, %v1235
        %1365 = vst.msk [vmem:[%s221 + $0x50] sm:$0xf] %vm1344, %v1236
        %1366 = vst.msk [vmem:[%s221 + $0x54] sm:$0xf] %vm1344, %v1237
        %1367 = vst.msk [vmem:[%s221 + $0x58] sm:$0xf] %vm1344, %v1238
        %1368 = vst.msk [vmem:[%s221 + $0x5c] sm:$0xf] %vm1344, %v1239
        %1369 = vst.msk [vmem:[%s221 + $0x60] sm:$0xf] %vm1344, %v1240
        %1370 = vst.msk [vmem:[%s221 + $0x64] sm:$0xf] %vm1344, %v1241
        %1371 = vst.msk [vmem:[%s221 + $0x68] sm:$0xf] %vm1344, %v1242
        %1372 = vst.msk [vmem:[%s221 + $0x6c] sm:$0xf] %vm1344, %v1243
        %1373 = vst.msk [vmem:[%s221 + $0x70] sm:$0xf] %vm1344, %v1244
        %1374 = vst.msk [vmem:[%s221 + $0x74] sm:$0xf] %vm1344, %v1245
        %1375 = vst.msk [vmem:[%s221 + $0x78] sm:$0xf] %vm1344, %v1246
        %1376 = vst.msk [vmem:[%s221 + $0x7c] sm:$0xf] %vm1344, %v1247
        %1377 = vst.msk [vmem:[%s221 + $0x80] sm:$0xf] %vm1344, %v1248
        %1378 = vst.msk [vmem:[%s221 + $0x84] sm:$0xf] %vm1344, %v1249
        %1379 = vst.msk [vmem:[%s221 + $0x88] sm:$0xf] %vm1344, %v1250
        %1380 = vst.msk [vmem:[%s221 + $0x8c] sm:$0xf] %vm1344, %v1251
        %1381 = vst.msk [vmem:[%s221 + $0x90] sm:$0xf] %vm1344, %v1252
        %1382 = vst.msk [vmem:[%s221 + $0x94] sm:$0xf] %vm1344, %v1253
        %1383 = vst.msk [vmem:[%s221 + $0x98] sm:$0xf] %vm1344, %v1254
        %1384 = vst.msk [vmem:[%s221 + $0x9c] sm:$0xf] %vm1344, %v1255
        %1385 = vst.msk [vmem:[%s221 + $0xa0] sm:$0xf] %vm1344, %v1256
        %1386 = vst.msk [vmem:[%s221 + $0xa4] sm:$0xf] %vm1344, %v1257
        %1387 = vst.msk [vmem:[%s221 + $0xa8] sm:$0xf] %vm1344, %v1258
        %1388 = vst.msk [vmem:[%s221 + $0xac] sm:$0xf] %vm1344, %v1259
        %1389 = vst.msk [vmem:[%s221 + $0xb0] sm:$0xf] %vm1344, %v1260
        %1390 = vst.msk [vmem:[%s221 + $0xb4] sm:$0xf] %vm1344, %v1261
        %1391 = vst.msk [vmem:[%s221 + $0xb8] sm:$0xf] %vm1344, %v1262
        %1392 = vst.msk [vmem:[%s221 + $0xbc] sm:$0xf] %vm1344, %v1263
        %1393 = vst.msk [vmem:[%s221 + $0xc0] sm:$0xf] %vm1344, %v1264
        %1394 = vst.msk [vmem:[%s221 + $0xc4] sm:$0xf] %vm1344, %v1265
        %1395 = vst.msk [vmem:[%s221 + $0xc8] sm:$0xf] %vm1344, %v1266
        %1396 = vst.msk [vmem:[%s221 + $0xcc] sm:$0xf] %vm1344, %v1267
        %1397 = vst.msk [vmem:[%s221 + $0xd0] sm:$0xf] %vm1344, %v1268
        %1398 = vst.msk [vmem:[%s221 + $0xd4] sm:$0xf] %vm1344, %v1269
        %1399 = vst.msk [vmem:[%s221 + $0xd8] sm:$0xf] %vm1344, %v1270
        %1400 = vst.msk [vmem:[%s221 + $0xdc] sm:$0xf] %vm1344, %v1271
        %1401 = vst.msk [vmem:[%s221 + $0xe0] sm:$0xf] %vm1344, %v1272
        %1402 = vst.msk [vmem:[%s221 + $0xe4] sm:$0xf] %vm1344, %v1273
        %1403 = vst.msk [vmem:[%s221 + $0xe8] sm:$0xf] %vm1344, %v1274
        %1404 = vst.msk [vmem:[%s221 + $0xec] sm:$0xf] %vm1344, %v1275
        %1405 = vst.msk [vmem:[%s221 + $0xf0] sm:$0xf] %vm1344, %v1276
        %1406 = vst.msk [vmem:[%s221 + $0xf4] sm:$0xf] %vm1344, %v1277
        %1407 = vst.msk [vmem:[%s221 + $0xf8] sm:$0xf] %vm1344, %v1278
        %1408 = vst.msk [vmem:[%s221 + $0xfc] sm:$0xf] %vm1344, %v1279
        %1409 = vst.msk [vmem:[%s221 + $0x100] sm:$0xf] %vm1344, %v1280
        %1410 = vst.msk [vmem:[%s221 + $0x104] sm:$0xf] %vm1344, %v1281
        %1411 = vst.msk [vmem:[%s221 + $0x108] sm:$0xf] %vm1344, %v1282
        %1412 = vst.msk [vmem:[%s221 + $0x10c] sm:$0xf] %vm1344, %v1283
        %1413 = vst.msk [vmem:[%s221 + $0x110] sm:$0xf] %vm1344, %v1284
        %1414 = vst.msk [vmem:[%s221 + $0x114] sm:$0xf] %vm1344, %v1285
        %1415 = vst.msk [vmem:[%s221 + $0x118] sm:$0xf] %vm1344, %v1286
        %1416 = vst.msk [vmem:[%s221 + $0x11c] sm:$0xf] %vm1344, %v1287
        %1417 = vst.msk [vmem:[%s221 + $0x120] sm:$0xf] %vm1344, %v1288
        %1418 = vst.msk [vmem:[%s221 + $0x124] sm:$0xf] %vm1344, %v1289
        %1419 = vst.msk [vmem:[%s221 + $0x128] sm:$0xf] %vm1344, %v1290
        %1420 = vst.msk [vmem:[%s221 + $0x12c] sm:$0xf] %vm1344, %v1291
        %1421 = vst.msk [vmem:[%s221 + $0x130] sm:$0xf] %vm1344, %v1292
        %1422 = vst.msk [vmem:[%s221 + $0x134] sm:$0xf] %vm1344, %v1293
        %1423 = vst.msk [vmem:[%s221 + $0x138] sm:$0xf] %vm1344, %v1294
        %1424 = vst.msk [vmem:[%s221 + $0x13c] sm:$0xf] %vm1344, %v1295
        %1425 = vst.msk [vmem:[%s221 + $0x140] sm:$0xf] %vm1344, %v1296
        %1426 = vst.msk [vmem:[%s221 + $0x144] sm:$0xf] %vm1344, %v1297
        %1427 = vst.msk [vmem:[%s221 + $0x148] sm:$0xf] %vm1344, %v1298
        %1428 = vst.msk [vmem:[%s221 + $0x14c] sm:$0xf] %vm1344, %v1299
        %1429 = vst.msk [vmem:[%s221 + $0x150] sm:$0xf] %vm1344, %v1300
        %1430 = vst.msk [vmem:[%s221 + $0x154] sm:$0xf] %vm1344, %v1301
        %1431 = vst.msk [vmem:[%s221 + $0x158] sm:$0xf] %vm1344, %v1302
        %1432 = vst.msk [vmem:[%s221 + $0x15c] sm:$0xf] %vm1344, %v1303
        %1433 = vst.msk [vmem:[%s221 + $0x160] sm:$0xf] %vm1344, %v1304
        %1434 = vst.msk [vmem:[%s221 + $0x164] sm:$0xf] %vm1344, %v1305
        %1435 = vst.msk [vmem:[%s221 + $0x168] sm:$0xf] %vm1344, %v1306
        %1436 = vst.msk [vmem:[%s221 + $0x16c] sm:$0xf] %vm1344, %v1307
        %1437 = vst.msk [vmem:[%s221 + $0x170] sm:$0xf] %vm1344, %v1308
        %1438 = vst.msk [vmem:[%s221 + $0x174] sm:$0xf] %vm1344, %v1309
        %1439 = vst.msk [vmem:[%s221 + $0x178] sm:$0xf] %vm1344, %v1310
        %1440 = vst.msk [vmem:[%s221 + $0x17c] sm:$0xf] %vm1344, %v1311
        %1441 = vst.msk [vmem:[%s221 + $0x180] sm:$0xf] %vm1344, %v1312
        %1442 = vst.msk [vmem:[%s221 + $0x184] sm:$0xf] %vm1344, %v1313
        %1443 = vst.msk [vmem:[%s221 + $0x188] sm:$0xf] %vm1344, %v1314
        %1444 = vst.msk [vmem:[%s221 + $0x18c] sm:$0xf] %vm1344, %v1315
        %1445 = vst.msk [vmem:[%s221 + $0x190] sm:$0xf] %vm1344, %v1316
        %1446 = vst.msk [vmem:[%s221 + $0x194] sm:$0xf] %vm1344, %v1317
        %1447 = vst.msk [vmem:[%s221 + $0x198] sm:$0xf] %vm1344, %v1318
        %1448 = vst.msk [vmem:[%s221 + $0x19c] sm:$0xf] %vm1344, %v1319
        %1449 = vst.msk [vmem:[%s221 + $0x1a0] sm:$0xf] %vm1344, %v1320
        %1450 = vst.msk [vmem:[%s221 + $0x1a4] sm:$0xf] %vm1344, %v1321
        %1451 = vst.msk [vmem:[%s221 + $0x1a8] sm:$0xf] %vm1344, %v1322
        %1452 = vst.msk [vmem:[%s221 + $0x1ac] sm:$0xf] %vm1344, %v1323
        %1453 = vst.msk [vmem:[%s221 + $0x1b0] sm:$0xf] %vm1344, %v1324
        %1454 = vst.msk [vmem:[%s221 + $0x1b4] sm:$0xf] %vm1344, %v1325
        %1455 = vst.msk [vmem:[%s221 + $0x1b8] sm:$0xf] %vm1344, %v1326
        %1456 = vst.msk [vmem:[%s221 + $0x1bc] sm:$0xf] %vm1344, %v1327
        %1457 = vst.msk [vmem:[%s221 + $0x1c0] sm:$0xf] %vm1344, %v1328
        %1458 = vst.msk [vmem:[%s221 + $0x1c4] sm:$0xf] %vm1344, %v1329
        %1459 = vst.msk [vmem:[%s221 + $0x1c8] sm:$0xf] %vm1344, %v1330
        %1460 = vst.msk [vmem:[%s221 + $0x1cc] sm:$0xf] %vm1344, %v1331
        %1461 = vst.msk [vmem:[%s221 + $0x1d0] sm:$0xf] %vm1344, %v1332
        %1462 = vst.msk [vmem:[%s221 + $0x1d4] sm:$0xf] %vm1344, %v1333
        %1463 = vst.msk [vmem:[%s221 + $0x1d8] sm:$0xf] %vm1344, %v1334
        %1464 = vst.msk [vmem:[%s221 + $0x1dc] sm:$0xf] %vm1344, %v1335
        %1465 = vst.msk [vmem:[%s221 + $0x1e0] sm:$0xf] %vm1344, %v1336
        %1466 = vst.msk [vmem:[%s221 + $0x1e4] sm:$0xf] %vm1344, %v1337
        %1467 = vst.msk [vmem:[%s221 + $0x1e8] sm:$0xf] %vm1344, %v1338
        %1468 = vst.msk [vmem:[%s221 + $0x1ec] sm:$0xf] %vm1344, %v1339
        %1469 = vst.msk [vmem:[%s221 + $0x1f0] sm:$0xf] %vm1344, %v1340
        %1470 = vst.msk [vmem:[%s221 + $0x1f4] sm:$0xf] %vm1344, %v1341
        %1471 = vst.msk [vmem:[%s221 + $0x1f8] sm:$0xf] %vm1344, %v1342
        %1472 = vst.msk [vmem:[%s221 + $0x1fc] sm:$0xf] %vm1344, %v1343
        %vm1473 = vcmask 523264
        %v1474 = vsel %vm1473, %v897, 0.0
        %v1475 = vsel %vm1473, %v899, 0.0
        %v1476 = vadd.f32 %v1474, %v1475
        %v1477 = vsel %vm1473, %v902, 0.0
        %v1478 = vadd.f32 %v1476, %v1477
        %v1479 = vsel %vm1473, %v904, 0.0
        %v1480 = vadd.f32 %v1478, %v1479
        %v1481 = vsel %vm1473, %v907, 0.0
        %v1482 = vadd.f32 %v1480, %v1481
        %v1483 = vsel %vm1473, %v909, 0.0
        %v1484 = vadd.f32 %v1482, %v1483
        %v1485 = vsel %vm1473, %v912, 0.0
        %v1486 = vadd.f32 %v1484, %v1485
        %v1487 = vsel %vm1473, %v914, 0.0
        %v1488 = vadd.f32 %v1486, %v1487
        %v1489 = vsel %vm1473, %v917, 0.0
        %v1490 = vadd.f32 %v1488, %v1489
        %v1491 = vsel %vm1473, %v919, 0.0
        %v1492 = vadd.f32 %v1490, %v1491
        %v1493 = vsel %vm1473, %v922, 0.0
        %v1494 = vadd.f32 %v1492, %v1493
        %v1495 = vsel %vm1473, %v924, 0.0
        %v1496 = vadd.f32 %v1494, %v1495
        %v1497 = vsel %vm1473, %v927, 0.0
        %v1498 = vadd.f32 %v1496, %v1497
        %v1499 = vsel %vm1473, %v929, 0.0
        %v1500 = vadd.f32 %v1498, %v1499
        %v1501 = vsel %vm1473, %v932, 0.0
        %v1502 = vadd.f32 %v1500, %v1501
        %v1503 = vsel %vm1473, %v934, 0.0
        %v1504 = vadd.f32 %v1502, %v1503
        %v1505 = vsel %vm1473, %v937, 0.0
        %v1506 = vadd.f32 %v1504, %v1505
        %v1507 = vsel %vm1473, %v939, 0.0
        %v1508 = vadd.f32 %v1506, %v1507
        %v1509 = vsel %vm1473, %v942, 0.0
        %v1510 = vadd.f32 %v1508, %v1509
        %v1511 = vsel %vm1473, %v944, 0.0
        %v1512 = vadd.f32 %v1510, %v1511
        %v1513 = vsel %vm1473, %v947, 0.0
        %v1514 = vadd.f32 %v1512, %v1513
        %v1515 = vsel %vm1473, %v949, 0.0
        %v1516 = vadd.f32 %v1514, %v1515
        %v1517 = vsel %vm1473, %v952, 0.0
        %v1518 = vadd.f32 %v1516, %v1517
        %v1519 = vsel %vm1473, %v954, 0.0
        %v1520 = vadd.f32 %v1518, %v1519
        %v1521 = vsel %vm1473, %v957, 0.0
        %v1522 = vadd.f32 %v1520, %v1521
        %v1523 = vsel %vm1473, %v959, 0.0
        %v1524 = vadd.f32 %v1522, %v1523
        %v1525 = vsel %vm1473, %v962, 0.0
        %v1526 = vadd.f32 %v1524, %v1525
        %v1527 = vsel %vm1473, %v964, 0.0
        %v1528 = vadd.f32 %v1526, %v1527
        %v1529 = vsel %vm1473, %v967, 0.0
        %v1530 = vadd.f32 %v1528, %v1529
        %v1531 = vsel %vm1473, %v969, 0.0
        %v1532 = vadd.f32 %v1530, %v1531
        %v1533 = vsel %vm1473, %v972, 0.0
        %v1534 = vadd.f32 %v1532, %v1533
        %v1535 = vsel %vm1473, %v974, 0.0
        %v1536 = vadd.f32 %v1534, %v1535
        %v1537 = vsel %vm1473, %v977, 0.0
        %v1538 = vadd.f32 %v1536, %v1537
        %v1539 = vsel %vm1473, %v979, 0.0
        %v1540 = vadd.f32 %v1538, %v1539
        %v1541 = vsel %vm1473, %v982, 0.0
        %v1542 = vadd.f32 %v1540, %v1541
        %v1543 = vsel %vm1473, %v984, 0.0
        %v1544 = vadd.f32 %v1542, %v1543
        %v1545 = vsel %vm1473, %v987, 0.0
        %v1546 = vadd.f32 %v1544, %v1545
        %v1547 = vsel %vm1473, %v989, 0.0
        %v1548 = vadd.f32 %v1546, %v1547
        %v1549 = vsel %vm1473, %v992, 0.0
        %v1550 = vadd.f32 %v1548, %v1549
        %v1551 = vsel %vm1473, %v994, 0.0
        %v1552 = vadd.f32 %v1550, %v1551
        %v1553 = vsel %vm1473, %v997, 0.0
        %v1554 = vadd.f32 %v1552, %v1553
        %v1555 = vsel %vm1473, %v999, 0.0
        %v1556 = vadd.f32 %v1554, %v1555
        %v1557 = vsel %vm1473, %v1002, 0.0
        %v1558 = vadd.f32 %v1556, %v1557
        %v1559 = vsel %vm1473, %v1004, 0.0
        %v1560 = vadd.f32 %v1558, %v1559
        %v1561 = vsel %vm1473, %v1007, 0.0
        %v1562 = vadd.f32 %v1560, %v1561
        %v1563 = vsel %vm1473, %v1009, 0.0
        %v1564 = vadd.f32 %v1562, %v1563
        %v1565 = vsel %vm1473, %v1012, 0.0
        %v1566 = vadd.f32 %v1564, %v1565
        %v1567 = vsel %vm1473, %v1014, 0.0
        %v1568 = vadd.f32 %v1566, %v1567
        %v1569 = vsel %vm1473, %v1017, 0.0
        %v1570 = vadd.f32 %v1568, %v1569
        %v1571 = vsel %vm1473, %v1019, 0.0
        %v1572 = vadd.f32 %v1570, %v1571
        %v1573 = vsel %vm1473, %v1022, 0.0
        %v1574 = vadd.f32 %v1572, %v1573
        %v1575 = vsel %vm1473, %v1024, 0.0
        %v1576 = vadd.f32 %v1574, %v1575
        %v1577 = vsel %vm1473, %v1027, 0.0
        %v1578 = vadd.f32 %v1576, %v1577
        %v1579 = vsel %vm1473, %v1029, 0.0
        %v1580 = vadd.f32 %v1578, %v1579
        %v1581 = vsel %vm1473, %v1032, 0.0
        %v1582 = vadd.f32 %v1580, %v1581
        %v1583 = vsel %vm1473, %v1034, 0.0
        %v1584 = vadd.f32 %v1582, %v1583
        %v1585 = vsel %vm1473, %v1037, 0.0
        %v1586 = vadd.f32 %v1584, %v1585
        %v1587 = vsel %vm1473, %v1039, 0.0
        %v1588 = vadd.f32 %v1586, %v1587
        %v1589 = vsel %vm1473, %v1042, 0.0
        %v1590 = vadd.f32 %v1588, %v1589
        %v1591 = vsel %vm1473, %v1044, 0.0
        %v1592 = vadd.f32 %v1590, %v1591
        %v1593 = vsel %vm1473, %v1047, 0.0
        %v1594 = vadd.f32 %v1592, %v1593
        %v1595 = vsel %vm1473, %v1049, 0.0
        %v1596 = vadd.f32 %v1594, %v1595
        %v1597 = vsel %vm1473, %v1052, 0.0
        %v1598 = vadd.f32 %v1596, %v1597
        %v1599 = vsel %vm1473, %v1054, 0.0
        %v1600 = vadd.f32 %v1598, %v1599
        %v1601 = vsel %vm1473, %v1057, 0.0
        %v1602 = vadd.f32 %v1600, %v1601
        %v1603 = vsel %vm1473, %v1059, 0.0
        %v1604 = vadd.f32 %v1602, %v1603
        %v1605 = vsel %vm1473, %v1062, 0.0
        %v1606 = vadd.f32 %v1604, %v1605
        %v1607 = vsel %vm1473, %v1064, 0.0
        %v1608 = vadd.f32 %v1606, %v1607
        %v1609 = vsel %vm1473, %v1067, 0.0
        %v1610 = vadd.f32 %v1608, %v1609
        %v1611 = vsel %vm1473, %v1069, 0.0
        %v1612 = vadd.f32 %v1610, %v1611
        %v1613 = vsel %vm1473, %v1072, 0.0
        %v1614 = vadd.f32 %v1612, %v1613
        %v1615 = vsel %vm1473, %v1074, 0.0
        %v1616 = vadd.f32 %v1614, %v1615
        %v1617 = vsel %vm1473, %v1077, 0.0
        %v1618 = vadd.f32 %v1616, %v1617
        %v1619 = vsel %vm1473, %v1079, 0.0
        %v1620 = vadd.f32 %v1618, %v1619
        %v1621 = vsel %vm1473, %v1082, 0.0
        %v1622 = vadd.f32 %v1620, %v1621
        %v1623 = vsel %vm1473, %v1084, 0.0
        %v1624 = vadd.f32 %v1622, %v1623
        %v1625 = vsel %vm1473, %v1087, 0.0
        %v1626 = vadd.f32 %v1624, %v1625
        %v1627 = vsel %vm1473, %v1089, 0.0
        %v1628 = vadd.f32 %v1626, %v1627
        %v1629 = vsel %vm1473, %v1092, 0.0
        %v1630 = vadd.f32 %v1628, %v1629
        %v1631 = vsel %vm1473, %v1094, 0.0
        %v1632 = vadd.f32 %v1630, %v1631
        %v1633 = vsel %vm1473, %v1097, 0.0
        %v1634 = vadd.f32 %v1632, %v1633
        %v1635 = vsel %vm1473, %v1099, 0.0
        %v1636 = vadd.f32 %v1634, %v1635
        %v1637 = vsel %vm1473, %v1102, 0.0
        %v1638 = vadd.f32 %v1636, %v1637
        %v1639 = vsel %vm1473, %v1104, 0.0
        %v1640 = vadd.f32 %v1638, %v1639
        %v1641 = vsel %vm1473, %v1107, 0.0
        %v1642 = vadd.f32 %v1640, %v1641
        %v1643 = vsel %vm1473, %v1109, 0.0
        %v1644 = vadd.f32 %v1642, %v1643
        %v1645 = vsel %vm1473, %v1112, 0.0
        %v1646 = vadd.f32 %v1644, %v1645
        %v1647 = vsel %vm1473, %v1114, 0.0
        %v1648 = vadd.f32 %v1646, %v1647
        %v1649 = vsel %vm1473, %v1117, 0.0
        %v1650 = vadd.f32 %v1648, %v1649
        %v1651 = vsel %vm1473, %v1119, 0.0
        %v1652 = vadd.f32 %v1650, %v1651
        %v1653 = vsel %vm1473, %v1122, 0.0
        %v1654 = vadd.f32 %v1652, %v1653
        %v1655 = vsel %vm1473, %v1124, 0.0
        %v1656 = vadd.f32 %v1654, %v1655
        %v1657 = vsel %vm1473, %v1127, 0.0
        %v1658 = vadd.f32 %v1656, %v1657
        %v1659 = vsel %vm1473, %v1129, 0.0
        %v1660 = vadd.f32 %v1658, %v1659
        %v1661 = vsel %vm1473, %v1132, 0.0
        %v1662 = vadd.f32 %v1660, %v1661
        %v1663 = vsel %vm1473, %v1134, 0.0
        %v1664 = vadd.f32 %v1662, %v1663
        %v1665 = vsel %vm1473, %v1137, 0.0
        %v1666 = vadd.f32 %v1664, %v1665
        %v1667 = vsel %vm1473, %v1139, 0.0
        %v1668 = vadd.f32 %v1666, %v1667
        %v1669 = vsel %vm1473, %v1142, 0.0
        %v1670 = vadd.f32 %v1668, %v1669
        %v1671 = vsel %vm1473, %v1144, 0.0
        %v1672 = vadd.f32 %v1670, %v1671
        %v1673 = vsel %vm1473, %v1147, 0.0
        %v1674 = vadd.f32 %v1672, %v1673
        %v1675 = vsel %vm1473, %v1149, 0.0
        %v1676 = vadd.f32 %v1674, %v1675
        %v1677 = vsel %vm1473, %v1152, 0.0
        %v1678 = vadd.f32 %v1676, %v1677
        %v1679 = vsel %vm1473, %v1154, 0.0
        %v1680 = vadd.f32 %v1678, %v1679
        %v1681 = vsel %vm1473, %v1157, 0.0
        %v1682 = vadd.f32 %v1680, %v1681
        %v1683 = vsel %vm1473, %v1159, 0.0
        %v1684 = vadd.f32 %v1682, %v1683
        %v1685 = vsel %vm1473, %v1162, 0.0
        %v1686 = vadd.f32 %v1684, %v1685
        %v1687 = vsel %vm1473, %v1164, 0.0
        %v1688 = vadd.f32 %v1686, %v1687
        %v1689 = vsel %vm1473, %v1167, 0.0
        %v1690 = vadd.f32 %v1688, %v1689
        %v1691 = vsel %vm1473, %v1169, 0.0
        %v1692 = vadd.f32 %v1690, %v1691
        %v1693 = vsel %vm1473, %v1172, 0.0
        %v1694 = vadd.f32 %v1692, %v1693
        %v1695 = vsel %vm1473, %v1174, 0.0
        %v1696 = vadd.f32 %v1694, %v1695
        %v1697 = vsel %vm1473, %v1177, 0.0
        %v1698 = vadd.f32 %v1696, %v1697
        %v1699 = vsel %vm1473, %v1179, 0.0
        %v1700 = vadd.f32 %v1698, %v1699
        %v1701 = vsel %vm1473, %v1182, 0.0
        %v1702 = vadd.f32 %v1700, %v1701
        %v1703 = vsel %vm1473, %v1184, 0.0
        %v1704 = vadd.f32 %v1702, %v1703
        %v1705 = vsel %vm1473, %v1187, 0.0
        %v1706 = vadd.f32 %v1704, %v1705
        %v1707 = vsel %vm1473, %v1189, 0.0
        %v1708 = vadd.f32 %v1706, %v1707
        %v1709 = vsel %vm1473, %v1192, 0.0
        %v1710 = vadd.f32 %v1708, %v1709
        %v1711 = vsel %vm1473, %v1194, 0.0
        %v1712 = vadd.f32 %v1710, %v1711
        %v1713 = vsel %vm1473, %v1197, 0.0
        %v1714 = vadd.f32 %v1712, %v1713
        %v1715 = vsel %vm1473, %v1199, 0.0
        %v1716 = vadd.f32 %v1714, %v1715
        %v1717 = vsel %vm1473, %v1202, 0.0
        %v1718 = vadd.f32 %v1716, %v1717
        %v1719 = vsel %vm1473, %v1204, 0.0
        %v1720 = vadd.f32 %v1718, %v1719
        %v1721 = vsel %vm1473, %v1207, 0.0
        %v1722 = vadd.f32 %v1720, %v1721
        %v1723 = vsel %vm1473, %v1209, 0.0
        %v1724 = vadd.f32 %v1722, %v1723
        %v1725 = vsel %vm1473, %v1212, 0.0
        %v1726 = vadd.f32 %v1724, %v1725
        %v1727 = vsel %vm1473, %v1214, 0.0
        %v1728 = vadd.f32 %v1726, %v1727
        %v1729 = vrot.slane %v1728, 4
        %v1730 = vadd.f32 %v1728, %v1729
        %v1731 = vrot.slane %v1730, 2
        %v1732 = vadd.f32 %v1730, %v1731
        %v1733 = vrot.slane %v1732, 1
        %v1734 = vadd.f32 %v1732, %v1733
        %v1735 = vmul.f32 %v897, %v897
        %v1736 = vmul.f32 %v899, %v899
        %v1737 = vmul.f32 %v902, %v902
        %v1738 = vmul.f32 %v904, %v904
        %v1739 = vmul.f32 %v907, %v907
        %v1740 = vmul.f32 %v909, %v909
        %v1741 = vmul.f32 %v912, %v912
        %v1742 = vmul.f32 %v914, %v914
        %v1743 = vmul.f32 %v917, %v917
        %v1744 = vmul.f32 %v919, %v919
        %v1745 = vmul.f32 %v922, %v922
        %v1746 = vmul.f32 %v924, %v924
        %v1747 = vmul.f32 %v927, %v927
        %v1748 = vmul.f32 %v929, %v929
        %v1749 = vmul.f32 %v932, %v932
        %v1750 = vmul.f32 %v934, %v934
        %v1751 = vmul.f32 %v937, %v937
        %v1752 = vmul.f32 %v939, %v939
        %v1753 = vmul.f32 %v942, %v942
        %v1754 = vmul.f32 %v944, %v944
        %v1755 = vmul.f32 %v947, %v947
        %v1756 = vmul.f32 %v949, %v949
        %v1757 = vmul.f32 %v952, %v952
        %v1758 = vmul.f32 %v954, %v954
        %v1759 = vmul.f32 %v957, %v957
        %v1760 = vmul.f32 %v959, %v959
        %v1761 = vmul.f32 %v962, %v962
        %v1762 = vmul.f32 %v964, %v964
        %v1763 = vmul.f32 %v967, %v967
        %v1764 = vmul.f32 %v969, %v969
        %v1765 = vmul.f32 %v972, %v972
        %v1766 = vmul.f32 %v974, %v974
        %v1767 = vmul.f32 %v977, %v977
        %v1768 = vmul.f32 %v979, %v979
        %v1769 = vmul.f32 %v982, %v982
        %v1770 = vmul.f32 %v984, %v984
        %v1771 = vmul.f32 %v987, %v987
        %v1772 = vmul.f32 %v989, %v989
        %v1773 = vmul.f32 %v992, %v992
        %v1774 = vmul.f32 %v994, %v994
        %v1775 = vmul.f32 %v997, %v997
        %v1776 = vmul.f32 %v999, %v999
        %v1777 = vmul.f32 %v1002, %v1002
        %v1778 = vmul.f32 %v1004, %v1004
        %v1779 = vmul.f32 %v1007, %v1007
        %v1780 = vmul.f32 %v1009, %v1009
        %v1781 = vmul.f32 %v1012, %v1012
        %v1782 = vmul.f32 %v1014, %v1014
        %v1783 = vmul.f32 %v1017, %v1017
        %v1784 = vmul.f32 %v1019, %v1019
        %v1785 = vmul.f32 %v1022, %v1022
        %v1786 = vmul.f32 %v1024, %v1024
        %v1787 = vmul.f32 %v1027, %v1027
        %v1788 = vmul.f32 %v1029, %v1029
        %v1789 = vmul.f32 %v1032, %v1032
        %v1790 = vmul.f32 %v1034, %v1034
        %v1791 = vmul.f32 %v1037, %v1037
        %v1792 = vmul.f32 %v1039, %v1039
        %v1793 = vmul.f32 %v1042, %v1042
        %v1794 = vmul.f32 %v1044, %v1044
        %v1795 = vmul.f32 %v1047, %v1047
        %v1796 = vmul.f32 %v1049, %v1049
        %v1797 = vmul.f32 %v1052, %v1052
        %v1798 = vmul.f32 %v1054, %v1054
        %v1799 = vmul.f32 %v1057, %v1057
        %v1800 = vmul.f32 %v1059, %v1059
        %v1801 = vmul.f32 %v1062, %v1062
        %v1802 = vmul.f32 %v1064, %v1064
        %v1803 = vmul.f32 %v1067, %v1067
        %v1804 = vmul.f32 %v1069, %v1069
        %v1805 = vmul.f32 %v1072, %v1072
        %v1806 = vmul.f32 %v1074, %v1074
        %v1807 = vmul.f32 %v1077, %v1077
        %v1808 = vmul.f32 %v1079, %v1079
        %v1809 = vmul.f32 %v1082, %v1082
        %v1810 = vmul.f32 %v1084, %v1084
        %v1811 = vmul.f32 %v1087, %v1087
        %v1812 = vmul.f32 %v1089, %v1089
        %v1813 = vmul.f32 %v1092, %v1092
        %v1814 = vmul.f32 %v1094, %v1094
        %v1815 = vmul.f32 %v1097, %v1097
        %v1816 = vmul.f32 %v1099, %v1099
        %v1817 = vmul.f32 %v1102, %v1102
        %v1818 = vmul.f32 %v1104, %v1104
        %v1819 = vmul.f32 %v1107, %v1107
        %v1820 = vmul.f32 %v1109, %v1109
        %v1821 = vmul.f32 %v1112, %v1112
        %v1822 = vmul.f32 %v1114, %v1114
        %v1823 = vmul.f32 %v1117, %v1117
        %v1824 = vmul.f32 %v1119, %v1119
        %v1825 = vmul.f32 %v1122, %v1122
        %v1826 = vmul.f32 %v1124, %v1124
        %v1827 = vmul.f32 %v1127, %v1127
        %v1828 = vmul.f32 %v1129, %v1129
        %v1829 = vmul.f32 %v1132, %v1132
        %v1830 = vmul.f32 %v1134, %v1134
        %v1831 = vmul.f32 %v1137, %v1137
        %v1832 = vmul.f32 %v1139, %v1139
        %v1833 = vmul.f32 %v1142, %v1142
        %v1834 = vmul.f32 %v1144, %v1144
        %v1835 = vmul.f32 %v1147, %v1147
        %v1836 = vmul.f32 %v1149, %v1149
        %v1837 = vmul.f32 %v1152, %v1152
        %v1838 = vmul.f32 %v1154, %v1154
        %v1839 = vmul.f32 %v1157, %v1157
        %v1840 = vmul.f32 %v1159, %v1159
        %v1841 = vmul.f32 %v1162, %v1162
        %v1842 = vmul.f32 %v1164, %v1164
        %v1843 = vmul.f32 %v1167, %v1167
        %v1844 = vmul.f32 %v1169, %v1169
        %v1845 = vmul.f32 %v1172, %v1172
        %v1846 = vmul.f32 %v1174, %v1174
        %v1847 = vmul.f32 %v1177, %v1177
        %v1848 = vmul.f32 %v1179, %v1179
        %v1849 = vmul.f32 %v1182, %v1182
        %v1850 = vmul.f32 %v1184, %v1184
        %v1851 = vmul.f32 %v1187, %v1187
        %v1852 = vmul.f32 %v1189, %v1189
        %v1853 = vmul.f32 %v1192, %v1192
        %v1854 = vmul.f32 %v1194, %v1194
        %v1855 = vmul.f32 %v1197, %v1197
        %v1856 = vmul.f32 %v1199, %v1199
        %v1857 = vmul.f32 %v1202, %v1202
        %v1858 = vmul.f32 %v1204, %v1204
        %v1859 = vmul.f32 %v1207, %v1207
        %v1860 = vmul.f32 %v1209, %v1209
        %v1861 = vmul.f32 %v1212, %v1212
        %v1862 = vmul.f32 %v1214, %v1214
        %v1863 = vsel %vm1473, %v1735, 0.0
        %v1864 = vsel %vm1473, %v1736, 0.0
        %v1865 = vadd.f32 %v1863, %v1864
        %v1866 = vsel %vm1473, %v1737, 0.0
        %v1867 = vadd.f32 %v1865, %v1866
        %v1868 = vsel %vm1473, %v1738, 0.0
        %v1869 = vadd.f32 %v1867, %v1868
        %v1870 = vsel %vm1473, %v1739, 0.0
        %v1871 = vadd.f32 %v1869, %v1870
        %v1872 = vsel %vm1473, %v1740, 0.0
        %v1873 = vadd.f32 %v1871, %v1872
        %v1874 = vsel %vm1473, %v1741, 0.0
        %v1875 = vadd.f32 %v1873, %v1874
        %v1876 = vsel %vm1473, %v1742, 0.0
        %v1877 = vadd.f32 %v1875, %v1876
        %v1878 = vsel %vm1473, %v1743, 0.0
        %v1879 = vadd.f32 %v1877, %v1878
        %v1880 = vsel %vm1473, %v1744, 0.0
        %v1881 = vadd.f32 %v1879, %v1880
        %v1882 = vsel %vm1473, %v1745, 0.0
        %v1883 = vadd.f32 %v1881, %v1882
        %v1884 = vsel %vm1473, %v1746, 0.0
        %v1885 = vadd.f32 %v1883, %v1884
        %v1886 = vsel %vm1473, %v1747, 0.0
        %v1887 = vadd.f32 %v1885, %v1886
        %v1888 = vsel %vm1473, %v1748, 0.0
        %v1889 = vadd.f32 %v1887, %v1888
        %v1890 = vsel %vm1473, %v1749, 0.0
        %v1891 = vadd.f32 %v1889, %v1890
        %v1892 = vsel %vm1473, %v1750, 0.0
        %v1893 = vadd.f32 %v1891, %v1892
        %v1894 = vsel %vm1473, %v1751, 0.0
        %v1895 = vadd.f32 %v1893, %v1894
        %v1896 = vsel %vm1473, %v1752, 0.0
        %v1897 = vadd.f32 %v1895, %v1896
        %v1898 = vsel %vm1473, %v1753, 0.0
        %v1899 = vadd.f32 %v1897, %v1898
        %v1900 = vsel %vm1473, %v1754, 0.0
        %v1901 = vadd.f32 %v1899, %v1900
        %v1902 = vsel %vm1473, %v1755, 0.0
        %v1903 = vadd.f32 %v1901, %v1902
        %v1904 = vsel %vm1473, %v1756, 0.0
        %v1905 = vadd.f32 %v1903, %v1904
        %v1906 = vsel %vm1473, %v1757, 0.0
        %v1907 = vadd.f32 %v1905, %v1906
        %v1908 = vsel %vm1473, %v1758, 0.0
        %v1909 = vadd.f32 %v1907, %v1908
        %v1910 = vsel %vm1473, %v1759, 0.0
        %v1911 = vadd.f32 %v1909, %v1910
        %v1912 = vsel %vm1473, %v1760, 0.0
        %v1913 = vadd.f32 %v1911, %v1912
        %v1914 = vsel %vm1473, %v1761, 0.0
        %v1915 = vadd.f32 %v1913, %v1914
        %v1916 = vsel %vm1473, %v1762, 0.0
        %v1917 = vadd.f32 %v1915, %v1916
        %v1918 = vsel %vm1473, %v1763, 0.0
        %v1919 = vadd.f32 %v1917, %v1918
        %v1920 = vsel %vm1473, %v1764, 0.0
        %v1921 = vadd.f32 %v1919, %v1920
        %v1922 = vsel %vm1473, %v1765, 0.0
        %v1923 = vadd.f32 %v1921, %v1922
        %v1924 = vsel %vm1473, %v1766, 0.0
        %v1925 = vadd.f32 %v1923, %v1924
        %v1926 = vsel %vm1473, %v1767, 0.0
        %v1927 = vadd.f32 %v1925, %v1926
        %v1928 = vsel %vm1473, %v1768, 0.0
        %v1929 = vadd.f32 %v1927, %v1928
        %v1930 = vsel %vm1473, %v1769, 0.0
        %v1931 = vadd.f32 %v1929, %v1930
        %v1932 = vsel %vm1473, %v1770, 0.0
        %v1933 = vadd.f32 %v1931, %v1932
        %v1934 = vsel %vm1473, %v1771, 0.0
        %v1935 = vadd.f32 %v1933, %v1934
        %v1936 = vsel %vm1473, %v1772, 0.0
        %v1937 = vadd.f32 %v1935, %v1936
        %v1938 = vsel %vm1473, %v1773, 0.0
        %v1939 = vadd.f32 %v1937, %v1938
        %v1940 = vsel %vm1473, %v1774, 0.0
        %v1941 = vadd.f32 %v1939, %v1940
        %v1942 = vsel %vm1473, %v1775, 0.0
        %v1943 = vadd.f32 %v1941, %v1942
        %v1944 = vsel %vm1473, %v1776, 0.0
        %v1945 = vadd.f32 %v1943, %v1944
        %v1946 = vsel %vm1473, %v1777, 0.0
        %v1947 = vadd.f32 %v1945, %v1946
        %v1948 = vsel %vm1473, %v1778, 0.0
        %v1949 = vadd.f32 %v1947, %v1948
        %v1950 = vsel %vm1473, %v1779, 0.0
        %v1951 = vadd.f32 %v1949, %v1950
        %v1952 = vsel %vm1473, %v1780, 0.0
        %v1953 = vadd.f32 %v1951, %v1952
        %v1954 = vsel %vm1473, %v1781, 0.0
        %v1955 = vadd.f32 %v1953, %v1954
        %v1956 = vsel %vm1473, %v1782, 0.0
        %v1957 = vadd.f32 %v1955, %v1956
        %v1958 = vsel %vm1473, %v1783, 0.0
        %v1959 = vadd.f32 %v1957, %v1958
        %v1960 = vsel %vm1473, %v1784, 0.0
        %v1961 = vadd.f32 %v1959, %v1960
        %v1962 = vsel %vm1473, %v1785, 0.0
        %v1963 = vadd.f32 %v1961, %v1962
        %v1964 = vsel %vm1473, %v1786, 0.0
        %v1965 = vadd.f32 %v1963, %v1964
        %v1966 = vsel %vm1473, %v1787, 0.0
        %v1967 = vadd.f32 %v1965, %v1966
        %v1968 = vsel %vm1473, %v1788, 0.0
        %v1969 = vadd.f32 %v1967, %v1968
        %v1970 = vsel %vm1473, %v1789, 0.0
        %v1971 = vadd.f32 %v1969, %v1970
        %v1972 = vsel %vm1473, %v1790, 0.0
        %v1973 = vadd.f32 %v1971, %v1972
        %v1974 = vsel %vm1473, %v1791, 0.0
        %v1975 = vadd.f32 %v1973, %v1974
        %v1976 = vsel %vm1473, %v1792, 0.0
        %v1977 = vadd.f32 %v1975, %v1976
        %v1978 = vsel %vm1473, %v1793, 0.0
        %v1979 = vadd.f32 %v1977, %v1978
        %v1980 = vsel %vm1473, %v1794, 0.0
        %v1981 = vadd.f32 %v1979, %v1980
        %v1982 = vsel %vm1473, %v1795, 0.0
        %v1983 = vadd.f32 %v1981, %v1982
        %v1984 = vsel %vm1473, %v1796, 0.0
        %v1985 = vadd.f32 %v1983, %v1984
        %v1986 = vsel %vm1473, %v1797, 0.0
        %v1987 = vadd.f32 %v1985, %v1986
        %v1988 = vsel %vm1473, %v1798, 0.0
        %v1989 = vadd.f32 %v1987, %v1988
        %v1990 = vsel %vm1473, %v1799, 0.0
        %v1991 = vadd.f32 %v1989, %v1990
        %v1992 = vsel %vm1473, %v1800, 0.0
        %v1993 = vadd.f32 %v1991, %v1992
        %v1994 = vsel %vm1473, %v1801, 0.0
        %v1995 = vadd.f32 %v1993, %v1994
        %v1996 = vsel %vm1473, %v1802, 0.0
        %v1997 = vadd.f32 %v1995, %v1996
        %v1998 = vsel %vm1473, %v1803, 0.0
        %v1999 = vadd.f32 %v1997, %v1998
        %v2000 = vsel %vm1473, %v1804, 0.0
        %v2001 = vadd.f32 %v1999, %v2000
        %v2002 = vsel %vm1473, %v1805, 0.0
        %v2003 = vadd.f32 %v2001, %v2002
        %v2004 = vsel %vm1473, %v1806, 0.0
        %v2005 = vadd.f32 %v2003, %v2004
        %v2006 = vsel %vm1473, %v1807, 0.0
        %v2007 = vadd.f32 %v2005, %v2006
        %v2008 = vsel %vm1473, %v1808, 0.0
        %v2009 = vadd.f32 %v2007, %v2008
        %v2010 = vsel %vm1473, %v1809, 0.0
        %v2011 = vadd.f32 %v2009, %v2010
        %v2012 = vsel %vm1473, %v1810, 0.0
        %v2013 = vadd.f32 %v2011, %v2012
        %v2014 = vsel %vm1473, %v1811, 0.0
        %v2015 = vadd.f32 %v2013, %v2014
        %v2016 = vsel %vm1473, %v1812, 0.0
        %v2017 = vadd.f32 %v2015, %v2016
        %v2018 = vsel %vm1473, %v1813, 0.0
        %v2019 = vadd.f32 %v2017, %v2018
        %v2020 = vsel %vm1473, %v1814, 0.0
        %v2021 = vadd.f32 %v2019, %v2020
        %v2022 = vsel %vm1473, %v1815, 0.0
        %v2023 = vadd.f32 %v2021, %v2022
        %v2024 = vsel %vm1473, %v1816, 0.0
        %v2025 = vadd.f32 %v2023, %v2024
        %v2026 = vsel %vm1473, %v1817, 0.0
        %v2027 = vadd.f32 %v2025, %v2026
        %v2028 = vsel %vm1473, %v1818, 0.0
        %v2029 = vadd.f32 %v2027, %v2028
        %v2030 = vsel %vm1473, %v1819, 0.0
        %v2031 = vadd.f32 %v2029, %v2030
        %v2032 = vsel %vm1473, %v1820, 0.0
        %v2033 = vadd.f32 %v2031, %v2032
        %v2034 = vsel %vm1473, %v1821, 0.0
        %v2035 = vadd.f32 %v2033, %v2034
        %v2036 = vsel %vm1473, %v1822, 0.0
        %v2037 = vadd.f32 %v2035, %v2036
        %v2038 = vsel %vm1473, %v1823, 0.0
        %v2039 = vadd.f32 %v2037, %v2038
        %v2040 = vsel %vm1473, %v1824, 0.0
        %v2041 = vadd.f32 %v2039, %v2040
        %v2042 = vsel %vm1473, %v1825, 0.0
        %v2043 = vadd.f32 %v2041, %v2042
        %v2044 = vsel %vm1473, %v1826, 0.0
        %v2045 = vadd.f32 %v2043, %v2044
        %v2046 = vsel %vm1473, %v1827, 0.0
        %v2047 = vadd.f32 %v2045, %v2046
        %v2048 = vsel %vm1473, %v1828, 0.0
        %v2049 = vadd.f32 %v2047, %v2048
        %v2050 = vsel %vm1473, %v1829, 0.0
        %v2051 = vadd.f32 %v2049, %v2050
        %v2052 = vsel %vm1473, %v1830, 0.0
        %v2053 = vadd.f32 %v2051, %v2052
        %v2054 = vsel %vm1473, %v1831, 0.0
        %v2055 = vadd.f32 %v2053, %v2054
        %v2056 = vsel %vm1473, %v1832, 0.0
        %v2057 = vadd.f32 %v2055, %v2056
        %v2058 = vsel %vm1473, %v1833, 0.0
        %v2059 = vadd.f32 %v2057, %v2058
        %v2060 = vsel %vm1473, %v1834, 0.0
        %v2061 = vadd.f32 %v2059, %v2060
        %v2062 = vsel %vm1473, %v1835, 0.0
        %v2063 = vadd.f32 %v2061, %v2062
        %v2064 = vsel %vm1473, %v1836, 0.0
        %v2065 = vadd.f32 %v2063, %v2064
        %v2066 = vsel %vm1473, %v1837, 0.0
        %v2067 = vadd.f32 %v2065, %v2066
        %v2068 = vsel %vm1473, %v1838, 0.0
        %v2069 = vadd.f32 %v2067, %v2068
        %v2070 = vsel %vm1473, %v1839, 0.0
        %v2071 = vadd.f32 %v2069, %v2070
        %v2072 = vsel %vm1473, %v1840, 0.0
        %v2073 = vadd.f32 %v2071, %v2072
        %v2074 = vsel %vm1473, %v1841, 0.0
        %v2075 = vadd.f32 %v2073, %v2074
        %v2076 = vsel %vm1473, %v1842, 0.0
        %v2077 = vadd.f32 %v2075, %v2076
        %v2078 = vsel %vm1473, %v1843, 0.0
        %v2079 = vadd.f32 %v2077, %v2078
        %v2080 = vsel %vm1473, %v1844, 0.0
        %v2081 = vadd.f32 %v2079, %v2080
        %v2082 = vsel %vm1473, %v1845, 0.0
        %v2083 = vadd.f32 %v2081, %v2082
        %v2084 = vsel %vm1473, %v1846, 0.0
        %v2085 = vadd.f32 %v2083, %v2084
        %v2086 = vsel %vm1473, %v1847, 0.0
        %v2087 = vadd.f32 %v2085, %v2086
        %v2088 = vsel %vm1473, %v1848, 0.0
        %v2089 = vadd.f32 %v2087, %v2088
        %v2090 = vsel %vm1473, %v1849, 0.0
        %v2091 = vadd.f32 %v2089, %v2090
        %v2092 = vsel %vm1473, %v1850, 0.0
        %v2093 = vadd.f32 %v2091, %v2092
        %v2094 = vsel %vm1473, %v1851, 0.0
        %v2095 = vadd.f32 %v2093, %v2094
        %v2096 = vsel %vm1473, %v1852, 0.0
        %v2097 = vadd.f32 %v2095, %v2096
        %v2098 = vsel %vm1473, %v1853, 0.0
        %v2099 = vadd.f32 %v2097, %v2098
        %v2100 = vsel %vm1473, %v1854, 0.0
        %v2101 = vadd.f32 %v2099, %v2100
        %v2102 = vsel %vm1473, %v1855, 0.0
        %v2103 = vadd.f32 %v2101, %v2102
        %v2104 = vsel %vm1473, %v1856, 0.0
        %v2105 = vadd.f32 %v2103, %v2104
        %v2106 = vsel %vm1473, %v1857, 0.0
        %v2107 = vadd.f32 %v2105, %v2106
        %v2108 = vsel %vm1473, %v1858, 0.0
        %v2109 = vadd.f32 %v2107, %v2108
        %v2110 = vsel %vm1473, %v1859, 0.0
        %v2111 = vadd.f32 %v2109, %v2110
        %v2112 = vsel %vm1473, %v1860, 0.0
        %v2113 = vadd.f32 %v2111, %v2112
        %v2114 = vsel %vm1473, %v1861, 0.0
        %v2115 = vadd.f32 %v2113, %v2114
        %v2116 = vsel %vm1473, %v1862, 0.0
        %v2117 = vadd.f32 %v2115, %v2116
        %v2118 = vrot.slane %v2117, 4
        %v2119 = vadd.f32 %v2117, %v2118
        %v2120 = vrot.slane %v2119, 2
        %v2121 = vadd.f32 %v2119, %v2120
        %v2122 = vrot.slane %v2121, 1
        %v2123 = vadd.f32 %v2121, %v2122
        %vm2124 = vcmask 1040384
        %v2125 = vsel %vm2124, %v1734, %v2123
        %vm2126 = vcmask 517120
        %2127 = vst.msk [vmem:[%s226] sm:$0x3] %vm2126, %v2125
        %s2128 = smul.u32 128, %s17
        %p2129 = scmp.lt.s32.totalorder %s2128, 255
        %s2130 = scalar_select %p2129, %s2128, 255
        %s2131 = smul.addr %s2130, 4
        %s2132 = scalar_lea.vmem %s3, %s2131
        %p2133 = scmp.lt.s32.totalorder %s17, 1
        %s2134 = scalar_select %p2133, %s17, 1
        %s2135 = smul.addr %s2134, 2
        %s2136 = scalar_lea.vmem %s4, %s2135
        // Predicated region
        $region37: #{cnn_forward.8} parent=31 // pred_check
          %p2137 = pneg %p103
        $region38: #{cnn_forward.8} parent=31 // pred_check_branch
          %2139 = sbr.rel (%p2137) target = $region40
        $region39: #{cnn_forward.8} parent=31 // pred_region
          %s2140 = smul.u32 128, %s17
        $region40: #{cnn_forward.8} parent=31 // pred_fallthru
          _
        // Predicated region
        $region41: #{cnn_forward.8} parent=31 // pred_check
          %p2141 = pneg %p129
        $region42: #{cnn_forward.8} parent=31 // pred_check_branch
          %2143 = sbr.rel (%p2141) target = $region44
        $region43: #{cnn_forward.8} parent=31 // pred_region
          _
        $region44: #{cnn_forward.8} parent=31 // pred_fallthru
          _
      $region32: #{cnn_forward.8} parent=5 // pred_fallthru
        _
      %p2144 = scmp.le.s32.totalorder 2, %s12
      // Predicated region
      $region45: #{cnn_forward.8} parent=5 // pred_check
        %p2145 = pneg %p2144
      $region46: #{cnn_forward.8} parent=5 // pred_check_branch
        %2147 = sbr.rel (%p2145) target = $region48
      $region47: #{cnn_forward.8} parent=5 // pred_region
        %s2148 = ssub.s32 %s12, 2
        // Predicated region
        $region49: #{cnn_forward.8} parent=47 // pred_check
          %p2149 = pneg %p109
        $region50: #{cnn_forward.8} parent=47 // pred_check_branch
          %2151 = sbr.rel (%p2149) target = $region52
        $region51: #{cnn_forward.8} parent=47 // pred_region
          %s2152 = smul.u32 128, %s18
          %p2153 = scmp.lt.s32.totalorder %s2152, 255
          %s2154 = scalar_select %p2153, %s2152, 255
          %s2155 = smul.addr %s2154, 4
          %s2156 = scalar_lea.vmem %s3, %s2155
        $region52: #{cnn_forward.8} parent=47 // pred_fallthru
          _
        // Predicated region
        $region53: #{cnn_forward.8} parent=47 // pred_check
          %p2157 = pneg %p135
        $region54: #{cnn_forward.8} parent=47 // pred_check_branch
          %2159 = sbr.rel (%p2157) target = $region56
        $region55: #{cnn_forward.8} parent=47 // pred_region
          %p2160 = scmp.lt.s32.totalorder %s18, 1
          %s2161 = scalar_select %p2160, %s18, 1
          %s2162 = smul.addr %s2161, 2
          %s2163 = scalar_lea.vmem %s4, %s2162
        $region56: #{cnn_forward.8} parent=47 // pred_fallthru
          _
      $region48: #{cnn_forward.8} parent=5 // pred_fallthru
        _
    $region6: #{cnn_forward.8} parent=1 // loop_footer
      %s16 = sadd.s32 1, %s12
    $region7: #{cnn_forward.8} parent=1 // loop_footer_branch
      %11 = sbr.rel target = $region3
    $region8: #{cnn_forward.8} parent=1 // loop_exit
      _
    %2164 = vsyncpa [#allocation3], 1
    %s2165 = scalar_lea.sflag [#allocation3], 1
    %2166 = vsyncpa %s2165, 1

// kernel: cnn_forward.10
$region0: #{cnn_forward.10}
  #allocation0 [shape = 'u32[]', space=smem, size = 0x4, offset = 0x4, fixed_abs, tag = 'smem constant byte address 0x4 - core index']
  #allocation1 [shape = 'u32[72,128]{1,0:T(1,128)}', space=vmem, size = 0x9000, scoped, tag = 'internal scratch']
  %s0 = inlined_call_operand.vmem [shape: bf16[32,1024], index: 0, kind: input, shape index: {}]
  %s1 = inlined_call_operand.vmem [shape: f32[32,2], index: 1, kind: input, shape index: {}]
  %s2 = inlined_call_operand.vmem [shape: f32[192,16], index: 2, kind: input, shape index: {}]
  %s3 = inlined_call_operand.vmem [shape: f32[1,16], index: 3, kind: input, shape index: {}]
  %s4 = inlined_call_operand.vmem [shape: f32[1,16], index: 4, kind: input, shape index: {}]
  %s5 = inlined_call_operand.vmem [shape: f32[16,4], index: 5, kind: input, shape index: {}]
  %s6 = inlined_call_operand.vmem [shape: f32[1,4], index: 6, kind: input, shape index: {}]
  %s7 = inlined_call_operand.vmem [shape: f32[32,4], index: 7, kind: output, shape index: {}]
  %s8 = sld [smem:[#allocation0]]
  $region38: #{cnn_forward.10} parent=0
    _
  %s10 = ssub.s32 1, %s8
  %s11 = scalar_select 0, %s10, %s8
  // Predicated region
  $region2: #{cnn_forward.10} parent=0 // pred_check
    _
  $region3: #{cnn_forward.10} parent=0 // pred_check_branch
    %13 = sbr.rel (0) target = $region5
  $region4: #{cnn_forward.10} parent=0 // pred_region
    _
  $region5: #{cnn_forward.10} parent=0 // pred_fallthru
    _
  // Predicated region
  $region6: #{cnn_forward.10} parent=0 // pred_check
    _
  $region7: #{cnn_forward.10} parent=0 // pred_check_branch
    %15 = sbr.rel (0) target = $region9
  $region8: #{cnn_forward.10} parent=0 // pred_region
    _
  $region9: #{cnn_forward.10} parent=0 // pred_fallthru
    _
  // Predicated region
  $region10: #{cnn_forward.10} parent=0 // pred_check
    _
  $region11: #{cnn_forward.10} parent=0 // pred_check_branch
    %17 = sbr.rel (0) target = $region13
  $region12: #{cnn_forward.10} parent=0 // pred_region
    _
  $region13: #{cnn_forward.10} parent=0 // pred_fallthru
    _
  // Predicated region
  $region14: #{cnn_forward.10} parent=0 // pred_check
    _
  $region15: #{cnn_forward.10} parent=0 // pred_check_branch
    %19 = sbr.rel (0) target = $region17
  $region16: #{cnn_forward.10} parent=0 // pred_region
    _
  $region17: #{cnn_forward.10} parent=0 // pred_fallthru
    _
  // Predicated region
  $region18: #{cnn_forward.10} parent=0 // pred_check
    _
  $region19: #{cnn_forward.10} parent=0 // pred_check_branch
    %21 = sbr.rel (0) target = $region21
  $region20: #{cnn_forward.10} parent=0 // pred_region
    _
  $region21: #{cnn_forward.10} parent=0 // pred_fallthru
    _
  // Predicated region
  $region22: #{cnn_forward.10} parent=0 // pred_check
    _
  $region23: #{cnn_forward.10} parent=0 // pred_check_branch
    %23 = sbr.rel (0) target = $region25
  $region24: #{cnn_forward.10} parent=0 // pred_region
    _
  $region25: #{cnn_forward.10} parent=0 // pred_fallthru
    _
  // Predicated region
  $region26: #{cnn_forward.10} parent=0 // pred_check
    _
  $region27: #{cnn_forward.10} parent=0 // pred_check_branch
    %25 = sbr.rel (0) target = $region29
  $region28: #{cnn_forward.10} parent=0 // pred_region
    _
  $region29: #{cnn_forward.10} parent=0 // pred_fallthru
    _
  %v26 = vld [vmem:[%s0] sm:$0xff]
  %v27 = vld [vmem:[%s0 + $0x8] sm:$0xff]
  %v28 = vld [vmem:[%s0 + $0x10] sm:$0xff]
  %v29 = vld [vmem:[%s0 + $0x18] sm:$0xff]
  %v30 = vld [vmem:[%s0 + $0x20] sm:$0xff]
  %v31 = vld [vmem:[%s0 + $0x28] sm:$0xff]
  %v32 = vld [vmem:[%s0 + $0x30] sm:$0xff]
  %v33 = vld [vmem:[%s0 + $0x38] sm:$0xff]
  %v34 = vld [vmem:[%s0 + $0x40] sm:$0xff]
  %v35 = vld [vmem:[%s0 + $0x48] sm:$0xff]
  %v36 = vld [vmem:[%s0 + $0x50] sm:$0xff]
  %v37 = vld [vmem:[%s0 + $0x58] sm:$0xff]
  %v38 = vld [vmem:[%s0 + $0x60] sm:$0xff]
  %v39 = vld [vmem:[%s0 + $0x68] sm:$0xff]
  %v40 = vld [vmem:[%s0 + $0x70] sm:$0xff]
  %v41 = vld [vmem:[%s0 + $0x78] sm:$0xff]
  %v42 = vunpack.c.l.bf16 %v26
  %v43 = vunpack.c.h.bf16 %v26
  %v44 = vunpack.c.l.bf16 %v27
  %v45 = vunpack.c.h.bf16 %v27
  %v46 = vunpack.c.l.bf16 %v28
  %v47 = vunpack.c.h.bf16 %v28
  %v48 = vunpack.c.l.bf16 %v29
  %v49 = vunpack.c.h.bf16 %v29
  %v50 = vunpack.c.l.bf16 %v30
  %v51 = vunpack.c.h.bf16 %v30
  %v52 = vunpack.c.l.bf16 %v31
  %v53 = vunpack.c.h.bf16 %v31
  %v54 = vunpack.c.l.bf16 %v32
  %v55 = vunpack.c.h.bf16 %v32
  %v56 = vunpack.c.l.bf16 %v33
  %v57 = vunpack.c.h.bf16 %v33
  %v58 = vunpack.c.l.bf16 %v34
  %v59 = vunpack.c.h.bf16 %v34
  %v60 = vunpack.c.l.bf16 %v35
  %v61 = vunpack.c.h.bf16 %v35
  %v62 = vunpack.c.l.bf16 %v36
  %v63 = vunpack.c.h.bf16 %v36
  %v64 = vunpack.c.l.bf16 %v37
  %v65 = vunpack.c.h.bf16 %v37
  %v66 = vunpack.c.l.bf16 %v38
  %v67 = vunpack.c.h.bf16 %v38
  %v68 = vunpack.c.l.bf16 %v39
  %v69 = vunpack.c.h.bf16 %v39
  %v70 = vunpack.c.l.bf16 %v40
  %v71 = vunpack.c.h.bf16 %v40
  %v72 = vunpack.c.l.bf16 %v41
  %v73 = vunpack.c.h.bf16 %v41
  %78 = vrot.lane.b32.xlu0 %v42, 64
  %v79 = vpop.permute.xlu0 %78
  %80 = vrot.lane.b32.xlu0 %v50, 64
  %v81 = vpop.permute.xlu0 %80
  %82 = vrot.lane.b32.xlu0 %v58, 64
  %v83 = vpop.permute.xlu0 %82
  %84 = vrot.lane.b32.xlu0 %v66, 64
  %v85 = vpop.permute.xlu0 %84
  %v90 = vadd.f32 %v42, %v79
  %v91 = vadd.f32 %v50, %v81
  %v92 = vadd.f32 %v58, %v83
  %v93 = vadd.f32 %v66, %v85
  %v94 = vadd.f32 %v90, %v43
  %v95 = vadd.f32 %v91, %v51
  %v96 = vadd.f32 %v92, %v59
  %v97 = vadd.f32 %v93, %v67
  %102 = vrot.lane.b32.xlu0 %v43, 64
  %v103 = vpop.permute.xlu0 %102
  %104 = vrot.lane.b32.xlu0 %v51, 64
  %v105 = vpop.permute.xlu0 %104
  %106 = vrot.lane.b32.xlu0 %v59, 64
  %v107 = vpop.permute.xlu0 %106
  %108 = vrot.lane.b32.xlu0 %v67, 64
  %v109 = vpop.permute.xlu0 %108
  %v114 = vadd.f32 %v94, %v103
  %v115 = vadd.f32 %v95, %v105
  %v116 = vadd.f32 %v96, %v107
  %v117 = vadd.f32 %v97, %v109
  %v118 = vadd.f32 %v114, %v44
  %v119 = vadd.f32 %v115, %v52
  %v120 = vadd.f32 %v116, %v60
  %v121 = vadd.f32 %v117, %v68
  %126 = vrot.lane.b32.xlu0 %v44, 64
  %v127 = vpop.permute.xlu0 %126
  %128 = vrot.lane.b32.xlu0 %v52, 64
  %v129 = vpop.permute.xlu0 %128
  %130 = vrot.lane.b32.xlu0 %v60, 64
  %v131 = vpop.permute.xlu0 %130
  %132 = vrot.lane.b32.xlu0 %v68, 64
  %v133 = vpop.permute.xlu0 %132
  %v138 = vadd.f32 %v118, %v127
  %v139 = vadd.f32 %v119, %v129
  %v140 = vadd.f32 %v120, %v131
  %v141 = vadd.f32 %v121, %v133
  %v142 = vadd.f32 %v138, %v45
  %v143 = vadd.f32 %v139, %v53
  %v144 = vadd.f32 %v140, %v61
  %v145 = vadd.f32 %v141, %v69
  %150 = vrot.lane.b32.xlu0 %v45, 64
  %v151 = vpop.permute.xlu0 %150
  %152 = vrot.lane.b32.xlu0 %v53, 64
  %v153 = vpop.permute.xlu0 %152
  %154 = vrot.lane.b32.xlu0 %v61, 64
  %v155 = vpop.permute.xlu0 %154
  %156 = vrot.lane.b32.xlu0 %v69, 64
  %v157 = vpop.permute.xlu0 %156
  %v162 = vadd.f32 %v142, %v151
  %v163 = vadd.f32 %v143, %v153
  %v164 = vadd.f32 %v144, %v155
  %v165 = vadd.f32 %v145, %v157
  %v166 = vadd.f32 %v162, %v46
  %v167 = vadd.f32 %v163, %v54
  %v168 = vadd.f32 %v164, %v62
  %v169 = vadd.f32 %v165, %v70
  %174 = vrot.lane.b32.xlu0 %v46, 64
  %v175 = vpop.permute.xlu0 %174
  %176 = vrot.lane.b32.xlu0 %v54, 64
  %v177 = vpop.permute.xlu0 %176
  %178 = vrot.lane.b32.xlu0 %v62, 64
  %v179 = vpop.permute.xlu0 %178
  %180 = vrot.lane.b32.xlu0 %v70, 64
  %v181 = vpop.permute.xlu0 %180
  %v186 = vadd.f32 %v166, %v175
  %v187 = vadd.f32 %v167, %v177
  %v188 = vadd.f32 %v168, %v179
  %v189 = vadd.f32 %v169, %v181
  %v190 = vadd.f32 %v186, %v47
  %v191 = vadd.f32 %v187, %v55
  %v192 = vadd.f32 %v188, %v63
  %v193 = vadd.f32 %v189, %v71
  %198 = vrot.lane.b32.xlu0 %v47, 64
  %v199 = vpop.permute.xlu0 %198
  %200 = vrot.lane.b32.xlu0 %v55, 64
  %v201 = vpop.permute.xlu0 %200
  %202 = vrot.lane.b32.xlu0 %v63, 64
  %v203 = vpop.permute.xlu0 %202
  %204 = vrot.lane.b32.xlu0 %v71, 64
  %v205 = vpop.permute.xlu0 %204
  %v210 = vadd.f32 %v190, %v199
  %v211 = vadd.f32 %v191, %v201
  %v212 = vadd.f32 %v192, %v203
  %v213 = vadd.f32 %v193, %v205
  %v214 = vadd.f32 %v210, %v48
  %v215 = vadd.f32 %v211, %v56
  %v216 = vadd.f32 %v212, %v64
  %v217 = vadd.f32 %v213, %v72
  %222 = vrot.lane.b32.xlu0 %v48, 64
  %v223 = vpop.permute.xlu0 %222
  %224 = vrot.lane.b32.xlu0 %v56, 64
  %v225 = vpop.permute.xlu0 %224
  %226 = vrot.lane.b32.xlu0 %v64, 64
  %v227 = vpop.permute.xlu0 %226
  %228 = vrot.lane.b32.xlu0 %v72, 64
  %v229 = vpop.permute.xlu0 %228
  %v234 = vadd.f32 %v214, %v223
  %v235 = vadd.f32 %v215, %v225
  %v236 = vadd.f32 %v216, %v227
  %v237 = vadd.f32 %v217, %v229
  %v238 = vadd.f32 %v234, %v49
  %v239 = vadd.f32 %v235, %v57
  %v240 = vadd.f32 %v236, %v65
  %v241 = vadd.f32 %v237, %v73
  %246 = vrot.lane.b32.xlu0 %v49, 64
  %v247 = vpop.permute.xlu0 %246
  %248 = vrot.lane.b32.xlu0 %v57, 64
  %v249 = vpop.permute.xlu0 %248
  %250 = vrot.lane.b32.xlu0 %v65, 64
  %v251 = vpop.permute.xlu0 %250
  %252 = vrot.lane.b32.xlu0 %v73, 64
  %v253 = vpop.permute.xlu0 %252
  %v258 = vadd.f32 %v238, %v247
  %v259 = vadd.f32 %v239, %v249
  %v260 = vadd.f32 %v240, %v251
  %v261 = vadd.f32 %v241, %v253
  %v262 = vmul.f32 %v258, 0.0625
  %v263 = vmul.f32 %v259, 0.0625
  %v264 = vmul.f32 %v260, 0.0625
  %v265 = vmul.f32 %v261, 0.0625
  %v266 = vld [vmem:[%s1] sm:$0xff]
  %v267 = vld [vmem:[%s1 + $0x8] sm:$0xff]
  %v268 = vld [vmem:[%s1 + $0x10] sm:$0xff]
  %v269 = vld [vmem:[%s1 + $0x18] sm:$0xff]
  %v270 = vrot.slane %v262, 7
  %v271 = vrot.slane %v263, 7
  %v272 = vrot.slane %v264, 7
  %v273 = vrot.slane %v265, 7
  %v274 = vlaneseq
  %v275 = vshrl.u32 %v274, 7
  %vm276 = vcmp.lt.s32.totalorder %v275, 1
  %v277 = vsel %vm276, %v272, %v273
  %v278 = vsel %vm276, %v271, %v272
  %v279 = vsel %vm276, %v270, %v271
  %v280 = vsel %vm276, %v273, %v270
  %282 = vset.pattern.permute.xlu0 0
  %283 = vperm.xlu0 %282, %v266
  %v284 = vpop.permute.xlu0 %283
  %287 = vset.pattern.permute.xlu0 0
  %288 = vperm.xlu0 %287, %v267
  %v289 = vpop.permute.xlu0 %288
  %292 = vset.pattern.permute.xlu0 0
  %293 = vperm.xlu0 %292, %v268
  %v294 = vpop.permute.xlu0 %293
  %297 = vset.pattern.permute.xlu0 0
  %298 = vperm.xlu0 %297, %v269
  %v299 = vpop.permute.xlu0 %298
  %v301 = vmul.f32 %v280, %v284
  %v302 = vmul.f32 %v279, %v289
  %v303 = vmul.f32 %v278, %v294
  %v304 = vmul.f32 %v277, %v299
  %v305 = vrot.slane %v262, 1
  %v306 = vrot.slane %v263, 1
  %v307 = vrot.slane %v264, 1
  %v308 = vrot.slane %v265, 1
  %vm309 = vcmp.lt.s32.totalorder %v275, 7
  %v310 = vsel %vm309, %v307, %v308
  %v311 = vsel %vm309, %v306, %v307
  %v312 = vsel %vm309, %v305, %v306
  %v313 = vsel %vm309, %v308, %v305
  %314 = vset.pattern.permute.xlu0 1
  %315 = vperm.xlu0 %314, %v266
  %v316 = vpop.permute.xlu0 %315
  %318 = vset.pattern.permute.xlu0 1
  %319 = vperm.xlu0 %318, %v267
  %v320 = vpop.permute.xlu0 %319
  %322 = vset.pattern.permute.xlu0 1
  %323 = vperm.xlu0 %322, %v268
  %v324 = vpop.permute.xlu0 %323
  %326 = vset.pattern.permute.xlu0 1
  %327 = vperm.xlu0 %326, %v269
  %v328 = vpop.permute.xlu0 %327
  %v330 = vmul.f32 %v312, %v316
  %v331 = vmul.f32 %v311, %v320
  %v332 = vmul.f32 %v310, %v324
  %v333 = vmul.f32 %v313, %v328
  %v334 = vld [vmem:[%s2] sm:$0xff]
  %v335 = vld [vmem:[%s2 + $0x8] sm:$0xff]
  %v336 = vld [vmem:[%s2 + $0x10] sm:$0xff]
  %v337 = vld [vmem:[%s2 + $0x18] sm:$0xff]
  %v338 = vld [vmem:[%s2 + $0x20] sm:$0xff]
  %v339 = vld [vmem:[%s2 + $0x28] sm:$0xff]
  %v340 = vld [vmem:[%s2 + $0x30] sm:$0xff]
  %v341 = vld [vmem:[%s2 + $0x38] sm:$0xff]
  %v342 = vld [vmem:[%s2 + $0x40] sm:$0xff]
  %v343 = vld [vmem:[%s2 + $0x48] sm:$0xff]
  %v344 = vld [vmem:[%s2 + $0x50] sm:$0xff]
  %v345 = vld [vmem:[%s2 + $0x58] sm:$0xff]
  %v346 = vld [vmem:[%s2 + $0x60] sm:$0xff]
  %v347 = vld [vmem:[%s2 + $0x68] sm:$0xff]
  %v348 = vld [vmem:[%s2 + $0x70] sm:$0xff]
  %v349 = vld [vmem:[%s2 + $0x78] sm:$0xff]
  %v350 = vld [vmem:[%s2 + $0x80] sm:$0xff]
  %v351 = vld [vmem:[%s2 + $0x88] sm:$0xff]
  %v352 = vld [vmem:[%s2 + $0x90] sm:$0xff]
  %v353 = vld [vmem:[%s2 + $0x98] sm:$0xff]
  %v354 = vld [vmem:[%s2 + $0xa0] sm:$0xff]
  %v355 = vld [vmem:[%s2 + $0xa8] sm:$0xff]
  %v356 = vld [vmem:[%s2 + $0xb0] sm:$0xff]
  %v357 = vld [vmem:[%s2 + $0xb8] sm:$0xff]
  %vm358 = vcmask 523264
  %v360 = vsel %vm358, %v262, 0
  %v363 = vsel %vm358, %v263, 0
  %v366 = vsel %vm358, %v264, 0
  %v369 = vsel %vm358, %v265, 0
  %371 = vmatpush.msra.mxu0 0.0
  %372 = vmatpush.msra.mxu0 0.0
  %373 = vmatpush.msra.mxu0 0.0
  %374 = vmatpush.msra.mxu0 0.0
  %375 = vmatpush.msra.mxu0 0.0
  %376 = vmatpush.msra.mxu0 0.0
  %377 = vmatpush.msra.mxu0 0.0
  %378 = vmatpush.msra.mxu0 0.0
  %379 = vmatpush.msra.mxu0 %v349
  %380 = vmatpush.msra.mxu0 %v348
  %381 = vmatpush.msra.mxu0 %v347
  %382 = vmatpush.msra.mxu0 %v346
  %383 = vmatpush.msra.mxu0 %v345
  %384 = vmatpush.msra.mxu0 %v344
  %385 = vmatpush.msra.mxu0 %v343
  %386 = vmatpush.msra.mxu0 %v342
  %387 = vmatmul.f32.gmra.mxu0 %v360
  %v388 = vpop.f32.mrf.mxu0
  %v389 = vadd.f32 0.0, %v388
  %390 = vmatmul.f32.gmra.mxu0 %v363
  %v391 = vpop.f32.mrf.mxu0
  %v392 = vadd.f32 0.0, %v391
  %393 = vmatmul.f32.gmra.mxu0 %v366
  %v394 = vpop.f32.mrf.mxu0
  %v395 = vadd.f32 0.0, %v394
  %396 = vmatmul.f32.gmra.mxu0 %v369
  %v397 = vpop.f32.mrf.mxu0
  %v398 = vadd.f32 0.0, %v397
  %399 = vdwg.mxu0
  %v401 = vsel %vm358, %v301, 0
  %v404 = vsel %vm358, %v302, 0
  %v407 = vsel %vm358, %v303, 0
  %v410 = vsel %vm358, %v304, 0
  %412 = vmatpush.msra.mxu0 0.0
  %413 = vmatpush.msra.mxu0 0.0
  %414 = vmatpush.msra.mxu0 0.0
  %415 = vmatpush.msra.mxu0 0.0
  %416 = vmatpush.msra.mxu0 0.0
  %417 = vmatpush.msra.mxu0 0.0
  %418 = vmatpush.msra.mxu0 0.0
  %419 = vmatpush.msra.mxu0 0.0
  %420 = vmatpush.msra.mxu0 %v341
  %421 = vmatpush.msra.mxu0 %v340
  %422 = vmatpush.msra.mxu0 %v339
  %423 = vmatpush.msra.mxu0 %v338
  %424 = vmatpush.msra.mxu0 %v337
  %425 = vmatpush.msra.mxu0 %v336
  %426 = vmatpush.msra.mxu0 %v335
  %427 = vmatpush.msra.mxu0 %v334
  %428 = vmatmul.f32.gmra.mxu0 %v401
  %v429 = vpop.f32.mrf.mxu0
  %v430 = vadd.f32 %v389, %v429
  %431 = vmatmul.f32.gmra.mxu0 %v404
  %v432 = vpop.f32.mrf.mxu0
  %v433 = vadd.f32 %v392, %v432
  %434 = vmatmul.f32.gmra.mxu0 %v407
  %v435 = vpop.f32.mrf.mxu0
  %v436 = vadd.f32 %v395, %v435
  %437 = vmatmul.f32.gmra.mxu0 %v410
  %v438 = vpop.f32.mrf.mxu0
  %v439 = vadd.f32 %v398, %v438
  %440 = vdwg.mxu0
  %v442 = vsel %vm358, %v330, 0
  %v445 = vsel %vm358, %v331, 0
  %v448 = vsel %vm358, %v332, 0
  %v451 = vsel %vm358, %v333, 0
  %453 = vmatpush.msra.mxu0 0.0
  %454 = vmatpush.msra.mxu0 0.0
  %455 = vmatpush.msra.mxu0 0.0
  %456 = vmatpush.msra.mxu0 0.0
  %457 = vmatpush.msra.mxu0 0.0
  %458 = vmatpush.msra.mxu0 0.0
  %459 = vmatpush.msra.mxu0 0.0
  %460 = vmatpush.msra.mxu0 0.0
  %461 = vmatpush.msra.mxu0 %v357
  %462 = vmatpush.msra.mxu0 %v356
  %463 = vmatpush.msra.mxu0 %v355
  %464 = vmatpush.msra.mxu0 %v354
  %465 = vmatpush.msra.mxu0 %v353
  %466 = vmatpush.msra.mxu0 %v352
  %467 = vmatpush.msra.mxu0 %v351
  %468 = vmatpush.msra.mxu0 %v350
  %469 = vmatmul.f32.gmra.mxu0 %v442
  %v470 = vpop.f32.mrf.mxu0
  %v471 = vadd.f32 0.0, %v470
  %472 = vmatmul.f32.gmra.mxu0 %v445
  %v473 = vpop.f32.mrf.mxu0
  %v474 = vadd.f32 0.0, %v473
  %475 = vmatmul.f32.gmra.mxu0 %v448
  %v476 = vpop.f32.mrf.mxu0
  %v477 = vadd.f32 0.0, %v476
  %478 = vmatmul.f32.gmra.mxu0 %v451
  %v479 = vpop.f32.mrf.mxu0
  %v480 = vadd.f32 0.0, %v479
  %481 = vdwg.mxu0
  %v482 = vadd.f32 %v430, %v471
  %v483 = vadd.f32 %v433, %v474
  %v484 = vadd.f32 %v436, %v477
  %v485 = vadd.f32 %v439, %v480
  %vm486 = vcmask 130048
  %v487 = vsel %vm486, %v482, 0.0
  %v488 = vsel %vm486, %v483, 0.0
  %v489 = vadd.f32 %v487, %v488
  %v490 = vsel %vm486, %v484, 0.0
  %v491 = vadd.f32 %v489, %v490
  %v492 = vsel %vm486, %v485, 0.0
  %v493 = vadd.f32 %v491, %v492
  %v494 = vrot.slane %v493, 4
  %v495 = vadd.f32 %v493, %v494
  %v496 = vrot.slane %v495, 2
  %v497 = vadd.f32 %v495, %v496
  %v498 = vrot.slane %v497, 1
  %v499 = vadd.f32 %v497, %v498
  %v500 = vmul.f32 %v499, 0.03125
  %v501 = vmul.f32 %v482, %v482
  %v502 = vmul.f32 %v483, %v483
  %v503 = vmul.f32 %v484, %v484
  %v504 = vmul.f32 %v485, %v485
  %v505 = vsel %vm486, %v501, 0.0
  %v506 = vsel %vm486, %v502, 0.0
  %v507 = vadd.f32 %v505, %v506
  %v508 = vsel %vm486, %v503, 0.0
  %v509 = vadd.f32 %v507, %v508
  %v510 = vsel %vm486, %v504, 0.0
  %v511 = vadd.f32 %v509, %v510
  %v512 = vrot.slane %v511, 4
  %v513 = vadd.f32 %v511, %v512
  %v514 = vrot.slane %v513, 2
  %v515 = vadd.f32 %v513, %v514
  %v516 = vrot.slane %v515, 1
  %v517 = vadd.f32 %v515, %v516
  %v518 = vmul.f32 %v517, 0.03125
  %v519 = vmul.f32 %v500, %v500
  %v520 = vsub.f32 %v518, %v519
  %v521 = vmax.f32 %v520, 0.0
  %v522 = vsub.f32 %v482, %v500
  %v523 = vsub.f32 %v483, %v500
  %v524 = vsub.f32 %v484, %v500
  %v525 = vsub.f32 %v485, %v500
  %v526 = vadd.f32 %v521, 1e-05
  %v527 = vrsqrt.pop %v526
  %v528 = vmul.f32 %v527, %v526
  %v529 = vmul.f32 %v528, %v527
  %v530 = vmul.f32 0.5, %v529
  %v531 = vsub.f32 1.5, %v530
  %v532 = vmul.f32 %v527, %v531
  %vm533 = vweird.f32 %v526
  %vm534 = vweird.f32 %v527
  %vm535 = vmor %vm533, %vm534
  %v536 = vsel %vm535, %v527, %v532
  %v537 = vmul.f32 %v522, %v536
  %v538 = vmul.f32 %v523, %v536
  %v539 = vmul.f32 %v524, %v536
  %v540 = vmul.f32 %v525, %v536
  %v541 = vld [vmem:[%s3] sm:$0x1]
  %v543 = vperm.slane %v541, 0
  %v545 = vmul.f32 %v537, %v543
  %v546 = vmul.f32 %v538, %v543
  %v547 = vmul.f32 %v539, %v543
  %v548 = vmul.f32 %v540, %v543
  %v549 = vld [vmem:[%s4] sm:$0x1]
  %v551 = vperm.slane %v549, 0
  %v553 = vadd.f32 %v545, %v551
  %v554 = vadd.f32 %v546, %v551
  %v555 = vadd.f32 %v547, %v551
  %v556 = vadd.f32 %v548, %v551
  %v557 = vmax.f32 %v553, 0.0
  %v558 = vmax.f32 %v554, 0.0
  %v559 = vmax.f32 %v555, 0.0
  %v560 = vmax.f32 %v556, 0.0
  %v561 = vld [vmem:[%s5] sm:$0xff]
  %v562 = vld [vmem:[%s5 + $0x8] sm:$0xff]
  %v563 = vld [vmem:[%s6] sm:$0x1]
  %v565 = vperm.slane %v563, 0
  %v568 = vsel %vm486, %v557, 0
  %v571 = vsel %vm486, %v558, 0
  %v574 = vsel %vm486, %v559, 0
  %v577 = vsel %vm486, %v560, 0
  %579 = vmatpush.msra.mxu0 0.0
  %580 = vmatpush.msra.mxu0 0.0
  %581 = vmatpush.msra.mxu0 0.0
  %582 = vmatpush.msra.mxu0 0.0
  %583 = vmatpush.msra.mxu0 0.0
  %584 = vmatpush.msra.mxu0 0.0
  %585 = vmatpush.msra.mxu0 0.0
  %586 = vmatpush.msra.mxu0 0.0
  %587 = vmatpush.msra.mxu0 0.0
  %588 = vmatpush.msra.mxu0 0.0
  %589 = vmatpush.msra.mxu0 0.0
  %590 = vmatpush.msra.mxu0 0.0
  %591 = vmatpush.msra.mxu0 0.0
  %592 = vmatpush.msra.mxu0 0.0
  %593 = vmatpush.msra.mxu0 %v562
  %594 = vmatpush.msra.mxu0 %v561
  %595 = vmatmul.f32.gmra.mxu0 %v568
  %v596 = vpop.f32.mrf.mxu0
  %v597 = vadd.f32 %v565, %v596
  %598 = vmatmul.f32.gmra.mxu0 %v571
  %v599 = vpop.f32.mrf.mxu0
  %v600 = vadd.f32 %v565, %v599
  %601 = vmatmul.f32.gmra.mxu0 %v574
  %v602 = vpop.f32.mrf.mxu0
  %v603 = vadd.f32 %v565, %v602
  %604 = vmatmul.f32.gmra.mxu0 %v577
  %v605 = vpop.f32.mrf.mxu0
  %v606 = vadd.f32 %v565, %v605
  %607 = vdwg.mxu0
  %v608 = vmul.f32 %v597, 0.032258064
  %v609 = vmul.f32 %v600, 0.032258064
  %v610 = vmul.f32 %v603, 0.032258064
  %v611 = vmul.f32 %v606, 0.032258064
  %vm612 = vcmask 31744
  %v613 = vsel %vm612, %v608, -inf
  %614 = vmax.xlane.f32.xlu0 %v613
  %v615 = vpop.xlane.xlu0 %614
  %v616 = vsel %vm612, %v609, -inf
  %617 = vmax.xlane.f32.xlu0 %v616
  %v618 = vpop.xlane.xlu0 %617
  %v619 = vsel %vm612, %v610, -inf
  %620 = vmax.xlane.f32.xlu0 %v619
  %v621 = vpop.xlane.xlu0 %620
  %v622 = vsel %vm612, %v611, -inf
  %623 = vmax.xlane.f32.xlu0 %v622
  %v624 = vpop.xlane.xlu0 %623
  %v625 = vsub.f32 %v608, %v615
  %v626 = vsub.f32 %v609, %v618
  %v627 = vsub.f32 %v610, %v621
  %v628 = vsub.f32 %v611, %v624
  %v629 = vmul.f32 %v625, 1.442695
  %v630 = vpow.pop %v629
  %v631 = vmul.f32 %v626, 1.442695
  %v632 = vpow.pop %v631
  %v633 = vmul.f32 %v627, 1.442695
  %v634 = vpow.pop %v633
  %v635 = vmul.f32 %v628, 1.442695
  %v636 = vpow.pop %v635
  %v637 = vsel %vm612, %v630, 0.0
  %638 = vadd.xlane.f32.xlu0 %v637
  %v639 = vpop.xlane.xlu0 %638
  %v640 = vsel %vm612, %v632, 0.0
  %641 = vadd.xlane.f32.xlu0 %v640
  %v642 = vpop.xlane.xlu0 %641
  %v643 = vsel %vm612, %v634, 0.0
  %644 = vadd.xlane.f32.xlu0 %v643
  %v645 = vpop.xlane.xlu0 %644
  %v646 = vsel %vm612, %v636, 0.0
  %647 = vadd.xlane.f32.xlu0 %v646
  %v648 = vpop.xlane.xlu0 %647
  %v649 = vrcp.pop %v639
  %v650 = vmul.f32 %v639, %v649
  %v651 = vsub.f32 1.0, %v650
  %v652 = vmul.f32 %v649, %v651
  %v653 = vadd.f32 %v649, %v652
  %vm654 = vweird.f32 %v639
  %vm655 = vweird.f32 %v649
  %vm656 = vmor %vm654, %vm655
  %v657 = vsel %vm656, %v649, %v653
  %v658 = vand.u32 2147483647, %v639
  %vm659 = vcmp.eq.f32.partialorder %v658, 8.507059e+37
  %v660 = vand.u32 %v639, 2147483648
  %v661 = vor.u32 1.1754944e-38, %v660
  %v662 = vsel %vm659, %v661, %v657
  %v663 = vmul.f32 %v630, %v662
  %v664 = vrcp.pop %v642
  %v665 = vmul.f32 %v642, %v664
  %v666 = vsub.f32 1.0, %v665
  %v667 = vmul.f32 %v664, %v666
  %v668 = vadd.f32 %v664, %v667
  %vm669 = vweird.f32 %v642
  %vm670 = vweird.f32 %v664
  %vm671 = vmor %vm669, %vm670
  %v672 = vsel %vm671, %v664, %v668
  %v673 = vand.u32 2147483647, %v642
  %vm674 = vcmp.eq.f32.partialorder %v673, 8.507059e+37
  %v675 = vand.u32 %v642, 2147483648
  %v676 = vor.u32 1.1754944e-38, %v675
  %v677 = vsel %vm674, %v676, %v672
  %v678 = vmul.f32 %v632, %v677
  %v679 = vrcp.pop %v645
  %v680 = vmul.f32 %v645, %v679
  %v681 = vsub.f32 1.0, %v680
  %v682 = vmul.f32 %v679, %v681
  %v683 = vadd.f32 %v679, %v682
  %vm684 = vweird.f32 %v645
  %vm685 = vweird.f32 %v679
  %vm686 = vmor %vm684, %vm685
  %v687 = vsel %vm686, %v679, %v683
  %v688 = vand.u32 2147483647, %v645
  %vm689 = vcmp.eq.f32.partialorder %v688, 8.507059e+37
  %v690 = vand.u32 %v645, 2147483648
  %v691 = vor.u32 1.1754944e-38, %v690
  %v692 = vsel %vm689, %v691, %v687
  %v693 = vmul.f32 %v634, %v692
  %v694 = vrcp.pop %v648
  %v695 = vmul.f32 %v648, %v694
  %v696 = vsub.f32 1.0, %v695
  %v697 = vmul.f32 %v694, %v696
  %v698 = vadd.f32 %v694, %v697
  %vm699 = vweird.f32 %v648
  %vm700 = vweird.f32 %v694
  %vm701 = vmor %vm699, %vm700
  %v702 = vsel %vm701, %v694, %v698
  %v703 = vand.u32 2147483647, %v648
  %vm704 = vcmp.eq.f32.partialorder %v703, 8.507059e+37
  %v705 = vand.u32 %v648, 2147483648
  %v706 = vor.u32 1.1754944e-38, %v705
  %v707 = vsel %vm704, %v706, %v702
  %v708 = vmul.f32 %v636, %v707
  %709 = vst.msk [vmem:[%s7] sm:$0xff] %vm612, %v663
  %710 = vst.msk [vmem:[%s7 + $0x8] sm:$0xff] %vm612, %v678
  %711 = vst.msk [vmem:[%s7 + $0x10] sm:$0xff] %vm612, %v693
  %712 = vst.msk [vmem:[%s7 + $0x18] sm:$0xff] %vm612, %v708
  // Predicated region
  $region30: #{cnn_forward.10} parent=0 // pred_check
    _
  $region31: #{cnn_forward.10} parent=0 // pred_check_branch
    %714 = sbr.rel (0) target = $region33
  $region32: #{cnn_forward.10} parent=0 // pred_region
    _
  $region33: #{cnn_forward.10} parent=0 // pred_fallthru
    _
  // Predicated region
  $region34: #{cnn_forward.10} parent=0 // pred_check
    _
  $region35: #{cnn_forward.10} parent=0 // pred_check_branch
    %716 = sbr.rel (0) target = $region37
  $region36: #{cnn_forward.10} parent=0 // pred_region
    _
  $region37: #{cnn_forward.10} parent=0 // pred_fallthru
    _

// kernel: cnn_forward.12
$region0: #{cnn_forward.12}
  #allocation0 [shape = 'u32[]', space=smem, size = 0x4, offset = 0x4, fixed_abs, tag = 'smem constant byte address 0x4 - core index']
  #allocation1 [shape = 'u32[72,128]{1,0:T(1,128)}', space=vmem, size = 0x9000, scoped, tag = 'internal scratch']
  %s0 = inlined_call_operand.vmem [shape: bf16[64,512], index: 0, kind: input, shape index: {}]
  %s1 = inlined_call_operand.vmem [shape: f32[2,2,64], index: 1, kind: input, shape index: {}]
  %s2 = inlined_call_operand.vmem [shape: f32[1,64], index: 2, kind: input, shape index: {}]
  %s3 = inlined_call_operand.vmem [shape: f32[1,64], index: 3, kind: input, shape index: {}]
  %s4 = inlined_call_operand.vmem [shape: bf16[64,128], index: 4, kind: output, shape index: {}]
  %s5 = sld [smem:[#allocation0]]
  $region49: #{cnn_forward.12} parent=0
    _
  %s7 = ssub.s32 1, %s5
  %s8 = scalar_select 0, %s7, %s5
  loop: start=0, step=1, limit=4
  $region2: #{cnn_forward.12} parent=0 // loop_pre_header
    _
  $region3: #{cnn_forward.12} parent=0 // loop_header
    %s10 = sphi 0, %s14
    %p11 = scmp.ge.s32.totalorder %s10, 4
    %s20 = sphi 0, %s22
    %s23 = sphi 0, %s20
    %s24 = sphi 0, %s23
    %s40 = sphi 0, %s24
    %s44 = sphi 0, %s44
    %s46 = sphi 0, %s44
    %s47 = sphi 0, %s46
    %s61 = sphi 0, %s47
    %s65 = sphi 0, %s65
    %s67 = sphi 0, %s65
    %s68 = sphi 0, %s67
    %s82 = sphi 0, %s68
    %s86 = sphi 0, %s86
    %s88 = sphi 0, %s86
    %s89 = sphi 0, %s88
    %s103 = sphi 0, %s89
    %s109 = sphi 0, %s111
    %s112 = sphi 0, %s109
    %s113 = sphi 0, %s112
    %s129 = sphi 0, %s113
  $region4: #{cnn_forward.12} parent=0 // loop_header_branch
    %13 = sbr.rel (%p11) target = $region8
  $region5: #{cnn_forward.12} parent=0 // loop_body
    %s15 = ssub.s32 %s10, 1
    %s16 = ssub.s32 %s10, 2
    %s17 = sadd.s32 %s10, 1
    %s18 = ssub.s32 %s10, %s17
    %p19 = scmp.eq.s32.totalorder %s18, 0
    %s21 = sadd.s32 %s20, 1
    %s22 = scalar_select %p19, %s20, %s21
    %p25 = pneg %p19
    %p26 = scmp.eq.s32.totalorder %s10, 1
    %p27 = por %p25, %p26
    %p28 = scmp.ne.s32.totalorder %s20, %s23
    %p29 = scmp.eq.s32.totalorder %s10, 0
    %p30 = por %p28, %p29
    %p31 = scmp.ne.s32.totalorder %s20, %s23
    %p32 = scmp.eq.s32.totalorder %s15, 1
    %p33 = por %p31, %p32
    %p34 = scmp.ne.s32.totalorder %s23, %s24
    %p35 = scmp.eq.s32.totalorder %s15, 0
    %p36 = por %p34, %p35
    %p37 = scmp.ne.s32.totalorder %s23, %s24
    %p38 = scmp.eq.s32.totalorder %s16, 1
    %p39 = por %p37, %p38
    %p41 = scmp.ne.s32.totalorder %s24, %s40
    %p42 = scmp.eq.s32.totalorder %s16, 0
    %p43 = por %p41, %p42
    %s45 = sadd.s32 %s44, 1
    %p48 = scmp.eq.s32.totalorder %s10, 1
    %p49 = scmp.ne.s32.totalorder %s44, %s46
    %p50 = scmp.eq.s32.totalorder %s10, 0
    %p51 = por %p49, %p50
    %p52 = scmp.ne.s32.totalorder %s44, %s46
    %p53 = scmp.eq.s32.totalorder %s15, 1
    %p54 = por %p52, %p53
    %p55 = scmp.ne.s32.totalorder %s46, %s47
    %p56 = scmp.eq.s32.totalorder %s15, 0
    %p57 = por %p55, %p56
    %p58 = scmp.ne.s32.totalorder %s46, %s47
    %p59 = scmp.eq.s32.totalorder %s16, 1
    %p60 = por %p58, %p59
    %p62 = scmp.ne.s32.totalorder %s47, %s61
    %p63 = scmp.eq.s32.totalorder %s16, 0
    %p64 = por %p62, %p63
    %s66 = sadd.s32 %s65, 1
    %p69 = scmp.eq.s32.totalorder %s10, 1
    %p70 = scmp.ne.s32.totalorder %s65, %s67
    %p71 = scmp.eq.s32.totalorder %s10, 0
    %p72 = por %p70, %p71
    %p73 = scmp.ne.s32.totalorder %s65, %s67
    %p74 = scmp.eq.s32.totalorder %s15, 1
    %p75 = por %p73, %p74
    %p76 = scmp.ne.s32.totalorder %s67, %s68
    %p77 = scmp.eq.s32.totalorder %s15, 0
    %p78 = por %p76, %p77
    %p79 = scmp.ne.s32.totalorder %s67, %s68
    %p80 = scmp.eq.s32.totalorder %s16, 1
    %p81 = por %p79, %p80
    %p83 = scmp.ne.s32.totalorder %s68, %s82
    %p84 = scmp.eq.s32.totalorder %s16, 0
    %p85 = por %p83, %p84
    %s87 = sadd.s32 %s86, 1
    %p90 = scmp.eq.s32.totalorder %s10, 1
    %p91 = scmp.ne.s32.totalorder %s86, %s88
    %p92 = scmp.eq.s32.totalorder %s10, 0
    %p93 = por %p91, %p92
    %p94 = scmp.ne.s32.totalorder %s86, %s88
    %p95 = scmp.eq.s32.totalorder %s15, 1
    %p96 = por %p94, %p95
    %p97 = scmp.ne.s32.totalorder %s88, %s89
    %p98 = scmp.eq.s32.totalorder %s15, 0
    %p99 = por %p97, %p98
    %p100 = scmp.ne.s32.totalorder %s88, %s89
    %p101 = scmp.eq.s32.totalorder %s16, 1
    %p102 = por %p100, %p101
    %p104 = scmp.ne.s32.totalorder %s89, %s103
    %p105 = scmp.eq.s32.totalorder %s16, 0
    %p106 = por %p104, %p105
    %s107 = ssub.s32 %s10, %s17
    %p108 = scmp.eq.s32.totalorder %s107, 0
    %s110 = sadd.s32 %s109, 1
    %s111 = scalar_select %p108, %s109, %s110
    %p114 = pneg %p108
    %p115 = scmp.eq.s32.totalorder %s10, 1
    %p116 = por %p114, %p115
    %p117 = scmp.ne.s32.totalorder %s109, %s112
    %p118 = scmp.eq.s32.totalorder %s10, 0
    %p119 = por %p117, %p118
    %p120 = scmp.ne.s32.totalorder %s109, %s112
    %p121 = scmp.eq.s32.totalorder %s15, 1
    %p122 = por %p120, %p121
    %p123 = scmp.ne.s32.totalorder %s112, %s113
    %p124 = scmp.eq.s32.totalorder %s15, 0
    %p125 = por %p123, %p124
    %p126 = scmp.ne.s32.totalorder %s112, %s113
    %p127 = scmp.eq.s32.totalorder %s16, 1
    %p128 = por %p126, %p127
    %p130 = scmp.ne.s32.totalorder %s113, %s129
    %p131 = scmp.eq.s32.totalorder %s16, 0
    %p132 = por %p130, %p131
    %p133 = scmp.le.s32.totalorder 1, %s10
    %p134 = scmp.lt.s32.totalorder %s10, 3
    %p135 = pnand %p133, %p134
    %p136 = pneg %p135
    // Predicated region
    $region9: #{cnn_forward.12} parent=5 // pred_check
      _
    $region10: #{cnn_forward.12} parent=5 // pred_check_branch
      %138 = sbr.rel (%p135) target = $region12
    $region11: #{cnn_forward.12} parent=5 // pred_region
      %s139 = ssub.s32 %s10, 1
      // Predicated region
      $region13: #{cnn_forward.12} parent=11 // pred_check
        %p140 = pneg %p57
      $region14: #{cnn_forward.12} parent=11 // pred_check_branch
        %142 = sbr.rel (%p140) target = $region16
      $region15: #{cnn_forward.12} parent=11 // pred_region
        _
      $region16: #{cnn_forward.12} parent=11 // pred_fallthru
        _
      // Predicated region
      $region17: #{cnn_forward.12} parent=11 // pred_check
        %p143 = pneg %p78
      $region18: #{cnn_forward.12} parent=11 // pred_check_branch
        %145 = sbr.rel (%p143) target = $region20
      $region19: #{cnn_forward.12} parent=11 // pred_region
        _
      $region20: #{cnn_forward.12} parent=11 // pred_fallthru
        _
      // Predicated region
      $region21: #{cnn_forward.12} parent=11 // pred_check
        %p146 = pneg %p99
      $region22: #{cnn_forward.12} parent=11 // pred_check_branch
        %148 = sbr.rel (%p146) target = $region24
      $region23: #{cnn_forward.12} parent=11 // pred_region
        _
      $region24: #{cnn_forward.12} parent=11 // pred_fallthru
        _
    $region12: #{cnn_forward.12} parent=5 // pred_fallthru
      _
    %p149 = scmp.lt.s32.totalorder %s10, 2
    // Predicated region
    $region25: #{cnn_forward.12} parent=5 // pred_check
      %p150 = pneg %p149
    $region26: #{cnn_forward.12} parent=5 // pred_check_branch
      %152 = sbr.rel (%p150) target = $region28
    $region27: #{cnn_forward.12} parent=5 // pred_region
      // Predicated region
      $region29: #{cnn_forward.12} parent=27 // pred_check
        %p153 = pneg %p30
      $region30: #{cnn_forward.12} parent=27 // pred_check_branch
        %155 = sbr.rel (%p153) target = $region32
      $region31: #{cnn_forward.12} parent=27 // pred_region
        %s156 = smul.u32 4, %s10
        %p157 = scmp.lt.s32.totalorder %s156, 7
        %s158 = scalar_select %p157, %s156, 7
        %s159 = smul.addr %s158, 4
        %s160 = smul.addr %s159, 4
        %s161 = scalar_lea.vmem %s0, %s160
        %s162 = smul.u32 4, %s10
      $region32: #{cnn_forward.12} parent=27 // pred_fallthru
        _
    $region28: #{cnn_forward.12} parent=5 // pred_fallthru
      _
    %p163 = scmp.le.s32.totalorder 1, %s10
    %p164 = scmp.lt.s32.totalorder %s10, 3
    %p165 = pnand %p163, %p164
    %p166 = pneg %p165
    // Predicated region
    $region33: #{cnn_forward.12} parent=5 // pred_check
      _
    $region34: #{cnn_forward.12} parent=5 // pred_check_branch
      %168 = sbr.rel (%p165) target = $region36
    $region35: #{cnn_forward.12} parent=5 // pred_region
      %s169 = ssub.s32 %s10, 1
      %s170 = smul.u32 4, %s15
      %p171 = scmp.lt.s32.totalorder %s170, 7
      %s172 = scalar_select %p171, %s170, 7
      %s173 = smul.addr %s172, 4
      %s174 = smul.addr %s173, 4
      %s175 = scalar_lea.vmem %s0, %s174
      %p176 = pneg %p36
      %p177 = pneg %p33
      %p178 = pneg %p57
      %p179 = pneg %p54
      %p180 = pneg %p78
      %p181 = pneg %p75
      %p182 = pneg %p99
      %p183 = pneg %p96
      %p184 = pneg %p125
      %p185 = pneg %p122
      %s186 = smul.u32 4, %s15
      %p187 = scmp.lt.s32.totalorder %s186, 7
      %s188 = scalar_select %p187, %s186, 7
      %s189 = smul.addr %s188, 4
      %s190 = scalar_lea.vmem %s4, %s189
      %s191 = smul.u32 4, %s15
      %p192 = scmp.lt.s32.totalorder %s191, 7
      %s193 = scalar_select %p192, %s191, 7
      %s194 = smul.addr %s193, 4
      %s195 = smul.addr %s194, 4
      %s196 = scalar_lea.vmem %s0, %s195
      %s197 = smul.u32 4, %s15
      %s198 = smul.u32 4, %s15
      %p199 = scmp.lt.s32.totalorder %s198, 7
      %s200 = scalar_select %p199, %s198, 7
      %s201 = smul.addr %s200, 4
      %s202 = scalar_lea.vmem %s4, %s201
      %s203 = smul.u32 4, %s15
      %v204 = vld [vmem:[%s1] sm:$0x3]
      %v205 = vld [vmem:[%s1 + $0x2] sm:$0x3]
      %vm206 = vcmask 517120
      %v207 = vsel %vm206, %v204, 0.0
      %v208 = vsel %vm206, %v205, 0.0
      %v209 = vadd.f32 %v207, %v208
      %v210 = vmul.f32 %v209, 0.001953125
      %v211 = vmul.f32 %v210, %v210
      %v213 = vrot.slane %v211, 7
      %v215 = vsub.f32 %v210, %v213
      %v216 = vmax.f32 %v215, 0.0
      %v217 = vld [vmem:[%s2] sm:$0x1]
      %v218 = vadd.f32 %v216, 0.001
      %v219 = vrsqrt.pop %v218
      %v220 = vmul.f32 %v219, %v218
      %v221 = vmul.f32 %v220, %v219
      %v222 = vmul.f32 0.5, %v221
      %v223 = vsub.f32 1.5, %v222
      %v224 = vmul.f32 %v219, %v223
      %vm225 = vweird.f32 %v218
      %vm226 = vweird.f32 %v219
      %vm227 = vmor %vm225, %vm226
      %v228 = vsel %vm227, %v219, %v224
      %230 = vst [vmem:[#allocation1] sm:$0xff] %v228
      %s231 = scalar_lea.vmem [#allocation1], 1
      %v232 = vld [vmem:[%s231] ss:$9 sm:$0xff]
      %v234 = vmul.f32 %v217, %v232
      %v235 = vld [vmem:[%s3] sm:$0x1]
      %v236 = vmul.f32 %v210, %v234
      %v237 = vsub.f32 %v235, %v236
      %v238 = vld [vmem:[%s196] sm:$0xff]
      %v239 = vld [vmem:[%s196 + $0x8] sm:$0xff]
      %v240 = vld [vmem:[%s196 + $0x10] sm:$0xff]
      %v241 = vld [vmem:[%s196 + $0x18] sm:$0xff]
      %v242 = vld [vmem:[%s196 + $0x20] sm:$0xff]
      %v243 = vld [vmem:[%s196 + $0x28] sm:$0xff]
      %v244 = vld [vmem:[%s196 + $0x30] sm:$0xff]
      %v245 = vld [vmem:[%s196 + $0x38] sm:$0xff]
      %v246 = vunpack.c.l.bf16 %v238
      %v247 = vunpack.c.h.bf16 %v238
      %v248 = vunpack.c.l.bf16 %v239
      %v249 = vunpack.c.h.bf16 %v239
      %v250 = vunpack.c.l.bf16 %v240
      %v251 = vunpack.c.h.bf16 %v240
      %v252 = vunpack.c.l.bf16 %v241
      %v253 = vunpack.c.h.bf16 %v241
      %v254 = vunpack.c.l.bf16 %v242
      %v255 = vunpack.c.h.bf16 %v242
      %v256 = vunpack.c.l.bf16 %v243
      %v257 = vunpack.c.h.bf16 %v243
      %v258 = vunpack.c.l.bf16 %v244
      %v259 = vunpack.c.h.bf16 %v244
      %v260 = vunpack.c.l.bf16 %v245
      %v261 = vunpack.c.h.bf16 %v245
      %v263 = vperm.slane %v234, 0
      %v265 = vmul.f32 %v246, %v263
      %v266 = vmul.f32 %v250, %v263
      %v267 = vmul.f32 %v254, %v263
      %v268 = vmul.f32 %v258, %v263
      %v270 = vperm.slane %v237, 0
      %v272 = vadd.f32 %v265, %v270
      %v273 = vadd.f32 %v266, %v270
      %v274 = vadd.f32 %v267, %v270
      %v275 = vadd.f32 %v268, %v270
      %v276 = vmax.f32 %v272, 0.0
      %v277 = vmax.f32 %v273, 0.0
      %v278 = vmax.f32 %v274, 0.0
      %v279 = vmax.f32 %v275, 0.0
      %280 = vrot.lane.b32.xlu0 %v263, 64
      %v281 = vpop.permute.xlu0 %280
      %v283 = vmul.f32 %v246, %v281
      %v284 = vmul.f32 %v250, %v281
      %v285 = vmul.f32 %v254, %v281
      %v286 = vmul.f32 %v258, %v281
      %287 = vrot.lane.b32.xlu0 %v270, 64
      %v288 = vpop.permute.xlu0 %287
      %v290 = vadd.f32 %v283, %v288
      %v291 = vadd.f32 %v284, %v288
      %v292 = vadd.f32 %v285, %v288
      %v293 = vadd.f32 %v286, %v288
      %v294 = vmax.f32 %v290, 0.0
      %v295 = vmax.f32 %v291, 0.0
      %v296 = vmax.f32 %v292, 0.0
      %v297 = vmax.f32 %v293, 0.0
      %302 = vrot.lane.b32.xlu0 %v294, 64
      %v303 = vpop.permute.xlu0 %302
      %304 = vrot.lane.b32.xlu0 %v295, 64
      %v305 = vpop.permute.xlu0 %304
      %306 = vrot.lane.b32.xlu0 %v296, 64
      %v307 = vpop.permute.xlu0 %306
      %308 = vrot.lane.b32.xlu0 %v297, 64
      %v309 = vpop.permute.xlu0 %308
      %v314 = vadd.f32 %v276, %v303
      %v315 = vadd.f32 %v277, %v305
      %v316 = vadd.f32 %v278, %v307
      %v317 = vadd.f32 %v279, %v309
      %v318 = vmul.f32 %v247, %v263
      %v319 = vmul.f32 %v251, %v263
      %v320 = vmul.f32 %v255, %v263
      %v321 = vmul.f32 %v259, %v263
      %v322 = vadd.f32 %v318, %v270
      %v323 = vadd.f32 %v319, %v270
      %v324 = vadd.f32 %v320, %v270
      %v325 = vadd.f32 %v321, %v270
      %v326 = vmax.f32 %v322, 0.0
      %v327 = vmax.f32 %v323, 0.0
      %v328 = vmax.f32 %v324, 0.0
      %v329 = vmax.f32 %v325, 0.0
      %v330 = vadd.f32 %v314, %v326
      %v331 = vadd.f32 %v315, %v327
      %v332 = vadd.f32 %v316, %v328
      %v333 = vadd.f32 %v317, %v329
      %v334 = vmul.f32 %v247, %v281
      %v335 = vmul.f32 %v251, %v281
      %v336 = vmul.f32 %v255, %v281
      %v337 = vmul.f32 %v259, %v281
      %v338 = vadd.f32 %v334, %v288
      %v339 = vadd.f32 %v335, %v288
      %v340 = vadd.f32 %v336, %v288
      %v341 = vadd.f32 %v337, %v288
      %v342 = vmax.f32 %v338, 0.0
      %v343 = vmax.f32 %v339, 0.0
      %v344 = vmax.f32 %v340, 0.0
      %v345 = vmax.f32 %v341, 0.0
      %350 = vrot.lane.b32.xlu0 %v342, 64
      %v351 = vpop.permute.xlu0 %350
      %352 = vrot.lane.b32.xlu0 %v343, 64
      %v353 = vpop.permute.xlu0 %352
      %354 = vrot.lane.b32.xlu0 %v344, 64
      %v355 = vpop.permute.xlu0 %354
      %356 = vrot.lane.b32.xlu0 %v345, 64
      %v357 = vpop.permute.xlu0 %356
      %v362 = vadd.f32 %v330, %v351
      %v363 = vadd.f32 %v331, %v353
      %v364 = vadd.f32 %v332, %v355
      %v365 = vadd.f32 %v333, %v357
      %v366 = vmul.f32 %v362, 0.25
      %v367 = vmul.f32 %v363, 0.25
      %v368 = vmul.f32 %v364, 0.25
      %v369 = vmul.f32 %v365, 0.25
      %v370 = vmul.f32 %v248, %v263
      %v371 = vmul.f32 %v252, %v263
      %v372 = vmul.f32 %v256, %v263
      %v373 = vmul.f32 %v260, %v263
      %v374 = vadd.f32 %v370, %v270
      %v375 = vadd.f32 %v371, %v270
      %v376 = vadd.f32 %v372, %v270
      %v377 = vadd.f32 %v373, %v270
      %v378 = vmax.f32 %v374, 0.0
      %v379 = vmax.f32 %v375, 0.0
      %v380 = vmax.f32 %v376, 0.0
      %v381 = vmax.f32 %v377, 0.0
      %v382 = vmul.f32 %v248, %v281
      %v383 = vmul.f32 %v252, %v281
      %v384 = vmul.f32 %v256, %v281
      %v385 = vmul.f32 %v260, %v281
      %v386 = vadd.f32 %v382, %v288
      %v387 = vadd.f32 %v383, %v288
      %v388 = vadd.f32 %v384, %v288
      %v389 = vadd.f32 %v385, %v288
      %v390 = vmax.f32 %v386, 0.0
      %v391 = vmax.f32 %v387, 0.0
      %v392 = vmax.f32 %v388, 0.0
      %v393 = vmax.f32 %v389, 0.0
      %398 = vrot.lane.b32.xlu0 %v390, 64
      %v399 = vpop.permute.xlu0 %398
      %400 = vrot.lane.b32.xlu0 %v391, 64
      %v401 = vpop.permute.xlu0 %400
      %402 = vrot.lane.b32.xlu0 %v392, 64
      %v403 = vpop.permute.xlu0 %402
      %404 = vrot.lane.b32.xlu0 %v393, 64
      %v405 = vpop.permute.xlu0 %404
      %v410 = vadd.f32 %v378, %v399
      %v411 = vadd.f32 %v379, %v401
      %v412 = vadd.f32 %v380, %v403
      %v413 = vadd.f32 %v381, %v405
      %v414 = vmul.f32 %v249, %v263
      %v415 = vmul.f32 %v253, %v263
      %v416 = vmul.f32 %v257, %v263
      %v417 = vmul.f32 %v261, %v263
      %v418 = vadd.f32 %v414, %v270
      %v419 = vadd.f32 %v415, %v270
      %v420 = vadd.f32 %v416, %v270
      %v421 = vadd.f32 %v417, %v270
      %v422 = vmax.f32 %v418, 0.0
      %v423 = vmax.f32 %v419, 0.0
      %v424 = vmax.f32 %v420, 0.0
      %v425 = vmax.f32 %v421, 0.0
      %v426 = vadd.f32 %v410, %v422
      %v427 = vadd.f32 %v411, %v423
      %v428 = vadd.f32 %v412, %v424
      %v429 = vadd.f32 %v413, %v425
      %v430 = vmul.f32 %v249, %v281
      %v431 = vmul.f32 %v253, %v281
      %v432 = vmul.f32 %v257, %v281
      %v433 = vmul.f32 %v261, %v281
      %v434 = vadd.f32 %v430, %v288
      %v435 = vadd.f32 %v431, %v288
      %v436 = vadd.f32 %v432, %v288
      %v437 = vadd.f32 %v433, %v288
      %v438 = vmax.f32 %v434, 0.0
      %v439 = vmax.f32 %v435, 0.0
      %v440 = vmax.f32 %v436, 0.0
      %v441 = vmax.f32 %v437, 0.0
      %446 = vrot.lane.b32.xlu0 %v438, 64
      %v447 = vpop.permute.xlu0 %446
      %448 = vrot.lane.b32.xlu0 %v439, 64
      %v449 = vpop.permute.xlu0 %448
      %450 = vrot.lane.b32.xlu0 %v440, 64
      %v451 = vpop.permute.xlu0 %450
      %452 = vrot.lane.b32.xlu0 %v441, 64
      %v453 = vpop.permute.xlu0 %452
      %v458 = vadd.f32 %v426, %v447
      %v459 = vadd.f32 %v427, %v449
      %v460 = vadd.f32 %v428, %v451
      %v461 = vadd.f32 %v429, %v453
      %v462 = vmul.f32 %v458, 0.25
      %v463 = vmul.f32 %v459, 0.25
      %v464 = vmul.f32 %v460, 0.25
      %v465 = vmul.f32 %v461, 0.25
      %470 = vrot.lane.b32.xlu0 %v462, 64
      %v471 = vpop.permute.xlu0 %470
      %472 = vrot.lane.b32.xlu0 %v463, 64
      %v473 = vpop.permute.xlu0 %472
      %474 = vrot.lane.b32.xlu0 %v464, 64
      %v475 = vpop.permute.xlu0 %474
      %476 = vrot.lane.b32.xlu0 %v465, 64
      %v477 = vpop.permute.xlu0 %476
      %vm482 = vcmask 523264
      %v483 = vsel %vm482, %v366, %v471
      %v484 = vsel %vm482, %v367, %v473
      %v485 = vsel %vm482, %v368, %v475
      %v486 = vsel %vm482, %v369, %v477
      %v487 = vpack.c.bf16 %v483, %v483
      %v488 = vpack.c.bf16 %v484, %v484
      %v489 = vpack.c.bf16 %v485, %v485
      %v490 = vpack.c.bf16 %v486, %v486
      %491 = vst [vmem:[%s202] sm:$0xf] %v487
      %492 = vst [vmem:[%s202 + $0x4] sm:$0xf] %v488
      %493 = vst [vmem:[%s202 + $0x8] sm:$0xf] %v489
      %494 = vst [vmem:[%s202 + $0xc] sm:$0xf] %v490
      %s495 = smul.u32 4, %s15
      %p496 = scmp.lt.s32.totalorder %s495, 7
      %s497 = scalar_select %p496, %s495, 7
      %s498 = smul.addr %s497, 4
      %s499 = scalar_lea.vmem %s4, %s498
      // Predicated region
      $region37: #{cnn_forward.12} parent=35 // pred_check
        %p500 = pneg %p122
      $region38: #{cnn_forward.12} parent=35 // pred_check_branch
        %502 = sbr.rel (%p500) target = $region40
      $region39: #{cnn_forward.12} parent=35 // pred_region
        %s503 = smul.u32 4, %s15
      $region40: #{cnn_forward.12} parent=35 // pred_fallthru
        _
    $region36: #{cnn_forward.12} parent=5 // pred_fallthru
      _
    %p504 = scmp.le.s32.totalorder 2, %s10
    // Predicated region
    $region41: #{cnn_forward.12} parent=5 // pred_check
      %p505 = pneg %p504
    $region42: #{cnn_forward.12} parent=5 // pred_check_branch
      %507 = sbr.rel (%p505) target = $region44
    $region43: #{cnn_forward.12} parent=5 // pred_region
      %s508 = ssub.s32 %s10, 2
      // Predicated region
      $region45: #{cnn_forward.12} parent=43 // pred_check
        %p509 = pneg %p128
      $region46: #{cnn_forward.12} parent=43 // pred_check_branch
        %511 = sbr.rel (%p509) target = $region48
      $region47: #{cnn_forward.12} parent=43 // pred_region
        %s512 = smul.u32 4, %s16
        %p513 = scmp.lt.s32.totalorder %s512, 7
        %s514 = scalar_select %p513, %s512, 7
        %s515 = smul.addr %s514, 4
        %s516 = scalar_lea.vmem %s4, %s515
      $region48: #{cnn_forward.12} parent=43 // pred_fallthru
        _
    $region44: #{cnn_forward.12} parent=5 // pred_fallthru
      _
  $region6: #{cnn_forward.12} parent=0 // loop_footer
    %s14 = sadd.s32 1, %s10
  $region7: #{cnn_forward.12} parent=0 // loop_footer_branch
    %9 = sbr.rel target = $region3
  $region8: #{cnn_forward.12} parent=0 // loop_exit
    _

// kernel: cnn_forward.11
$region0: #{cnn_forward.11}
  #allocation0 [shape = 'u32[]', space=smem, size = 0x4, offset = 0x4, fixed_abs, tag = 'smem constant byte address 0x4 - core index']
  #allocation1 [shape = 'u32[72,128]{1,0:T(1,128)}', space=vmem, size = 0x9000, scoped, tag = 'internal scratch']
  %s0 = inlined_call_operand.vmem [shape: bf16[512,576], index: 0, kind: input, shape index: {}]
  %s1 = inlined_call_operand.vmem [shape: bf16[576,256], index: 1, kind: input, shape index: {}]
  %s2 = inlined_call_operand.vmem [shape: f32[1,256], index: 2, kind: input, shape index: {}]
  %s3 = inlined_call_operand.vmem [shape: f32[512,4], index: 3, kind: input, shape index: {}]
  %s4 = inlined_call_operand.vmem [shape: bf16[512,64], index: 4, kind: output, shape index: {0}]
  %s5 = inlined_call_operand.vmem [shape: f32[2,2,64], index: 5, kind: output, shape index: {1}]
  %6 = xla_tuple %s4, %s5
  %s7 = sld [smem:[#allocation0]]
  $region57: #{cnn_forward.11} parent=0
    _
  %s9 = ssub.s32 1, %s7
  %s10 = scalar_select 0, %s9, %s7
  loop: start=0, step=1, limit=4
  $region2: #{cnn_forward.11} parent=0 // loop_pre_header
    _
  $region3: #{cnn_forward.11} parent=0 // loop_header
    %s12 = sphi 0, %s16
    %p13 = scmp.ge.s32.totalorder %s12, 4
    %s22 = sphi 0, %s24
    %s25 = sphi 0, %s22
    %s26 = sphi 0, %s25
    %s42 = sphi 0, %s26
    %s46 = sphi 0, %s46
    %s48 = sphi 0, %s46
    %s49 = sphi 0, %s48
    %s63 = sphi 0, %s49
    %s67 = sphi 0, %s67
    %s69 = sphi 0, %s67
    %s70 = sphi 0, %s69
    %s84 = sphi 0, %s70
    %s90 = sphi 0, %s92
    %s93 = sphi 0, %s90
    %s94 = sphi 0, %s93
    %s110 = sphi 0, %s94
    %s116 = sphi 0, %s118
    %s119 = sphi 0, %s116
    %s120 = sphi 0, %s119
    %s136 = sphi 0, %s120
    %s142 = sphi 0, %s144
    %s145 = sphi 0, %s142
    %s146 = sphi 0, %s145
    %s162 = sphi 0, %s146
  $region4: #{cnn_forward.11} parent=0 // loop_header_branch
    %15 = sbr.rel (%p13) target = $region8
  $region5: #{cnn_forward.11} parent=0 // loop_body
    %s17 = ssub.s32 %s12, 1
    %s18 = ssub.s32 %s12, 2
    %s19 = sadd.s32 %s12, 1
    %s20 = ssub.s32 %s12, %s19
    %p21 = scmp.eq.s32.totalorder %s20, 0
    %s23 = sadd.s32 %s22, 1
    %s24 = scalar_select %p21, %s22, %s23
    %p27 = pneg %p21
    %p28 = scmp.eq.s32.totalorder %s12, 1
    %p29 = por %p27, %p28
    %p30 = scmp.ne.s32.totalorder %s22, %s25
    %p31 = scmp.eq.s32.totalorder %s12, 0
    %p32 = por %p30, %p31
    %p33 = scmp.ne.s32.totalorder %s22, %s25
    %p34 = scmp.eq.s32.totalorder %s17, 1
    %p35 = por %p33, %p34
    %p36 = scmp.ne.s32.totalorder %s25, %s26
    %p37 = scmp.eq.s32.totalorder %s17, 0
    %p38 = por %p36, %p37
    %p39 = scmp.ne.s32.totalorder %s25, %s26
    %p40 = scmp.eq.s32.totalorder %s18, 1
    %p41 = por %p39, %p40
    %p43 = scmp.ne.s32.totalorder %s26, %s42
    %p44 = scmp.eq.s32.totalorder %s18, 0
    %p45 = por %p43, %p44
    %s47 = sadd.s32 %s46, 1
    %p50 = scmp.eq.s32.totalorder %s12, 1
    %p51 = scmp.ne.s32.totalorder %s46, %s48
    %p52 = scmp.eq.s32.totalorder %s12, 0
    %p53 = por %p51, %p52
    %p54 = scmp.ne.s32.totalorder %s46, %s48
    %p55 = scmp.eq.s32.totalorder %s17, 1
    %p56 = por %p54, %p55
    %p57 = scmp.ne.s32.totalorder %s48, %s49
    %p58 = scmp.eq.s32.totalorder %s17, 0
    %p59 = por %p57, %p58
    %p60 = scmp.ne.s32.totalorder %s48, %s49
    %p61 = scmp.eq.s32.totalorder %s18, 1
    %p62 = por %p60, %p61
    %p64 = scmp.ne.s32.totalorder %s49, %s63
    %p65 = scmp.eq.s32.totalorder %s18, 0
    %p66 = por %p64, %p65
    %s68 = sadd.s32 %s67, 1
    %p71 = scmp.eq.s32.totalorder %s12, 1
    %p72 = scmp.ne.s32.totalorder %s67, %s69
    %p73 = scmp.eq.s32.totalorder %s12, 0
    %p74 = por %p72, %p73
    %p75 = scmp.ne.s32.totalorder %s67, %s69
    %p76 = scmp.eq.s32.totalorder %s17, 1
    %p77 = por %p75, %p76
    %p78 = scmp.ne.s32.totalorder %s69, %s70
    %p79 = scmp.eq.s32.totalorder %s17, 0
    %p80 = por %p78, %p79
    %p81 = scmp.ne.s32.totalorder %s69, %s70
    %p82 = scmp.eq.s32.totalorder %s18, 1
    %p83 = por %p81, %p82
    %p85 = scmp.ne.s32.totalorder %s70, %s84
    %p86 = scmp.eq.s32.totalorder %s18, 0
    %p87 = por %p85, %p86
    %s88 = ssub.s32 %s12, %s19
    %p89 = scmp.eq.s32.totalorder %s88, 0
    %s91 = sadd.s32 %s90, 1
    %s92 = scalar_select %p89, %s90, %s91
    %p95 = pneg %p89
    %p96 = scmp.eq.s32.totalorder %s12, 1
    %p97 = por %p95, %p96
    %p98 = scmp.ne.s32.totalorder %s90, %s93
    %p99 = scmp.eq.s32.totalorder %s12, 0
    %p100 = por %p98, %p99
    %p101 = scmp.ne.s32.totalorder %s90, %s93
    %p102 = scmp.eq.s32.totalorder %s17, 1
    %p103 = por %p101, %p102
    %p104 = scmp.ne.s32.totalorder %s93, %s94
    %p105 = scmp.eq.s32.totalorder %s17, 0
    %p106 = por %p104, %p105
    %p107 = scmp.ne.s32.totalorder %s93, %s94
    %p108 = scmp.eq.s32.totalorder %s18, 1
    %p109 = por %p107, %p108
    %p111 = scmp.ne.s32.totalorder %s94, %s110
    %p112 = scmp.eq.s32.totalorder %s18, 0
    %p113 = por %p111, %p112
    %s114 = ssub.s32 %s12, %s19
    %p115 = scmp.eq.s32.totalorder %s114, 0
    %s117 = sadd.s32 %s116, 1
    %s118 = scalar_select %p115, %s116, %s117
    %p121 = pneg %p115
    %p122 = scmp.eq.s32.totalorder %s12, 1
    %p123 = por %p121, %p122
    %p124 = scmp.ne.s32.totalorder %s116, %s119
    %p125 = scmp.eq.s32.totalorder %s12, 0
    %p126 = por %p124, %p125
    %p127 = scmp.ne.s32.totalorder %s116, %s119
    %p128 = scmp.eq.s32.totalorder %s17, 1
    %p129 = por %p127, %p128
    %p130 = scmp.ne.s32.totalorder %s119, %s120
    %p131 = scmp.eq.s32.totalorder %s17, 0
    %p132 = por %p130, %p131
    %p133 = scmp.ne.s32.totalorder %s119, %s120
    %p134 = scmp.eq.s32.totalorder %s18, 1
    %p135 = por %p133, %p134
    %p137 = scmp.ne.s32.totalorder %s120, %s136
    %p138 = scmp.eq.s32.totalorder %s18, 0
    %p139 = por %p137, %p138
    %s140 = ssub.s32 %s12, %s19
    %p141 = scmp.eq.s32.totalorder %s140, 0
    %s143 = sadd.s32 %s142, 1
    %s144 = scalar_select %p141, %s142, %s143
    %p147 = pneg %p141
    %p148 = scmp.eq.s32.totalorder %s12, 1
    %p149 = por %p147, %p148
    %p150 = scmp.ne.s32.totalorder %s142, %s145
    %p151 = scmp.eq.s32.totalorder %s12, 0
    %p152 = por %p150, %p151
    %p153 = scmp.ne.s32.totalorder %s142, %s145
    %p154 = scmp.eq.s32.totalorder %s17, 1
    %p155 = por %p153, %p154
    %p156 = scmp.ne.s32.totalorder %s145, %s146
    %p157 = scmp.eq.s32.totalorder %s17, 0
    %p158 = por %p156, %p157
    %p159 = scmp.ne.s32.totalorder %s145, %s146
    %p160 = scmp.eq.s32.totalorder %s18, 1
    %p161 = por %p159, %p160
    %p163 = scmp.ne.s32.totalorder %s146, %s162
    %p164 = scmp.eq.s32.totalorder %s18, 0
    %p165 = por %p163, %p164
    %p166 = scmp.le.s32.totalorder 1, %s12
    %p167 = scmp.lt.s32.totalorder %s12, 3
    %p168 = pnand %p166, %p167
    %p169 = pneg %p168
    // Predicated region
    $region9: #{cnn_forward.11} parent=5 // pred_check
      _
    $region10: #{cnn_forward.11} parent=5 // pred_check_branch
      %171 = sbr.rel (%p168) target = $region12
    $region11: #{cnn_forward.11} parent=5 // pred_region
      %s172 = ssub.s32 %s12, 1
      // Predicated region
      $region13: #{cnn_forward.11} parent=11 // pred_check
        %p173 = pneg %p59
      $region14: #{cnn_forward.11} parent=11 // pred_check_branch
        %175 = sbr.rel (%p173) target = $region16
      $region15: #{cnn_forward.11} parent=11 // pred_region
        _
      $region16: #{cnn_forward.11} parent=11 // pred_fallthru
        _
      // Predicated region
      $region17: #{cnn_forward.11} parent=11 // pred_check
        %p176 = pneg %p80
      $region18: #{cnn_forward.11} parent=11 // pred_check_branch
        %178 = sbr.rel (%p176) target = $region20
      $region19: #{cnn_forward.11} parent=11 // pred_region
        _
      $region20: #{cnn_forward.11} parent=11 // pred_fallthru
        _
    $region12: #{cnn_forward.11} parent=5 // pred_fallthru
      _
    %p179 = scmp.lt.s32.totalorder %s12, 2
    // Predicated region
    $region21: #{cnn_forward.11} parent=5 // pred_check
      %p180 = pneg %p179
    $region22: #{cnn_forward.11} parent=5 // pred_check_branch
      %182 = sbr.rel (%p180) target = $region24
    $region23: #{cnn_forward.11} parent=5 // pred_region
      // Predicated region
      $region25: #{cnn_forward.11} parent=23 // pred_check
        %p183 = pneg %p32
      $region26: #{cnn_forward.11} parent=23 // pred_check_branch
        %185 = sbr.rel (%p183) target = $region28
      $region27: #{cnn_forward.11} parent=23 // pred_region
        %s186 = smul.u32 32, %s12
        %p187 = scmp.lt.s32.totalorder %s186, 63
        %s188 = scalar_select %p187, %s186, 63
        %s189 = smul.addr %s188, 5
        %s190 = smul.addr %s189, 4
        %s191 = scalar_lea.vmem %s0, %s190
        %s192 = smul.u32 32, %s12
      $region28: #{cnn_forward.11} parent=23 // pred_fallthru
        _
      // Predicated region
      $region29: #{cnn_forward.11} parent=23 // pred_check
        %p193 = pneg %p100
      $region30: #{cnn_forward.11} parent=23 // pred_check_branch
        %195 = sbr.rel (%p193) target = $region32
      $region31: #{cnn_forward.11} parent=23 // pred_region
        %s196 = smul.u32 32, %s12
        %p197 = scmp.lt.s32.totalorder %s196, 63
        %s198 = scalar_select %p197, %s196, 63
        %s199 = smul.addr %s198, 8
        %s200 = scalar_lea.vmem %s3, %s199
        %s201 = smul.u32 32, %s12
      $region32: #{cnn_forward.11} parent=23 // pred_fallthru
        _
    $region24: #{cnn_forward.11} parent=5 // pred_fallthru
      _
    %p202 = scmp.le.s32.totalorder 1, %s12
    %p203 = scmp.lt.s32.totalorder %s12, 3
    %p204 = pnand %p202, %p203
    %p205 = pneg %p204
    // Predicated region
    $region33: #{cnn_forward.11} parent=5 // pred_check
      _
    $region34: #{cnn_forward.11} parent=5 // pred_check_branch
      %207 = sbr.rel (%p204) target = $region36
    $region35: #{cnn_forward.11} parent=5 // pred_region
      %s208 = ssub.s32 %s12, 1
      %s209 = smul.u32 32, %s17
      %p210 = scmp.lt.s32.totalorder %s209, 63
      %s211 = scalar_select %p210, %s209, 63
      %s212 = smul.addr %s211, 5
      %s213 = smul.addr %s212, 4
      %s214 = scalar_lea.vmem %s0, %s213
      %p215 = pneg %p38
      %p216 = pneg %p35
      %p217 = pneg %p59
      %p218 = pneg %p56
      %p219 = pneg %p80
      %p220 = pneg %p77
      %s221 = smul.u32 32, %s17
      %p222 = scmp.lt.s32.totalorder %s221, 63
      %s223 = scalar_select %p222, %s221, 63
      %s224 = smul.addr %s223, 8
      %s225 = scalar_lea.vmem %s3, %s224
      %p226 = pneg %p106
      %p227 = pneg %p103
      %p228 = pneg %p132
      %p229 = pneg %p129
      %s230 = smul.u32 32, %s17
      %p231 = scmp.lt.s32.totalorder %s230, 63
      %s232 = scalar_select %p231, %s230, 63
      %s233 = smul.addr %s232, 4
      %s234 = scalar_lea.vmem %s4, %s233
      %p235 = pneg %p158
      %p236 = pneg %p155
      %p237 = scmp.lt.s32.totalorder %s17, 1
      %s238 = scalar_select %p237, %s17, 1
      %s239 = smul.addr %s238, 2
      %s240 = scalar_lea.vmem %s5, %s239
      %s241 = smul.u32 32, %s17
      %p242 = scmp.lt.s32.totalorder %s241, 63
      %s243 = scalar_select %p242, %s241, 63
      %s244 = smul.addr %s243, 5
      %s245 = smul.addr %s244, 4
      %s246 = scalar_lea.vmem %s0, %s245
      %s247 = smul.u32 32, %s17
      %s248 = smul.u32 32, %s17
      %p249 = scmp.lt.s32.totalorder %s248, 63
      %s250 = scalar_select %p249, %s248, 63
      %s251 = smul.addr %s250, 8
      %s252 = scalar_lea.vmem %s3, %s251
      %s253 = smul.u32 32, %s17
      %s254 = smul.u32 32, %s17
      %p255 = scmp.lt.s32.totalorder %s254, 63
      %s256 = scalar_select %p255, %s254, 63
      %s257 = smul.addr %s256, 4
      %s258 = scalar_lea.vmem %s4, %s257
      %s259 = smul.u32 32, %s17
      %p260 = scmp.lt.s32.totalorder %s17, 1
      %s261 = scalar_select %p260, %s17, 1
      %s262 = smul.addr %s261, 2
      %s263 = scalar_lea.vmem %s5, %s262
      %v265 = vld [vmem:[%s246] sm:$0xff]
      %v266 = vld [vmem:[%s246 + $0x8] sm:$0xff]
      %v267 = vld [vmem:[%s246 + $0x10] sm:$0xf]
      %v268 = vld [vmem:[%s246 + $0x14] sm:$0xff]
      %v269 = vld [vmem:[%s246 + $0x1c] sm:$0xff]
      %v270 = vld [vmem:[%s246 + $0x24] sm:$0xf]
      %v271 = vld [vmem:[%s246 + $0x28] sm:$0xff]
      %v272 = vld [vmem:[%s246 + $0x30] sm:$0xff]
      %v273 = vld [vmem:[%s246 + $0x38] sm:$0xf]
      %v274 = vld [vmem:[%s246 + $0x3c] sm:$0xff]
      %v275 = vld [vmem:[%s246 + $0x44] sm:$0xff]
      %v276 = vld [vmem:[%s246 + $0x4c] sm:$0xf]
      %v277 = vld [vmem:[%s246 + $0x50] sm:$0xff]
      %v278 = vld [vmem:[%s246 + $0x58] sm:$0xff]
      %v279 = vld [vmem:[%s246 + $0x60] sm:$0xf]
      %v280 = vld [vmem:[%s246 + $0x64] sm:$0xff]
      %v281 = vld [vmem:[%s246 + $0x6c] sm:$0xff]
      %v282 = vld [vmem:[%s246 + $0x74] sm:$0xf]
      %v283 = vld [vmem:[%s246 + $0x78] sm:$0xff]
      %v284 = vld [vmem:[%s246 + $0x80] sm:$0xff]
      %v285 = vld [vmem:[%s246 + $0x88] sm:$0xf]
      %v286 = vld [vmem:[%s246 + $0x8c] sm:$0xff]
      %v287 = vld [vmem:[%s246 + $0x94] sm:$0xff]
      %v288 = vld [vmem:[%s246 + $0x9c] sm:$0xf]
      %v289 = vld [vmem:[%s246 + $0xa0] sm:$0xff]
      %v290 = vld [vmem:[%s246 + $0xa8] sm:$0xff]
      %v291 = vld [vmem:[%s246 + $0xb0] sm:$0xf]
      %v292 = vld [vmem:[%s246 + $0xb4] sm:$0xff]
      %v293 = vld [vmem:[%s246 + $0xbc] sm:$0xff]
      %v294 = vld [vmem:[%s246 + $0xc4] sm:$0xf]
      %v295 = vld [vmem:[%s246 + $0xc8] sm:$0xff]
      %v296 = vld [vmem:[%s246 + $0xd0] sm:$0xff]
      %v297 = vld [vmem:[%s246 + $0xd8] sm:$0xf]
      %v298 = vld [vmem:[%s246 + $0xdc] sm:$0xff]
      %v299 = vld [vmem:[%s246 + $0xe4] sm:$0xff]
      %v300 = vld [vmem:[%s246 + $0xec] sm:$0xf]
      %v301 = vld [vmem:[%s246 + $0xf0] sm:$0xff]
      %v302 = vld [vmem:[%s246 + $0xf8] sm:$0xff]
      %v303 = vld [vmem:[%s246 + $0x100] sm:$0xf]
      %v304 = vld [vmem:[%s246 + $0x104] sm:$0xff]
      %v305 = vld [vmem:[%s246 + $0x10c] sm:$0xff]
      %v306 = vld [vmem:[%s246 + $0x114] sm:$0xf]
      %v307 = vld [vmem:[%s246 + $0x118] sm:$0xff]
      %v308 = vld [vmem:[%s246 + $0x120] sm:$0xff]
      %v309 = vld [vmem:[%s246 + $0x128] sm:$0xf]
      %v310 = vld [vmem:[%s246 + $0x12c] sm:$0xff]
      %v311 = vld [vmem:[%s246 + $0x134] sm:$0xff]
      %v312 = vld [vmem:[%s246 + $0x13c] sm:$0xf]
      %v313 = vld [vmem:[%s246 + $0x140] sm:$0xff]
      %v314 = vld [vmem:[%s246 + $0x148] sm:$0xff]
      %v315 = vld [vmem:[%s246 + $0x150] sm:$0xf]
      %v316 = vld [vmem:[%s246 + $0x154] sm:$0xff]
      %v317 = vld [vmem:[%s246 + $0x15c] sm:$0xff]
      %v318 = vld [vmem:[%s246 + $0x164] sm:$0xf]
      %v319 = vld [vmem:[%s246 + $0x168] sm:$0xff]
      %v320 = vld [vmem:[%s246 + $0x170] sm:$0xff]
      %v321 = vld [vmem:[%s246 + $0x178] sm:$0xf]
      %v322 = vld [vmem:[%s246 + $0x17c] sm:$0xff]
      %v323 = vld [vmem:[%s246 + $0x184] sm:$0xff]
      %v324 = vld [vmem:[%s246 + $0x18c] sm:$0xf]
      %v325 = vld [vmem:[%s246 + $0x190] sm:$0xff]
      %v326 = vld [vmem:[%s246 + $0x198] sm:$0xff]
      %v327 = vld [vmem:[%s246 + $0x1a0] sm:$0xf]
      %v328 = vld [vmem:[%s246 + $0x1a4] sm:$0xff]
      %v329 = vld [vmem:[%s246 + $0x1ac] sm:$0xff]
      %v330 = vld [vmem:[%s246 + $0x1b4] sm:$0xf]
      %v331 = vld [vmem:[%s246 + $0x1b8] sm:$0xff]
      %v332 = vld [vmem:[%s246 + $0x1c0] sm:$0xff]
      %v333 = vld [vmem:[%s246 + $0x1c8] sm:$0xf]
      %v334 = vld [vmem:[%s246 + $0x1cc] sm:$0xff]
      %v335 = vld [vmem:[%s246 + $0x1d4] sm:$0xff]
      %v336 = vld [vmem:[%s246 + $0x1dc] sm:$0xf]
      %v337 = vld [vmem:[%s246 + $0x1e0] sm:$0xff]
      %v338 = vld [vmem:[%s246 + $0x1e8] sm:$0xff]
      %v339 = vld [vmem:[%s246 + $0x1f0] sm:$0xf]
      %v340 = vld [vmem:[%s246 + $0x1f4] sm:$0xff]
      %v341 = vld [vmem:[%s246 + $0x1fc] sm:$0xff]
      %v342 = vld [vmem:[%s246 + $0x204] sm:$0xf]
      %v343 = vld [vmem:[%s246 + $0x208] sm:$0xff]
      %v344 = vld [vmem:[%s246 + $0x210] sm:$0xff]
      %v345 = vld [vmem:[%s246 + $0x218] sm:$0xf]
      %v346 = vld [vmem:[%s246 + $0x21c] sm:$0xff]
      %v347 = vld [vmem:[%s246 + $0x224] sm:$0xff]
      %v348 = vld [vmem:[%s246 + $0x22c] sm:$0xf]
      %v349 = vld [vmem:[%s246 + $0x230] sm:$0xff]
      %v350 = vld [vmem:[%s246 + $0x238] sm:$0xff]
      %v351 = vld [vmem:[%s246 + $0x240] sm:$0xf]
      %v352 = vld [vmem:[%s246 + $0x244] sm:$0xff]
      %v353 = vld [vmem:[%s246 + $0x24c] sm:$0xff]
      %v354 = vld [vmem:[%s246 + $0x254] sm:$0xf]
      %v355 = vld [vmem:[%s246 + $0x258] sm:$0xff]
      %v356 = vld [vmem:[%s246 + $0x260] sm:$0xff]
      %v357 = vld [vmem:[%s246 + $0x268] sm:$0xf]
      %v358 = vld [vmem:[%s246 + $0x26c] sm:$0xff]
      %v359 = vld [vmem:[%s246 + $0x274] sm:$0xff]
      %v360 = vld [vmem:[%s246 + $0x27c] sm:$0xf]
      %v361 = vld [vmem:[%s1] sm:$0xff]
      %v362 = vld [vmem:[%s1 + $0x8] sm:$0xff]
      %v363 = vld [vmem:[%s1 + $0x10] sm:$0xff]
      %v364 = vld [vmem:[%s1 + $0x18] sm:$0xff]
      %v365 = vld [vmem:[%s1 + $0x20] sm:$0xff]
      %v366 = vld [vmem:[%s1 + $0x28] sm:$0xff]
      %v367 = vld [vmem:[%s1 + $0x30] sm:$0xff]
      %v368 = vld [vmem:[%s1 + $0x38] sm:$0xff]
      %v369 = vld [vmem:[%s1 + $0x40] sm:$0xff]
      %v370 = vld [vmem:[%s1 + $0x48] sm:$0xff]
      %v371 = vld [vmem:[%s1 + $0x50] sm:$0xff]
      %v372 = vld [vmem:[%s1 + $0x58] sm:$0xff]
      %v373 = vld [vmem:[%s1 + $0x60] sm:$0xff]
      %v374 = vld [vmem:[%s1 + $0x68] sm:$0xff]
      %v375 = vld [vmem:[%s1 + $0x70] sm:$0xff]
      %v376 = vld [vmem:[%s1 + $0x78] sm:$0xff]
      %v377 = vld [vmem:[%s1 + $0x80] sm:$0xff]
      %v378 = vld [vmem:[%s1 + $0x88] sm:$0xff]
      %v379 = vld [vmem:[%s1 + $0x90] sm:$0xff]
      %v380 = vld [vmem:[%s1 + $0x98] sm:$0xff]
      %v381 = vld [vmem:[%s1 + $0xa0] sm:$0xff]
      %v382 = vld [vmem:[%s1 + $0xa8] sm:$0xff]
      %v383 = vld [vmem:[%s1 + $0xb0] sm:$0xff]
      %v384 = vld [vmem:[%s1 + $0xb8] sm:$0xff]
      %v385 = vld [vmem:[%s1 + $0xc0] sm:$0xff]
      %v386 = vld [vmem:[%s1 + $0xc8] sm:$0xff]
      %v387 = vld [vmem:[%s1 + $0xd0] sm:$0xff]
      %v388 = vld [vmem:[%s1 + $0xd8] sm:$0xff]
      %v389 = vld [vmem:[%s1 + $0xe0] sm:$0xff]
      %v390 = vld [vmem:[%s1 + $0xe8] sm:$0xff]
      %v391 = vld [vmem:[%s1 + $0xf0] sm:$0xff]
      %v392 = vld [vmem:[%s1 + $0xf8] sm:$0xff]
      %v393 = vld [vmem:[%s1 + $0x100] sm:$0xff]
      %v394 = vld [vmem:[%s1 + $0x108] sm:$0xff]
      %v395 = vld [vmem:[%s1 + $0x110] sm:$0xff]
      %v396 = vld [vmem:[%s1 + $0x118] sm:$0xff]
      %v397 = vld [vmem:[%s1 + $0x120] sm:$0xff]
      %v398 = vld [vmem:[%s1 + $0x128] sm:$0xff]
      %v399 = vld [vmem:[%s1 + $0x130] sm:$0xff]
      %v400 = vld [vmem:[%s1 + $0x138] sm:$0xff]
      %v401 = vld [vmem:[%s1 + $0x140] sm:$0xff]
      %v402 = vld [vmem:[%s1 + $0x148] sm:$0xff]
      %v403 = vld [vmem:[%s1 + $0x150] sm:$0xff]
      %v404 = vld [vmem:[%s1 + $0x158] sm:$0xff]
      %v405 = vld [vmem:[%s1 + $0x160] sm:$0xff]
      %v406 = vld [vmem:[%s1 + $0x168] sm:$0xff]
      %v407 = vld [vmem:[%s1 + $0x170] sm:$0xff]
      %v408 = vld [vmem:[%s1 + $0x178] sm:$0xff]
      %v409 = vld [vmem:[%s1 + $0x180] sm:$0xff]
      %v410 = vld [vmem:[%s1 + $0x188] sm:$0xff]
      %v411 = vld [vmem:[%s1 + $0x190] sm:$0xff]
      %v412 = vld [vmem:[%s1 + $0x198] sm:$0xff]
      %v413 = vld [vmem:[%s1 + $0x1a0] sm:$0xff]
      %v414 = vld [vmem:[%s1 + $0x1a8] sm:$0xff]
      %v415 = vld [vmem:[%s1 + $0x1b0] sm:$0xff]
      %v416 = vld [vmem:[%s1 + $0x1b8] sm:$0xff]
      %v417 = vld [vmem:[%s1 + $0x1c0] sm:$0xff]
      %v418 = vld [vmem:[%s1 + $0x1c8] sm:$0xff]
      %v419 = vld [vmem:[%s1 + $0x1d0] sm:$0xff]
      %v420 = vld [vmem:[%s1 + $0x1d8] sm:$0xff]
      %v421 = vld [vmem:[%s1 + $0x1e0] sm:$0xff]
      %v422 = vld [vmem:[%s1 + $0x1e8] sm:$0xff]
      %v423 = vld [vmem:[%s1 + $0x1f0] sm:$0xff]
      %v424 = vld [vmem:[%s1 + $0x1f8] sm:$0xff]
      %v425 = vld [vmem:[%s1 + $0x200] sm:$0xff]
      %v426 = vld [vmem:[%s1 + $0x208] sm:$0xff]
      %v427 = vld [vmem:[%s1 + $0x210] sm:$0xff]
      %v428 = vld [vmem:[%s1 + $0x218] sm:$0xff]
      %v429 = vld [vmem:[%s1 + $0x220] sm:$0xff]
      %v430 = vld [vmem:[%s1 + $0x228] sm:$0xff]
      %v431 = vld [vmem:[%s1 + $0x230] sm:$0xff]
      %v432 = vld [vmem:[%s1 + $0x238] sm:$0xff]
      %v433 = vld [vmem:[%s2] sm:$0x3]
      %v435 = vperm.slane %v433, 0
      %v436 = vperm.slane %v433, 1
      %v535 = vunpack.c.l.b16 %v265
      %v536 = vunpack.c.h.b16 %v265
      %v537 = vunpack.c.l.b16 %v266
      %v538 = vunpack.c.h.b16 %v266
      %v539 = vunpack.c.l.b16 %v267
      %v540 = vunpack.c.l.b16 %v268
      %v541 = vunpack.c.h.b16 %v268
      %v542 = vunpack.c.l.b16 %v269
      %v543 = vunpack.c.h.b16 %v269
      %v544 = vunpack.c.l.b16 %v270
      %v545 = vunpack.c.l.b16 %v271
      %v546 = vunpack.c.h.b16 %v271
      %v547 = vunpack.c.l.b16 %v272
      %v548 = vunpack.c.h.b16 %v272
      %v549 = vunpack.c.l.b16 %v273
      %v550 = vunpack.c.l.b16 %v274
      %v551 = vunpack.c.h.b16 %v274
      %v552 = vunpack.c.l.b16 %v275
      %v553 = vunpack.c.h.b16 %v275
      %v554 = vunpack.c.l.b16 %v276
      %v555 = vunpack.c.l.b16 %v277
      %v556 = vunpack.c.h.b16 %v277
      %v557 = vunpack.c.l.b16 %v278
      %v558 = vunpack.c.h.b16 %v278
      %v559 = vunpack.c.l.b16 %v279
      %v560 = vunpack.c.l.b16 %v280
      %v561 = vunpack.c.h.b16 %v280
      %v562 = vunpack.c.l.b16 %v281
      %v563 = vunpack.c.h.b16 %v281
      %v564 = vunpack.c.l.b16 %v282
      %v565 = vunpack.c.l.b16 %v283
      %v566 = vunpack.c.h.b16 %v283
      %v567 = vunpack.c.l.b16 %v284
      %v568 = vunpack.c.h.b16 %v284
      %v569 = vunpack.c.l.b16 %v285
      %v570 = vunpack.c.l.b16 %v286
      %v571 = vunpack.c.h.b16 %v286
      %v572 = vunpack.c.l.b16 %v287
      %v573 = vunpack.c.h.b16 %v287
      %v574 = vunpack.c.l.b16 %v288
      %v575 = vunpack.c.l.b16 %v289
      %v576 = vunpack.c.h.b16 %v289
      %v577 = vunpack.c.l.b16 %v290
      %v578 = vunpack.c.h.b16 %v290
      %v579 = vunpack.c.l.b16 %v291
      %v580 = vunpack.c.l.b16 %v292
      %v581 = vunpack.c.h.b16 %v292
      %v582 = vunpack.c.l.b16 %v293
      %v583 = vunpack.c.h.b16 %v293
      %v584 = vunpack.c.l.b16 %v294
      %v585 = vunpack.c.l.b16 %v295
      %v586 = vunpack.c.h.b16 %v295
      %v587 = vunpack.c.l.b16 %v296
      %v588 = vunpack.c.h.b16 %v296
      %v589 = vunpack.c.l.b16 %v297
      %v590 = vunpack.c.l.b16 %v298
      %v591 = vunpack.c.h.b16 %v298
      %v592 = vunpack.c.l.b16 %v299
      %v593 = vunpack.c.h.b16 %v299
      %v594 = vunpack.c.l.b16 %v300
      %v595 = vunpack.c.l.b16 %v301
      %v596 = vunpack.c.h.b16 %v301
      %v597 = vunpack.c.l.b16 %v302
      %v598 = vunpack.c.h.b16 %v302
      %v599 = vunpack.c.l.b16 %v303
      %v600 = vunpack.c.l.b16 %v304
      %v601 = vunpack.c.h.b16 %v304
      %v602 = vunpack.c.l.b16 %v305
      %v603 = vunpack.c.h.b16 %v305
      %v604 = vunpack.c.l.b16 %v306
      %v605 = vunpack.c.l.b16 %v307
      %v606 = vunpack.c.h.b16 %v307
      %v607 = vunpack.c.l.b16 %v308
      %v608 = vunpack.c.h.b16 %v308
      %v609 = vunpack.c.l.b16 %v309
      %v610 = vunpack.c.l.b16 %v310
      %v611 = vunpack.c.h.b16 %v310
      %v612 = vunpack.c.l.b16 %v311
      %v613 = vunpack.c.h.b16 %v311
      %v614 = vunpack.c.l.b16 %v312
      %v615 = vunpack.c.l.b16 %v313
      %v616 = vunpack.c.h.b16 %v313
      %v617 = vunpack.c.l.b16 %v314
      %v618 = vunpack.c.h.b16 %v314
      %v619 = vunpack.c.l.b16 %v315
      %v620 = vunpack.c.l.b16 %v316
      %v621 = vunpack.c.h.b16 %v316
      %v622 = vunpack.c.l.b16 %v317
      %v623 = vunpack.c.h.b16 %v317
      %v624 = vunpack.c.l.b16 %v318
      %v625 = vunpack.c.l.b16 %v319
      %v626 = vunpack.c.h.b16 %v319
      %v627 = vunpack.c.l.b16 %v320
      %v628 = vunpack.c.h.b16 %v320
      %v629 = vunpack.c.l.b16 %v321
      %v630 = vunpack.c.l.b16 %v322
      %v631 = vunpack.c.h.b16 %v322
      %v632 = vunpack.c.l.b16 %v323
      %v633 = vunpack.c.h.b16 %v323
      %v634 = vunpack.c.l.b16 %v324
      %v635 = vunpack.c.l.b16 %v325
      %v636 = vunpack.c.h.b16 %v325
      %v637 = vunpack.c.l.b16 %v326
      %v638 = vunpack.c.h.b16 %v326
      %v639 = vunpack.c.l.b16 %v327
      %v640 = vunpack.c.l.b16 %v328
      %v641 = vunpack.c.h.b16 %v328
      %v642 = vunpack.c.l.b16 %v329
      %v643 = vunpack.c.h.b16 %v329
      %v644 = vunpack.c.l.b16 %v330
      %v645 = vunpack.c.l.b16 %v331
      %v646 = vunpack.c.h.b16 %v331
      %v647 = vunpack.c.l.b16 %v332
      %v648 = vunpack.c.h.b16 %v332
      %v649 = vunpack.c.l.b16 %v333
      %v650 = vunpack.c.l.b16 %v334
      %v651 = vunpack.c.h.b16 %v334
      %v652 = vunpack.c.l.b16 %v335
      %v653 = vunpack.c.h.b16 %v335
      %v654 = vunpack.c.l.b16 %v336
      %v655 = vunpack.c.l.b16 %v337
      %v656 = vunpack.c.h.b16 %v337
      %v657 = vunpack.c.l.b16 %v338
      %v658 = vunpack.c.h.b16 %v338
      %v659 = vunpack.c.l.b16 %v339
      %v660 = vunpack.c.l.b16 %v340
      %v661 = vunpack.c.h.b16 %v340
      %v662 = vunpack.c.l.b16 %v341
      %v663 = vunpack.c.h.b16 %v341
      %v664 = vunpack.c.l.b16 %v342
      %v665 = vunpack.c.l.b16 %v343
      %v666 = vunpack.c.h.b16 %v343
      %v667 = vunpack.c.l.b16 %v344
      %v668 = vunpack.c.h.b16 %v344
      %v669 = vunpack.c.l.b16 %v345
      %v670 = vunpack.c.l.b16 %v346
      %v671 = vunpack.c.h.b16 %v346
      %v672 = vunpack.c.l.b16 %v347
      %v673 = vunpack.c.h.b16 %v347
      %v674 = vunpack.c.l.b16 %v348
      %v675 = vunpack.c.l.b16 %v349
      %v676 = vunpack.c.h.b16 %v349
      %v677 = vunpack.c.l.b16 %v350
      %v678 = vunpack.c.h.b16 %v350
      %v679 = vunpack.c.l.b16 %v351
      %v680 = vunpack.c.l.b16 %v352
      %v681 = vunpack.c.h.b16 %v352
      %v682 = vunpack.c.l.b16 %v353
      %v683 = vunpack.c.h.b16 %v353
      %v684 = vunpack.c.l.b16 %v354
      %v685 = vunpack.c.l.b16 %v355
      %v686 = vunpack.c.h.b16 %v355
      %v687 = vunpack.c.l.b16 %v356
      %v688 = vunpack.c.h.b16 %v356
      %v689 = vunpack.c.l.b16 %v357
      %v690 = vunpack.c.l.b16 %v358
      %v691 = vunpack.c.h.b16 %v358
      %v692 = vunpack.c.l.b16 %v359
      %v693 = vunpack.c.h.b16 %v359
      %v694 = vunpack.c.l.b16 %v360
      %v695 = vpack.c.b16 %v540, %v535
      %v696 = vpack.c.b16 %v541, %v536
      %v697 = vpack.c.b16 %v542, %v537
      %v698 = vpack.c.b16 %v543, %v538
      %v699 = vpack.c.b16 %v544, %v539
      %v700 = vpack.c.b16 %v550, %v545
      %v701 = vpack.c.b16 %v551, %v546
      %v702 = vpack.c.b16 %v552, %v547
      %v703 = vpack.c.b16 %v553, %v548
      %v704 = vpack.c.b16 %v554, %v549
      %v705 = vpack.c.b16 %v560, %v555
      %v706 = vpack.c.b16 %v561, %v556
      %v707 = vpack.c.b16 %v562, %v557
      %v708 = vpack.c.b16 %v563, %v558
      %v709 = vpack.c.b16 %v564, %v559
      %v710 = vpack.c.b16 %v570, %v565
      %v711 = vpack.c.b16 %v571, %v566
      %v712 = vpack.c.b16 %v572, %v567
      %v713 = vpack.c.b16 %v573, %v568
      %v714 = vpack.c.b16 %v574, %v569
      %v715 = vpack.c.b16 %v580, %v575
      %v716 = vpack.c.b16 %v581, %v576
      %v717 = vpack.c.b16 %v582, %v577
      %v718 = vpack.c.b16 %v583, %v578
      %v719 = vpack.c.b16 %v584, %v579
      %v720 = vpack.c.b16 %v590, %v585
      %v721 = vpack.c.b16 %v591, %v586
      %v722 = vpack.c.b16 %v592, %v587
      %v723 = vpack.c.b16 %v593, %v588
      %v724 = vpack.c.b16 %v594, %v589
      %v725 = vpack.c.b16 %v600, %v595
      %v726 = vpack.c.b16 %v601, %v596
      %v727 = vpack.c.b16 %v602, %v597
      %v728 = vpack.c.b16 %v603, %v598
      %v729 = vpack.c.b16 %v604, %v599
      %v730 = vpack.c.b16 %v610, %v605
      %v731 = vpack.c.b16 %v611, %v606
      %v732 = vpack.c.b16 %v612, %v607
      %v733 = vpack.c.b16 %v613, %v608
      %v734 = vpack.c.b16 %v614, %v609
      %v735 = vpack.c.b16 %v620, %v615
      %v736 = vpack.c.b16 %v621, %v616
      %v737 = vpack.c.b16 %v622, %v617
      %v738 = vpack.c.b16 %v623, %v618
      %v739 = vpack.c.b16 %v624, %v619
      %v740 = vpack.c.b16 %v630, %v625
      %v741 = vpack.c.b16 %v631, %v626
      %v742 = vpack.c.b16 %v632, %v627
      %v743 = vpack.c.b16 %v633, %v628
      %v744 = vpack.c.b16 %v634, %v629
      %v745 = vpack.c.b16 %v640, %v635
      %v746 = vpack.c.b16 %v641, %v636
      %v747 = vpack.c.b16 %v642, %v637
      %v748 = vpack.c.b16 %v643, %v638
      %v749 = vpack.c.b16 %v644, %v639
      %v750 = vpack.c.b16 %v650, %v645
      %v751 = vpack.c.b16 %v651, %v646
      %v752 = vpack.c.b16 %v652, %v647
      %v753 = vpack.c.b16 %v653, %v648
      %v754 = vpack.c.b16 %v654, %v649
      %v755 = vpack.c.b16 %v660, %v655
      %v756 = vpack.c.b16 %v661, %v656
      %v757 = vpack.c.b16 %v662, %v657
      %v758 = vpack.c.b16 %v663, %v658
      %v759 = vpack.c.b16 %v664, %v659
      %v760 = vpack.c.b16 %v670, %v665
      %v761 = vpack.c.b16 %v671, %v666
      %v762 = vpack.c.b16 %v672, %v667
      %v763 = vpack.c.b16 %v673, %v668
      %v764 = vpack.c.b16 %v674, %v669
      %v765 = vpack.c.b16 %v680, %v675
      %v766 = vpack.c.b16 %v681, %v676
      %v767 = vpack.c.b16 %v682, %v677
      %v768 = vpack.c.b16 %v683, %v678
      %v769 = vpack.c.b16 %v684, %v679
      %v770 = vpack.c.b16 %v690, %v685
      %v771 = vpack.c.b16 %v691, %v686
      %v772 = vpack.c.b16 %v692, %v687
      %v773 = vpack.c.b16 %v693, %v688
      %v774 = vpack.c.b16 %v694, %v689
      %v911 = vunpack.c.l.b16 %v361
      %v912 = vunpack.c.h.b16 %v361
      %v913 = vunpack.c.l.b16 %v362
      %v914 = vunpack.c.h.b16 %v362
      %v915 = vunpack.c.l.b16 %v363
      %v916 = vunpack.c.h.b16 %v363
      %v917 = vunpack.c.l.b16 %v364
      %v918 = vunpack.c.h.b16 %v364
      %v919 = vunpack.c.l.b16 %v365
      %v920 = vunpack.c.h.b16 %v365
      %v921 = vunpack.c.l.b16 %v366
      %v922 = vunpack.c.h.b16 %v366
      %v923 = vunpack.c.l.b16 %v367
      %v924 = vunpack.c.h.b16 %v367
      %v925 = vunpack.c.l.b16 %v368
      %v926 = vunpack.c.h.b16 %v368
      %v927 = vunpack.c.l.b16 %v369
      %v928 = vunpack.c.h.b16 %v369
      %v929 = vunpack.c.l.b16 %v370
      %v930 = vunpack.c.h.b16 %v370
      %v931 = vunpack.c.l.b16 %v371
      %v932 = vunpack.c.h.b16 %v371
      %v933 = vunpack.c.l.b16 %v372
      %v934 = vunpack.c.h.b16 %v372
      %v935 = vunpack.c.l.b16 %v373
      %v936 = vunpack.c.h.b16 %v373
      %v937 = vunpack.c.l.b16 %v374
      %v938 = vunpack.c.h.b16 %v374
      %v939 = vunpack.c.l.b16 %v375
      %v940 = vunpack.c.h.b16 %v375
      %v941 = vunpack.c.l.b16 %v376
      %v942 = vunpack.c.h.b16 %v376
      %v943 = vunpack.c.l.b16 %v377
      %v944 = vunpack.c.h.b16 %v377
      %v945 = vunpack.c.l.b16 %v378
      %v946 = vunpack.c.h.b16 %v378
      %v947 = vunpack.c.l.b16 %v379
      %v948 = vunpack.c.h.b16 %v379
      %v949 = vunpack.c.l.b16 %v380
      %v950 = vunpack.c.h.b16 %v380
      %v951 = vunpack.c.l.b16 %v381
      %v952 = vunpack.c.h.b16 %v381
      %v953 = vunpack.c.l.b16 %v382
      %v954 = vunpack.c.h.b16 %v382
      %v955 = vunpack.c.l.b16 %v383
      %v956 = vunpack.c.h.b16 %v383
      %v957 = vunpack.c.l.b16 %v384
      %v958 = vunpack.c.h.b16 %v384
      %v959 = vunpack.c.l.b16 %v385
      %v960 = vunpack.c.h.b16 %v385
      %v961 = vunpack.c.l.b16 %v386
      %v962 = vunpack.c.h.b16 %v386
      %v963 = vunpack.c.l.b16 %v387
      %v964 = vunpack.c.h.b16 %v387
      %v965 = vunpack.c.l.b16 %v388
      %v966 = vunpack.c.h.b16 %v388
      %v967 = vunpack.c.l.b16 %v389
      %v968 = vunpack.c.h.b16 %v389
      %v969 = vunpack.c.l.b16 %v390
      %v970 = vunpack.c.h.b16 %v390
      %v971 = vunpack.c.l.b16 %v391
      %v972 = vunpack.c.h.b16 %v391
      %v973 = vunpack.c.l.b16 %v392
      %v974 = vunpack.c.h.b16 %v392
      %v975 = vunpack.c.l.b16 %v393
      %v976 = vunpack.c.h.b16 %v393
      %v977 = vunpack.c.l.b16 %v394
      %v978 = vunpack.c.h.b16 %v394
      %v979 = vunpack.c.l.b16 %v395
      %v980 = vunpack.c.h.b16 %v395
      %v981 = vunpack.c.l.b16 %v396
      %v982 = vunpack.c.h.b16 %v396
      %v983 = vunpack.c.l.b16 %v397
      %v984 = vunpack.c.h.b16 %v397
      %v985 = vunpack.c.l.b16 %v398
      %v986 = vunpack.c.h.b16 %v398
      %v987 = vunpack.c.l.b16 %v399
      %v988 = vunpack.c.h.b16 %v399
      %v989 = vunpack.c.l.b16 %v400
      %v990 = vunpack.c.h.b16 %v400
      %v991 = vunpack.c.l.b16 %v401
      %v992 = vunpack.c.h.b16 %v401
      %v993 = vunpack.c.l.b16 %v402
      %v994 = vunpack.c.h.b16 %v402
      %v995 = vunpack.c.l.b16 %v403
      %v996 = vunpack.c.h.b16 %v403
      %v997 = vunpack.c.l.b16 %v404
      %v998 = vunpack.c.h.b16 %v404
      %v999 = vunpack.c.l.b16 %v405
      %v1000 = vunpack.c.h.b16 %v405
      %v1001 = vunpack.c.l.b16 %v406
      %v1002 = vunpack.c.h.b16 %v406
      %v1003 = vunpack.c.l.b16 %v407
      %v1004 = vunpack.c.h.b16 %v407
      %v1005 = vunpack.c.l.b16 %v408
      %v1006 = vunpack.c.h.b16 %v408
      %v1007 = vunpack.c.l.b16 %v409
      %v1008 = vunpack.c.h.b16 %v409
      %v1009 = vunpack.c.l.b16 %v410
      %v1010 = vunpack.c.h.b16 %v410
      %v1011 = vunpack.c.l.b16 %v411
      %v1012 = vunpack.c.h.b16 %v411
      %v1013 = vunpack.c.l.b16 %v412
      %v1014 = vunpack.c.h.b16 %v412
      %v1015 = vunpack.c.l.b16 %v413
      %v1016 = vunpack.c.h.b16 %v413
      %v1017 = vunpack.c.l.b16 %v414
      %v1018 = vunpack.c.h.b16 %v414
      %v1019 = vunpack.c.l.b16 %v415
      %v1020 = vunpack.c.h.b16 %v415
      %v1021 = vunpack.c.l.b16 %v416
      %v1022 = vunpack.c.h.b16 %v416
      %v1023 = vunpack.c.l.b16 %v417
      %v1024 = vunpack.c.h.b16 %v417
      %v1025 = vunpack.c.l.b16 %v418
      %v1026 = vunpack.c.h.b16 %v418
      %v1027 = vunpack.c.l.b16 %v419
      %v1028 = vunpack.c.h.b16 %v419
      %v1029 = vunpack.c.l.b16 %v420
      %v1030 = vunpack.c.h.b16 %v420
      %v1031 = vunpack.c.l.b16 %v421
      %v1032 = vunpack.c.h.b16 %v421
      %v1033 = vunpack.c.l.b16 %v422
      %v1034 = vunpack.c.h.b16 %v422
      %v1035 = vunpack.c.l.b16 %v423
      %v1036 = vunpack.c.h.b16 %v423
      %v1037 = vunpack.c.l.b16 %v424
      %v1038 = vunpack.c.h.b16 %v424
      %v1039 = vunpack.c.l.b16 %v425
      %v1040 = vunpack.c.h.b16 %v425
      %v1041 = vunpack.c.l.b16 %v426
      %v1042 = vunpack.c.h.b16 %v426
      %v1043 = vunpack.c.l.b16 %v427
      %v1044 = vunpack.c.h.b16 %v427
      %v1045 = vunpack.c.l.b16 %v428
      %v1046 = vunpack.c.h.b16 %v428
      %v1047 = vunpack.c.l.b16 %v429
      %v1048 = vunpack.c.h.b16 %v429
      %v1049 = vunpack.c.l.b16 %v430
      %v1050 = vunpack.c.h.b16 %v430
      %v1051 = vunpack.c.l.b16 %v431
      %v1052 = vunpack.c.h.b16 %v431
      %v1053 = vunpack.c.l.b16 %v432
      %v1054 = vunpack.c.h.b16 %v432
      %v1055 = vpack.c.b16 %v913, %v911
      %v1056 = vpack.c.b16 %v914, %v912
      %v1057 = vpack.c.b16 %v917, %v915
      %v1058 = vpack.c.b16 %v918, %v916
      %v1059 = vpack.c.b16 %v921, %v919
      %v1060 = vpack.c.b16 %v922, %v920
      %v1061 = vpack.c.b16 %v925, %v923
      %v1062 = vpack.c.b16 %v926, %v924
      %v1063 = vpack.c.b16 %v929, %v927
      %v1064 = vpack.c.b16 %v930, %v928
      %v1065 = vpack.c.b16 %v933, %v931
      %v1066 = vpack.c.b16 %v934, %v932
      %v1067 = vpack.c.b16 %v937, %v935
      %v1068 = vpack.c.b16 %v938, %v936
      %v1069 = vpack.c.b16 %v941, %v939
      %v1070 = vpack.c.b16 %v942, %v940
      %v1071 = vpack.c.b16 %v945, %v943
      %v1072 = vpack.c.b16 %v946, %v944
      %v1073 = vpack.c.b16 %v949, %v947
      %v1074 = vpack.c.b16 %v950, %v948
      %v1075 = vpack.c.b16 %v953, %v951
      %v1076 = vpack.c.b16 %v954, %v952
      %v1077 = vpack.c.b16 %v957, %v955
      %v1078 = vpack.c.b16 %v958, %v956
      %v1079 = vpack.c.b16 %v961, %v959
      %v1080 = vpack.c.b16 %v962, %v960
      %v1081 = vpack.c.b16 %v965, %v963
      %v1082 = vpack.c.b16 %v966, %v964
      %v1083 = vpack.c.b16 %v969, %v967
      %v1084 = vpack.c.b16 %v970, %v968
      %v1085 = vpack.c.b16 %v973, %v971
      %v1086 = vpack.c.b16 %v974, %v972
      %v1087 = vpack.c.b16 %v977, %v975
      %v1088 = vpack.c.b16 %v978, %v976
      %v1089 = vpack.c.b16 %v981, %v979
      %v1090 = vpack.c.b16 %v982, %v980
      %v1091 = vpack.c.b16 %v985, %v983
      %v1092 = vpack.c.b16 %v986, %v984
      %v1093 = vpack.c.b16 %v989, %v987
      %v1094 = vpack.c.b16 %v990, %v988
      %v1095 = vpack.c.b16 %v993, %v991
      %v1096 = vpack.c.b16 %v994, %v992
      %v1097 = vpack.c.b16 %v997, %v995
      %v1098 = vpack.c.b16 %v998, %v996
      %v1099 = vpack.c.b16 %v1001, %v999
      %v1100 = vpack.c.b16 %v1002, %v1000
      %v1101 = vpack.c.b16 %v1005, %v1003
      %v1102 = vpack.c.b16 %v1006, %v1004
      %v1103 = vpack.c.b16 %v1009, %v1007
      %v1104 = vpack.c.b16 %v1010, %v1008
      %v1105 = vpack.c.b16 %v1013, %v1011
      %v1106 = vpack.c.b16 %v1014, %v1012
      %v1107 = vpack.c.b16 %v1017, %v1015
      %v1108 = vpack.c.b16 %v1018, %v1016
      %v1109 = vpack.c.b16 %v1021, %v1019
      %v1110 = vpack.c.b16 %v1022, %v1020
      %v1111 = vpack.c.b16 %v1025, %v1023
      %v1112 = vpack.c.b16 %v1026, %v1024
      %v1113 = vpack.c.b16 %v1029, %v1027
      %v1114 = vpack.c.b16 %v1030, %v1028
      %v1115 = vpack.c.b16 %v1033, %v1031
      %v1116 = vpack.c.b16 %v1034, %v1032
      %v1117 = vpack.c.b16 %v1037, %v1035
      %v1118 = vpack.c.b16 %v1038, %v1036
      %v1119 = vpack.c.b16 %v1041, %v1039
      %v1120 = vpack.c.b16 %v1042, %v1040
      %v1121 = vpack.c.b16 %v1045, %v1043
      %v1122 = vpack.c.b16 %v1046, %v1044
      %v1123 = vpack.c.b16 %v1049, %v1047
      %v1124 = vpack.c.b16 %v1050, %v1048
      %v1125 = vpack.c.b16 %v1053, %v1051
      %v1126 = vpack.c.b16 %v1054, %v1052
      %vm1199 = vcmask 523264
      %v1201 = vsel %vm1199, %v699, 0
      %v1204 = vsel %vm1199, %v704, 0
      %v1207 = vsel %vm1199, %v709, 0
      %v1210 = vsel %vm1199, %v714, 0
      %v1213 = vsel %vm1199, %v719, 0
      %v1216 = vsel %vm1199, %v724, 0
      %v1219 = vsel %vm1199, %v729, 0
      %v1222 = vsel %vm1199, %v734, 0
      %v1225 = vsel %vm1199, %v739, 0
      %v1228 = vsel %vm1199, %v744, 0
      %v1231 = vsel %vm1199, %v749, 0
      %v1234 = vsel %vm1199, %v754, 0
      %v1237 = vsel %vm1199, %v759, 0
      %v1240 = vsel %vm1199, %v764, 0
      %v1243 = vsel %vm1199, %v769, 0
      %v1246 = vsel %vm1199, %v774, 0
      %1248 = vmatpush.bf16.msra.mxu0 %v1069
      %1249 = vmatpush.bf16.msra.mxu0 %v1067
      %1250 = vmatpush.bf16.msra.mxu0 %v1065
      %1251 = vmatpush.bf16.msra.mxu0 %v1063
      %1252 = vmatpush.bf16.msra.mxu0 %v1061
      %1253 = vmatpush.bf16.msra.mxu0 %v1059
      %1254 = vmatpush.bf16.msra.mxu0 %v1057
      %1255 = vmatpush.bf16.msra.mxu0 %v1055
      %1256 = vmatmul.bf16.gmra.mxu0 %v695
      %v1257 = vpop.f32.mrf.mxu0
      %v1258 = vadd.f32 %v435, %v1257
      %v1259 = vpop.f32.mrf.mxu0
      %v1260 = vadd.f32 %v435, %v1259
      %1261 = vmatmul.bf16.gmra.mxu0 %v700
      %v1262 = vpop.f32.mrf.mxu0
      %v1263 = vadd.f32 %v435, %v1262
      %v1264 = vpop.f32.mrf.mxu0
      %v1265 = vadd.f32 %v435, %v1264
      %1266 = vmatmul.bf16.gmra.mxu0 %v705
      %v1267 = vpop.f32.mrf.mxu0
      %v1268 = vadd.f32 %v435, %v1267
      %v1269 = vpop.f32.mrf.mxu0
      %v1270 = vadd.f32 %v435, %v1269
      %1271 = vmatmul.bf16.gmra.mxu0 %v710
      %v1272 = vpop.f32.mrf.mxu0
      %v1273 = vadd.f32 %v435, %v1272
      %v1274 = vpop.f32.mrf.mxu0
      %v1275 = vadd.f32 %v435, %v1274
      %1276 = vmatmul.bf16.gmra.mxu0 %v715
      %v1277 = vpop.f32.mrf.mxu0
      %v1278 = vadd.f32 %v435, %v1277
      %v1279 = vpop.f32.mrf.mxu0
      %v1280 = vadd.f32 %v435, %v1279
      %1281 = vmatmul.bf16.gmra.mxu0 %v720
      %v1282 = vpop.f32.mrf.mxu0
      %v1283 = vadd.f32 %v435, %v1282
      %v1284 = vpop.f32.mrf.mxu0
      %v1285 = vadd.f32 %v435, %v1284
      %1286 = vmatmul.bf16.gmra.mxu0 %v725
      %v1287 = vpop.f32.mrf.mxu0
      %v1288 = vadd.f32 %v435, %v1287
      %v1289 = vpop.f32.mrf.mxu0
      %v1290 = vadd.f32 %v435, %v1289
      %1291 = vmatmul.bf16.gmra.mxu0 %v730
      %v1292 = vpop.f32.mrf.mxu0
      %v1293 = vadd.f32 %v435, %v1292
      %v1294 = vpop.f32.mrf.mxu0
      %v1295 = vadd.f32 %v435, %v1294
      %1296 = vmatmul.bf16.gmra.mxu0 %v735
      %v1297 = vpop.f32.mrf.mxu0
      %v1298 = vadd.f32 %v435, %v1297
      %v1299 = vpop.f32.mrf.mxu0
      %v1300 = vadd.f32 %v435, %v1299
      %1301 = vmatmul.bf16.gmra.mxu0 %v740
      %v1302 = vpop.f32.mrf.mxu0
      %v1303 = vadd.f32 %v435, %v1302
      %v1304 = vpop.f32.mrf.mxu0
      %v1305 = vadd.f32 %v435, %v1304
      %1306 = vmatmul.bf16.gmra.mxu0 %v745
      %v1307 = vpop.f32.mrf.mxu0
      %v1308 = vadd.f32 %v435, %v1307
      %v1309 = vpop.f32.mrf.mxu0
      %v1310 = vadd.f32 %v435, %v1309
      %1311 = vmatmul.bf16.gmra.mxu0 %v750
      %v1312 = vpop.f32.mrf.mxu0
      %v1313 = vadd.f32 %v435, %v1312
      %v1314 = vpop.f32.mrf.mxu0
      %v1315 = vadd.f32 %v435, %v1314
      %1316 = vmatmul.bf16.gmra.mxu0 %v755
      %v1317 = vpop.f32.mrf.mxu0
      %v1318 = vadd.f32 %v435, %v1317
      %v1319 = vpop.f32.mrf.mxu0
      %v1320 = vadd.f32 %v435, %v1319
      %1321 = vmatmul.bf16.gmra.mxu0 %v760
      %v1322 = vpop.f32.mrf.mxu0
      %v1323 = vadd.f32 %v435, %v1322
      %v1324 = vpop.f32.mrf.mxu0
      %v1325 = vadd.f32 %v435, %v1324
      %1326 = vmatmul.bf16.gmra.mxu0 %v765
      %v1327 = vpop.f32.mrf.mxu0
      %v1328 = vadd.f32 %v435, %v1327
      %v1329 = vpop.f32.mrf.mxu0
      %v1330 = vadd.f32 %v435, %v1329
      %1331 = vmatmul.bf16.gmra.mxu0 %v770
      %v1332 = vpop.f32.mrf.mxu0
      %v1333 = vadd.f32 %v435, %v1332
      %v1334 = vpop.f32.mrf.mxu0
      %v1335 = vadd.f32 %v435, %v1334
      %1336 = vdwg.mxu0
      %1337 = vmatpush.bf16.msra.mxu0 %v1085
      %1338 = vmatpush.bf16.msra.mxu0 %v1083
      %1339 = vmatpush.bf16.msra.mxu0 %v1081
      %1340 = vmatpush.bf16.msra.mxu0 %v1079
      %1341 = vmatpush.bf16.msra.mxu0 %v1077
      %1342 = vmatpush.bf16.msra.mxu0 %v1075
      %1343 = vmatpush.bf16.msra.mxu0 %v1073
      %1344 = vmatpush.bf16.msra.mxu0 %v1071
      %1345 = vmatmul.bf16.gmra.mxu0 %v696
      %v1346 = vpop.f32.mrf.mxu0
      %v1347 = vadd.f32 %v1258, %v1346
      %v1348 = vpop.f32.mrf.mxu0
      %v1349 = vadd.f32 %v1260, %v1348
      %1350 = vmatmul.bf16.gmra.mxu0 %v701
      %v1351 = vpop.f32.mrf.mxu0
      %v1352 = vadd.f32 %v1263, %v1351
      %v1353 = vpop.f32.mrf.mxu0
      %v1354 = vadd.f32 %v1265, %v1353
      %1355 = vmatmul.bf16.gmra.mxu0 %v706
      %v1356 = vpop.f32.mrf.mxu0
      %v1357 = vadd.f32 %v1268, %v1356
      %v1358 = vpop.f32.mrf.mxu0
      %v1359 = vadd.f32 %v1270, %v1358
      %1360 = vmatmul.bf16.gmra.mxu0 %v711
      %v1361 = vpop.f32.mrf.mxu0
      %v1362 = vadd.f32 %v1273, %v1361
      %v1363 = vpop.f32.mrf.mxu0
      %v1364 = vadd.f32 %v1275, %v1363
      %1365 = vmatmul.bf16.gmra.mxu0 %v716
      %v1366 = vpop.f32.mrf.mxu0
      %v1367 = vadd.f32 %v1278, %v1366
      %v1368 = vpop.f32.mrf.mxu0
      %v1369 = vadd.f32 %v1280, %v1368
      %1370 = vmatmul.bf16.gmra.mxu0 %v721
      %v1371 = vpop.f32.mrf.mxu0
      %v1372 = vadd.f32 %v1283, %v1371
      %v1373 = vpop.f32.mrf.mxu0
      %v1374 = vadd.f32 %v1285, %v1373
      %1375 = vmatmul.bf16.gmra.mxu0 %v726
      %v1376 = vpop.f32.mrf.mxu0
      %v1377 = vadd.f32 %v1288, %v1376
      %v1378 = vpop.f32.mrf.mxu0
      %v1379 = vadd.f32 %v1290, %v1378
      %1380 = vmatmul.bf16.gmra.mxu0 %v731
      %v1381 = vpop.f32.mrf.mxu0
      %v1382 = vadd.f32 %v1293, %v1381
      %v1383 = vpop.f32.mrf.mxu0
      %v1384 = vadd.f32 %v1295, %v1383
      %1385 = vmatmul.bf16.gmra.mxu0 %v736
      %v1386 = vpop.f32.mrf.mxu0
      %v1387 = vadd.f32 %v1298, %v1386
      %v1388 = vpop.f32.mrf.mxu0
      %v1389 = vadd.f32 %v1300, %v1388
      %1390 = vmatmul.bf16.gmra.mxu0 %v741
      %v1391 = vpop.f32.mrf.mxu0
      %v1392 = vadd.f32 %v1303, %v1391
      %v1393 = vpop.f32.mrf.mxu0
      %v1394 = vadd.f32 %v1305, %v1393
      %1395 = vmatmul.bf16.gmra.mxu0 %v746
      %v1396 = vpop.f32.mrf.mxu0
      %v1397 = vadd.f32 %v1308, %v1396
      %v1398 = vpop.f32.mrf.mxu0
      %v1399 = vadd.f32 %v1310, %v1398
      %1400 = vmatmul.bf16.gmra.mxu0 %v751
      %v1401 = vpop.f32.mrf.mxu0
      %v1402 = vadd.f32 %v1313, %v1401
      %v1403 = vpop.f32.mrf.mxu0
      %v1404 = vadd.f32 %v1315, %v1403
      %1405 = vmatmul.bf16.gmra.mxu0 %v756
      %v1406 = vpop.f32.mrf.mxu0
      %v1407 = vadd.f32 %v1318, %v1406
      %v1408 = vpop.f32.mrf.mxu0
      %v1409 = vadd.f32 %v1320, %v1408
      %1410 = vmatmul.bf16.gmra.mxu0 %v761
      %v1411 = vpop.f32.mrf.mxu0
      %v1412 = vadd.f32 %v1323, %v1411
      %v1413 = vpop.f32.mrf.mxu0
      %v1414 = vadd.f32 %v1325, %v1413
      %1415 = vmatmul.bf16.gmra.mxu0 %v766
      %v1416 = vpop.f32.mrf.mxu0
      %v1417 = vadd.f32 %v1328, %v1416
      %v1418 = vpop.f32.mrf.mxu0
      %v1419 = vadd.f32 %v1330, %v1418
      %1420 = vmatmul.bf16.gmra.mxu0 %v771
      %v1421 = vpop.f32.mrf.mxu0
      %v1422 = vadd.f32 %v1333, %v1421
      %v1423 = vpop.f32.mrf.mxu0
      %v1424 = vadd.f32 %v1335, %v1423
      %1425 = vdwg.mxu0
      %1426 = vmatpush.bf16.msra.mxu0 %v1101
      %1427 = vmatpush.bf16.msra.mxu0 %v1099
      %1428 = vmatpush.bf16.msra.mxu0 %v1097
      %1429 = vmatpush.bf16.msra.mxu0 %v1095
      %1430 = vmatpush.bf16.msra.mxu0 %v1093
      %1431 = vmatpush.bf16.msra.mxu0 %v1091
      %1432 = vmatpush.bf16.msra.mxu0 %v1089
      %1433 = vmatpush.bf16.msra.mxu0 %v1087
      %1434 = vmatmul.bf16.gmra.mxu0 %v697
      %v1435 = vpop.f32.mrf.mxu0
      %v1436 = vadd.f32 %v1347, %v1435
      %v1437 = vpop.f32.mrf.mxu0
      %v1438 = vadd.f32 %v1349, %v1437
      %1439 = vmatmul.bf16.gmra.mxu0 %v702
      %v1440 = vpop.f32.mrf.mxu0
      %v1441 = vadd.f32 %v1352, %v1440
      %v1442 = vpop.f32.mrf.mxu0
      %v1443 = vadd.f32 %v1354, %v1442
      %1444 = vmatmul.bf16.gmra.mxu0 %v707
      %v1445 = vpop.f32.mrf.mxu0
      %v1446 = vadd.f32 %v1357, %v1445
      %v1447 = vpop.f32.mrf.mxu0
      %v1448 = vadd.f32 %v1359, %v1447
      %1449 = vmatmul.bf16.gmra.mxu0 %v712
      %v1450 = vpop.f32.mrf.mxu0
      %v1451 = vadd.f32 %v1362, %v1450
      %v1452 = vpop.f32.mrf.mxu0
      %v1453 = vadd.f32 %v1364, %v1452
      %1454 = vmatmul.bf16.gmra.mxu0 %v717
      %v1455 = vpop.f32.mrf.mxu0
      %v1456 = vadd.f32 %v1367, %v1455
      %v1457 = vpop.f32.mrf.mxu0
      %v1458 = vadd.f32 %v1369, %v1457
      %1459 = vmatmul.bf16.gmra.mxu0 %v722
      %v1460 = vpop.f32.mrf.mxu0
      %v1461 = vadd.f32 %v1372, %v1460
      %v1462 = vpop.f32.mrf.mxu0
      %v1463 = vadd.f32 %v1374, %v1462
      %1464 = vmatmul.bf16.gmra.mxu0 %v727
      %v1465 = vpop.f32.mrf.mxu0
      %v1466 = vadd.f32 %v1377, %v1465
      %v1467 = vpop.f32.mrf.mxu0
      %v1468 = vadd.f32 %v1379, %v1467
      %1469 = vmatmul.bf16.gmra.mxu0 %v732
      %v1470 = vpop.f32.mrf.mxu0
      %v1471 = vadd.f32 %v1382, %v1470
      %v1472 = vpop.f32.mrf.mxu0
      %v1473 = vadd.f32 %v1384, %v1472
      %1474 = vmatmul.bf16.gmra.mxu0 %v737
      %v1475 = vpop.f32.mrf.mxu0
      %v1476 = vadd.f32 %v1387, %v1475
      %v1477 = vpop.f32.mrf.mxu0
      %v1478 = vadd.f32 %v1389, %v1477
      %1479 = vmatmul.bf16.gmra.mxu0 %v742
      %v1480 = vpop.f32.mrf.mxu0
      %v1481 = vadd.f32 %v1392, %v1480
      %v1482 = vpop.f32.mrf.mxu0
      %v1483 = vadd.f32 %v1394, %v1482
      %1484 = vmatmul.bf16.gmra.mxu0 %v747
      %v1485 = vpop.f32.mrf.mxu0
      %v1486 = vadd.f32 %v1397, %v1485
      %v1487 = vpop.f32.mrf.mxu0
      %v1488 = vadd.f32 %v1399, %v1487
      %1489 = vmatmul.bf16.gmra.mxu0 %v752
      %v1490 = vpop.f32.mrf.mxu0
      %v1491 = vadd.f32 %v1402, %v1490
      %v1492 = vpop.f32.mrf.mxu0
      %v1493 = vadd.f32 %v1404, %v1492
      %1494 = vmatmul.bf16.gmra.mxu0 %v757
      %v1495 = vpop.f32.mrf.mxu0
      %v1496 = vadd.f32 %v1407, %v1495
      %v1497 = vpop.f32.mrf.mxu0
      %v1498 = vadd.f32 %v1409, %v1497
      %1499 = vmatmul.bf16.gmra.mxu0 %v762
      %v1500 = vpop.f32.mrf.mxu0
      %v1501 = vadd.f32 %v1412, %v1500
      %v1502 = vpop.f32.mrf.mxu0
      %v1503 = vadd.f32 %v1414, %v1502
      %1504 = vmatmul.bf16.gmra.mxu0 %v767
      %v1505 = vpop.f32.mrf.mxu0
      %v1506 = vadd.f32 %v1417, %v1505
      %v1507 = vpop.f32.mrf.mxu0
      %v1508 = vadd.f32 %v1419, %v1507
      %1509 = vmatmul.bf16.gmra.mxu0 %v772
      %v1510 = vpop.f32.mrf.mxu0
      %v1511 = vadd.f32 %v1422, %v1510
      %v1512 = vpop.f32.mrf.mxu0
      %v1513 = vadd.f32 %v1424, %v1512
      %1514 = vdwg.mxu0
      %1515 = vmatpush.bf16.msra.mxu0 %v1117
      %1516 = vmatpush.bf16.msra.mxu0 %v1115
      %1517 = vmatpush.bf16.msra.mxu0 %v1113
      %1518 = vmatpush.bf16.msra.mxu0 %v1111
      %1519 = vmatpush.bf16.msra.mxu0 %v1109
      %1520 = vmatpush.bf16.msra.mxu0 %v1107
      %1521 = vmatpush.bf16.msra.mxu0 %v1105
      %1522 = vmatpush.bf16.msra.mxu0 %v1103
      %1523 = vmatmul.bf16.gmra.mxu0 %v698
      %v1524 = vpop.f32.mrf.mxu0
      %v1525 = vadd.f32 %v1436, %v1524
      %v1526 = vpop.f32.mrf.mxu0
      %v1527 = vadd.f32 %v1438, %v1526
      %1528 = vmatmul.bf16.gmra.mxu0 %v703
      %v1529 = vpop.f32.mrf.mxu0
      %v1530 = vadd.f32 %v1441, %v1529
      %v1531 = vpop.f32.mrf.mxu0
      %v1532 = vadd.f32 %v1443, %v1531
      %1533 = vmatmul.bf16.gmra.mxu0 %v708
      %v1534 = vpop.f32.mrf.mxu0
      %v1535 = vadd.f32 %v1446, %v1534
      %v1536 = vpop.f32.mrf.mxu0
      %v1537 = vadd.f32 %v1448, %v1536
      %1538 = vmatmul.bf16.gmra.mxu0 %v713
      %v1539 = vpop.f32.mrf.mxu0
      %v1540 = vadd.f32 %v1451, %v1539
      %v1541 = vpop.f32.mrf.mxu0
      %v1542 = vadd.f32 %v1453, %v1541
      %1543 = vmatmul.bf16.gmra.mxu0 %v718
      %v1544 = vpop.f32.mrf.mxu0
      %v1545 = vadd.f32 %v1456, %v1544
      %v1546 = vpop.f32.mrf.mxu0
      %v1547 = vadd.f32 %v1458, %v1546
      %1548 = vmatmul.bf16.gmra.mxu0 %v723
      %v1549 = vpop.f32.mrf.mxu0
      %v1550 = vadd.f32 %v1461, %v1549
      %v1551 = vpop.f32.mrf.mxu0
      %v1552 = vadd.f32 %v1463, %v1551
      %1553 = vmatmul.bf16.gmra.mxu0 %v728
      %v1554 = vpop.f32.mrf.mxu0
      %v1555 = vadd.f32 %v1466, %v1554
      %v1556 = vpop.f32.mrf.mxu0
      %v1557 = vadd.f32 %v1468, %v1556
      %1558 = vmatmul.bf16.gmra.mxu0 %v733
      %v1559 = vpop.f32.mrf.mxu0
      %v1560 = vadd.f32 %v1471, %v1559
      %v1561 = vpop.f32.mrf.mxu0
      %v1562 = vadd.f32 %v1473, %v1561
      %1563 = vmatmul.bf16.gmra.mxu0 %v738
      %v1564 = vpop.f32.mrf.mxu0
      %v1565 = vadd.f32 %v1476, %v1564
      %v1566 = vpop.f32.mrf.mxu0
      %v1567 = vadd.f32 %v1478, %v1566
      %1568 = vmatmul.bf16.gmra.mxu0 %v743
      %v1569 = vpop.f32.mrf.mxu0
      %v1570 = vadd.f32 %v1481, %v1569
      %v1571 = vpop.f32.mrf.mxu0
      %v1572 = vadd.f32 %v1483, %v1571
      %1573 = vmatmul.bf16.gmra.mxu0 %v748
      %v1574 = vpop.f32.mrf.mxu0
      %v1575 = vadd.f32 %v1486, %v1574
      %v1576 = vpop.f32.mrf.mxu0
      %v1577 = vadd.f32 %v1488, %v1576
      %1578 = vmatmul.bf16.gmra.mxu0 %v753
      %v1579 = vpop.f32.mrf.mxu0
      %v1580 = vadd.f32 %v1491, %v1579
      %v1581 = vpop.f32.mrf.mxu0
      %v1582 = vadd.f32 %v1493, %v1581
      %1583 = vmatmul.bf16.gmra.mxu0 %v758
      %v1584 = vpop.f32.mrf.mxu0
      %v1585 = vadd.f32 %v1496, %v1584
      %v1586 = vpop.f32.mrf.mxu0
      %v1587 = vadd.f32 %v1498, %v1586
      %1588 = vmatmul.bf16.gmra.mxu0 %v763
      %v1589 = vpop.f32.mrf.mxu0
      %v1590 = vadd.f32 %v1501, %v1589
      %v1591 = vpop.f32.mrf.mxu0
      %v1592 = vadd.f32 %v1503, %v1591
      %1593 = vmatmul.bf16.gmra.mxu0 %v768
      %v1594 = vpop.f32.mrf.mxu0
      %v1595 = vadd.f32 %v1506, %v1594
      %v1596 = vpop.f32.mrf.mxu0
      %v1597 = vadd.f32 %v1508, %v1596
      %1598 = vmatmul.bf16.gmra.mxu0 %v773
      %v1599 = vpop.f32.mrf.mxu0
      %v1600 = vadd.f32 %v1511, %v1599
      %v1601 = vpop.f32.mrf.mxu0
      %v1602 = vadd.f32 %v1513, %v1601
      %1603 = vdwg.mxu0
      %1604 = vmatpush.bf16.msra.mxu0 0
      %1605 = vmatpush.bf16.msra.mxu0 0
      %1606 = vmatpush.bf16.msra.mxu0 0
      %1607 = vmatpush.bf16.msra.mxu0 0
      %1608 = vmatpush.bf16.msra.mxu0 %v1125
      %1609 = vmatpush.bf16.msra.mxu0 %v1123
      %1610 = vmatpush.bf16.msra.mxu0 %v1121
      %1611 = vmatpush.bf16.msra.mxu0 %v1119
      %1612 = vmatmul.bf16.gmra.mxu0 %v1201
      %v1613 = vpop.f32.mrf.mxu0
      %v1614 = vadd.f32 %v1525, %v1613
      %v1615 = vpop.f32.mrf.mxu0
      %v1616 = vadd.f32 %v1527, %v1615
      %1617 = vmatmul.bf16.gmra.mxu0 %v1204
      %v1618 = vpop.f32.mrf.mxu0
      %v1619 = vadd.f32 %v1530, %v1618
      %v1620 = vpop.f32.mrf.mxu0
      %v1621 = vadd.f32 %v1532, %v1620
      %1622 = vmatmul.bf16.gmra.mxu0 %v1207
      %v1623 = vpop.f32.mrf.mxu0
      %v1624 = vadd.f32 %v1535, %v1623
      %v1625 = vpop.f32.mrf.mxu0
      %v1626 = vadd.f32 %v1537, %v1625
      %1627 = vmatmul.bf16.gmra.mxu0 %v1210
      %v1628 = vpop.f32.mrf.mxu0
      %v1629 = vadd.f32 %v1540, %v1628
      %v1630 = vpop.f32.mrf.mxu0
      %v1631 = vadd.f32 %v1542, %v1630
      %1632 = vmatmul.bf16.gmra.mxu0 %v1213
      %v1633 = vpop.f32.mrf.mxu0
      %v1634 = vadd.f32 %v1545, %v1633
      %v1635 = vpop.f32.mrf.mxu0
      %v1636 = vadd.f32 %v1547, %v1635
      %1637 = vmatmul.bf16.gmra.mxu0 %v1216
      %v1638 = vpop.f32.mrf.mxu0
      %v1639 = vadd.f32 %v1550, %v1638
      %v1640 = vpop.f32.mrf.mxu0
      %v1641 = vadd.f32 %v1552, %v1640
      %1642 = vmatmul.bf16.gmra.mxu0 %v1219
      %v1643 = vpop.f32.mrf.mxu0
      %v1644 = vadd.f32 %v1555, %v1643
      %v1645 = vpop.f32.mrf.mxu0
      %v1646 = vadd.f32 %v1557, %v1645
      %1647 = vmatmul.bf16.gmra.mxu0 %v1222
      %v1648 = vpop.f32.mrf.mxu0
      %v1649 = vadd.f32 %v1560, %v1648
      %v1650 = vpop.f32.mrf.mxu0
      %v1651 = vadd.f32 %v1562, %v1650
      %1652 = vmatmul.bf16.gmra.mxu0 %v1225
      %v1653 = vpop.f32.mrf.mxu0
      %v1654 = vadd.f32 %v1565, %v1653
      %v1655 = vpop.f32.mrf.mxu0
      %v1656 = vadd.f32 %v1567, %v1655
      %1657 = vmatmul.bf16.gmra.mxu0 %v1228
      %v1658 = vpop.f32.mrf.mxu0
      %v1659 = vadd.f32 %v1570, %v1658
      %v1660 = vpop.f32.mrf.mxu0
      %v1661 = vadd.f32 %v1572, %v1660
      %1662 = vmatmul.bf16.gmra.mxu0 %v1231
      %v1663 = vpop.f32.mrf.mxu0
      %v1664 = vadd.f32 %v1575, %v1663
      %v1665 = vpop.f32.mrf.mxu0
      %v1666 = vadd.f32 %v1577, %v1665
      %1667 = vmatmul.bf16.gmra.mxu0 %v1234
      %v1668 = vpop.f32.mrf.mxu0
      %v1669 = vadd.f32 %v1580, %v1668
      %v1670 = vpop.f32.mrf.mxu0
      %v1671 = vadd.f32 %v1582, %v1670
      %1672 = vmatmul.bf16.gmra.mxu0 %v1237
      %v1673 = vpop.f32.mrf.mxu0
      %v1674 = vadd.f32 %v1585, %v1673
      %v1675 = vpop.f32.mrf.mxu0
      %v1676 = vadd.f32 %v1587, %v1675
      %1677 = vmatmul.bf16.gmra.mxu0 %v1240
      %v1678 = vpop.f32.mrf.mxu0
      %v1679 = vadd.f32 %v1590, %v1678
      %v1680 = vpop.f32.mrf.mxu0
      %v1681 = vadd.f32 %v1592, %v1680
      %1682 = vmatmul.bf16.gmra.mxu0 %v1243
      %v1683 = vpop.f32.mrf.mxu0
      %v1684 = vadd.f32 %v1595, %v1683
      %v1685 = vpop.f32.mrf.mxu0
      %v1686 = vadd.f32 %v1597, %v1685
      %1687 = vmatmul.bf16.gmra.mxu0 %v1246
      %v1688 = vpop.f32.mrf.mxu0
      %v1689 = vadd.f32 %v1600, %v1688
      %v1690 = vpop.f32.mrf.mxu0
      %v1691 = vadd.f32 %v1602, %v1690
      %1692 = vdwg.mxu0
      %1693 = vmatpush.bf16.msra.mxu0 %v1070
      %1694 = vmatpush.bf16.msra.mxu0 %v1068
      %1695 = vmatpush.bf16.msra.mxu0 %v1066
      %1696 = vmatpush.bf16.msra.mxu0 %v1064
      %1697 = vmatpush.bf16.msra.mxu0 %v1062
      %1698 = vmatpush.bf16.msra.mxu0 %v1060
      %1699 = vmatpush.bf16.msra.mxu0 %v1058
      %1700 = vmatpush.bf16.msra.mxu0 %v1056
      %1701 = vmatmul.bf16.gmra.mxu0 %v695
      %v1702 = vpop.f32.mrf.mxu0
      %v1703 = vadd.f32 %v436, %v1702
      %v1704 = vpop.f32.mrf.mxu0
      %v1705 = vadd.f32 %v436, %v1704
      %1706 = vmatmul.bf16.gmra.mxu0 %v700
      %v1707 = vpop.f32.mrf.mxu0
      %v1708 = vadd.f32 %v436, %v1707
      %v1709 = vpop.f32.mrf.mxu0
      %v1710 = vadd.f32 %v436, %v1709
      %1711 = vmatmul.bf16.gmra.mxu0 %v705
      %v1712 = vpop.f32.mrf.mxu0
      %v1713 = vadd.f32 %v436, %v1712
      %v1714 = vpop.f32.mrf.mxu0
      %v1715 = vadd.f32 %v436, %v1714
      %1716 = vmatmul.bf16.gmra.mxu0 %v710
      %v1717 = vpop.f32.mrf.mxu0
      %v1718 = vadd.f32 %v436, %v1717
      %v1719 = vpop.f32.mrf.mxu0
      %v1720 = vadd.f32 %v436, %v1719
      %1721 = vmatmul.bf16.gmra.mxu0 %v715
      %v1722 = vpop.f32.mrf.mxu0
      %v1723 = vadd.f32 %v436, %v1722
      %v1724 = vpop.f32.mrf.mxu0
      %v1725 = vadd.f32 %v436, %v1724
      %1726 = vmatmul.bf16.gmra.mxu0 %v720
      %v1727 = vpop.f32.mrf.mxu0
      %v1728 = vadd.f32 %v436, %v1727
      %v1729 = vpop.f32.mrf.mxu0
      %v1730 = vadd.f32 %v436, %v1729
      %1731 = vmatmul.bf16.gmra.mxu0 %v725
      %v1732 = vpop.f32.mrf.mxu0
      %v1733 = vadd.f32 %v436, %v1732
      %v1734 = vpop.f32.mrf.mxu0
      %v1735 = vadd.f32 %v436, %v1734
      %1736 = vmatmul.bf16.gmra.mxu0 %v730
      %v1737 = vpop.f32.mrf.mxu0
      %v1738 = vadd.f32 %v436, %v1737
      %v1739 = vpop.f32.mrf.mxu0
      %v1740 = vadd.f32 %v436, %v1739
      %1741 = vmatmul.bf16.gmra.mxu0 %v735
      %v1742 = vpop.f32.mrf.mxu0
      %v1743 = vadd.f32 %v436, %v1742
      %v1744 = vpop.f32.mrf.mxu0
      %v1745 = vadd.f32 %v436, %v1744
      %1746 = vmatmul.bf16.gmra.mxu0 %v740
      %v1747 = vpop.f32.mrf.mxu0
      %v1748 = vadd.f32 %v436, %v1747
      %v1749 = vpop.f32.mrf.mxu0
      %v1750 = vadd.f32 %v436, %v1749
      %1751 = vmatmul.bf16.gmra.mxu0 %v745
      %v1752 = vpop.f32.mrf.mxu0
      %v1753 = vadd.f32 %v436, %v1752
      %v1754 = vpop.f32.mrf.mxu0
      %v1755 = vadd.f32 %v436, %v1754
      %1756 = vmatmul.bf16.gmra.mxu0 %v750
      %v1757 = vpop.f32.mrf.mxu0
      %v1758 = vadd.f32 %v436, %v1757
      %v1759 = vpop.f32.mrf.mxu0
      %v1760 = vadd.f32 %v436, %v1759
      %1761 = vmatmul.bf16.gmra.mxu0 %v755
      %v1762 = vpop.f32.mrf.mxu0
      %v1763 = vadd.f32 %v436, %v1762
      %v1764 = vpop.f32.mrf.mxu0
      %v1765 = vadd.f32 %v436, %v1764
      %1766 = vmatmul.bf16.gmra.mxu0 %v760
      %v1767 = vpop.f32.mrf.mxu0
      %v1768 = vadd.f32 %v436, %v1767
      %v1769 = vpop.f32.mrf.mxu0
      %v1770 = vadd.f32 %v436, %v1769
      %1771 = vmatmul.bf16.gmra.mxu0 %v765
      %v1772 = vpop.f32.mrf.mxu0
      %v1773 = vadd.f32 %v436, %v1772
      %v1774 = vpop.f32.mrf.mxu0
      %v1775 = vadd.f32 %v436, %v1774
      %1776 = vmatmul.bf16.gmra.mxu0 %v770
      %v1777 = vpop.f32.mrf.mxu0
      %v1778 = vadd.f32 %v436, %v1777
      %v1779 = vpop.f32.mrf.mxu0
      %v1780 = vadd.f32 %v436, %v1779
      %1781 = vdwg.mxu0
      %1782 = vmatpush.bf16.msra.mxu0 %v1086
      %1783 = vmatpush.bf16.msra.mxu0 %v1084
      %1784 = vmatpush.bf16.msra.mxu0 %v1082
      %1785 = vmatpush.bf16.msra.mxu0 %v1080
      %1786 = vmatpush.bf16.msra.mxu0 %v1078
      %1787 = vmatpush.bf16.msra.mxu0 %v1076
      %1788 = vmatpush.bf16.msra.mxu0 %v1074
      %1789 = vmatpush.bf16.msra.mxu0 %v1072
      %1790 = vmatmul.bf16.gmra.mxu0 %v696
      %v1791 = vpop.f32.mrf.mxu0
      %v1792 = vadd.f32 %v1703, %v1791
      %v1793 = vpop.f32.mrf.mxu0
      %v1794 = vadd.f32 %v1705, %v1793
      %1795 = vmatmul.bf16.gmra.mxu0 %v701
      %v1796 = vpop.f32.mrf.mxu0
      %v1797 = vadd.f32 %v1708, %v1796
      %v1798 = vpop.f32.mrf.mxu0
      %v1799 = vadd.f32 %v1710, %v1798
      %1800 = vmatmul.bf16.gmra.mxu0 %v706
      %v1801 = vpop.f32.mrf.mxu0
      %v1802 = vadd.f32 %v1713, %v1801
      %v1803 = vpop.f32.mrf.mxu0
      %v1804 = vadd.f32 %v1715, %v1803
      %1805 = vmatmul.bf16.gmra.mxu0 %v711
      %v1806 = vpop.f32.mrf.mxu0
      %v1807 = vadd.f32 %v1718, %v1806
      %v1808 = vpop.f32.mrf.mxu0
      %v1809 = vadd.f32 %v1720, %v1808
      %1810 = vmatmul.bf16.gmra.mxu0 %v716
      %v1811 = vpop.f32.mrf.mxu0
      %v1812 = vadd.f32 %v1723, %v1811
      %v1813 = vpop.f32.mrf.mxu0
      %v1814 = vadd.f32 %v1725, %v1813
      %1815 = vmatmul.bf16.gmra.mxu0 %v721
      %v1816 = vpop.f32.mrf.mxu0
      %v1817 = vadd.f32 %v1728, %v1816
      %v1818 = vpop.f32.mrf.mxu0
      %v1819 = vadd.f32 %v1730, %v1818
      %1820 = vmatmul.bf16.gmra.mxu0 %v726
      %v1821 = vpop.f32.mrf.mxu0
      %v1822 = vadd.f32 %v1733, %v1821
      %v1823 = vpop.f32.mrf.mxu0
      %v1824 = vadd.f32 %v1735, %v1823
      %1825 = vmatmul.bf16.gmra.mxu0 %v731
      %v1826 = vpop.f32.mrf.mxu0
      %v1827 = vadd.f32 %v1738, %v1826
      %v1828 = vpop.f32.mrf.mxu0
      %v1829 = vadd.f32 %v1740, %v1828
      %1830 = vmatmul.bf16.gmra.mxu0 %v736
      %v1831 = vpop.f32.mrf.mxu0
      %v1832 = vadd.f32 %v1743, %v1831
      %v1833 = vpop.f32.mrf.mxu0
      %v1834 = vadd.f32 %v1745, %v1833
      %1835 = vmatmul.bf16.gmra.mxu0 %v741
      %v1836 = vpop.f32.mrf.mxu0
      %v1837 = vadd.f32 %v1748, %v1836
      %v1838 = vpop.f32.mrf.mxu0
      %v1839 = vadd.f32 %v1750, %v1838
      %1840 = vmatmul.bf16.gmra.mxu0 %v746
      %v1841 = vpop.f32.mrf.mxu0
      %v1842 = vadd.f32 %v1753, %v1841
      %v1843 = vpop.f32.mrf.mxu0
      %v1844 = vadd.f32 %v1755, %v1843
      %1845 = vmatmul.bf16.gmra.mxu0 %v751
      %v1846 = vpop.f32.mrf.mxu0
      %v1847 = vadd.f32 %v1758, %v1846
      %v1848 = vpop.f32.mrf.mxu0
      %v1849 = vadd.f32 %v1760, %v1848
      %1850 = vmatmul.bf16.gmra.mxu0 %v756
      %v1851 = vpop.f32.mrf.mxu0
      %v1852 = vadd.f32 %v1763, %v1851
      %v1853 = vpop.f32.mrf.mxu0
      %v1854 = vadd.f32 %v1765, %v1853
      %1855 = vmatmul.bf16.gmra.mxu0 %v761
      %v1856 = vpop.f32.mrf.mxu0
      %v1857 = vadd.f32 %v1768, %v1856
      %v1858 = vpop.f32.mrf.mxu0
      %v1859 = vadd.f32 %v1770, %v1858
      %1860 = vmatmul.bf16.gmra.mxu0 %v766
      %v1861 = vpop.f32.mrf.mxu0
      %v1862 = vadd.f32 %v1773, %v1861
      %v1863 = vpop.f32.mrf.mxu0
      %v1864 = vadd.f32 %v1775, %v1863
      %1865 = vmatmul.bf16.gmra.mxu0 %v771
      %v1866 = vpop.f32.mrf.mxu0
      %v1867 = vadd.f32 %v1778, %v1866
      %v1868 = vpop.f32.mrf.mxu0
      %v1869 = vadd.f32 %v1780, %v1868
      %1870 = vdwg.mxu0
      %1871 = vmatpush.bf16.msra.mxu0 %v1102
      %1872 = vmatpush.bf16.msra.mxu0 %v1100
      %1873 = vmatpush.bf16.msra.mxu0 %v1098
      %1874 = vmatpush.bf16.msra.mxu0 %v1096
      %1875 = vmatpush.bf16.msra.mxu0 %v1094
      %1876 = vmatpush.bf16.msra.mxu0 %v1092
      %1877 = vmatpush.bf16.msra.mxu0 %v1090
      %1878 = vmatpush.bf16.msra.mxu0 %v1088
      %1879 = vmatmul.bf16.gmra.mxu0 %v697
      %v1880 = vpop.f32.mrf.mxu0
      %v1881 = vadd.f32 %v1792, %v1880
      %v1882 = vpop.f32.mrf.mxu0
      %v1883 = vadd.f32 %v1794, %v1882
      %1884 = vmatmul.bf16.gmra.mxu0 %v702
      %v1885 = vpop.f32.mrf.mxu0
      %v1886 = vadd.f32 %v1797, %v1885
      %v1887 = vpop.f32.mrf.mxu0
      %v1888 = vadd.f32 %v1799, %v1887
      %1889 = vmatmul.bf16.gmra.mxu0 %v707
      %v1890 = vpop.f32.mrf.mxu0
      %v1891 = vadd.f32 %v1802, %v1890
      %v1892 = vpop.f32.mrf.mxu0
      %v1893 = vadd.f32 %v1804, %v1892
      %1894 = vmatmul.bf16.gmra.mxu0 %v712
      %v1895 = vpop.f32.mrf.mxu0
      %v1896 = vadd.f32 %v1807, %v1895
      %v1897 = vpop.f32.mrf.mxu0
      %v1898 = vadd.f32 %v1809, %v1897
      %1899 = vmatmul.bf16.gmra.mxu0 %v717
      %v1900 = vpop.f32.mrf.mxu0
      %v1901 = vadd.f32 %v1812, %v1900
      %v1902 = vpop.f32.mrf.mxu0
      %v1903 = vadd.f32 %v1814, %v1902
      %1904 = vmatmul.bf16.gmra.mxu0 %v722
      %v1905 = vpop.f32.mrf.mxu0
      %v1906 = vadd.f32 %v1817, %v1905
      %v1907 = vpop.f32.mrf.mxu0
      %v1908 = vadd.f32 %v1819, %v1907
      %1909 = vmatmul.bf16.gmra.mxu0 %v727
      %v1910 = vpop.f32.mrf.mxu0
      %v1911 = vadd.f32 %v1822, %v1910
      %v1912 = vpop.f32.mrf.mxu0
      %v1913 = vadd.f32 %v1824, %v1912
      %1914 = vmatmul.bf16.gmra.mxu0 %v732
      %v1915 = vpop.f32.mrf.mxu0
      %v1916 = vadd.f32 %v1827, %v1915
      %v1917 = vpop.f32.mrf.mxu0
      %v1918 = vadd.f32 %v1829, %v1917
      %1919 = vmatmul.bf16.gmra.mxu0 %v737
      %v1920 = vpop.f32.mrf.mxu0
      %v1921 = vadd.f32 %v1832, %v1920
      %v1922 = vpop.f32.mrf.mxu0
      %v1923 = vadd.f32 %v1834, %v1922
      %1924 = vmatmul.bf16.gmra.mxu0 %v742
      %v1925 = vpop.f32.mrf.mxu0
      %v1926 = vadd.f32 %v1837, %v1925
      %v1927 = vpop.f32.mrf.mxu0
      %v1928 = vadd.f32 %v1839, %v1927
      %1929 = vmatmul.bf16.gmra.mxu0 %v747
      %v1930 = vpop.f32.mrf.mxu0
      %v1931 = vadd.f32 %v1842, %v1930
      %v1932 = vpop.f32.mrf.mxu0
      %v1933 = vadd.f32 %v1844, %v1932
      %1934 = vmatmul.bf16.gmra.mxu0 %v752
      %v1935 = vpop.f32.mrf.mxu0
      %v1936 = vadd.f32 %v1847, %v1935
      %v1937 = vpop.f32.mrf.mxu0
      %v1938 = vadd.f32 %v1849, %v1937
      %1939 = vmatmul.bf16.gmra.mxu0 %v757
      %v1940 = vpop.f32.mrf.mxu0
      %v1941 = vadd.f32 %v1852, %v1940
      %v1942 = vpop.f32.mrf.mxu0
      %v1943 = vadd.f32 %v1854, %v1942
      %1944 = vmatmul.bf16.gmra.mxu0 %v762
      %v1945 = vpop.f32.mrf.mxu0
      %v1946 = vadd.f32 %v1857, %v1945
      %v1947 = vpop.f32.mrf.mxu0
      %v1948 = vadd.f32 %v1859, %v1947
      %1949 = vmatmul.bf16.gmra.mxu0 %v767
      %v1950 = vpop.f32.mrf.mxu0
      %v1951 = vadd.f32 %v1862, %v1950
      %v1952 = vpop.f32.mrf.mxu0
      %v1953 = vadd.f32 %v1864, %v1952
      %1954 = vmatmul.bf16.gmra.mxu0 %v772
      %v1955 = vpop.f32.mrf.mxu0
      %v1956 = vadd.f32 %v1867, %v1955
      %v1957 = vpop.f32.mrf.mxu0
      %v1958 = vadd.f32 %v1869, %v1957
      %1959 = vdwg.mxu0
      %1960 = vmatpush.bf16.msra.mxu0 %v1118
      %1961 = vmatpush.bf16.msra.mxu0 %v1116
      %1962 = vmatpush.bf16.msra.mxu0 %v1114
      %1963 = vmatpush.bf16.msra.mxu0 %v1112
      %1964 = vmatpush.bf16.msra.mxu0 %v1110
      %1965 = vmatpush.bf16.msra.mxu0 %v1108
      %1966 = vmatpush.bf16.msra.mxu0 %v1106
      %1967 = vmatpush.bf16.msra.mxu0 %v1104
      %1968 = vmatmul.bf16.gmra.mxu0 %v698
      %v1969 = vpop.f32.mrf.mxu0
      %v1970 = vadd.f32 %v1881, %v1969
      %v1971 = vpop.f32.mrf.mxu0
      %v1972 = vadd.f32 %v1883, %v1971
      %1973 = vmatmul.bf16.gmra.mxu0 %v703
      %v1974 = vpop.f32.mrf.mxu0
      %v1975 = vadd.f32 %v1886, %v1974
      %v1976 = vpop.f32.mrf.mxu0
      %v1977 = vadd.f32 %v1888, %v1976
      %1978 = vmatmul.bf16.gmra.mxu0 %v708
      %v1979 = vpop.f32.mrf.mxu0
      %v1980 = vadd.f32 %v1891, %v1979
      %v1981 = vpop.f32.mrf.mxu0
      %v1982 = vadd.f32 %v1893, %v1981
      %1983 = vmatmul.bf16.gmra.mxu0 %v713
      %v1984 = vpop.f32.mrf.mxu0
      %v1985 = vadd.f32 %v1896, %v1984
      %v1986 = vpop.f32.mrf.mxu0
      %v1987 = vadd.f32 %v1898, %v1986
      %1988 = vmatmul.bf16.gmra.mxu0 %v718
      %v1989 = vpop.f32.mrf.mxu0
      %v1990 = vadd.f32 %v1901, %v1989
      %v1991 = vpop.f32.mrf.mxu0
      %v1992 = vadd.f32 %v1903, %v1991
      %1993 = vmatmul.bf16.gmra.mxu0 %v723
      %v1994 = vpop.f32.mrf.mxu0
      %v1995 = vadd.f32 %v1906, %v1994
      %v1996 = vpop.f32.mrf.mxu0
      %v1997 = vadd.f32 %v1908, %v1996
      %1998 = vmatmul.bf16.gmra.mxu0 %v728
      %v1999 = vpop.f32.mrf.mxu0
      %v2000 = vadd.f32 %v1911, %v1999
      %v2001 = vpop.f32.mrf.mxu0
      %v2002 = vadd.f32 %v1913, %v2001
      %2003 = vmatmul.bf16.gmra.mxu0 %v733
      %v2004 = vpop.f32.mrf.mxu0
      %v2005 = vadd.f32 %v1916, %v2004
      %v2006 = vpop.f32.mrf.mxu0
      %v2007 = vadd.f32 %v1918, %v2006
      %2008 = vmatmul.bf16.gmra.mxu0 %v738
      %v2009 = vpop.f32.mrf.mxu0
      %v2010 = vadd.f32 %v1921, %v2009
      %v2011 = vpop.f32.mrf.mxu0
      %v2012 = vadd.f32 %v1923, %v2011
      %2013 = vmatmul.bf16.gmra.mxu0 %v743
      %v2014 = vpop.f32.mrf.mxu0
      %v2015 = vadd.f32 %v1926, %v2014
      %v2016 = vpop.f32.mrf.mxu0
      %v2017 = vadd.f32 %v1928, %v2016
      %2018 = vmatmul.bf16.gmra.mxu0 %v748
      %v2019 = vpop.f32.mrf.mxu0
      %v2020 = vadd.f32 %v1931, %v2019
      %v2021 = vpop.f32.mrf.mxu0
      %v2022 = vadd.f32 %v1933, %v2021
      %2023 = vmatmul.bf16.gmra.mxu0 %v753
      %v2024 = vpop.f32.mrf.mxu0
      %v2025 = vadd.f32 %v1936, %v2024
      %v2026 = vpop.f32.mrf.mxu0
      %v2027 = vadd.f32 %v1938, %v2026
      %2028 = vmatmul.bf16.gmra.mxu0 %v758
      %v2029 = vpop.f32.mrf.mxu0
      %v2030 = vadd.f32 %v1941, %v2029
      %v2031 = vpop.f32.mrf.mxu0
      %v2032 = vadd.f32 %v1943, %v2031
      %2033 = vmatmul.bf16.gmra.mxu0 %v763
      %v2034 = vpop.f32.mrf.mxu0
      %v2035 = vadd.f32 %v1946, %v2034
      %v2036 = vpop.f32.mrf.mxu0
      %v2037 = vadd.f32 %v1948, %v2036
      %2038 = vmatmul.bf16.gmra.mxu0 %v768
      %v2039 = vpop.f32.mrf.mxu0
      %v2040 = vadd.f32 %v1951, %v2039
      %v2041 = vpop.f32.mrf.mxu0
      %v2042 = vadd.f32 %v1953, %v2041
      %2043 = vmatmul.bf16.gmra.mxu0 %v773
      %v2044 = vpop.f32.mrf.mxu0
      %v2045 = vadd.f32 %v1956, %v2044
      %v2046 = vpop.f32.mrf.mxu0
      %v2047 = vadd.f32 %v1958, %v2046
      %2048 = vdwg.mxu0
      %2049 = vmatpush.bf16.msra.mxu0 0
      %2050 = vmatpush.bf16.msra.mxu0 0
      %2051 = vmatpush.bf16.msra.mxu0 0
      %2052 = vmatpush.bf16.msra.mxu0 0
      %2053 = vmatpush.bf16.msra.mxu0 %v1126
      %2054 = vmatpush.bf16.msra.mxu0 %v1124
      %2055 = vmatpush.bf16.msra.mxu0 %v1122
      %2056 = vmatpush.bf16.msra.mxu0 %v1120
      %2057 = vmatmul.bf16.gmra.mxu0 %v1201
      %v2058 = vpop.f32.mrf.mxu0
      %v2059 = vadd.f32 %v1970, %v2058
      %v2060 = vpop.f32.mrf.mxu0
      %v2061 = vadd.f32 %v1972, %v2060
      %2062 = vmatmul.bf16.gmra.mxu0 %v1204
      %v2063 = vpop.f32.mrf.mxu0
      %v2064 = vadd.f32 %v1975, %v2063
      %v2065 = vpop.f32.mrf.mxu0
      %v2066 = vadd.f32 %v1977, %v2065
      %2067 = vmatmul.bf16.gmra.mxu0 %v1207
      %v2068 = vpop.f32.mrf.mxu0
      %v2069 = vadd.f32 %v1980, %v2068
      %v2070 = vpop.f32.mrf.mxu0
      %v2071 = vadd.f32 %v1982, %v2070
      %2072 = vmatmul.bf16.gmra.mxu0 %v1210
      %v2073 = vpop.f32.mrf.mxu0
      %v2074 = vadd.f32 %v1985, %v2073
      %v2075 = vpop.f32.mrf.mxu0
      %v2076 = vadd.f32 %v1987, %v2075
      %2077 = vmatmul.bf16.gmra.mxu0 %v1213
      %v2078 = vpop.f32.mrf.mxu0
      %v2079 = vadd.f32 %v1990, %v2078
      %v2080 = vpop.f32.mrf.mxu0
      %v2081 = vadd.f32 %v1992, %v2080
      %2082 = vmatmul.bf16.gmra.mxu0 %v1216
      %v2083 = vpop.f32.mrf.mxu0
      %v2084 = vadd.f32 %v1995, %v2083
      %v2085 = vpop.f32.mrf.mxu0
      %v2086 = vadd.f32 %v1997, %v2085
      %2087 = vmatmul.bf16.gmra.mxu0 %v1219
      %v2088 = vpop.f32.mrf.mxu0
      %v2089 = vadd.f32 %v2000, %v2088
      %v2090 = vpop.f32.mrf.mxu0
      %v2091 = vadd.f32 %v2002, %v2090
      %2092 = vmatmul.bf16.gmra.mxu0 %v1222
      %v2093 = vpop.f32.mrf.mxu0
      %v2094 = vadd.f32 %v2005, %v2093
      %v2095 = vpop.f32.mrf.mxu0
      %v2096 = vadd.f32 %v2007, %v2095
      %2097 = vmatmul.bf16.gmra.mxu0 %v1225
      %v2098 = vpop.f32.mrf.mxu0
      %v2099 = vadd.f32 %v2010, %v2098
      %v2100 = vpop.f32.mrf.mxu0
      %v2101 = vadd.f32 %v2012, %v2100
      %2102 = vmatmul.bf16.gmra.mxu0 %v1228
      %v2103 = vpop.f32.mrf.mxu0
      %v2104 = vadd.f32 %v2015, %v2103
      %v2105 = vpop.f32.mrf.mxu0
      %v2106 = vadd.f32 %v2017, %v2105
      %2107 = vmatmul.bf16.gmra.mxu0 %v1231
      %v2108 = vpop.f32.mrf.mxu0
      %v2109 = vadd.f32 %v2020, %v2108
      %v2110 = vpop.f32.mrf.mxu0
      %v2111 = vadd.f32 %v2022, %v2110
      %2112 = vmatmul.bf16.gmra.mxu0 %v1234
      %v2113 = vpop.f32.mrf.mxu0
      %v2114 = vadd.f32 %v2025, %v2113
      %v2115 = vpop.f32.mrf.mxu0
      %v2116 = vadd.f32 %v2027, %v2115
      %2117 = vmatmul.bf16.gmra.mxu0 %v1237
      %v2118 = vpop.f32.mrf.mxu0
      %v2119 = vadd.f32 %v2030, %v2118
      %v2120 = vpop.f32.mrf.mxu0
      %v2121 = vadd.f32 %v2032, %v2120
      %2122 = vmatmul.bf16.gmra.mxu0 %v1240
      %v2123 = vpop.f32.mrf.mxu0
      %v2124 = vadd.f32 %v2035, %v2123
      %v2125 = vpop.f32.mrf.mxu0
      %v2126 = vadd.f32 %v2037, %v2125
      %2127 = vmatmul.bf16.gmra.mxu0 %v1243
      %v2128 = vpop.f32.mrf.mxu0
      %v2129 = vadd.f32 %v2040, %v2128
      %v2130 = vpop.f32.mrf.mxu0
      %v2131 = vadd.f32 %v2042, %v2130
      %2132 = vmatmul.bf16.gmra.mxu0 %v1246
      %v2133 = vpop.f32.mrf.mxu0
      %v2134 = vadd.f32 %v2045, %v2133
      %v2135 = vpop.f32.mrf.mxu0
      %v2136 = vadd.f32 %v2047, %v2135
      %2137 = vdwg.mxu0
      %v2138 = vld [vmem:[%s252] sm:$0xff]
      %v2139 = vld [vmem:[%s252 + $0x8] sm:$0xff]
      %v2140 = vld [vmem:[%s252 + $0x10] sm:$0xff]
      %v2141 = vld [vmem:[%s252 + $0x18] sm:$0xff]
      %v2142 = vld [vmem:[%s252 + $0x20] sm:$0xff]
      %v2143 = vld [vmem:[%s252 + $0x28] sm:$0xff]
      %v2144 = vld [vmem:[%s252 + $0x30] sm:$0xff]
      %v2145 = vld [vmem:[%s252 + $0x38] sm:$0xff]
      %v2146 = vld [vmem:[%s252 + $0x40] sm:$0xff]
      %v2147 = vld [vmem:[%s252 + $0x48] sm:$0xff]
      %v2148 = vld [vmem:[%s252 + $0x50] sm:$0xff]
      %v2149 = vld [vmem:[%s252 + $0x58] sm:$0xff]
      %v2150 = vld [vmem:[%s252 + $0x60] sm:$0xff]
      %v2151 = vld [vmem:[%s252 + $0x68] sm:$0xff]
      %v2152 = vld [vmem:[%s252 + $0x70] sm:$0xff]
      %v2153 = vld [vmem:[%s252 + $0x78] sm:$0xff]
      %v2154 = vld [vmem:[%s252 + $0x80] sm:$0xff]
      %v2155 = vld [vmem:[%s252 + $0x88] sm:$0xff]
      %v2156 = vld [vmem:[%s252 + $0x90] sm:$0xff]
      %v2157 = vld [vmem:[%s252 + $0x98] sm:$0xff]
      %v2158 = vld [vmem:[%s252 + $0xa0] sm:$0xff]
      %v2159 = vld [vmem:[%s252 + $0xa8] sm:$0xff]
      %v2160 = vld [vmem:[%s252 + $0xb0] sm:$0xff]
      %v2161 = vld [vmem:[%s252 + $0xb8] sm:$0xff]
      %v2162 = vld [vmem:[%s252 + $0xc0] sm:$0xff]
      %v2163 = vld [vmem:[%s252 + $0xc8] sm:$0xff]
      %v2164 = vld [vmem:[%s252 + $0xd0] sm:$0xff]
      %v2165 = vld [vmem:[%s252 + $0xd8] sm:$0xff]
      %v2166 = vld [vmem:[%s252 + $0xe0] sm:$0xff]
      %v2167 = vld [vmem:[%s252 + $0xe8] sm:$0xff]
      %v2168 = vld [vmem:[%s252 + $0xf0] sm:$0xff]
      %v2169 = vld [vmem:[%s252 + $0xf8] sm:$0xff]
      %2171 = vset.pattern.permute.xlu0 0
      %2172 = vperm.xlu0 %2171, %v2138
      %v2173 = vpop.permute.xlu0 %2172
      %2176 = vset.pattern.permute.xlu0 0
      %2177 = vperm.xlu0 %2176, %v2139
      %v2178 = vpop.permute.xlu0 %2177
      %2181 = vset.pattern.permute.xlu0 0
      %2182 = vperm.xlu0 %2181, %v2140
      %v2183 = vpop.permute.xlu0 %2182
      %2186 = vset.pattern.permute.xlu0 0
      %2187 = vperm.xlu0 %2186, %v2141
      %v2188 = vpop.permute.xlu0 %2187
      %2191 = vset.pattern.permute.xlu0 0
      %2192 = vperm.xlu0 %2191, %v2142
      %v2193 = vpop.permute.xlu0 %2192
      %2196 = vset.pattern.permute.xlu0 0
      %2197 = vperm.xlu0 %2196, %v2143
      %v2198 = vpop.permute.xlu0 %2197
      %2201 = vset.pattern.permute.xlu0 0
      %2202 = vperm.xlu0 %2201, %v2144
      %v2203 = vpop.permute.xlu0 %2202
      %2206 = vset.pattern.permute.xlu0 0
      %2207 = vperm.xlu0 %2206, %v2145
      %v2208 = vpop.permute.xlu0 %2207
      %2211 = vset.pattern.permute.xlu0 0
      %2212 = vperm.xlu0 %2211, %v2146
      %v2213 = vpop.permute.xlu0 %2212
      %2216 = vset.pattern.permute.xlu0 0
      %2217 = vperm.xlu0 %2216, %v2147
      %v2218 = vpop.permute.xlu0 %2217
      %2221 = vset.pattern.permute.xlu0 0
      %2222 = vperm.xlu0 %2221, %v2148
      %v2223 = vpop.permute.xlu0 %2222
      %2226 = vset.pattern.permute.xlu0 0
      %2227 = vperm.xlu0 %2226, %v2149
      %v2228 = vpop.permute.xlu0 %2227
      %2231 = vset.pattern.permute.xlu0 0
      %2232 = vperm.xlu0 %2231, %v2150
      %v2233 = vpop.permute.xlu0 %2232
      %2236 = vset.pattern.permute.xlu0 0
      %2237 = vperm.xlu0 %2236, %v2151
      %v2238 = vpop.permute.xlu0 %2237
      %2241 = vset.pattern.permute.xlu0 0
      %2242 = vperm.xlu0 %2241, %v2152
      %v2243 = vpop.permute.xlu0 %2242
      %2246 = vset.pattern.permute.xlu0 0
      %2247 = vperm.xlu0 %2246, %v2153
      %v2248 = vpop.permute.xlu0 %2247
      %2251 = vset.pattern.permute.xlu0 0
      %2252 = vperm.xlu0 %2251, %v2154
      %v2253 = vpop.permute.xlu0 %2252
      %2256 = vset.pattern.permute.xlu0 0
      %2257 = vperm.xlu0 %2256, %v2155
      %v2258 = vpop.permute.xlu0 %2257
      %2261 = vset.pattern.permute.xlu0 0
      %2262 = vperm.xlu0 %2261, %v2156
      %v2263 = vpop.permute.xlu0 %2262
      %2266 = vset.pattern.permute.xlu0 0
      %2267 = vperm.xlu0 %2266, %v2157
      %v2268 = vpop.permute.xlu0 %2267
      %2271 = vset.pattern.permute.xlu0 0
      %2272 = vperm.xlu0 %2271, %v2158
      %v2273 = vpop.permute.xlu0 %2272
      %2276 = vset.pattern.permute.xlu0 0
      %2277 = vperm.xlu0 %2276, %v2159
      %v2278 = vpop.permute.xlu0 %2277
      %2281 = vset.pattern.permute.xlu0 0
      %2282 = vperm.xlu0 %2281, %v2160
      %v2283 = vpop.permute.xlu0 %2282
      %2286 = vset.pattern.permute.xlu0 0
      %2287 = vperm.xlu0 %2286, %v2161
      %v2288 = vpop.permute.xlu0 %2287
      %2291 = vset.pattern.permute.xlu0 0
      %2292 = vperm.xlu0 %2291, %v2162
      %v2293 = vpop.permute.xlu0 %2292
      %2296 = vset.pattern.permute.xlu0 0
      %2297 = vperm.xlu0 %2296, %v2163
      %v2298 = vpop.permute.xlu0 %2297
      %2301 = vset.pattern.permute.xlu0 0
      %2302 = vperm.xlu0 %2301, %v2164
      %v2303 = vpop.permute.xlu0 %2302
      %2306 = vset.pattern.permute.xlu0 0
      %2307 = vperm.xlu0 %2306, %v2165
      %v2308 = vpop.permute.xlu0 %2307
      %2311 = vset.pattern.permute.xlu0 0
      %2312 = vperm.xlu0 %2311, %v2166
      %v2313 = vpop.permute.xlu0 %2312
      %2316 = vset.pattern.permute.xlu0 0
      %2317 = vperm.xlu0 %2316, %v2167
      %v2318 = vpop.permute.xlu0 %2317
      %2321 = vset.pattern.permute.xlu0 0
      %2322 = vperm.xlu0 %2321, %v2168
      %v2323 = vpop.permute.xlu0 %2322
      %2326 = vset.pattern.permute.xlu0 0
      %2327 = vperm.xlu0 %2326, %v2169
      %v2328 = vpop.permute.xlu0 %2327
      %v2330 = vmul.f32 %v2173, %v1614
      %v2331 = vmul.f32 %v2178, %v1616
      %v2332 = vmul.f32 %v2183, %v1619
      %v2333 = vmul.f32 %v2188, %v1621
      %v2334 = vmul.f32 %v2193, %v1624
      %v2335 = vmul.f32 %v2198, %v1626
      %v2336 = vmul.f32 %v2203, %v1629
      %v2337 = vmul.f32 %v2208, %v1631
      %v2338 = vmul.f32 %v2213, %v1634
      %v2339 = vmul.f32 %v2218, %v1636
      %v2340 = vmul.f32 %v2223, %v1639
      %v2341 = vmul.f32 %v2228, %v1641
      %v2342 = vmul.f32 %v2233, %v1644
      %v2343 = vmul.f32 %v2238, %v1646
      %v2344 = vmul.f32 %v2243, %v1649
      %v2345 = vmul.f32 %v2248, %v1651
      %v2346 = vmul.f32 %v2253, %v1654
      %v2347 = vmul.f32 %v2258, %v1656
      %v2348 = vmul.f32 %v2263, %v1659
      %v2349 = vmul.f32 %v2268, %v1661
      %v2350 = vmul.f32 %v2273, %v1664
      %v2351 = vmul.f32 %v2278, %v1666
      %v2352 = vmul.f32 %v2283, %v1669
      %v2353 = vmul.f32 %v2288, %v1671
      %v2354 = vmul.f32 %v2293, %v1674
      %v2355 = vmul.f32 %v2298, %v1676
      %v2356 = vmul.f32 %v2303, %v1679
      %v2357 = vmul.f32 %v2308, %v1681
      %v2358 = vmul.f32 %v2313, %v1684
      %v2359 = vmul.f32 %v2318, %v1686
      %v2360 = vmul.f32 %v2323, %v1689
      %v2361 = vmul.f32 %v2328, %v1691
      %2362 = vset.pattern.permute.xlu0 1
      %2363 = vperm.xlu0 %2362, %v2138
      %v2364 = vpop.permute.xlu0 %2363
      %2366 = vset.pattern.permute.xlu0 1
      %2367 = vperm.xlu0 %2366, %v2139
      %v2368 = vpop.permute.xlu0 %2367
      %2370 = vset.pattern.permute.xlu0 1
      %2371 = vperm.xlu0 %2370, %v2140
      %v2372 = vpop.permute.xlu0 %2371
      %2374 = vset.pattern.permute.xlu0 1
      %2375 = vperm.xlu0 %2374, %v2141
      %v2376 = vpop.permute.xlu0 %2375
      %2378 = vset.pattern.permute.xlu0 1
      %2379 = vperm.xlu0 %2378, %v2142
      %v2380 = vpop.permute.xlu0 %2379
      %2382 = vset.pattern.permute.xlu0 1
      %2383 = vperm.xlu0 %2382, %v2143
      %v2384 = vpop.permute.xlu0 %2383
      %2386 = vset.pattern.permute.xlu0 1
      %2387 = vperm.xlu0 %2386, %v2144
      %v2388 = vpop.permute.xlu0 %2387
      %2390 = vset.pattern.permute.xlu0 1
      %2391 = vperm.xlu0 %2390, %v2145
      %v2392 = vpop.permute.xlu0 %2391
      %2394 = vset.pattern.permute.xlu0 1
      %2395 = vperm.xlu0 %2394, %v2146
      %v2396 = vpop.permute.xlu0 %2395
      %2398 = vset.pattern.permute.xlu0 1
      %2399 = vperm.xlu0 %2398, %v2147
      %v2400 = vpop.permute.xlu0 %2399
      %2402 = vset.pattern.permute.xlu0 1
      %2403 = vperm.xlu0 %2402, %v2148
      %v2404 = vpop.permute.xlu0 %2403
      %2406 = vset.pattern.permute.xlu0 1
      %2407 = vperm.xlu0 %2406, %v2149
      %v2408 = vpop.permute.xlu0 %2407
      %2410 = vset.pattern.permute.xlu0 1
      %2411 = vperm.xlu0 %2410, %v2150
      %v2412 = vpop.permute.xlu0 %2411
      %2414 = vset.pattern.permute.xlu0 1
      %2415 = vperm.xlu0 %2414, %v2151
      %v2416 = vpop.permute.xlu0 %2415
      %2418 = vset.pattern.permute.xlu0 1
      %2419 = vperm.xlu0 %2418, %v2152
      %v2420 = vpop.permute.xlu0 %2419
      %2422 = vset.pattern.permute.xlu0 1
      %2423 = vperm.xlu0 %2422, %v2153
      %v2424 = vpop.permute.xlu0 %2423
      %2426 = vset.pattern.permute.xlu0 1
      %2427 = vperm.xlu0 %2426, %v2154
      %v2428 = vpop.permute.xlu0 %2427
      %2430 = vset.pattern.permute.xlu0 1
      %2431 = vperm.xlu0 %2430, %v2155
      %v2432 = vpop.permute.xlu0 %2431
      %2434 = vset.pattern.permute.xlu0 1
      %2435 = vperm.xlu0 %2434, %v2156
      %v2436 = vpop.permute.xlu0 %2435
      %2438 = vset.pattern.permute.xlu0 1
      %2439 = vperm.xlu0 %2438, %v2157
      %v2440 = vpop.permute.xlu0 %2439
      %2442 = vset.pattern.permute.xlu0 1
      %2443 = vperm.xlu0 %2442, %v2158
      %v2444 = vpop.permute.xlu0 %2443
      %2446 = vset.pattern.permute.xlu0 1
      %2447 = vperm.xlu0 %2446, %v2159
      %v2448 = vpop.permute.xlu0 %2447
      %2450 = vset.pattern.permute.xlu0 1
      %2451 = vperm.xlu0 %2450, %v2160
      %v2452 = vpop.permute.xlu0 %2451
      %2454 = vset.pattern.permute.xlu0 1
      %2455 = vperm.xlu0 %2454, %v2161
      %v2456 = vpop.permute.xlu0 %2455
      %2458 = vset.pattern.permute.xlu0 1
      %2459 = vperm.xlu0 %2458, %v2162
      %v2460 = vpop.permute.xlu0 %2459
      %2462 = vset.pattern.permute.xlu0 1
      %2463 = vperm.xlu0 %2462, %v2163
      %v2464 = vpop.permute.xlu0 %2463
      %2466 = vset.pattern.permute.xlu0 1
      %2467 = vperm.xlu0 %2466, %v2164
      %v2468 = vpop.permute.xlu0 %2467
      %2470 = vset.pattern.permute.xlu0 1
      %2471 = vperm.xlu0 %2470, %v2165
      %v2472 = vpop.permute.xlu0 %2471
      %2474 = vset.pattern.permute.xlu0 1
      %2475 = vperm.xlu0 %2474, %v2166
      %v2476 = vpop.permute.xlu0 %2475
      %2478 = vset.pattern.permute.xlu0 1
      %2479 = vperm.xlu0 %2478, %v2167
      %v2480 = vpop.permute.xlu0 %2479
      %2482 = vset.pattern.permute.xlu0 1
      %2483 = vperm.xlu0 %2482, %v2168
      %v2484 = vpop.permute.xlu0 %2483
      %2486 = vset.pattern.permute.xlu0 1
      %2487 = vperm.xlu0 %2486, %v2169
      %v2488 = vpop.permute.xlu0 %2487
      %v2490 = vmul.f32 %v2364, %v1614
      %v2491 = vmul.f32 %v2368, %v1616
      %v2492 = vmul.f32 %v2372, %v1619
      %v2493 = vmul.f32 %v2376, %v1621
      %v2494 = vmul.f32 %v2380, %v1624
      %v2495 = vmul.f32 %v2384, %v1626
      %v2496 = vmul.f32 %v2388, %v1629
      %v2497 = vmul.f32 %v2392, %v1631
      %v2498 = vmul.f32 %v2396, %v1634
      %v2499 = vmul.f32 %v2400, %v1636
      %v2500 = vmul.f32 %v2404, %v1639
      %v2501 = vmul.f32 %v2408, %v1641
      %v2502 = vmul.f32 %v2412, %v1644
      %v2503 = vmul.f32 %v2416, %v1646
      %v2504 = vmul.f32 %v2420, %v1649
      %v2505 = vmul.f32 %v2424, %v1651
      %v2506 = vmul.f32 %v2428, %v1654
      %v2507 = vmul.f32 %v2432, %v1656
      %v2508 = vmul.f32 %v2436, %v1659
      %v2509 = vmul.f32 %v2440, %v1661
      %v2510 = vmul.f32 %v2444, %v1664
      %v2511 = vmul.f32 %v2448, %v1666
      %v2512 = vmul.f32 %v2452, %v1669
      %v2513 = vmul.f32 %v2456, %v1671
      %v2514 = vmul.f32 %v2460, %v1674
      %v2515 = vmul.f32 %v2464, %v1676
      %v2516 = vmul.f32 %v2468, %v1679
      %v2517 = vmul.f32 %v2472, %v1681
      %v2518 = vmul.f32 %v2476, %v1684
      %v2519 = vmul.f32 %v2480, %v1686
      %v2520 = vmul.f32 %v2484, %v1689
      %v2521 = vmul.f32 %v2488, %v1691
      %2554 = vrot.lane.b32.xlu0 %v2490, 64
      %v2555 = vpop.permute.xlu0 %2554
      %2556 = vrot.lane.b32.xlu0 %v2491, 64
      %v2557 = vpop.permute.xlu0 %2556
      %2558 = vrot.lane.b32.xlu0 %v2492, 64
      %v2559 = vpop.permute.xlu0 %2558
      %2560 = vrot.lane.b32.xlu0 %v2493, 64
      %v2561 = vpop.permute.xlu0 %2560
      %2562 = vrot.lane.b32.xlu0 %v2494, 64
      %v2563 = vpop.permute.xlu0 %2562
      %2564 = vrot.lane.b32.xlu0 %v2495, 64
      %v2565 = vpop.permute.xlu0 %2564
      %2566 = vrot.lane.b32.xlu0 %v2496, 64
      %v2567 = vpop.permute.xlu0 %2566
      %2568 = vrot.lane.b32.xlu0 %v2497, 64
      %v2569 = vpop.permute.xlu0 %2568
      %2570 = vrot.lane.b32.xlu0 %v2498, 64
      %v2571 = vpop.permute.xlu0 %2570
      %2572 = vrot.lane.b32.xlu0 %v2499, 64
      %v2573 = vpop.permute.xlu0 %2572
      %2574 = vrot.lane.b32.xlu0 %v2500, 64
      %v2575 = vpop.permute.xlu0 %2574
      %2576 = vrot.lane.b32.xlu0 %v2501, 64
      %v2577 = vpop.permute.xlu0 %2576
      %2578 = vrot.lane.b32.xlu0 %v2502, 64
      %v2579 = vpop.permute.xlu0 %2578
      %2580 = vrot.lane.b32.xlu0 %v2503, 64
      %v2581 = vpop.permute.xlu0 %2580
      %2582 = vrot.lane.b32.xlu0 %v2504, 64
      %v2583 = vpop.permute.xlu0 %2582
      %2584 = vrot.lane.b32.xlu0 %v2505, 64
      %v2585 = vpop.permute.xlu0 %2584
      %2586 = vrot.lane.b32.xlu0 %v2506, 64
      %v2587 = vpop.permute.xlu0 %2586
      %2588 = vrot.lane.b32.xlu0 %v2507, 64
      %v2589 = vpop.permute.xlu0 %2588
      %2590 = vrot.lane.b32.xlu0 %v2508, 64
      %v2591 = vpop.permute.xlu0 %2590
      %2592 = vrot.lane.b32.xlu0 %v2509, 64
      %v2593 = vpop.permute.xlu0 %2592
      %2594 = vrot.lane.b32.xlu0 %v2510, 64
      %v2595 = vpop.permute.xlu0 %2594
      %2596 = vrot.lane.b32.xlu0 %v2511, 64
      %v2597 = vpop.permute.xlu0 %2596
      %2598 = vrot.lane.b32.xlu0 %v2512, 64
      %v2599 = vpop.permute.xlu0 %2598
      %2600 = vrot.lane.b32.xlu0 %v2513, 64
      %v2601 = vpop.permute.xlu0 %2600
      %2602 = vrot.lane.b32.xlu0 %v2514, 64
      %v2603 = vpop.permute.xlu0 %2602
      %2604 = vrot.lane.b32.xlu0 %v2515, 64
      %v2605 = vpop.permute.xlu0 %2604
      %2606 = vrot.lane.b32.xlu0 %v2516, 64
      %v2607 = vpop.permute.xlu0 %2606
      %2608 = vrot.lane.b32.xlu0 %v2517, 64
      %v2609 = vpop.permute.xlu0 %2608
      %2610 = vrot.lane.b32.xlu0 %v2518, 64
      %v2611 = vpop.permute.xlu0 %2610
      %2612 = vrot.lane.b32.xlu0 %v2519, 64
      %v2613 = vpop.permute.xlu0 %2612
      %2614 = vrot.lane.b32.xlu0 %v2520, 64
      %v2615 = vpop.permute.xlu0 %2614
      %2616 = vrot.lane.b32.xlu0 %v2521, 64
      %v2617 = vpop.permute.xlu0 %2616
      %v2650 = vadd.f32 %v2330, %v2555
      %v2651 = vadd.f32 %v2331, %v2557
      %v2652 = vadd.f32 %v2332, %v2559
      %v2653 = vadd.f32 %v2333, %v2561
      %v2654 = vadd.f32 %v2334, %v2563
      %v2655 = vadd.f32 %v2335, %v2565
      %v2656 = vadd.f32 %v2336, %v2567
      %v2657 = vadd.f32 %v2337, %v2569
      %v2658 = vadd.f32 %v2338, %v2571
      %v2659 = vadd.f32 %v2339, %v2573
      %v2660 = vadd.f32 %v2340, %v2575
      %v2661 = vadd.f32 %v2341, %v2577
      %v2662 = vadd.f32 %v2342, %v2579
      %v2663 = vadd.f32 %v2343, %v2581
      %v2664 = vadd.f32 %v2344, %v2583
      %v2665 = vadd.f32 %v2345, %v2585
      %v2666 = vadd.f32 %v2346, %v2587
      %v2667 = vadd.f32 %v2347, %v2589
      %v2668 = vadd.f32 %v2348, %v2591
      %v2669 = vadd.f32 %v2349, %v2593
      %v2670 = vadd.f32 %v2350, %v2595
      %v2671 = vadd.f32 %v2351, %v2597
      %v2672 = vadd.f32 %v2352, %v2599
      %v2673 = vadd.f32 %v2353, %v2601
      %v2674 = vadd.f32 %v2354, %v2603
      %v2675 = vadd.f32 %v2355, %v2605
      %v2676 = vadd.f32 %v2356, %v2607
      %v2677 = vadd.f32 %v2357, %v2609
      %v2678 = vadd.f32 %v2358, %v2611
      %v2679 = vadd.f32 %v2359, %v2613
      %v2680 = vadd.f32 %v2360, %v2615
      %v2681 = vadd.f32 %v2361, %v2617
      %2682 = vset.pattern.permute.xlu0 2
      %2683 = vperm.xlu0 %2682, %v2138
      %v2684 = vpop.permute.xlu0 %2683
      %2686 = vset.pattern.permute.xlu0 2
      %2687 = vperm.xlu0 %2686, %v2139
      %v2688 = vpop.permute.xlu0 %2687
      %2690 = vset.pattern.permute.xlu0 2
      %2691 = vperm.xlu0 %2690, %v2140
      %v2692 = vpop.permute.xlu0 %2691
      %2694 = vset.pattern.permute.xlu0 2
      %2695 = vperm.xlu0 %2694, %v2141
      %v2696 = vpop.permute.xlu0 %2695
      %2698 = vset.pattern.permute.xlu0 2
      %2699 = vperm.xlu0 %2698, %v2142
      %v2700 = vpop.permute.xlu0 %2699
      %2702 = vset.pattern.permute.xlu0 2
      %2703 = vperm.xlu0 %2702, %v2143
      %v2704 = vpop.permute.xlu0 %2703
      %2706 = vset.pattern.permute.xlu0 2
      %2707 = vperm.xlu0 %2706, %v2144
      %v2708 = vpop.permute.xlu0 %2707
      %2710 = vset.pattern.permute.xlu0 2
      %2711 = vperm.xlu0 %2710, %v2145
      %v2712 = vpop.permute.xlu0 %2711
      %2714 = vset.pattern.permute.xlu0 2
      %2715 = vperm.xlu0 %2714, %v2146
      %v2716 = vpop.permute.xlu0 %2715
      %2718 = vset.pattern.permute.xlu0 2
      %2719 = vperm.xlu0 %2718, %v2147
      %v2720 = vpop.permute.xlu0 %2719
      %2722 = vset.pattern.permute.xlu0 2
      %2723 = vperm.xlu0 %2722, %v2148
      %v2724 = vpop.permute.xlu0 %2723
      %2726 = vset.pattern.permute.xlu0 2
      %2727 = vperm.xlu0 %2726, %v2149
      %v2728 = vpop.permute.xlu0 %2727
      %2730 = vset.pattern.permute.xlu0 2
      %2731 = vperm.xlu0 %2730, %v2150
      %v2732 = vpop.permute.xlu0 %2731
      %2734 = vset.pattern.permute.xlu0 2
      %2735 = vperm.xlu0 %2734, %v2151
      %v2736 = vpop.permute.xlu0 %2735
      %2738 = vset.pattern.permute.xlu0 2
      %2739 = vperm.xlu0 %2738, %v2152
      %v2740 = vpop.permute.xlu0 %2739
      %2742 = vset.pattern.permute.xlu0 2
      %2743 = vperm.xlu0 %2742, %v2153
      %v2744 = vpop.permute.xlu0 %2743
      %2746 = vset.pattern.permute.xlu0 2
      %2747 = vperm.xlu0 %2746, %v2154
      %v2748 = vpop.permute.xlu0 %2747
      %2750 = vset.pattern.permute.xlu0 2
      %2751 = vperm.xlu0 %2750, %v2155
      %v2752 = vpop.permute.xlu0 %2751
      %2754 = vset.pattern.permute.xlu0 2
      %2755 = vperm.xlu0 %2754, %v2156
      %v2756 = vpop.permute.xlu0 %2755
      %2758 = vset.pattern.permute.xlu0 2
      %2759 = vperm.xlu0 %2758, %v2157
      %v2760 = vpop.permute.xlu0 %2759
      %2762 = vset.pattern.permute.xlu0 2
      %2763 = vperm.xlu0 %2762, %v2158
      %v2764 = vpop.permute.xlu0 %2763
      %2766 = vset.pattern.permute.xlu0 2
      %2767 = vperm.xlu0 %2766, %v2159
      %v2768 = vpop.permute.xlu0 %2767
      %2770 = vset.pattern.permute.xlu0 2
      %2771 = vperm.xlu0 %2770, %v2160
      %v2772 = vpop.permute.xlu0 %2771
      %2774 = vset.pattern.permute.xlu0 2
      %2775 = vperm.xlu0 %2774, %v2161
      %v2776 = vpop.permute.xlu0 %2775
      %2778 = vset.pattern.permute.xlu0 2
      %2779 = vperm.xlu0 %2778, %v2162
      %v2780 = vpop.permute.xlu0 %2779
      %2782 = vset.pattern.permute.xlu0 2
      %2783 = vperm.xlu0 %2782, %v2163
      %v2784 = vpop.permute.xlu0 %2783
      %2786 = vset.pattern.permute.xlu0 2
      %2787 = vperm.xlu0 %2786, %v2164
      %v2788 = vpop.permute.xlu0 %2787
      %2790 = vset.pattern.permute.xlu0 2
      %2791 = vperm.xlu0 %2790, %v2165
      %v2792 = vpop.permute.xlu0 %2791
      %2794 = vset.pattern.permute.xlu0 2
      %2795 = vperm.xlu0 %2794, %v2166
      %v2796 = vpop.permute.xlu0 %2795
      %2798 = vset.pattern.permute.xlu0 2
      %2799 = vperm.xlu0 %2798, %v2167
      %v2800 = vpop.permute.xlu0 %2799
      %2802 = vset.pattern.permute.xlu0 2
      %2803 = vperm.xlu0 %2802, %v2168
      %v2804 = vpop.permute.xlu0 %2803
      %2806 = vset.pattern.permute.xlu0 2
      %2807 = vperm.xlu0 %2806, %v2169
      %v2808 = vpop.permute.xlu0 %2807
      %v2810 = vmul.f32 %v2684, %v2059
      %v2811 = vmul.f32 %v2688, %v2061
      %v2812 = vmul.f32 %v2692, %v2064
      %v2813 = vmul.f32 %v2696, %v2066
      %v2814 = vmul.f32 %v2700, %v2069
      %v2815 = vmul.f32 %v2704, %v2071
      %v2816 = vmul.f32 %v2708, %v2074
      %v2817 = vmul.f32 %v2712, %v2076
      %v2818 = vmul.f32 %v2716, %v2079
      %v2819 = vmul.f32 %v2720, %v2081
      %v2820 = vmul.f32 %v2724, %v2084
      %v2821 = vmul.f32 %v2728, %v2086
      %v2822 = vmul.f32 %v2732, %v2089
      %v2823 = vmul.f32 %v2736, %v2091
      %v2824 = vmul.f32 %v2740, %v2094
      %v2825 = vmul.f32 %v2744, %v2096
      %v2826 = vmul.f32 %v2748, %v2099
      %v2827 = vmul.f32 %v2752, %v2101
      %v2828 = vmul.f32 %v2756, %v2104
      %v2829 = vmul.f32 %v2760, %v2106
      %v2830 = vmul.f32 %v2764, %v2109
      %v2831 = vmul.f32 %v2768, %v2111
      %v2832 = vmul.f32 %v2772, %v2114
      %v2833 = vmul.f32 %v2776, %v2116
      %v2834 = vmul.f32 %v2780, %v2119
      %v2835 = vmul.f32 %v2784, %v2121
      %v2836 = vmul.f32 %v2788, %v2124
      %v2837 = vmul.f32 %v2792, %v2126
      %v2838 = vmul.f32 %v2796, %v2129
      %v2839 = vmul.f32 %v2800, %v2131
      %v2840 = vmul.f32 %v2804, %v2134
      %v2841 = vmul.f32 %v2808, %v2136
      %v2842 = vadd.f32 %v2650, %v2810
      %v2843 = vadd.f32 %v2651, %v2811
      %v2844 = vadd.f32 %v2652, %v2812
      %v2845 = vadd.f32 %v2653, %v2813
      %v2846 = vadd.f32 %v2654, %v2814
      %v2847 = vadd.f32 %v2655, %v2815
      %v2848 = vadd.f32 %v2656, %v2816
      %v2849 = vadd.f32 %v2657, %v2817
      %v2850 = vadd.f32 %v2658, %v2818
      %v2851 = vadd.f32 %v2659, %v2819
      %v2852 = vadd.f32 %v2660, %v2820
      %v2853 = vadd.f32 %v2661, %v2821
      %v2854 = vadd.f32 %v2662, %v2822
      %v2855 = vadd.f32 %v2663, %v2823
      %v2856 = vadd.f32 %v2664, %v2824
      %v2857 = vadd.f32 %v2665, %v2825
      %v2858 = vadd.f32 %v2666, %v2826
      %v2859 = vadd.f32 %v2667, %v2827
      %v2860 = vadd.f32 %v2668, %v2828
      %v2861 = vadd.f32 %v2669, %v2829
      %v2862 = vadd.f32 %v2670, %v2830
      %v2863 = vadd.f32 %v2671, %v2831
      %v2864 = vadd.f32 %v2672, %v2832
      %v2865 = vadd.f32 %v2673, %v2833
      %v2866 = vadd.f32 %v2674, %v2834
      %v2867 = vadd.f32 %v2675, %v2835
      %v2868 = vadd.f32 %v2676, %v2836
      %v2869 = vadd.f32 %v2677, %v2837
      %v2870 = vadd.f32 %v2678, %v2838
      %v2871 = vadd.f32 %v2679, %v2839
      %v2872 = vadd.f32 %v2680, %v2840
      %v2873 = vadd.f32 %v2681, %v2841
      %2874 = vset.pattern.permute.xlu0 3
      %2875 = vperm.xlu0 %2874, %v2138
      %v2876 = vpop.permute.xlu0 %2875
      %2878 = vset.pattern.permute.xlu0 3
      %2879 = vperm.xlu0 %2878, %v2139
      %v2880 = vpop.permute.xlu0 %2879
      %2882 = vset.pattern.permute.xlu0 3
      %2883 = vperm.xlu0 %2882, %v2140
      %v2884 = vpop.permute.xlu0 %2883
      %2886 = vset.pattern.permute.xlu0 3
      %2887 = vperm.xlu0 %2886, %v2141
      %v2888 = vpop.permute.xlu0 %2887
      %2890 = vset.pattern.permute.xlu0 3
      %2891 = vperm.xlu0 %2890, %v2142
      %v2892 = vpop.permute.xlu0 %2891
      %2894 = vset.pattern.permute.xlu0 3
      %2895 = vperm.xlu0 %2894, %v2143
      %v2896 = vpop.permute.xlu0 %2895
      %2898 = vset.pattern.permute.xlu0 3
      %2899 = vperm.xlu0 %2898, %v2144
      %v2900 = vpop.permute.xlu0 %2899
      %2902 = vset.pattern.permute.xlu0 3
      %2903 = vperm.xlu0 %2902, %v2145
      %v2904 = vpop.permute.xlu0 %2903
      %2906 = vset.pattern.permute.xlu0 3
      %2907 = vperm.xlu0 %2906, %v2146
      %v2908 = vpop.permute.xlu0 %2907
      %2910 = vset.pattern.permute.xlu0 3
      %2911 = vperm.xlu0 %2910, %v2147
      %v2912 = vpop.permute.xlu0 %2911
      %2914 = vset.pattern.permute.xlu0 3
      %2915 = vperm.xlu0 %2914, %v2148
      %v2916 = vpop.permute.xlu0 %2915
      %2918 = vset.pattern.permute.xlu0 3
      %2919 = vperm.xlu0 %2918, %v2149
      %v2920 = vpop.permute.xlu0 %2919
      %2922 = vset.pattern.permute.xlu0 3
      %2923 = vperm.xlu0 %2922, %v2150
      %v2924 = vpop.permute.xlu0 %2923
      %2926 = vset.pattern.permute.xlu0 3
      %2927 = vperm.xlu0 %2926, %v2151
      %v2928 = vpop.permute.xlu0 %2927
      %2930 = vset.pattern.permute.xlu0 3
      %2931 = vperm.xlu0 %2930, %v2152
      %v2932 = vpop.permute.xlu0 %2931
      %2934 = vset.pattern.permute.xlu0 3
      %2935 = vperm.xlu0 %2934, %v2153
      %v2936 = vpop.permute.xlu0 %2935
      %2938 = vset.pattern.permute.xlu0 3
      %2939 = vperm.xlu0 %2938, %v2154
      %v2940 = vpop.permute.xlu0 %2939
      %2942 = vset.pattern.permute.xlu0 3
      %2943 = vperm.xlu0 %2942, %v2155
      %v2944 = vpop.permute.xlu0 %2943
      %2946 = vset.pattern.permute.xlu0 3
      %2947 = vperm.xlu0 %2946, %v2156
      %v2948 = vpop.permute.xlu0 %2947
      %2950 = vset.pattern.permute.xlu0 3
      %2951 = vperm.xlu0 %2950, %v2157
      %v2952 = vpop.permute.xlu0 %2951
      %2954 = vset.pattern.permute.xlu0 3
      %2955 = vperm.xlu0 %2954, %v2158
      %v2956 = vpop.permute.xlu0 %2955
      %2958 = vset.pattern.permute.xlu0 3
      %2959 = vperm.xlu0 %2958, %v2159
      %v2960 = vpop.permute.xlu0 %2959
      %2962 = vset.pattern.permute.xlu0 3
      %2963 = vperm.xlu0 %2962, %v2160
      %v2964 = vpop.permute.xlu0 %2963
      %2966 = vset.pattern.permute.xlu0 3
      %2967 = vperm.xlu0 %2966, %v2161
      %v2968 = vpop.permute.xlu0 %2967
      %2970 = vset.pattern.permute.xlu0 3
      %2971 = vperm.xlu0 %2970, %v2162
      %v2972 = vpop.permute.xlu0 %2971
      %2974 = vset.pattern.permute.xlu0 3
      %2975 = vperm.xlu0 %2974, %v2163
      %v2976 = vpop.permute.xlu0 %2975
      %2978 = vset.pattern.permute.xlu0 3
      %2979 = vperm.xlu0 %2978, %v2164
      %v2980 = vpop.permute.xlu0 %2979
      %2982 = vset.pattern.permute.xlu0 3
      %2983 = vperm.xlu0 %2982, %v2165
      %v2984 = vpop.permute.xlu0 %2983
      %2986 = vset.pattern.permute.xlu0 3
      %2987 = vperm.xlu0 %2986, %v2166
      %v2988 = vpop.permute.xlu0 %2987
      %2990 = vset.pattern.permute.xlu0 3
      %2991 = vperm.xlu0 %2990, %v2167
      %v2992 = vpop.permute.xlu0 %2991
      %2994 = vset.pattern.permute.xlu0 3
      %2995 = vperm.xlu0 %2994, %v2168
      %v2996 = vpop.permute.xlu0 %2995
      %2998 = vset.pattern.permute.xlu0 3
      %2999 = vperm.xlu0 %2998, %v2169
      %v3000 = vpop.permute.xlu0 %2999
      %v3002 = vmul.f32 %v2876, %v2059
      %v3003 = vmul.f32 %v2880, %v2061
      %v3004 = vmul.f32 %v2884, %v2064
      %v3005 = vmul.f32 %v2888, %v2066
      %v3006 = vmul.f32 %v2892, %v2069
      %v3007 = vmul.f32 %v2896, %v2071
      %v3008 = vmul.f32 %v2900, %v2074
      %v3009 = vmul.f32 %v2904, %v2076
      %v3010 = vmul.f32 %v2908, %v2079
      %v3011 = vmul.f32 %v2912, %v2081
      %v3012 = vmul.f32 %v2916, %v2084
      %v3013 = vmul.f32 %v2920, %v2086
      %v3014 = vmul.f32 %v2924, %v2089
      %v3015 = vmul.f32 %v2928, %v2091
      %v3016 = vmul.f32 %v2932, %v2094
      %v3017 = vmul.f32 %v2936, %v2096
      %v3018 = vmul.f32 %v2940, %v2099
      %v3019 = vmul.f32 %v2944, %v2101
      %v3020 = vmul.f32 %v2948, %v2104
      %v3021 = vmul.f32 %v2952, %v2106
      %v3022 = vmul.f32 %v2956, %v2109
      %v3023 = vmul.f32 %v2960, %v2111
      %v3024 = vmul.f32 %v2964, %v2114
      %v3025 = vmul.f32 %v2968, %v2116
      %v3026 = vmul.f32 %v2972, %v2119
      %v3027 = vmul.f32 %v2976, %v2121
      %v3028 = vmul.f32 %v2980, %v2124
      %v3029 = vmul.f32 %v2984, %v2126
      %v3030 = vmul.f32 %v2988, %v2129
      %v3031 = vmul.f32 %v2992, %v2131
      %v3032 = vmul.f32 %v2996, %v2134
      %v3033 = vmul.f32 %v3000, %v2136
      %3066 = vrot.lane.b32.xlu0 %v3002, 64
      %v3067 = vpop.permute.xlu0 %3066
      %3068 = vrot.lane.b32.xlu0 %v3003, 64
      %v3069 = vpop.permute.xlu0 %3068
      %3070 = vrot.lane.b32.xlu0 %v3004, 64
      %v3071 = vpop.permute.xlu0 %3070
      %3072 = vrot.lane.b32.xlu0 %v3005, 64
      %v3073 = vpop.permute.xlu0 %3072
      %3074 = vrot.lane.b32.xlu0 %v3006, 64
      %v3075 = vpop.permute.xlu0 %3074
      %3076 = vrot.lane.b32.xlu0 %v3007, 64
      %v3077 = vpop.permute.xlu0 %3076
      %3078 = vrot.lane.b32.xlu0 %v3008, 64
      %v3079 = vpop.permute.xlu0 %3078
      %3080 = vrot.lane.b32.xlu0 %v3009, 64
      %v3081 = vpop.permute.xlu0 %3080
      %3082 = vrot.lane.b32.xlu0 %v3010, 64
      %v3083 = vpop.permute.xlu0 %3082
      %3084 = vrot.lane.b32.xlu0 %v3011, 64
      %v3085 = vpop.permute.xlu0 %3084
      %3086 = vrot.lane.b32.xlu0 %v3012, 64
      %v3087 = vpop.permute.xlu0 %3086
      %3088 = vrot.lane.b32.xlu0 %v3013, 64
      %v3089 = vpop.permute.xlu0 %3088
      %3090 = vrot.lane.b32.xlu0 %v3014, 64
      %v3091 = vpop.permute.xlu0 %3090
      %3092 = vrot.lane.b32.xlu0 %v3015, 64
      %v3093 = vpop.permute.xlu0 %3092
      %3094 = vrot.lane.b32.xlu0 %v3016, 64
      %v3095 = vpop.permute.xlu0 %3094
      %3096 = vrot.lane.b32.xlu0 %v3017, 64
      %v3097 = vpop.permute.xlu0 %3096
      %3098 = vrot.lane.b32.xlu0 %v3018, 64
      %v3099 = vpop.permute.xlu0 %3098
      %3100 = vrot.lane.b32.xlu0 %v3019, 64
      %v3101 = vpop.permute.xlu0 %3100
      %3102 = vrot.lane.b32.xlu0 %v3020, 64
      %v3103 = vpop.permute.xlu0 %3102
      %3104 = vrot.lane.b32.xlu0 %v3021, 64
      %v3105 = vpop.permute.xlu0 %3104
      %3106 = vrot.lane.b32.xlu0 %v3022, 64
      %v3107 = vpop.permute.xlu0 %3106
      %3108 = vrot.lane.b32.xlu0 %v3023, 64
      %v3109 = vpop.permute.xlu0 %3108
      %3110 = vrot.lane.b32.xlu0 %v3024, 64
      %v3111 = vpop.permute.xlu0 %3110
      %3112 = vrot.lane.b32.xlu0 %v3025, 64
      %v3113 = vpop.permute.xlu0 %3112
      %3114 = vrot.lane.b32.xlu0 %v3026, 64
      %v3115 = vpop.permute.xlu0 %3114
      %3116 = vrot.lane.b32.xlu0 %v3027, 64
      %v3117 = vpop.permute.xlu0 %3116
      %3118 = vrot.lane.b32.xlu0 %v3028, 64
      %v3119 = vpop.permute.xlu0 %3118
      %3120 = vrot.lane.b32.xlu0 %v3029, 64
      %v3121 = vpop.permute.xlu0 %3120
      %3122 = vrot.lane.b32.xlu0 %v3030, 64
      %v3123 = vpop.permute.xlu0 %3122
      %3124 = vrot.lane.b32.xlu0 %v3031, 64
      %v3125 = vpop.permute.xlu0 %3124
      %3126 = vrot.lane.b32.xlu0 %v3032, 64
      %v3127 = vpop.permute.xlu0 %3126
      %3128 = vrot.lane.b32.xlu0 %v3033, 64
      %v3129 = vpop.permute.xlu0 %3128
      %v3162 = vadd.f32 %v2842, %v3067
      %v3163 = vadd.f32 %v2843, %v3069
      %v3164 = vadd.f32 %v2844, %v3071
      %v3165 = vadd.f32 %v2845, %v3073
      %v3166 = vadd.f32 %v2846, %v3075
      %v3167 = vadd.f32 %v2847, %v3077
      %v3168 = vadd.f32 %v2848, %v3079
      %v3169 = vadd.f32 %v2849, %v3081
      %v3170 = vadd.f32 %v2850, %v3083
      %v3171 = vadd.f32 %v2851, %v3085
      %v3172 = vadd.f32 %v2852, %v3087
      %v3173 = vadd.f32 %v2853, %v3089
      %v3174 = vadd.f32 %v2854, %v3091
      %v3175 = vadd.f32 %v2855, %v3093
      %v3176 = vadd.f32 %v2856, %v3095
      %v3177 = vadd.f32 %v2857, %v3097
      %v3178 = vadd.f32 %v2858, %v3099
      %v3179 = vadd.f32 %v2859, %v3101
      %v3180 = vadd.f32 %v2860, %v3103
      %v3181 = vadd.f32 %v2861, %v3105
      %v3182 = vadd.f32 %v2862, %v3107
      %v3183 = vadd.f32 %v2863, %v3109
      %v3184 = vadd.f32 %v2864, %v3111
      %v3185 = vadd.f32 %v2865, %v3113
      %v3186 = vadd.f32 %v2866, %v3115
      %v3187 = vadd.f32 %v2867, %v3117
      %v3188 = vadd.f32 %v2868, %v3119
      %v3189 = vadd.f32 %v2869, %v3121
      %v3190 = vadd.f32 %v2870, %v3123
      %v3191 = vadd.f32 %v2871, %v3125
      %v3192 = vadd.f32 %v2872, %v3127
      %v3193 = vadd.f32 %v2873, %v3129
      %v3194 = vpack.c.bf16 %v3162, %v3162
      %v3195 = vpack.c.bf16 %v3163, %v3163
      %v3196 = vpack.c.bf16 %v3164, %v3164
      %v3197 = vpack.c.bf16 %v3165, %v3165
      %v3198 = vpack.c.bf16 %v3166, %v3166
      %v3199 = vpack.c.bf16 %v3167, %v3167
      %v3200 = vpack.c.bf16 %v3168, %v3168
      %v3201 = vpack.c.bf16 %v3169, %v3169
      %v3202 = vpack.c.bf16 %v3170, %v3170
      %v3203 = vpack.c.bf16 %v3171, %v3171
      %v3204 = vpack.c.bf16 %v3172, %v3172
      %v3205 = vpack.c.bf16 %v3173, %v3173
      %v3206 = vpack.c.bf16 %v3174, %v3174
      %v3207 = vpack.c.bf16 %v3175, %v3175
      %v3208 = vpack.c.bf16 %v3176, %v3176
      %v3209 = vpack.c.bf16 %v3177, %v3177
      %v3210 = vpack.c.bf16 %v3178, %v3178
      %v3211 = vpack.c.bf16 %v3179, %v3179
      %v3212 = vpack.c.bf16 %v3180, %v3180
      %v3213 = vpack.c.bf16 %v3181, %v3181
      %v3214 = vpack.c.bf16 %v3182, %v3182
      %v3215 = vpack.c.bf16 %v3183, %v3183
      %v3216 = vpack.c.bf16 %v3184, %v3184
      %v3217 = vpack.c.bf16 %v3185, %v3185
      %v3218 = vpack.c.bf16 %v3186, %v3186
      %v3219 = vpack.c.bf16 %v3187, %v3187
      %v3220 = vpack.c.bf16 %v3188, %v3188
      %v3221 = vpack.c.bf16 %v3189, %v3189
      %v3222 = vpack.c.bf16 %v3190, %v3190
      %v3223 = vpack.c.bf16 %v3191, %v3191
      %v3224 = vpack.c.bf16 %v3192, %v3192
      %v3225 = vpack.c.bf16 %v3193, %v3193
      %vm3226 = vcmask 519168
      %3227 = vst.msk [vmem:[%s258] sm:$0xf] %vm3226, %v3194
      %3228 = vst.msk [vmem:[%s258 + $0x4] sm:$0xf] %vm3226, %v3195
      %3229 = vst.msk [vmem:[%s258 + $0x8] sm:$0xf] %vm3226, %v3196
      %3230 = vst.msk [vmem:[%s258 + $0xc] sm:$0xf] %vm3226, %v3197
      %3231 = vst.msk [vmem:[%s258 + $0x10] sm:$0xf] %vm3226, %v3198
      %3232 = vst.msk [vmem:[%s258 + $0x14] sm:$0xf] %vm3226, %v3199
      %3233 = vst.msk [vmem:[%s258 + $0x18] sm:$0xf] %vm3226, %v3200
      %3234 = vst.msk [vmem:[%s258 + $0x1c] sm:$0xf] %vm3226, %v3201
      %3235 = vst.msk [vmem:[%s258 + $0x20] sm:$0xf] %vm3226, %v3202
      %3236 = vst.msk [vmem:[%s258 + $0x24] sm:$0xf] %vm3226, %v3203
      %3237 = vst.msk [vmem:[%s258 + $0x28] sm:$0xf] %vm3226, %v3204
      %3238 = vst.msk [vmem:[%s258 + $0x2c] sm:$0xf] %vm3226, %v3205
      %3239 = vst.msk [vmem:[%s258 + $0x30] sm:$0xf] %vm3226, %v3206
      %3240 = vst.msk [vmem:[%s258 + $0x34] sm:$0xf] %vm3226, %v3207
      %3241 = vst.msk [vmem:[%s258 + $0x38] sm:$0xf] %vm3226, %v3208
      %3242 = vst.msk [vmem:[%s258 + $0x3c] sm:$0xf] %vm3226, %v3209
      %3243 = vst.msk [vmem:[%s258 + $0x40] sm:$0xf] %vm3226, %v3210
      %3244 = vst.msk [vmem:[%s258 + $0x44] sm:$0xf] %vm3226, %v3211
      %3245 = vst.msk [vmem:[%s258 + $0x48] sm:$0xf] %vm3226, %v3212
      %3246 = vst.msk [vmem:[%s258 + $0x4c] sm:$0xf] %vm3226, %v3213
      %3247 = vst.msk [vmem:[%s258 + $0x50] sm:$0xf] %vm3226, %v3214
      %3248 = vst.msk [vmem:[%s258 + $0x54] sm:$0xf] %vm3226, %v3215
      %3249 = vst.msk [vmem:[%s258 + $0x58] sm:$0xf] %vm3226, %v3216
      %3250 = vst.msk [vmem:[%s258 + $0x5c] sm:$0xf] %vm3226, %v3217
      %3251 = vst.msk [vmem:[%s258 + $0x60] sm:$0xf] %vm3226, %v3218
      %3252 = vst.msk [vmem:[%s258 + $0x64] sm:$0xf] %vm3226, %v3219
      %3253 = vst.msk [vmem:[%s258 + $0x68] sm:$0xf] %vm3226, %v3220
      %3254 = vst.msk [vmem:[%s258 + $0x6c] sm:$0xf] %vm3226, %v3221
      %3255 = vst.msk [vmem:[%s258 + $0x70] sm:$0xf] %vm3226, %v3222
      %3256 = vst.msk [vmem:[%s258 + $0x74] sm:$0xf] %vm3226, %v3223
      %3257 = vst.msk [vmem:[%s258 + $0x78] sm:$0xf] %vm3226, %v3224
      %3258 = vst.msk [vmem:[%s258 + $0x7c] sm:$0xf] %vm3226, %v3225
      %v3259 = vsel %vm1199, %v3162, 0.0
      %v3260 = vsel %vm1199, %v3163, 0.0
      %v3261 = vadd.f32 %v3259, %v3260
      %v3262 = vsel %vm1199, %v3164, 0.0
      %v3263 = vadd.f32 %v3261, %v3262
      %v3264 = vsel %vm1199, %v3165, 0.0
      %v3265 = vadd.f32 %v3263, %v3264
      %v3266 = vsel %vm1199, %v3166, 0.0
      %v3267 = vadd.f32 %v3265, %v3266
      %v3268 = vsel %vm1199, %v3167, 0.0
      %v3269 = vadd.f32 %v3267, %v3268
      %v3270 = vsel %vm1199, %v3168, 0.0
      %v3271 = vadd.f32 %v3269, %v3270
      %v3272 = vsel %vm1199, %v3169, 0.0
      %v3273 = vadd.f32 %v3271, %v3272
      %v3274 = vsel %vm1199, %v3170, 0.0
      %v3275 = vadd.f32 %v3273, %v3274
      %v3276 = vsel %vm1199, %v3171, 0.0
      %v3277 = vadd.f32 %v3275, %v3276
      %v3278 = vsel %vm1199, %v3172, 0.0
      %v3279 = vadd.f32 %v3277, %v3278
      %v3280 = vsel %vm1199, %v3173, 0.0
      %v3281 = vadd.f32 %v3279, %v3280
      %v3282 = vsel %vm1199, %v3174, 0.0
      %v3283 = vadd.f32 %v3281, %v3282
      %v3284 = vsel %vm1199, %v3175, 0.0
      %v3285 = vadd.f32 %v3283, %v3284
      %v3286 = vsel %vm1199, %v3176, 0.0
      %v3287 = vadd.f32 %v3285, %v3286
      %v3288 = vsel %vm1199, %v3177, 0.0
      %v3289 = vadd.f32 %v3287, %v3288
      %v3290 = vsel %vm1199, %v3178, 0.0
      %v3291 = vadd.f32 %v3289, %v3290
      %v3292 = vsel %vm1199, %v3179, 0.0
      %v3293 = vadd.f32 %v3291, %v3292
      %v3294 = vsel %vm1199, %v3180, 0.0
      %v3295 = vadd.f32 %v3293, %v3294
      %v3296 = vsel %vm1199, %v3181, 0.0
      %v3297 = vadd.f32 %v3295, %v3296
      %v3298 = vsel %vm1199, %v3182, 0.0
      %v3299 = vadd.f32 %v3297, %v3298
      %v3300 = vsel %vm1199, %v3183, 0.0
      %v3301 = vadd.f32 %v3299, %v3300
      %v3302 = vsel %vm1199, %v3184, 0.0
      %v3303 = vadd.f32 %v3301, %v3302
      %v3304 = vsel %vm1199, %v3185, 0.0
      %v3305 = vadd.f32 %v3303, %v3304
      %v3306 = vsel %vm1199, %v3186, 0.0
      %v3307 = vadd.f32 %v3305, %v3306
      %v3308 = vsel %vm1199, %v3187, 0.0
      %v3309 = vadd.f32 %v3307, %v3308
      %v3310 = vsel %vm1199, %v3188, 0.0
      %v3311 = vadd.f32 %v3309, %v3310
      %v3312 = vsel %vm1199, %v3189, 0.0
      %v3313 = vadd.f32 %v3311, %v3312
      %v3314 = vsel %vm1199, %v3190, 0.0
      %v3315 = vadd.f32 %v3313, %v3314
      %v3316 = vsel %vm1199, %v3191, 0.0
      %v3317 = vadd.f32 %v3315, %v3316
      %v3318 = vsel %vm1199, %v3192, 0.0
      %v3319 = vadd.f32 %v3317, %v3318
      %v3320 = vsel %vm1199, %v3193, 0.0
      %v3321 = vadd.f32 %v3319, %v3320
      %v3322 = vrot.slane %v3321, 4
      %v3323 = vadd.f32 %v3321, %v3322
      %v3324 = vrot.slane %v3323, 2
      %v3325 = vadd.f32 %v3323, %v3324
      %v3326 = vrot.slane %v3325, 1
      %v3327 = vadd.f32 %v3325, %v3326
      %v3328 = vmul.f32 %v3162, %v3162
      %v3329 = vmul.f32 %v3163, %v3163
      %v3330 = vmul.f32 %v3164, %v3164
      %v3331 = vmul.f32 %v3165, %v3165
      %v3332 = vmul.f32 %v3166, %v3166
      %v3333 = vmul.f32 %v3167, %v3167
      %v3334 = vmul.f32 %v3168, %v3168
      %v3335 = vmul.f32 %v3169, %v3169
      %v3336 = vmul.f32 %v3170, %v3170
      %v3337 = vmul.f32 %v3171, %v3171
      %v3338 = vmul.f32 %v3172, %v3172
      %v3339 = vmul.f32 %v3173, %v3173
      %v3340 = vmul.f32 %v3174, %v3174
      %v3341 = vmul.f32 %v3175, %v3175
      %v3342 = vmul.f32 %v3176, %v3176
      %v3343 = vmul.f32 %v3177, %v3177
      %v3344 = vmul.f32 %v3178, %v3178
      %v3345 = vmul.f32 %v3179, %v3179
      %v3346 = vmul.f32 %v3180, %v3180
      %v3347 = vmul.f32 %v3181, %v3181
      %v3348 = vmul.f32 %v3182, %v3182
      %v3349 = vmul.f32 %v3183, %v3183
      %v3350 = vmul.f32 %v3184, %v3184
      %v3351 = vmul.f32 %v3185, %v3185
      %v3352 = vmul.f32 %v3186, %v3186
      %v3353 = vmul.f32 %v3187, %v3187
      %v3354 = vmul.f32 %v3188, %v3188
      %v3355 = vmul.f32 %v3189, %v3189
      %v3356 = vmul.f32 %v3190, %v3190
      %v3357 = vmul.f32 %v3191, %v3191
      %v3358 = vmul.f32 %v3192, %v3192
      %v3359 = vmul.f32 %v3193, %v3193
      %v3360 = vsel %vm1199, %v3328, 0.0
      %v3361 = vsel %vm1199, %v3329, 0.0
      %v3362 = vadd.f32 %v3360, %v3361
      %v3363 = vsel %vm1199, %v3330, 0.0
      %v3364 = vadd.f32 %v3362, %v3363
      %v3365 = vsel %vm1199, %v3331, 0.0
      %v3366 = vadd.f32 %v3364, %v3365
      %v3367 = vsel %vm1199, %v3332, 0.0
      %v3368 = vadd.f32 %v3366, %v3367
      %v3369 = vsel %vm1199, %v3333, 0.0
      %v3370 = vadd.f32 %v3368, %v3369
      %v3371 = vsel %vm1199, %v3334, 0.0
      %v3372 = vadd.f32 %v3370, %v3371
      %v3373 = vsel %vm1199, %v3335, 0.0
      %v3374 = vadd.f32 %v3372, %v3373
      %v3375 = vsel %vm1199, %v3336, 0.0
      %v3376 = vadd.f32 %v3374, %v3375
      %v3377 = vsel %vm1199, %v3337, 0.0
      %v3378 = vadd.f32 %v3376, %v3377
      %v3379 = vsel %vm1199, %v3338, 0.0
      %v3380 = vadd.f32 %v3378, %v3379
      %v3381 = vsel %vm1199, %v3339, 0.0
      %v3382 = vadd.f32 %v3380, %v3381
      %v3383 = vsel %vm1199, %v3340, 0.0
      %v3384 = vadd.f32 %v3382, %v3383
      %v3385 = vsel %vm1199, %v3341, 0.0
      %v3386 = vadd.f32 %v3384, %v3385
      %v3387 = vsel %vm1199, %v3342, 0.0
      %v3388 = vadd.f32 %v3386, %v3387
      %v3389 = vsel %vm1199, %v3343, 0.0
      %v3390 = vadd.f32 %v3388, %v3389
      %v3391 = vsel %vm1199, %v3344, 0.0
      %v3392 = vadd.f32 %v3390, %v3391
      %v3393 = vsel %vm1199, %v3345, 0.0
      %v3394 = vadd.f32 %v3392, %v3393
      %v3395 = vsel %vm1199, %v3346, 0.0
      %v3396 = vadd.f32 %v3394, %v3395
      %v3397 = vsel %vm1199, %v3347, 0.0
      %v3398 = vadd.f32 %v3396, %v3397
      %v3399 = vsel %vm1199, %v3348, 0.0
      %v3400 = vadd.f32 %v3398, %v3399
      %v3401 = vsel %vm1199, %v3349, 0.0
      %v3402 = vadd.f32 %v3400, %v3401
      %v3403 = vsel %vm1199, %v3350, 0.0
      %v3404 = vadd.f32 %v3402, %v3403
      %v3405 = vsel %vm1199, %v3351, 0.0
      %v3406 = vadd.f32 %v3404, %v3405
      %v3407 = vsel %vm1199, %v3352, 0.0
      %v3408 = vadd.f32 %v3406, %v3407
      %v3409 = vsel %vm1199, %v3353, 0.0
      %v3410 = vadd.f32 %v3408, %v3409
      %v3411 = vsel %vm1199, %v3354, 0.0
      %v3412 = vadd.f32 %v3410, %v3411
      %v3413 = vsel %vm1199, %v3355, 0.0
      %v3414 = vadd.f32 %v3412, %v3413
      %v3415 = vsel %vm1199, %v3356, 0.0
      %v3416 = vadd.f32 %v3414, %v3415
      %v3417 = vsel %vm1199, %v3357, 0.0
      %v3418 = vadd.f32 %v3416, %v3417
      %v3419 = vsel %vm1199, %v3358, 0.0
      %v3420 = vadd.f32 %v3418, %v3419
      %v3421 = vsel %vm1199, %v3359, 0.0
      %v3422 = vadd.f32 %v3420, %v3421
      %v3423 = vrot.slane %v3422, 4
      %v3424 = vadd.f32 %v3422, %v3423
      %v3425 = vrot.slane %v3424, 2
      %v3426 = vadd.f32 %v3424, %v3425
      %v3427 = vrot.slane %v3426, 1
      %v3428 = vadd.f32 %v3426, %v3427
      %vm3429 = vcmask 1040384
      %v3430 = vsel %vm3429, %v3327, %v3428
      %vm3431 = vcmask 517120
      %3432 = vst.msk [vmem:[%s263] sm:$0x3] %vm3431, %v3430
      %s3433 = smul.u32 32, %s17
      %p3434 = scmp.lt.s32.totalorder %s3433, 63
      %s3435 = scalar_select %p3434, %s3433, 63
      %s3436 = smul.addr %s3435, 4
      %s3437 = scalar_lea.vmem %s4, %s3436
      %p3438 = scmp.lt.s32.totalorder %s17, 1
      %s3439 = scalar_select %p3438, %s17, 1
      %s3440 = smul.addr %s3439, 2
      %s3441 = scalar_lea.vmem %s5, %s3440
      // Predicated region
      $region37: #{cnn_forward.11} parent=35 // pred_check
        %p3442 = pneg %p129
      $region38: #{cnn_forward.11} parent=35 // pred_check_branch
        %3444 = sbr.rel (%p3442) target = $region40
      $region39: #{cnn_forward.11} parent=35 // pred_region
        %s3445 = smul.u32 32, %s17
      $region40: #{cnn_forward.11} parent=35 // pred_fallthru
        _
      // Predicated region
      $region41: #{cnn_forward.11} parent=35 // pred_check
        %p3446 = pneg %p155
      $region42: #{cnn_forward.11} parent=35 // pred_check_branch
        %3448 = sbr.rel (%p3446) target = $region44
      $region43: #{cnn_forward.11} parent=35 // pred_region
        _
      $region44: #{cnn_forward.11} parent=35 // pred_fallthru
        _
    $region36: #{cnn_forward.11} parent=5 // pred_fallthru
      _
    %p3449 = scmp.le.s32.totalorder 2, %s12
    // Predicated region
    $region45: #{cnn_forward.11} parent=5 // pred_check
      %p3450 = pneg %p3449
    $region46: #{cnn_forward.11} parent=5 // pred_check_branch
      %3452 = sbr.rel (%p3450) target = $region48
    $region47: #{cnn_forward.11} parent=5 // pred_region
      %s3453 = ssub.s32 %s12, 2
      // Predicated region
      $region49: #{cnn_forward.11} parent=47 // pred_check
        %p3454 = pneg %p135
      $region50: #{cnn_forward.11} parent=47 // pred_check_branch
        %3456 = sbr.rel (%p3454) target = $region52
      $region51: #{cnn_forward.11} parent=47 // pred_region
        %s3457 = smul.u32 32, %s18
        %p3458 = scmp.lt.s32.totalorder %s3457, 63
        %s3459 = scalar_select %p3458, %s3457, 63
        %s3460 = smul.addr %s3459, 4
        %s3461 = scalar_lea.vmem %s4, %s3460
      $region52: #{cnn_forward.11} parent=47 // pred_fallthru
        _
      // Predicated region
      $region53: #{cnn_forward.11} parent=47 // pred_check
        %p3462 = pneg %p161
      $region54: #{cnn_forward.11} parent=47 // pred_check_branch
        %3464 = sbr.rel (%p3462) target = $region56
      $region55: #{cnn_forward.11} parent=47 // pred_region
        %p3465 = scmp.lt.s32.totalorder %s18, 1
        %s3466 = scalar_select %p3465, %s18, 1
        %s3467 = smul.addr %s3466, 2
        %s3468 = scalar_lea.vmem %s5, %s3467
      $region56: #{cnn_forward.11} parent=47 // pred_fallthru
        _
    $region48: #{cnn_forward.11} parent=5 // pred_fallthru
      _
  $region6: #{cnn_forward.11} parent=0 // loop_footer
    %s16 = sadd.s32 1, %s12
  $region7: #{cnn_forward.11} parent=0 // loop_footer_branch
    %11 = sbr.rel target = $region3
  $region8: #{cnn_forward.11} parent=0 // loop_exit
    _

// kernel: cnn_forward.15
$region0: #{cnn_forward.15}
  #allocation0 [shape = 'u32[]', space=smem, size = 0x4, offset = 0x4, fixed_abs, tag = 'smem constant byte address 0x4 - core index']
  #allocation1 [shape = 'u32[72,128]{1,0:T(1,128)}', space=vmem, size = 0x9000, scoped, tag = 'internal scratch']
  %s0 = inlined_call_operand.vmem [shape: bf16[16,512], index: 0, kind: input, shape index: {}]
  %s1 = inlined_call_operand.vmem [shape: f32[2,2,64], index: 1, kind: input, shape index: {}]
  %s2 = inlined_call_operand.vmem [shape: f32[1,64], index: 2, kind: input, shape index: {}]
  %s3 = inlined_call_operand.vmem [shape: f32[1,64], index: 3, kind: input, shape index: {}]
  %s4 = inlined_call_operand.vmem [shape: f32[16,128], index: 4, kind: output, shape index: {}]
  %s5 = sld [smem:[#allocation0]]
  $region26: #{cnn_forward.15} parent=0
    _
  %s7 = ssub.s32 1, %s5
  %s8 = scalar_select 0, %s7, %s5
  // Predicated region
  $region2: #{cnn_forward.15} parent=0 // pred_check
    _
  $region3: #{cnn_forward.15} parent=0 // pred_check_branch
    %10 = sbr.rel (0) target = $region5
  $region4: #{cnn_forward.15} parent=0 // pred_region
    _
  $region5: #{cnn_forward.15} parent=0 // pred_fallthru
    _
  // Predicated region
  $region6: #{cnn_forward.15} parent=0 // pred_check
    _
  $region7: #{cnn_forward.15} parent=0 // pred_check_branch
    %12 = sbr.rel (0) target = $region9
  $region8: #{cnn_forward.15} parent=0 // pred_region
    _
  $region9: #{cnn_forward.15} parent=0 // pred_fallthru
    _
  // Predicated region
  $region10: #{cnn_forward.15} parent=0 // pred_check
    _
  $region11: #{cnn_forward.15} parent=0 // pred_check_branch
    %14 = sbr.rel (0) target = $region13
  $region12: #{cnn_forward.15} parent=0 // pred_region
    _
  $region13: #{cnn_forward.15} parent=0 // pred_fallthru
    _
  // Predicated region
  $region14: #{cnn_forward.15} parent=0 // pred_check
    _
  $region15: #{cnn_forward.15} parent=0 // pred_check_branch
    %16 = sbr.rel (0) target = $region17
  $region16: #{cnn_forward.15} parent=0 // pred_region
    _
  $region17: #{cnn_forward.15} parent=0 // pred_fallthru
    _
  %v17 = vld [vmem:[%s1] sm:$0x3]
  %v18 = vld [vmem:[%s1 + $0x2] sm:$0x3]
  %vm19 = vcmask 517120
  %v20 = vsel %vm19, %v17, 0.0
  %v21 = vsel %vm19, %v18, 0.0
  %v22 = vadd.f32 %v20, %v21
  %v23 = vmul.f32 %v22, 0.0078125
  %v24 = vmul.f32 %v23, %v23
  %v26 = vrot.slane %v24, 7
  %v28 = vsub.f32 %v23, %v26
  %v29 = vmax.f32 %v28, 0.0
  %v30 = vld [vmem:[%s2] sm:$0x1]
  %v31 = vadd.f32 %v29, 0.001
  %v32 = vrsqrt.pop %v31
  %v33 = vmul.f32 %v32, %v31
  %v34 = vmul.f32 %v33, %v32
  %v35 = vmul.f32 0.5, %v34
  %v36 = vsub.f32 1.5, %v35
  %v37 = vmul.f32 %v32, %v36
  %vm38 = vweird.f32 %v31
  %vm39 = vweird.f32 %v32
  %vm40 = vmor %vm38, %vm39
  %v41 = vsel %vm40, %v32, %v37
  %43 = vst [vmem:[#allocation1] sm:$0xff] %v41
  %s44 = scalar_lea.vmem [#allocation1], 1
  %v45 = vld [vmem:[%s44] ss:$9 sm:$0xff]
  %v47 = vmul.f32 %v30, %v45
  %v48 = vld [vmem:[%s3] sm:$0x1]
  %v49 = vmul.f32 %v23, %v47
  %v50 = vsub.f32 %v48, %v49
  %v51 = vld [vmem:[%s0] sm:$0xff]
  %v52 = vld [vmem:[%s0 + $0x8] sm:$0xff]
  %v53 = vld [vmem:[%s0 + $0x10] sm:$0xff]
  %v54 = vld [vmem:[%s0 + $0x18] sm:$0xff]
  %v55 = vunpack.c.l.bf16 %v51
  %v56 = vunpack.c.h.bf16 %v51
  %v57 = vunpack.c.l.bf16 %v52
  %v58 = vunpack.c.h.bf16 %v52
  %v59 = vunpack.c.l.bf16 %v53
  %v60 = vunpack.c.h.bf16 %v53
  %v61 = vunpack.c.l.bf16 %v54
  %v62 = vunpack.c.h.bf16 %v54
  %v64 = vperm.slane %v47, 0
  %v66 = vmul.f32 %v55, %v64
  %v67 = vmul.f32 %v59, %v64
  %v69 = vperm.slane %v50, 0
  %v71 = vadd.f32 %v66, %v69
  %v72 = vadd.f32 %v67, %v69
  %v73 = vmax.f32 %v71, 0.0
  %v74 = vmax.f32 %v72, 0.0
  %75 = vrot.lane.b32.xlu0 %v64, 64
  %v76 = vpop.permute.xlu0 %75
  %v78 = vmul.f32 %v55, %v76
  %v79 = vmul.f32 %v59, %v76
  %80 = vrot.lane.b32.xlu0 %v69, 64
  %v81 = vpop.permute.xlu0 %80
  %v83 = vadd.f32 %v78, %v81
  %v84 = vadd.f32 %v79, %v81
  %v85 = vmax.f32 %v83, 0.0
  %v86 = vmax.f32 %v84, 0.0
  %89 = vrot.lane.b32.xlu0 %v85, 64
  %v90 = vpop.permute.xlu0 %89
  %91 = vrot.lane.b32.xlu0 %v86, 64
  %v92 = vpop.permute.xlu0 %91
  %v95 = vadd.f32 %v73, %v90
  %v96 = vadd.f32 %v74, %v92
  %v97 = vmul.f32 %v56, %v64
  %v98 = vmul.f32 %v60, %v64
  %v99 = vadd.f32 %v97, %v69
  %v100 = vadd.f32 %v98, %v69
  %v101 = vmax.f32 %v99, 0.0
  %v102 = vmax.f32 %v100, 0.0
  %v103 = vadd.f32 %v95, %v101
  %v104 = vadd.f32 %v96, %v102
  %v105 = vmul.f32 %v56, %v76
  %v106 = vmul.f32 %v60, %v76
  %v107 = vadd.f32 %v105, %v81
  %v108 = vadd.f32 %v106, %v81
  %v109 = vmax.f32 %v107, 0.0
  %v110 = vmax.f32 %v108, 0.0
  %113 = vrot.lane.b32.xlu0 %v109, 64
  %v114 = vpop.permute.xlu0 %113
  %115 = vrot.lane.b32.xlu0 %v110, 64
  %v116 = vpop.permute.xlu0 %115
  %v119 = vadd.f32 %v103, %v114
  %v120 = vadd.f32 %v104, %v116
  %v121 = vmul.f32 %v119, 0.25
  %v122 = vmul.f32 %v120, 0.25
  %v123 = vmul.f32 %v57, %v64
  %v124 = vmul.f32 %v61, %v64
  %v125 = vadd.f32 %v123, %v69
  %v126 = vadd.f32 %v124, %v69
  %v127 = vmax.f32 %v125, 0.0
  %v128 = vmax.f32 %v126, 0.0
  %v129 = vmul.f32 %v57, %v76
  %v130 = vmul.f32 %v61, %v76
  %v131 = vadd.f32 %v129, %v81
  %v132 = vadd.f32 %v130, %v81
  %v133 = vmax.f32 %v131, 0.0
  %v134 = vmax.f32 %v132, 0.0
  %137 = vrot.lane.b32.xlu0 %v133, 64
  %v138 = vpop.permute.xlu0 %137
  %139 = vrot.lane.b32.xlu0 %v134, 64
  %v140 = vpop.permute.xlu0 %139
  %v143 = vadd.f32 %v127, %v138
  %v144 = vadd.f32 %v128, %v140
  %v145 = vmul.f32 %v58, %v64
  %v146 = vmul.f32 %v62, %v64
  %v147 = vadd.f32 %v145, %v69
  %v148 = vadd.f32 %v146, %v69
  %v149 = vmax.f32 %v147, 0.0
  %v150 = vmax.f32 %v148, 0.0
  %v151 = vadd.f32 %v143, %v149
  %v152 = vadd.f32 %v144, %v150
  %v153 = vmul.f32 %v58, %v76
  %v154 = vmul.f32 %v62, %v76
  %v155 = vadd.f32 %v153, %v81
  %v156 = vadd.f32 %v154, %v81
  %v157 = vmax.f32 %v155, 0.0
  %v158 = vmax.f32 %v156, 0.0
  %161 = vrot.lane.b32.xlu0 %v157, 64
  %v162 = vpop.permute.xlu0 %161
  %163 = vrot.lane.b32.xlu0 %v158, 64
  %v164 = vpop.permute.xlu0 %163
  %v167 = vadd.f32 %v151, %v162
  %v168 = vadd.f32 %v152, %v164
  %v169 = vmul.f32 %v167, 0.25
  %v170 = vmul.f32 %v168, 0.25
  %173 = vrot.lane.b32.xlu0 %v169, 64
  %v174 = vpop.permute.xlu0 %173
  %175 = vrot.lane.b32.xlu0 %v170, 64
  %v176 = vpop.permute.xlu0 %175
  %vm179 = vcmask 523264
  %v180 = vsel %vm179, %v121, %v174
  %v181 = vsel %vm179, %v122, %v176
  %182 = vst [vmem:[%s4] sm:$0xff] %v180
  %183 = vst [vmem:[%s4 + $0x8] sm:$0xff] %v181
  // Predicated region
  $region18: #{cnn_forward.15} parent=0 // pred_check
    _
  $region19: #{cnn_forward.15} parent=0 // pred_check_branch
    %185 = sbr.rel (0) target = $region21
  $region20: #{cnn_forward.15} parent=0 // pred_region
    _
  $region21: #{cnn_forward.15} parent=0 // pred_fallthru
    _
  // Predicated region
  $region22: #{cnn_forward.15} parent=0 // pred_check
    _
  $region23: #{cnn_forward.15} parent=0 // pred_check_branch
    %187 = sbr.rel (0) target = $region25
  $region24: #{cnn_forward.15} parent=0 // pred_region
    _
  $region25: #{cnn_forward.15} parent=0 // pred_fallthru
    _

// kernel: cnn_forward.13
$region0: #{cnn_forward.13}
  #allocation0 [shape = 'u32[]', space=smem, size = 0x4, offset = 0x4, fixed_abs, tag = 'smem constant byte address 0x4 - core index']
  #allocation1 [shape = 'u32[72,128]{1,0:T(1,128)}', space=vmem, size = 0x9000, scoped, tag = 'internal scratch']
  %s0 = inlined_call_operand.vmem [shape: bf16[32,256], index: 0, kind: input, shape index: {}]
  %s1 = inlined_call_operand.vmem [shape: f32[32,2], index: 1, kind: input, shape index: {}]
  %s2 = inlined_call_operand.vmem [shape: f32[192,16], index: 2, kind: input, shape index: {}]
  %s3 = inlined_call_operand.vmem [shape: f32[1,16], index: 3, kind: input, shape index: {}]
  %s4 = inlined_call_operand.vmem [shape: f32[1,16], index: 4, kind: input, shape index: {}]
  %s5 = inlined_call_operand.vmem [shape: f32[16,4], index: 5, kind: input, shape index: {}]
  %s6 = inlined_call_operand.vmem [shape: f32[1,4], index: 6, kind: input, shape index: {}]
  %s7 = inlined_call_operand.vmem [shape: f32[32,4], index: 7, kind: output, shape index: {}]
  %s8 = sld [smem:[#allocation0]]
  $region38: #{cnn_forward.13} parent=0
    _
  %s10 = ssub.s32 1, %s8
  %s11 = scalar_select 0, %s10, %s8
  // Predicated region
  $region2: #{cnn_forward.13} parent=0 // pred_check
    _
  $region3: #{cnn_forward.13} parent=0 // pred_check_branch
    %13 = sbr.rel (0) target = $region5
  $region4: #{cnn_forward.13} parent=0 // pred_region
    _
  $region5: #{cnn_forward.13} parent=0 // pred_fallthru
    _
  // Predicated region
  $region6: #{cnn_forward.13} parent=0 // pred_check
    _
  $region7: #{cnn_forward.13} parent=0 // pred_check_branch
    %15 = sbr.rel (0) target = $region9
  $region8: #{cnn_forward.13} parent=0 // pred_region
    _
  $region9: #{cnn_forward.13} parent=0 // pred_fallthru
    _
  // Predicated region
  $region10: #{cnn_forward.13} parent=0 // pred_check
    _
  $region11: #{cnn_forward.13} parent=0 // pred_check_branch
    %17 = sbr.rel (0) target = $region13
  $region12: #{cnn_forward.13} parent=0 // pred_region
    _
  $region13: #{cnn_forward.13} parent=0 // pred_fallthru
    _
  // Predicated region
  $region14: #{cnn_forward.13} parent=0 // pred_check
    _
  $region15: #{cnn_forward.13} parent=0 // pred_check_branch
    %19 = sbr.rel (0) target = $region17
  $region16: #{cnn_forward.13} parent=0 // pred_region
    _
  $region17: #{cnn_forward.13} parent=0 // pred_fallthru
    _
  // Predicated region
  $region18: #{cnn_forward.13} parent=0 // pred_check
    _
  $region19: #{cnn_forward.13} parent=0 // pred_check_branch
    %21 = sbr.rel (0) target = $region21
  $region20: #{cnn_forward.13} parent=0 // pred_region
    _
  $region21: #{cnn_forward.13} parent=0 // pred_fallthru
    _
  // Predicated region
  $region22: #{cnn_forward.13} parent=0 // pred_check
    _
  $region23: #{cnn_forward.13} parent=0 // pred_check_branch
    %23 = sbr.rel (0) target = $region25
  $region24: #{cnn_forward.13} parent=0 // pred_region
    _
  $region25: #{cnn_forward.13} parent=0 // pred_fallthru
    _
  // Predicated region
  $region26: #{cnn_forward.13} parent=0 // pred_check
    _
  $region27: #{cnn_forward.13} parent=0 // pred_check_branch
    %25 = sbr.rel (0) target = $region29
  $region28: #{cnn_forward.13} parent=0 // pred_region
    _
  $region29: #{cnn_forward.13} parent=0 // pred_fallthru
    _
  %v26 = vld [vmem:[%s0] sm:$0xff]
  %v27 = vld [vmem:[%s0 + $0x8] sm:$0xff]
  %v28 = vld [vmem:[%s0 + $0x10] sm:$0xff]
  %v29 = vld [vmem:[%s0 + $0x18] sm:$0xff]
  %v30 = vunpack.c.l.bf16 %v26
  %v31 = vunpack.c.h.bf16 %v26
  %v32 = vunpack.c.l.bf16 %v27
  %v33 = vunpack.c.h.bf16 %v27
  %v34 = vunpack.c.l.bf16 %v28
  %v35 = vunpack.c.h.bf16 %v28
  %v36 = vunpack.c.l.bf16 %v29
  %v37 = vunpack.c.h.bf16 %v29
  %42 = vrot.lane.b32.xlu0 %v30, 64
  %v43 = vpop.permute.xlu0 %42
  %44 = vrot.lane.b32.xlu0 %v32, 64
  %v45 = vpop.permute.xlu0 %44
  %46 = vrot.lane.b32.xlu0 %v34, 64
  %v47 = vpop.permute.xlu0 %46
  %48 = vrot.lane.b32.xlu0 %v36, 64
  %v49 = vpop.permute.xlu0 %48
  %v54 = vadd.f32 %v30, %v43
  %v55 = vadd.f32 %v32, %v45
  %v56 = vadd.f32 %v34, %v47
  %v57 = vadd.f32 %v36, %v49
  %v58 = vadd.f32 %v54, %v31
  %v59 = vadd.f32 %v55, %v33
  %v60 = vadd.f32 %v56, %v35
  %v61 = vadd.f32 %v57, %v37
  %66 = vrot.lane.b32.xlu0 %v31, 64
  %v67 = vpop.permute.xlu0 %66
  %68 = vrot.lane.b32.xlu0 %v33, 64
  %v69 = vpop.permute.xlu0 %68
  %70 = vrot.lane.b32.xlu0 %v35, 64
  %v71 = vpop.permute.xlu0 %70
  %72 = vrot.lane.b32.xlu0 %v37, 64
  %v73 = vpop.permute.xlu0 %72
  %v78 = vadd.f32 %v58, %v67
  %v79 = vadd.f32 %v59, %v69
  %v80 = vadd.f32 %v60, %v71
  %v81 = vadd.f32 %v61, %v73
  %v82 = vmul.f32 %v78, 0.25
  %v83 = vmul.f32 %v79, 0.25
  %v84 = vmul.f32 %v80, 0.25
  %v85 = vmul.f32 %v81, 0.25
  %v86 = vld [vmem:[%s1] sm:$0xff]
  %v87 = vld [vmem:[%s1 + $0x8] sm:$0xff]
  %v88 = vld [vmem:[%s1 + $0x10] sm:$0xff]
  %v89 = vld [vmem:[%s1 + $0x18] sm:$0xff]
  %v90 = vrot.slane %v82, 7
  %v91 = vrot.slane %v83, 7
  %v92 = vrot.slane %v84, 7
  %v93 = vrot.slane %v85, 7
  %v94 = vlaneseq
  %v95 = vshrl.u32 %v94, 7
  %vm96 = vcmp.lt.s32.totalorder %v95, 1
  %v97 = vsel %vm96, %v92, %v93
  %v98 = vsel %vm96, %v91, %v92
  %v99 = vsel %vm96, %v90, %v91
  %v100 = vsel %vm96, %v93, %v90
  %102 = vset.pattern.permute.xlu0 0
  %103 = vperm.xlu0 %102, %v86
  %v104 = vpop.permute.xlu0 %103
  %107 = vset.pattern.permute.xlu0 0
  %108 = vperm.xlu0 %107, %v87
  %v109 = vpop.permute.xlu0 %108
  %112 = vset.pattern.permute.xlu0 0
  %113 = vperm.xlu0 %112, %v88
  %v114 = vpop.permute.xlu0 %113
  %117 = vset.pattern.permute.xlu0 0
  %118 = vperm.xlu0 %117, %v89
  %v119 = vpop.permute.xlu0 %118
  %v121 = vmul.f32 %v100, %v104
  %v122 = vmul.f32 %v99, %v109
  %v123 = vmul.f32 %v98, %v114
  %v124 = vmul.f32 %v97, %v119
  %v125 = vrot.slane %v82, 1
  %v126 = vrot.slane %v83, 1
  %v127 = vrot.slane %v84, 1
  %v128 = vrot.slane %v85, 1
  %vm129 = vcmp.lt.s32.totalorder %v95, 7
  %v130 = vsel %vm129, %v127, %v128
  %v131 = vsel %vm129, %v126, %v127
  %v132 = vsel %vm129, %v125, %v126
  %v133 = vsel %vm129, %v128, %v125
  %134 = vset.pattern.permute.xlu0 1
  %135 = vperm.xlu0 %134, %v86
  %v136 = vpop.permute.xlu0 %135
  %138 = vset.pattern.permute.xlu0 1
  %139 = vperm.xlu0 %138, %v87
  %v140 = vpop.permute.xlu0 %139
  %142 = vset.pattern.permute.xlu0 1
  %143 = vperm.xlu0 %142, %v88
  %v144 = vpop.permute.xlu0 %143
  %146 = vset.pattern.permute.xlu0 1
  %147 = vperm.xlu0 %146, %v89
  %v148 = vpop.permute.xlu0 %147
  %v150 = vmul.f32 %v132, %v136
  %v151 = vmul.f32 %v131, %v140
  %v152 = vmul.f32 %v130, %v144
  %v153 = vmul.f32 %v133, %v148
  %v154 = vld [vmem:[%s2] sm:$0xff]
  %v155 = vld [vmem:[%s2 + $0x8] sm:$0xff]
  %v156 = vld [vmem:[%s2 + $0x10] sm:$0xff]
  %v157 = vld [vmem:[%s2 + $0x18] sm:$0xff]
  %v158 = vld [vmem:[%s2 + $0x20] sm:$0xff]
  %v159 = vld [vmem:[%s2 + $0x28] sm:$0xff]
  %v160 = vld [vmem:[%s2 + $0x30] sm:$0xff]
  %v161 = vld [vmem:[%s2 + $0x38] sm:$0xff]
  %v162 = vld [vmem:[%s2 + $0x40] sm:$0xff]
  %v163 = vld [vmem:[%s2 + $0x48] sm:$0xff]
  %v164 = vld [vmem:[%s2 + $0x50] sm:$0xff]
  %v165 = vld [vmem:[%s2 + $0x58] sm:$0xff]
  %v166 = vld [vmem:[%s2 + $0x60] sm:$0xff]
  %v167 = vld [vmem:[%s2 + $0x68] sm:$0xff]
  %v168 = vld [vmem:[%s2 + $0x70] sm:$0xff]
  %v169 = vld [vmem:[%s2 + $0x78] sm:$0xff]
  %v170 = vld [vmem:[%s2 + $0x80] sm:$0xff]
  %v171 = vld [vmem:[%s2 + $0x88] sm:$0xff]
  %v172 = vld [vmem:[%s2 + $0x90] sm:$0xff]
  %v173 = vld [vmem:[%s2 + $0x98] sm:$0xff]
  %v174 = vld [vmem:[%s2 + $0xa0] sm:$0xff]
  %v175 = vld [vmem:[%s2 + $0xa8] sm:$0xff]
  %v176 = vld [vmem:[%s2 + $0xb0] sm:$0xff]
  %v177 = vld [vmem:[%s2 + $0xb8] sm:$0xff]
  %vm178 = vcmask 523264
  %v180 = vsel %vm178, %v82, 0
  %v183 = vsel %vm178, %v83, 0
  %v186 = vsel %vm178, %v84, 0
  %v189 = vsel %vm178, %v85, 0
  %191 = vmatpush.msra.mxu0 0.0
  %192 = vmatpush.msra.mxu0 0.0
  %193 = vmatpush.msra.mxu0 0.0
  %194 = vmatpush.msra.mxu0 0.0
  %195 = vmatpush.msra.mxu0 0.0
  %196 = vmatpush.msra.mxu0 0.0
  %197 = vmatpush.msra.mxu0 0.0
  %198 = vmatpush.msra.mxu0 0.0
  %199 = vmatpush.msra.mxu0 %v169
  %200 = vmatpush.msra.mxu0 %v168
  %201 = vmatpush.msra.mxu0 %v167
  %202 = vmatpush.msra.mxu0 %v166
  %203 = vmatpush.msra.mxu0 %v165
  %204 = vmatpush.msra.mxu0 %v164
  %205 = vmatpush.msra.mxu0 %v163
  %206 = vmatpush.msra.mxu0 %v162
  %207 = vmatmul.f32.gmra.mxu0 %v180
  %v208 = vpop.f32.mrf.mxu0
  %v209 = vadd.f32 0.0, %v208
  %210 = vmatmul.f32.gmra.mxu0 %v183
  %v211 = vpop.f32.mrf.mxu0
  %v212 = vadd.f32 0.0, %v211
  %213 = vmatmul.f32.gmra.mxu0 %v186
  %v214 = vpop.f32.mrf.mxu0
  %v215 = vadd.f32 0.0, %v214
  %216 = vmatmul.f32.gmra.mxu0 %v189
  %v217 = vpop.f32.mrf.mxu0
  %v218 = vadd.f32 0.0, %v217
  %219 = vdwg.mxu0
  %v221 = vsel %vm178, %v121, 0
  %v224 = vsel %vm178, %v122, 0
  %v227 = vsel %vm178, %v123, 0
  %v230 = vsel %vm178, %v124, 0
  %232 = vmatpush.msra.mxu0 0.0
  %233 = vmatpush.msra.mxu0 0.0
  %234 = vmatpush.msra.mxu0 0.0
  %235 = vmatpush.msra.mxu0 0.0
  %236 = vmatpush.msra.mxu0 0.0
  %237 = vmatpush.msra.mxu0 0.0
  %238 = vmatpush.msra.mxu0 0.0
  %239 = vmatpush.msra.mxu0 0.0
  %240 = vmatpush.msra.mxu0 %v161
  %241 = vmatpush.msra.mxu0 %v160
  %242 = vmatpush.msra.mxu0 %v159
  %243 = vmatpush.msra.mxu0 %v158
  %244 = vmatpush.msra.mxu0 %v157
  %245 = vmatpush.msra.mxu0 %v156
  %246 = vmatpush.msra.mxu0 %v155
  %247 = vmatpush.msra.mxu0 %v154
  %248 = vmatmul.f32.gmra.mxu0 %v221
  %v249 = vpop.f32.mrf.mxu0
  %v250 = vadd.f32 %v209, %v249
  %251 = vmatmul.f32.gmra.mxu0 %v224
  %v252 = vpop.f32.mrf.mxu0
  %v253 = vadd.f32 %v212, %v252
  %254 = vmatmul.f32.gmra.mxu0 %v227
  %v255 = vpop.f32.mrf.mxu0
  %v256 = vadd.f32 %v215, %v255
  %257 = vmatmul.f32.gmra.mxu0 %v230
  %v258 = vpop.f32.mrf.mxu0
  %v259 = vadd.f32 %v218, %v258
  %260 = vdwg.mxu0
  %v262 = vsel %vm178, %v150, 0
  %v265 = vsel %vm178, %v151, 0
  %v268 = vsel %vm178, %v152, 0
  %v271 = vsel %vm178, %v153, 0
  %273 = vmatpush.msra.mxu0 0.0
  %274 = vmatpush.msra.mxu0 0.0
  %275 = vmatpush.msra.mxu0 0.0
  %276 = vmatpush.msra.mxu0 0.0
  %277 = vmatpush.msra.mxu0 0.0
  %278 = vmatpush.msra.mxu0 0.0
  %279 = vmatpush.msra.mxu0 0.0
  %280 = vmatpush.msra.mxu0 0.0
  %281 = vmatpush.msra.mxu0 %v177
  %282 = vmatpush.msra.mxu0 %v176
  %283 = vmatpush.msra.mxu0 %v175
  %284 = vmatpush.msra.mxu0 %v174
  %285 = vmatpush.msra.mxu0 %v173
  %286 = vmatpush.msra.mxu0 %v172
  %287 = vmatpush.msra.mxu0 %v171
  %288 = vmatpush.msra.mxu0 %v170
  %289 = vmatmul.f32.gmra.mxu0 %v262
  %v290 = vpop.f32.mrf.mxu0
  %v291 = vadd.f32 0.0, %v290
  %292 = vmatmul.f32.gmra.mxu0 %v265
  %v293 = vpop.f32.mrf.mxu0
  %v294 = vadd.f32 0.0, %v293
  %295 = vmatmul.f32.gmra.mxu0 %v268
  %v296 = vpop.f32.mrf.mxu0
  %v297 = vadd.f32 0.0, %v296
  %298 = vmatmul.f32.gmra.mxu0 %v271
  %v299 = vpop.f32.mrf.mxu0
  %v300 = vadd.f32 0.0, %v299
  %301 = vdwg.mxu0
  %v302 = vadd.f32 %v250, %v291
  %v303 = vadd.f32 %v253, %v294
  %v304 = vadd.f32 %v256, %v297
  %v305 = vadd.f32 %v259, %v300
  %vm306 = vcmask 130048
  %v307 = vsel %vm306, %v302, 0.0
  %v308 = vsel %vm306, %v303, 0.0
  %v309 = vadd.f32 %v307, %v308
  %v310 = vsel %vm306, %v304, 0.0
  %v311 = vadd.f32 %v309, %v310
  %v312 = vsel %vm306, %v305, 0.0
  %v313 = vadd.f32 %v311, %v312
  %v314 = vrot.slane %v313, 4
  %v315 = vadd.f32 %v313, %v314
  %v316 = vrot.slane %v315, 2
  %v317 = vadd.f32 %v315, %v316
  %v318 = vrot.slane %v317, 1
  %v319 = vadd.f32 %v317, %v318
  %v320 = vmul.f32 %v319, 0.03125
  %v321 = vmul.f32 %v302, %v302
  %v322 = vmul.f32 %v303, %v303
  %v323 = vmul.f32 %v304, %v304
  %v324 = vmul.f32 %v305, %v305
  %v325 = vsel %vm306, %v321, 0.0
  %v326 = vsel %vm306, %v322, 0.0
  %v327 = vadd.f32 %v325, %v326
  %v328 = vsel %vm306, %v323, 0.0
  %v329 = vadd.f32 %v327, %v328
  %v330 = vsel %vm306, %v324, 0.0
  %v331 = vadd.f32 %v329, %v330
  %v332 = vrot.slane %v331, 4
  %v333 = vadd.f32 %v331, %v332
  %v334 = vrot.slane %v333, 2
  %v335 = vadd.f32 %v333, %v334
  %v336 = vrot.slane %v335, 1
  %v337 = vadd.f32 %v335, %v336
  %v338 = vmul.f32 %v337, 0.03125
  %v339 = vmul.f32 %v320, %v320
  %v340 = vsub.f32 %v338, %v339
  %v341 = vmax.f32 %v340, 0.0
  %v342 = vsub.f32 %v302, %v320
  %v343 = vsub.f32 %v303, %v320
  %v344 = vsub.f32 %v304, %v320
  %v345 = vsub.f32 %v305, %v320
  %v346 = vadd.f32 %v341, 1e-05
  %v347 = vrsqrt.pop %v346
  %v348 = vmul.f32 %v347, %v346
  %v349 = vmul.f32 %v348, %v347
  %v350 = vmul.f32 0.5, %v349
  %v351 = vsub.f32 1.5, %v350
  %v352 = vmul.f32 %v347, %v351
  %vm353 = vweird.f32 %v346
  %vm354 = vweird.f32 %v347
  %vm355 = vmor %vm353, %vm354
  %v356 = vsel %vm355, %v347, %v352
  %v357 = vmul.f32 %v342, %v356
  %v358 = vmul.f32 %v343, %v356
  %v359 = vmul.f32 %v344, %v356
  %v360 = vmul.f32 %v345, %v356
  %v361 = vld [vmem:[%s3] sm:$0x1]
  %v363 = vperm.slane %v361, 0
  %v365 = vmul.f32 %v357, %v363
  %v366 = vmul.f32 %v358, %v363
  %v367 = vmul.f32 %v359, %v363
  %v368 = vmul.f32 %v360, %v363
  %v369 = vld [vmem:[%s4] sm:$0x1]
  %v371 = vperm.slane %v369, 0
  %v373 = vadd.f32 %v365, %v371
  %v374 = vadd.f32 %v366, %v371
  %v375 = vadd.f32 %v367, %v371
  %v376 = vadd.f32 %v368, %v371
  %v377 = vmax.f32 %v373, 0.0
  %v378 = vmax.f32 %v374, 0.0
  %v379 = vmax.f32 %v375, 0.0
  %v380 = vmax.f32 %v376, 0.0
  %v381 = vld [vmem:[%s5] sm:$0xff]
  %v382 = vld [vmem:[%s5 + $0x8] sm:$0xff]
  %v383 = vld [vmem:[%s6] sm:$0x1]
  %v385 = vperm.slane %v383, 0
  %v388 = vsel %vm306, %v377, 0
  %v391 = vsel %vm306, %v378, 0
  %v394 = vsel %vm306, %v379, 0
  %v397 = vsel %vm306, %v380, 0
  %399 = vmatpush.msra.mxu0 0.0
  %400 = vmatpush.msra.mxu0 0.0
  %401 = vmatpush.msra.mxu0 0.0
  %402 = vmatpush.msra.mxu0 0.0
  %403 = vmatpush.msra.mxu0 0.0
  %404 = vmatpush.msra.mxu0 0.0
  %405 = vmatpush.msra.mxu0 0.0
  %406 = vmatpush.msra.mxu0 0.0
  %407 = vmatpush.msra.mxu0 0.0
  %408 = vmatpush.msra.mxu0 0.0
  %409 = vmatpush.msra.mxu0 0.0
  %410 = vmatpush.msra.mxu0 0.0
  %411 = vmatpush.msra.mxu0 0.0
  %412 = vmatpush.msra.mxu0 0.0
  %413 = vmatpush.msra.mxu0 %v382
  %414 = vmatpush.msra.mxu0 %v381
  %415 = vmatmul.f32.gmra.mxu0 %v388
  %v416 = vpop.f32.mrf.mxu0
  %v417 = vadd.f32 %v385, %v416
  %418 = vmatmul.f32.gmra.mxu0 %v391
  %v419 = vpop.f32.mrf.mxu0
  %v420 = vadd.f32 %v385, %v419
  %421 = vmatmul.f32.gmra.mxu0 %v394
  %v422 = vpop.f32.mrf.mxu0
  %v423 = vadd.f32 %v385, %v422
  %424 = vmatmul.f32.gmra.mxu0 %v397
  %v425 = vpop.f32.mrf.mxu0
  %v426 = vadd.f32 %v385, %v425
  %427 = vdwg.mxu0
  %v428 = vmul.f32 %v417, 0.032258064
  %v429 = vmul.f32 %v420, 0.032258064
  %v430 = vmul.f32 %v423, 0.032258064
  %v431 = vmul.f32 %v426, 0.032258064
  %vm432 = vcmask 31744
  %v433 = vsel %vm432, %v428, -inf
  %434 = vmax.xlane.f32.xlu0 %v433
  %v435 = vpop.xlane.xlu0 %434
  %v436 = vsel %vm432, %v429, -inf
  %437 = vmax.xlane.f32.xlu0 %v436
  %v438 = vpop.xlane.xlu0 %437
  %v439 = vsel %vm432, %v430, -inf
  %440 = vmax.xlane.f32.xlu0 %v439
  %v441 = vpop.xlane.xlu0 %440
  %v442 = vsel %vm432, %v431, -inf
  %443 = vmax.xlane.f32.xlu0 %v442
  %v444 = vpop.xlane.xlu0 %443
  %v445 = vsub.f32 %v428, %v435
  %v446 = vsub.f32 %v429, %v438
  %v447 = vsub.f32 %v430, %v441
  %v448 = vsub.f32 %v431, %v444
  %v449 = vmul.f32 %v445, 1.442695
  %v450 = vpow.pop %v449
  %v451 = vmul.f32 %v446, 1.442695
  %v452 = vpow.pop %v451
  %v453 = vmul.f32 %v447, 1.442695
  %v454 = vpow.pop %v453
  %v455 = vmul.f32 %v448, 1.442695
  %v456 = vpow.pop %v455
  %v457 = vsel %vm432, %v450, 0.0
  %458 = vadd.xlane.f32.xlu0 %v457
  %v459 = vpop.xlane.xlu0 %458
  %v460 = vsel %vm432, %v452, 0.0
  %461 = vadd.xlane.f32.xlu0 %v460
  %v462 = vpop.xlane.xlu0 %461
  %v463 = vsel %vm432, %v454, 0.0
  %464 = vadd.xlane.f32.xlu0 %v463
  %v465 = vpop.xlane.xlu0 %464
  %v466 = vsel %vm432, %v456, 0.0
  %467 = vadd.xlane.f32.xlu0 %v466
  %v468 = vpop.xlane.xlu0 %467
  %v469 = vrcp.pop %v459
  %v470 = vmul.f32 %v459, %v469
  %v471 = vsub.f32 1.0, %v470
  %v472 = vmul.f32 %v469, %v471
  %v473 = vadd.f32 %v469, %v472
  %vm474 = vweird.f32 %v459
  %vm475 = vweird.f32 %v469
  %vm476 = vmor %vm474, %vm475
  %v477 = vsel %vm476, %v469, %v473
  %v478 = vand.u32 2147483647, %v459
  %vm479 = vcmp.eq.f32.partialorder %v478, 8.507059e+37
  %v480 = vand.u32 %v459, 2147483648
  %v481 = vor.u32 1.1754944e-38, %v480
  %v482 = vsel %vm479, %v481, %v477
  %v483 = vmul.f32 %v450, %v482
  %v484 = vrcp.pop %v462
  %v485 = vmul.f32 %v462, %v484
  %v486 = vsub.f32 1.0, %v485
  %v487 = vmul.f32 %v484, %v486
  %v488 = vadd.f32 %v484, %v487
  %vm489 = vweird.f32 %v462
  %vm490 = vweird.f32 %v484
  %vm491 = vmor %vm489, %vm490
  %v492 = vsel %vm491, %v484, %v488
  %v493 = vand.u32 2147483647, %v462
  %vm494 = vcmp.eq.f32.partialorder %v493, 8.507059e+37
  %v495 = vand.u32 %v462, 2147483648
  %v496 = vor.u32 1.1754944e-38, %v495
  %v497 = vsel %vm494, %v496, %v492
  %v498 = vmul.f32 %v452, %v497
  %v499 = vrcp.pop %v465
  %v500 = vmul.f32 %v465, %v499
  %v501 = vsub.f32 1.0, %v500
  %v502 = vmul.f32 %v499, %v501
  %v503 = vadd.f32 %v499, %v502
  %vm504 = vweird.f32 %v465
  %vm505 = vweird.f32 %v499
  %vm506 = vmor %vm504, %vm505
  %v507 = vsel %vm506, %v499, %v503
  %v508 = vand.u32 2147483647, %v465
  %vm509 = vcmp.eq.f32.partialorder %v508, 8.507059e+37
  %v510 = vand.u32 %v465, 2147483648
  %v511 = vor.u32 1.1754944e-38, %v510
  %v512 = vsel %vm509, %v511, %v507
  %v513 = vmul.f32 %v454, %v512
  %v514 = vrcp.pop %v468
  %v515 = vmul.f32 %v468, %v514
  %v516 = vsub.f32 1.0, %v515
  %v517 = vmul.f32 %v514, %v516
  %v518 = vadd.f32 %v514, %v517
  %vm519 = vweird.f32 %v468
  %vm520 = vweird.f32 %v514
  %vm521 = vmor %vm519, %vm520
  %v522 = vsel %vm521, %v514, %v518
  %v523 = vand.u32 2147483647, %v468
  %vm524 = vcmp.eq.f32.partialorder %v523, 8.507059e+37
  %v525 = vand.u32 %v468, 2147483648
  %v526 = vor.u32 1.1754944e-38, %v525
  %v527 = vsel %vm524, %v526, %v522
  %v528 = vmul.f32 %v456, %v527
  %529 = vst.msk [vmem:[%s7] sm:$0xff] %vm432, %v483
  %530 = vst.msk [vmem:[%s7 + $0x8] sm:$0xff] %vm432, %v498
  %531 = vst.msk [vmem:[%s7 + $0x10] sm:$0xff] %vm432, %v513
  %532 = vst.msk [vmem:[%s7 + $0x18] sm:$0xff] %vm432, %v528
  // Predicated region
  $region30: #{cnn_forward.13} parent=0 // pred_check
    _
  $region31: #{cnn_forward.13} parent=0 // pred_check_branch
    %534 = sbr.rel (0) target = $region33
  $region32: #{cnn_forward.13} parent=0 // pred_region
    _
  $region33: #{cnn_forward.13} parent=0 // pred_fallthru
    _
  // Predicated region
  $region34: #{cnn_forward.13} parent=0 // pred_check
    _
  $region35: #{cnn_forward.13} parent=0 // pred_check_branch
    %536 = sbr.rel (0) target = $region37
  $region36: #{cnn_forward.13} parent=0 // pred_region
    _
  $region37: #{cnn_forward.13} parent=0 // pred_fallthru
    _

// kernel: cnn_forward.14
$region0: #{cnn_forward.14}
  #allocation0 [shape = 'u32[]', space=smem, size = 0x4, offset = 0x4, fixed_abs, tag = 'smem constant byte address 0x4 - core index']
  #allocation1 [shape = 'u32[72,128]{1,0:T(1,128)}', space=vmem, size = 0x9000, scoped, tag = 'internal scratch']
  %s0 = inlined_call_operand.vmem [shape: bf16[128,576], index: 0, kind: input, shape index: {}]
  %s1 = inlined_call_operand.vmem [shape: bf16[576,256], index: 1, kind: input, shape index: {}]
  %s2 = inlined_call_operand.vmem [shape: f32[1,256], index: 2, kind: input, shape index: {}]
  %s3 = inlined_call_operand.vmem [shape: f32[128,4], index: 3, kind: input, shape index: {}]
  %s4 = inlined_call_operand.vmem [shape: bf16[128,64], index: 4, kind: output, shape index: {0}]
  %s5 = inlined_call_operand.vmem [shape: f32[2,2,64], index: 5, kind: output, shape index: {1}]
  %6 = xla_tuple %s4, %s5
  %s7 = sld [smem:[#allocation0]]
  $region57: #{cnn_forward.14} parent=0
    _
  %s9 = ssub.s32 1, %s7
  %s10 = scalar_select 0, %s9, %s7
  loop: start=0, step=1, limit=4
  $region2: #{cnn_forward.14} parent=0 // loop_pre_header
    _
  $region3: #{cnn_forward.14} parent=0 // loop_header
    %s12 = sphi 0, %s16
    %p13 = scmp.ge.s32.totalorder %s12, 4
    %s22 = sphi 0, %s24
    %s25 = sphi 0, %s22
    %s26 = sphi 0, %s25
    %s42 = sphi 0, %s26
    %s46 = sphi 0, %s46
    %s48 = sphi 0, %s46
    %s49 = sphi 0, %s48
    %s63 = sphi 0, %s49
    %s67 = sphi 0, %s67
    %s69 = sphi 0, %s67
    %s70 = sphi 0, %s69
    %s84 = sphi 0, %s70
    %s90 = sphi 0, %s92
    %s93 = sphi 0, %s90
    %s94 = sphi 0, %s93
    %s110 = sphi 0, %s94
    %s116 = sphi 0, %s118
    %s119 = sphi 0, %s116
    %s120 = sphi 0, %s119
    %s136 = sphi 0, %s120
    %s142 = sphi 0, %s144
    %s145 = sphi 0, %s142
    %s146 = sphi 0, %s145
    %s162 = sphi 0, %s146
  $region4: #{cnn_forward.14} parent=0 // loop_header_branch
    %15 = sbr.rel (%p13) target = $region8
  $region5: #{cnn_forward.14} parent=0 // loop_body
    %s17 = ssub.s32 %s12, 1
    %s18 = ssub.s32 %s12, 2
    %s19 = sadd.s32 %s12, 1
    %s20 = ssub.s32 %s12, %s19
    %p21 = scmp.eq.s32.totalorder %s20, 0
    %s23 = sadd.s32 %s22, 1
    %s24 = scalar_select %p21, %s22, %s23
    %p27 = pneg %p21
    %p28 = scmp.eq.s32.totalorder %s12, 1
    %p29 = por %p27, %p28
    %p30 = scmp.ne.s32.totalorder %s22, %s25
    %p31 = scmp.eq.s32.totalorder %s12, 0
    %p32 = por %p30, %p31
    %p33 = scmp.ne.s32.totalorder %s22, %s25
    %p34 = scmp.eq.s32.totalorder %s17, 1
    %p35 = por %p33, %p34
    %p36 = scmp.ne.s32.totalorder %s25, %s26
    %p37 = scmp.eq.s32.totalorder %s17, 0
    %p38 = por %p36, %p37
    %p39 = scmp.ne.s32.totalorder %s25, %s26
    %p40 = scmp.eq.s32.totalorder %s18, 1
    %p41 = por %p39, %p40
    %p43 = scmp.ne.s32.totalorder %s26, %s42
    %p44 = scmp.eq.s32.totalorder %s18, 0
    %p45 = por %p43, %p44
    %s47 = sadd.s32 %s46, 1
    %p50 = scmp.eq.s32.totalorder %s12, 1
    %p51 = scmp.ne.s32.totalorder %s46, %s48
    %p52 = scmp.eq.s32.totalorder %s12, 0
    %p53 = por %p51, %p52
    %p54 = scmp.ne.s32.totalorder %s46, %s48
    %p55 = scmp.eq.s32.totalorder %s17, 1
    %p56 = por %p54, %p55
    %p57 = scmp.ne.s32.totalorder %s48, %s49
    %p58 = scmp.eq.s32.totalorder %s17, 0
    %p59 = por %p57, %p58
    %p60 = scmp.ne.s32.totalorder %s48, %s49
    %p61 = scmp.eq.s32.totalorder %s18, 1
    %p62 = por %p60, %p61
    %p64 = scmp.ne.s32.totalorder %s49, %s63
    %p65 = scmp.eq.s32.totalorder %s18, 0
    %p66 = por %p64, %p65
    %s68 = sadd.s32 %s67, 1
    %p71 = scmp.eq.s32.totalorder %s12, 1
    %p72 = scmp.ne.s32.totalorder %s67, %s69
    %p73 = scmp.eq.s32.totalorder %s12, 0
    %p74 = por %p72, %p73
    %p75 = scmp.ne.s32.totalorder %s67, %s69
    %p76 = scmp.eq.s32.totalorder %s17, 1
    %p77 = por %p75, %p76
    %p78 = scmp.ne.s32.totalorder %s69, %s70
    %p79 = scmp.eq.s32.totalorder %s17, 0
    %p80 = por %p78, %p79
    %p81 = scmp.ne.s32.totalorder %s69, %s70
    %p82 = scmp.eq.s32.totalorder %s18, 1
    %p83 = por %p81, %p82
    %p85 = scmp.ne.s32.totalorder %s70, %s84
    %p86 = scmp.eq.s32.totalorder %s18, 0
    %p87 = por %p85, %p86
    %s88 = ssub.s32 %s12, %s19
    %p89 = scmp.eq.s32.totalorder %s88, 0
    %s91 = sadd.s32 %s90, 1
    %s92 = scalar_select %p89, %s90, %s91
    %p95 = pneg %p89
    %p96 = scmp.eq.s32.totalorder %s12, 1
    %p97 = por %p95, %p96
    %p98 = scmp.ne.s32.totalorder %s90, %s93
    %p99 = scmp.eq.s32.totalorder %s12, 0
    %p100 = por %p98, %p99
    %p101 = scmp.ne.s32.totalorder %s90, %s93
    %p102 = scmp.eq.s32.totalorder %s17, 1
    %p103 = por %p101, %p102
    %p104 = scmp.ne.s32.totalorder %s93, %s94
    %p105 = scmp.eq.s32.totalorder %s17, 0
    %p106 = por %p104, %p105
    %p107 = scmp.ne.s32.totalorder %s93, %s94
    %p108 = scmp.eq.s32.totalorder %s18, 1
    %p109 = por %p107, %p108
    %p111 = scmp.ne.s32.totalorder %s94, %s110
    %p112 = scmp.eq.s32.totalorder %s18, 0
    %p113 = por %p111, %p112
    %s114 = ssub.s32 %s12, %s19
    %p115 = scmp.eq.s32.totalorder %s114, 0
    %s117 = sadd.s32 %s116, 1
    %s118 = scalar_select %p115, %s116, %s117
    %p121 = pneg %p115
    %p122 = scmp.eq.s32.totalorder %s12, 1
    %p123 = por %p121, %p122
    %p124 = scmp.ne.s32.totalorder %s116, %s119
    %p125 = scmp.eq.s32.totalorder %s12, 0
    %p126 = por %p124, %p125
    %p127 = scmp.ne.s32.totalorder %s116, %s119
    %p128 = scmp.eq.s32.totalorder %s17, 1
    %p129 = por %p127, %p128
    %p130 = scmp.ne.s32.totalorder %s119, %s120
    %p131 = scmp.eq.s32.totalorder %s17, 0
    %p132 = por %p130, %p131
    %p133 = scmp.ne.s32.totalorder %s119, %s120
    %p134 = scmp.eq.s32.totalorder %s18, 1
    %p135 = por %p133, %p134
    %p137 = scmp.ne.s32.totalorder %s120, %s136
    %p138 = scmp.eq.s32.totalorder %s18, 0
    %p139 = por %p137, %p138
    %s140 = ssub.s32 %s12, %s19
    %p141 = scmp.eq.s32.totalorder %s140, 0
    %s143 = sadd.s32 %s142, 1
    %s144 = scalar_select %p141, %s142, %s143
    %p147 = pneg %p141
    %p148 = scmp.eq.s32.totalorder %s12, 1
    %p149 = por %p147, %p148
    %p150 = scmp.ne.s32.totalorder %s142, %s145
    %p151 = scmp.eq.s32.totalorder %s12, 0
    %p152 = por %p150, %p151
    %p153 = scmp.ne.s32.totalorder %s142, %s145
    %p154 = scmp.eq.s32.totalorder %s17, 1
    %p155 = por %p153, %p154
    %p156 = scmp.ne.s32.totalorder %s145, %s146
    %p157 = scmp.eq.s32.totalorder %s17, 0
    %p158 = por %p156, %p157
    %p159 = scmp.ne.s32.totalorder %s145, %s146
    %p160 = scmp.eq.s32.totalorder %s18, 1
    %p161 = por %p159, %p160
    %p163 = scmp.ne.s32.totalorder %s146, %s162
    %p164 = scmp.eq.s32.totalorder %s18, 0
    %p165 = por %p163, %p164
    %p166 = scmp.le.s32.totalorder 1, %s12
    %p167 = scmp.lt.s32.totalorder %s12, 3
    %p168 = pnand %p166, %p167
    %p169 = pneg %p168
    // Predicated region
    $region9: #{cnn_forward.14} parent=5 // pred_check
      _
    $region10: #{cnn_forward.14} parent=5 // pred_check_branch
      %171 = sbr.rel (%p168) target = $region12
    $region11: #{cnn_forward.14} parent=5 // pred_region
      %s172 = ssub.s32 %s12, 1
      // Predicated region
      $region13: #{cnn_forward.14} parent=11 // pred_check
        %p173 = pneg %p59
      $region14: #{cnn_forward.14} parent=11 // pred_check_branch
        %175 = sbr.rel (%p173) target = $region16
      $region15: #{cnn_forward.14} parent=11 // pred_region
        _
      $region16: #{cnn_forward.14} parent=11 // pred_fallthru
        _
      // Predicated region
      $region17: #{cnn_forward.14} parent=11 // pred_check
        %p176 = pneg %p80
      $region18: #{cnn_forward.14} parent=11 // pred_check_branch
        %178 = sbr.rel (%p176) target = $region20
      $region19: #{cnn_forward.14} parent=11 // pred_region
        _
      $region20: #{cnn_forward.14} parent=11 // pred_fallthru
        _
    $region12: #{cnn_forward.14} parent=5 // pred_fallthru
      _
    %p179 = scmp.lt.s32.totalorder %s12, 2
    // Predicated region
    $region21: #{cnn_forward.14} parent=5 // pred_check
      %p180 = pneg %p179
    $region22: #{cnn_forward.14} parent=5 // pred_check_branch
      %182 = sbr.rel (%p180) target = $region24
    $region23: #{cnn_forward.14} parent=5 // pred_region
      // Predicated region
      $region25: #{cnn_forward.14} parent=23 // pred_check
        %p183 = pneg %p32
      $region26: #{cnn_forward.14} parent=23 // pred_check_branch
        %185 = sbr.rel (%p183) target = $region28
      $region27: #{cnn_forward.14} parent=23 // pred_region
        %s186 = smul.u32 8, %s12
        %p187 = scmp.lt.s32.totalorder %s186, 15
        %s188 = scalar_select %p187, %s186, 15
        %s189 = smul.addr %s188, 5
        %s190 = smul.addr %s189, 4
        %s191 = scalar_lea.vmem %s0, %s190
        %s192 = smul.u32 8, %s12
      $region28: #{cnn_forward.14} parent=23 // pred_fallthru
        _
      // Predicated region
      $region29: #{cnn_forward.14} parent=23 // pred_check
        %p193 = pneg %p100
      $region30: #{cnn_forward.14} parent=23 // pred_check_branch
        %195 = sbr.rel (%p193) target = $region32
      $region31: #{cnn_forward.14} parent=23 // pred_region
        %s196 = smul.u32 8, %s12
        %p197 = scmp.lt.s32.totalorder %s196, 15
        %s198 = scalar_select %p197, %s196, 15
        %s199 = smul.addr %s198, 8
        %s200 = scalar_lea.vmem %s3, %s199
        %s201 = smul.u32 8, %s12
      $region32: #{cnn_forward.14} parent=23 // pred_fallthru
        _
    $region24: #{cnn_forward.14} parent=5 // pred_fallthru
      _
    %p202 = scmp.le.s32.totalorder 1, %s12
    %p203 = scmp.lt.s32.totalorder %s12, 3
    %p204 = pnand %p202, %p203
    %p205 = pneg %p204
    // Predicated region
    $region33: #{cnn_forward.14} parent=5 // pred_check
      _
    $region34: #{cnn_forward.14} parent=5 // pred_check_branch
      %207 = sbr.rel (%p204) target = $region36
    $region35: #{cnn_forward.14} parent=5 // pred_region
      %s208 = ssub.s32 %s12, 1
      %s209 = smul.u32 8, %s17
      %p210 = scmp.lt.s32.totalorder %s209, 15
      %s211 = scalar_select %p210, %s209, 15
      %s212 = smul.addr %s211, 5
      %s213 = smul.addr %s212, 4
      %s214 = scalar_lea.vmem %s0, %s213
      %p215 = pneg %p38
      %p216 = pneg %p35
      %p217 = pneg %p59
      %p218 = pneg %p56
      %p219 = pneg %p80
      %p220 = pneg %p77
      %s221 = smul.u32 8, %s17
      %p222 = scmp.lt.s32.totalorder %s221, 15
      %s223 = scalar_select %p222, %s221, 15
      %s224 = smul.addr %s223, 8
      %s225 = scalar_lea.vmem %s3, %s224
      %p226 = pneg %p106
      %p227 = pneg %p103
      %p228 = pneg %p132
      %p229 = pneg %p129
      %s230 = smul.u32 8, %s17
      %p231 = scmp.lt.s32.totalorder %s230, 15
      %s232 = scalar_select %p231, %s230, 15
      %s233 = smul.addr %s232, 4
      %s234 = scalar_lea.vmem %s4, %s233
      %p235 = pneg %p158
      %p236 = pneg %p155
      %p237 = scmp.lt.s32.totalorder %s17, 1
      %s238 = scalar_select %p237, %s17, 1
      %s239 = smul.addr %s238, 2
      %s240 = scalar_lea.vmem %s5, %s239
      %s241 = smul.u32 8, %s17
      %p242 = scmp.lt.s32.totalorder %s241, 15
      %s243 = scalar_select %p242, %s241, 15
      %s244 = smul.addr %s243, 5
      %s245 = smul.addr %s244, 4
      %s246 = scalar_lea.vmem %s0, %s245
      %s247 = smul.u32 8, %s17
      %s248 = smul.u32 8, %s17
      %p249 = scmp.lt.s32.totalorder %s248, 15
      %s250 = scalar_select %p249, %s248, 15
      %s251 = smul.addr %s250, 8
      %s252 = scalar_lea.vmem %s3, %s251
      %s253 = smul.u32 8, %s17
      %s254 = smul.u32 8, %s17
      %p255 = scmp.lt.s32.totalorder %s254, 15
      %s256 = scalar_select %p255, %s254, 15
      %s257 = smul.addr %s256, 4
      %s258 = scalar_lea.vmem %s4, %s257
      %s259 = smul.u32 8, %s17
      %p260 = scmp.lt.s32.totalorder %s17, 1
      %s261 = scalar_select %p260, %s17, 1
      %s262 = smul.addr %s261, 2
      %s263 = scalar_lea.vmem %s5, %s262
      %v265 = vld [vmem:[%s246] sm:$0xff]
      %v266 = vld [vmem:[%s246 + $0x8] sm:$0xff]
      %v267 = vld [vmem:[%s246 + $0x10] sm:$0xf]
      %v268 = vld [vmem:[%s246 + $0x14] sm:$0xff]
      %v269 = vld [vmem:[%s246 + $0x1c] sm:$0xff]
      %v270 = vld [vmem:[%s246 + $0x24] sm:$0xf]
      %v271 = vld [vmem:[%s246 + $0x28] sm:$0xff]
      %v272 = vld [vmem:[%s246 + $0x30] sm:$0xff]
      %v273 = vld [vmem:[%s246 + $0x38] sm:$0xf]
      %v274 = vld [vmem:[%s246 + $0x3c] sm:$0xff]
      %v275 = vld [vmem:[%s246 + $0x44] sm:$0xff]
      %v276 = vld [vmem:[%s246 + $0x4c] sm:$0xf]
      %v277 = vld [vmem:[%s246 + $0x50] sm:$0xff]
      %v278 = vld [vmem:[%s246 + $0x58] sm:$0xff]
      %v279 = vld [vmem:[%s246 + $0x60] sm:$0xf]
      %v280 = vld [vmem:[%s246 + $0x64] sm:$0xff]
      %v281 = vld [vmem:[%s246 + $0x6c] sm:$0xff]
      %v282 = vld [vmem:[%s246 + $0x74] sm:$0xf]
      %v283 = vld [vmem:[%s246 + $0x78] sm:$0xff]
      %v284 = vld [vmem:[%s246 + $0x80] sm:$0xff]
      %v285 = vld [vmem:[%s246 + $0x88] sm:$0xf]
      %v286 = vld [vmem:[%s246 + $0x8c] sm:$0xff]
      %v287 = vld [vmem:[%s246 + $0x94] sm:$0xff]
      %v288 = vld [vmem:[%s246 + $0x9c] sm:$0xf]
      %v289 = vld [vmem:[%s1] sm:$0xff]
      %v290 = vld [vmem:[%s1 + $0x8] sm:$0xff]
      %v291 = vld [vmem:[%s1 + $0x10] sm:$0xff]
      %v292 = vld [vmem:[%s1 + $0x18] sm:$0xff]
      %v293 = vld [vmem:[%s1 + $0x20] sm:$0xff]
      %v294 = vld [vmem:[%s1 + $0x28] sm:$0xff]
      %v295 = vld [vmem:[%s1 + $0x30] sm:$0xff]
      %v296 = vld [vmem:[%s1 + $0x38] sm:$0xff]
      %v297 = vld [vmem:[%s1 + $0x40] sm:$0xff]
      %v298 = vld [vmem:[%s1 + $0x48] sm:$0xff]
      %v299 = vld [vmem:[%s1 + $0x50] sm:$0xff]
      %v300 = vld [vmem:[%s1 + $0x58] sm:$0xff]
      %v301 = vld [vmem:[%s1 + $0x60] sm:$0xff]
      %v302 = vld [vmem:[%s1 + $0x68] sm:$0xff]
      %v303 = vld [vmem:[%s1 + $0x70] sm:$0xff]
      %v304 = vld [vmem:[%s1 + $0x78] sm:$0xff]
      %v305 = vld [vmem:[%s1 + $0x80] sm:$0xff]
      %v306 = vld [vmem:[%s1 + $0x88] sm:$0xff]
      %v307 = vld [vmem:[%s1 + $0x90] sm:$0xff]
      %v308 = vld [vmem:[%s1 + $0x98] sm:$0xff]
      %v309 = vld [vmem:[%s1 + $0xa0] sm:$0xff]
      %v310 = vld [vmem:[%s1 + $0xa8] sm:$0xff]
      %v311 = vld [vmem:[%s1 + $0xb0] sm:$0xff]
      %v312 = vld [vmem:[%s1 + $0xb8] sm:$0xff]
      %v313 = vld [vmem:[%s1 + $0xc0] sm:$0xff]
      %v314 = vld [vmem:[%s1 + $0xc8] sm:$0xff]
      %v315 = vld [vmem:[%s1 + $0xd0] sm:$0xff]
      %v316 = vld [vmem:[%s1 + $0xd8] sm:$0xff]
      %v317 = vld [vmem:[%s1 + $0xe0] sm:$0xff]
      %v318 = vld [vmem:[%s1 + $0xe8] sm:$0xff]
      %v319 = vld [vmem:[%s1 + $0xf0] sm:$0xff]
      %v320 = vld [vmem:[%s1 + $0xf8] sm:$0xff]
      %v321 = vld [vmem:[%s1 + $0x100] sm:$0xff]
      %v322 = vld [vmem:[%s1 + $0x108] sm:$0xff]
      %v323 = vld [vmem:[%s1 + $0x110] sm:$0xff]
      %v324 = vld [vmem:[%s1 + $0x118] sm:$0xff]
      %v325 = vld [vmem:[%s1 + $0x120] sm:$0xff]
      %v326 = vld [vmem:[%s1 + $0x128] sm:$0xff]
      %v327 = vld [vmem:[%s1 + $0x130] sm:$0xff]
      %v328 = vld [vmem:[%s1 + $0x138] sm:$0xff]
      %v329 = vld [vmem:[%s1 + $0x140] sm:$0xff]
      %v330 = vld [vmem:[%s1 + $0x148] sm:$0xff]
      %v331 = vld [vmem:[%s1 + $0x150] sm:$0xff]
      %v332 = vld [vmem:[%s1 + $0x158] sm:$0xff]
      %v333 = vld [vmem:[%s1 + $0x160] sm:$0xff]
      %v334 = vld [vmem:[%s1 + $0x168] sm:$0xff]
      %v335 = vld [vmem:[%s1 + $0x170] sm:$0xff]
      %v336 = vld [vmem:[%s1 + $0x178] sm:$0xff]
      %v337 = vld [vmem:[%s1 + $0x180] sm:$0xff]
      %v338 = vld [vmem:[%s1 + $0x188] sm:$0xff]
      %v339 = vld [vmem:[%s1 + $0x190] sm:$0xff]
      %v340 = vld [vmem:[%s1 + $0x198] sm:$0xff]
      %v341 = vld [vmem:[%s1 + $0x1a0] sm:$0xff]
      %v342 = vld [vmem:[%s1 + $0x1a8] sm:$0xff]
      %v343 = vld [vmem:[%s1 + $0x1b0] sm:$0xff]
      %v344 = vld [vmem:[%s1 + $0x1b8] sm:$0xff]
      %v345 = vld [vmem:[%s1 + $0x1c0] sm:$0xff]
      %v346 = vld [vmem:[%s1 + $0x1c8] sm:$0xff]
      %v347 = vld [vmem:[%s1 + $0x1d0] sm:$0xff]
      %v348 = vld [vmem:[%s1 + $0x1d8] sm:$0xff]
      %v349 = vld [vmem:[%s1 + $0x1e0] sm:$0xff]
      %v350 = vld [vmem:[%s1 + $0x1e8] sm:$0xff]
      %v351 = vld [vmem:[%s1 + $0x1f0] sm:$0xff]
      %v352 = vld [vmem:[%s1 + $0x1f8] sm:$0xff]
      %v353 = vld [vmem:[%s1 + $0x200] sm:$0xff]
      %v354 = vld [vmem:[%s1 + $0x208] sm:$0xff]
      %v355 = vld [vmem:[%s1 + $0x210] sm:$0xff]
      %v356 = vld [vmem:[%s1 + $0x218] sm:$0xff]
      %v357 = vld [vmem:[%s1 + $0x220] sm:$0xff]
      %v358 = vld [vmem:[%s1 + $0x228] sm:$0xff]
      %v359 = vld [vmem:[%s1 + $0x230] sm:$0xff]
      %v360 = vld [vmem:[%s1 + $0x238] sm:$0xff]
      %v361 = vld [vmem:[%s2] sm:$0x3]
      %v363 = vperm.slane %v361, 0
      %v364 = vperm.slane %v361, 1
      %v391 = vunpack.c.l.b16 %v265
      %v392 = vunpack.c.h.b16 %v265
      %v393 = vunpack.c.l.b16 %v266
      %v394 = vunpack.c.h.b16 %v266
      %v395 = vunpack.c.l.b16 %v267
      %v396 = vunpack.c.l.b16 %v268
      %v397 = vunpack.c.h.b16 %v268
      %v398 = vunpack.c.l.b16 %v269
      %v399 = vunpack.c.h.b16 %v269
      %v400 = vunpack.c.l.b16 %v270
      %v401 = vunpack.c.l.b16 %v271
      %v402 = vunpack.c.h.b16 %v271
      %v403 = vunpack.c.l.b16 %v272
      %v404 = vunpack.c.h.b16 %v272
      %v405 = vunpack.c.l.b16 %v273
      %v406 = vunpack.c.l.b16 %v274
      %v407 = vunpack.c.h.b16 %v274
      %v408 = vunpack.c.l.b16 %v275
      %v409 = vunpack.c.h.b16 %v275
      %v410 = vunpack.c.l.b16 %v276
      %v411 = vunpack.c.l.b16 %v277
      %v412 = vunpack.c.h.b16 %v277
      %v413 = vunpack.c.l.b16 %v278
      %v414 = vunpack.c.h.b16 %v278
      %v415 = vunpack.c.l.b16 %v279
      %v416 = vunpack.c.l.b16 %v280
      %v417 = vunpack.c.h.b16 %v280
      %v418 = vunpack.c.l.b16 %v281
      %v419 = vunpack.c.h.b16 %v281
      %v420 = vunpack.c.l.b16 %v282
      %v421 = vunpack.c.l.b16 %v283
      %v422 = vunpack.c.h.b16 %v283
      %v423 = vunpack.c.l.b16 %v284
      %v424 = vunpack.c.h.b16 %v284
      %v425 = vunpack.c.l.b16 %v285
      %v426 = vunpack.c.l.b16 %v286
      %v427 = vunpack.c.h.b16 %v286
      %v428 = vunpack.c.l.b16 %v287
      %v429 = vunpack.c.h.b16 %v287
      %v430 = vunpack.c.l.b16 %v288
      %v431 = vpack.c.b16 %v396, %v391
      %v432 = vpack.c.b16 %v397, %v392
      %v433 = vpack.c.b16 %v398, %v393
      %v434 = vpack.c.b16 %v399, %v394
      %v435 = vpack.c.b16 %v400, %v395
      %v436 = vpack.c.b16 %v406, %v401
      %v437 = vpack.c.b16 %v407, %v402
      %v438 = vpack.c.b16 %v408, %v403
      %v439 = vpack.c.b16 %v409, %v404
      %v440 = vpack.c.b16 %v410, %v405
      %v441 = vpack.c.b16 %v416, %v411
      %v442 = vpack.c.b16 %v417, %v412
      %v443 = vpack.c.b16 %v418, %v413
      %v444 = vpack.c.b16 %v419, %v414
      %v445 = vpack.c.b16 %v420, %v415
      %v446 = vpack.c.b16 %v426, %v421
      %v447 = vpack.c.b16 %v427, %v422
      %v448 = vpack.c.b16 %v428, %v423
      %v449 = vpack.c.b16 %v429, %v424
      %v450 = vpack.c.b16 %v430, %v425
      %v539 = vunpack.c.l.b16 %v289
      %v540 = vunpack.c.h.b16 %v289
      %v541 = vunpack.c.l.b16 %v290
      %v542 = vunpack.c.h.b16 %v290
      %v543 = vunpack.c.l.b16 %v291
      %v544 = vunpack.c.h.b16 %v291
      %v545 = vunpack.c.l.b16 %v292
      %v546 = vunpack.c.h.b16 %v292
      %v547 = vunpack.c.l.b16 %v293
      %v548 = vunpack.c.h.b16 %v293
      %v549 = vunpack.c.l.b16 %v294
      %v550 = vunpack.c.h.b16 %v294
      %v551 = vunpack.c.l.b16 %v295
      %v552 = vunpack.c.h.b16 %v295
      %v553 = vunpack.c.l.b16 %v296
      %v554 = vunpack.c.h.b16 %v296
      %v555 = vunpack.c.l.b16 %v297
      %v556 = vunpack.c.h.b16 %v297
      %v557 = vunpack.c.l.b16 %v298
      %v558 = vunpack.c.h.b16 %v298
      %v559 = vunpack.c.l.b16 %v299
      %v560 = vunpack.c.h.b16 %v299
      %v561 = vunpack.c.l.b16 %v300
      %v562 = vunpack.c.h.b16 %v300
      %v563 = vunpack.c.l.b16 %v301
      %v564 = vunpack.c.h.b16 %v301
      %v565 = vunpack.c.l.b16 %v302
      %v566 = vunpack.c.h.b16 %v302
      %v567 = vunpack.c.l.b16 %v303
      %v568 = vunpack.c.h.b16 %v303
      %v569 = vunpack.c.l.b16 %v304
      %v570 = vunpack.c.h.b16 %v304
      %v571 = vunpack.c.l.b16 %v305
      %v572 = vunpack.c.h.b16 %v305
      %v573 = vunpack.c.l.b16 %v306
      %v574 = vunpack.c.h.b16 %v306
      %v575 = vunpack.c.l.b16 %v307
      %v576 = vunpack.c.h.b16 %v307
      %v577 = vunpack.c.l.b16 %v308
      %v578 = vunpack.c.h.b16 %v308
      %v579 = vunpack.c.l.b16 %v309
      %v580 = vunpack.c.h.b16 %v309
      %v581 = vunpack.c.l.b16 %v310
      %v582 = vunpack.c.h.b16 %v310
      %v583 = vunpack.c.l.b16 %v311
      %v584 = vunpack.c.h.b16 %v311
      %v585 = vunpack.c.l.b16 %v312
      %v586 = vunpack.c.h.b16 %v312
      %v587 = vunpack.c.l.b16 %v313
      %v588 = vunpack.c.h.b16 %v313
      %v589 = vunpack.c.l.b16 %v314
      %v590 = vunpack.c.h.b16 %v314
      %v591 = vunpack.c.l.b16 %v315
      %v592 = vunpack.c.h.b16 %v315
      %v593 = vunpack.c.l.b16 %v316
      %v594 = vunpack.c.h.b16 %v316
      %v595 = vunpack.c.l.b16 %v317
      %v596 = vunpack.c.h.b16 %v317
      %v597 = vunpack.c.l.b16 %v318
      %v598 = vunpack.c.h.b16 %v318
      %v599 = vunpack.c.l.b16 %v319
      %v600 = vunpack.c.h.b16 %v319
      %v601 = vunpack.c.l.b16 %v320
      %v602 = vunpack.c.h.b16 %v320
      %v603 = vunpack.c.l.b16 %v321
      %v604 = vunpack.c.h.b16 %v321
      %v605 = vunpack.c.l.b16 %v322
      %v606 = vunpack.c.h.b16 %v322
      %v607 = vunpack.c.l.b16 %v323
      %v608 = vunpack.c.h.b16 %v323
      %v609 = vunpack.c.l.b16 %v324
      %v610 = vunpack.c.h.b16 %v324
      %v611 = vunpack.c.l.b16 %v325
      %v612 = vunpack.c.h.b16 %v325
      %v613 = vunpack.c.l.b16 %v326
      %v614 = vunpack.c.h.b16 %v326
      %v615 = vunpack.c.l.b16 %v327
      %v616 = vunpack.c.h.b16 %v327
      %v617 = vunpack.c.l.b16 %v328
      %v618 = vunpack.c.h.b16 %v328
      %v619 = vunpack.c.l.b16 %v329
      %v620 = vunpack.c.h.b16 %v329
      %v621 = vunpack.c.l.b16 %v330
      %v622 = vunpack.c.h.b16 %v330
      %v623 = vunpack.c.l.b16 %v331
      %v624 = vunpack.c.h.b16 %v331
      %v625 = vunpack.c.l.b16 %v332
      %v626 = vunpack.c.h.b16 %v332
      %v627 = vunpack.c.l.b16 %v333
      %v628 = vunpack.c.h.b16 %v333
      %v629 = vunpack.c.l.b16 %v334
      %v630 = vunpack.c.h.b16 %v334
      %v631 = vunpack.c.l.b16 %v335
      %v632 = vunpack.c.h.b16 %v335
      %v633 = vunpack.c.l.b16 %v336
      %v634 = vunpack.c.h.b16 %v336
      %v635 = vunpack.c.l.b16 %v337
      %v636 = vunpack.c.h.b16 %v337
      %v637 = vunpack.c.l.b16 %v338
      %v638 = vunpack.c.h.b16 %v338
      %v639 = vunpack.c.l.b16 %v339
      %v640 = vunpack.c.h.b16 %v339
      %v641 = vunpack.c.l.b16 %v340
      %v642 = vunpack.c.h.b16 %v340
      %v643 = vunpack.c.l.b16 %v341
      %v644 = vunpack.c.h.b16 %v341
      %v645 = vunpack.c.l.b16 %v342
      %v646 = vunpack.c.h.b16 %v342
      %v647 = vunpack.c.l.b16 %v343
      %v648 = vunpack.c.h.b16 %v343
      %v649 = vunpack.c.l.b16 %v344
      %v650 = vunpack.c.h.b16 %v344
      %v651 = vunpack.c.l.b16 %v345
      %v652 = vunpack.c.h.b16 %v345
      %v653 = vunpack.c.l.b16 %v346
      %v654 = vunpack.c.h.b16 %v346
      %v655 = vunpack.c.l.b16 %v347
      %v656 = vunpack.c.h.b16 %v347
      %v657 = vunpack.c.l.b16 %v348
      %v658 = vunpack.c.h.b16 %v348
      %v659 = vunpack.c.l.b16 %v349
      %v660 = vunpack.c.h.b16 %v349
      %v661 = vunpack.c.l.b16 %v350
      %v662 = vunpack.c.h.b16 %v350
      %v663 = vunpack.c.l.b16 %v351
      %v664 = vunpack.c.h.b16 %v351
      %v665 = vunpack.c.l.b16 %v352
      %v666 = vunpack.c.h.b16 %v352
      %v667 = vunpack.c.l.b16 %v353
      %v668 = vunpack.c.h.b16 %v353
      %v669 = vunpack.c.l.b16 %v354
      %v670 = vunpack.c.h.b16 %v354
      %v671 = vunpack.c.l.b16 %v355
      %v672 = vunpack.c.h.b16 %v355
      %v673 = vunpack.c.l.b16 %v356
      %v674 = vunpack.c.h.b16 %v356
      %v675 = vunpack.c.l.b16 %v357
      %v676 = vunpack.c.h.b16 %v357
      %v677 = vunpack.c.l.b16 %v358
      %v678 = vunpack.c.h.b16 %v358
      %v679 = vunpack.c.l.b16 %v359
      %v680 = vunpack.c.h.b16 %v359
      %v681 = vunpack.c.l.b16 %v360
      %v682 = vunpack.c.h.b16 %v360
      %v683 = vpack.c.b16 %v541, %v539
      %v684 = vpack.c.b16 %v542, %v540
      %v685 = vpack.c.b16 %v545, %v543
      %v686 = vpack.c.b16 %v546, %v544
      %v687 = vpack.c.b16 %v549, %v547
      %v688 = vpack.c.b16 %v550, %v548
      %v689 = vpack.c.b16 %v553, %v551
      %v690 = vpack.c.b16 %v554, %v552
      %v691 = vpack.c.b16 %v557, %v555
      %v692 = vpack.c.b16 %v558, %v556
      %v693 = vpack.c.b16 %v561, %v559
      %v694 = vpack.c.b16 %v562, %v560
      %v695 = vpack.c.b16 %v565, %v563
      %v696 = vpack.c.b16 %v566, %v564
      %v697 = vpack.c.b16 %v569, %v567
      %v698 = vpack.c.b16 %v570, %v568
      %v699 = vpack.c.b16 %v573, %v571
      %v700 = vpack.c.b16 %v574, %v572
      %v701 = vpack.c.b16 %v577, %v575
      %v702 = vpack.c.b16 %v578, %v576
      %v703 = vpack.c.b16 %v581, %v579
      %v704 = vpack.c.b16 %v582, %v580
      %v705 = vpack.c.b16 %v585, %v583
      %v706 = vpack.c.b16 %v586, %v584
      %v707 = vpack.c.b16 %v589, %v587
      %v708 = vpack.c.b16 %v590, %v588
      %v709 = vpack.c.b16 %v593, %v591
      %v710 = vpack.c.b16 %v594, %v592
      %v711 = vpack.c.b16 %v597, %v595
      %v712 = vpack.c.b16 %v598, %v596
      %v713 = vpack.c.b16 %v601, %v599
      %v714 = vpack.c.b16 %v602, %v600
      %v715 = vpack.c.b16 %v605, %v603
      %v716 = vpack.c.b16 %v606, %v604
      %v717 = vpack.c.b16 %v609, %v607
      %v718 = vpack.c.b16 %v610, %v608
      %v719 = vpack.c.b16 %v613, %v611
      %v720 = vpack.c.b16 %v614, %v612
      %v721 = vpack.c.b16 %v617, %v615
      %v722 = vpack.c.b16 %v618, %v616
      %v723 = vpack.c.b16 %v621, %v619
      %v724 = vpack.c.b16 %v622, %v620
      %v725 = vpack.c.b16 %v625, %v623
      %v726 = vpack.c.b16 %v626, %v624
      %v727 = vpack.c.b16 %v629, %v627
      %v728 = vpack.c.b16 %v630, %v628
      %v729 = vpack.c.b16 %v633, %v631
      %v730 = vpack.c.b16 %v634, %v632
      %v731 = vpack.c.b16 %v637, %v635
      %v732 = vpack.c.b16 %v638, %v636
      %v733 = vpack.c.b16 %v641, %v639
      %v734 = vpack.c.b16 %v642, %v640
      %v735 = vpack.c.b16 %v645, %v643
      %v736 = vpack.c.b16 %v646, %v644
      %v737 = vpack.c.b16 %v649, %v647
      %v738 = vpack.c.b16 %v650, %v648
      %v739 = vpack.c.b16 %v653, %v651
      %v740 = vpack.c.b16 %v654, %v652
      %v741 = vpack.c.b16 %v657, %v655
      %v742 = vpack.c.b16 %v658, %v656
      %v743 = vpack.c.b16 %v661, %v659
      %v744 = vpack.c.b16 %v662, %v660
      %v745 = vpack.c.b16 %v665, %v663
      %v746 = vpack.c.b16 %v666, %v664
      %v747 = vpack.c.b16 %v669, %v667
      %v748 = vpack.c.b16 %v670, %v668
      %v749 = vpack.c.b16 %v673, %v671
      %v750 = vpack.c.b16 %v674, %v672
      %v751 = vpack.c.b16 %v677, %v675
      %v752 = vpack.c.b16 %v678, %v676
      %v753 = vpack.c.b16 %v681, %v679
      %v754 = vpack.c.b16 %v682, %v680
      %vm827 = vcmask 523264
      %v829 = vsel %vm827, %v435, 0
      %v832 = vsel %vm827, %v440, 0
      %v835 = vsel %vm827, %v445, 0
      %v838 = vsel %vm827, %v450, 0
      %840 = vmatpush.bf16.msra.mxu0 %v697
      %841 = vmatpush.bf16.msra.mxu0 %v695
      %842 = vmatpush.bf16.msra.mxu0 %v693
      %843 = vmatpush.bf16.msra.mxu0 %v691
      %844 = vmatpush.bf16.msra.mxu0 %v689
      %845 = vmatpush.bf16.msra.mxu0 %v687
      %846 = vmatpush.bf16.msra.mxu0 %v685
      %847 = vmatpush.bf16.msra.mxu0 %v683
      %848 = vmatmul.bf16.gmra.mxu0 %v431
      %v849 = vpop.f32.mrf.mxu0
      %v850 = vadd.f32 %v363, %v849
      %v851 = vpop.f32.mrf.mxu0
      %v852 = vadd.f32 %v363, %v851
      %853 = vmatmul.bf16.gmra.mxu0 %v436
      %v854 = vpop.f32.mrf.mxu0
      %v855 = vadd.f32 %v363, %v854
      %v856 = vpop.f32.mrf.mxu0
      %v857 = vadd.f32 %v363, %v856
      %858 = vmatmul.bf16.gmra.mxu0 %v441
      %v859 = vpop.f32.mrf.mxu0
      %v860 = vadd.f32 %v363, %v859
      %v861 = vpop.f32.mrf.mxu0
      %v862 = vadd.f32 %v363, %v861
      %863 = vmatmul.bf16.gmra.mxu0 %v446
      %v864 = vpop.f32.mrf.mxu0
      %v865 = vadd.f32 %v363, %v864
      %v866 = vpop.f32.mrf.mxu0
      %v867 = vadd.f32 %v363, %v866
      %868 = vdwg.mxu0
      %869 = vmatpush.bf16.msra.mxu0 %v713
      %870 = vmatpush.bf16.msra.mxu0 %v711
      %871 = vmatpush.bf16.msra.mxu0 %v709
      %872 = vmatpush.bf16.msra.mxu0 %v707
      %873 = vmatpush.bf16.msra.mxu0 %v705
      %874 = vmatpush.bf16.msra.mxu0 %v703
      %875 = vmatpush.bf16.msra.mxu0 %v701
      %876 = vmatpush.bf16.msra.mxu0 %v699
      %877 = vmatmul.bf16.gmra.mxu0 %v432
      %v878 = vpop.f32.mrf.mxu0
      %v879 = vadd.f32 %v850, %v878
      %v880 = vpop.f32.mrf.mxu0
      %v881 = vadd.f32 %v852, %v880
      %882 = vmatmul.bf16.gmra.mxu0 %v437
      %v883 = vpop.f32.mrf.mxu0
      %v884 = vadd.f32 %v855, %v883
      %v885 = vpop.f32.mrf.mxu0
      %v886 = vadd.f32 %v857, %v885
      %887 = vmatmul.bf16.gmra.mxu0 %v442
      %v888 = vpop.f32.mrf.mxu0
      %v889 = vadd.f32 %v860, %v888
      %v890 = vpop.f32.mrf.mxu0
      %v891 = vadd.f32 %v862, %v890
      %892 = vmatmul.bf16.gmra.mxu0 %v447
      %v893 = vpop.f32.mrf.mxu0
      %v894 = vadd.f32 %v865, %v893
      %v895 = vpop.f32.mrf.mxu0
      %v896 = vadd.f32 %v867, %v895
      %897 = vdwg.mxu0
      %898 = vmatpush.bf16.msra.mxu0 %v729
      %899 = vmatpush.bf16.msra.mxu0 %v727
      %900 = vmatpush.bf16.msra.mxu0 %v725
      %901 = vmatpush.bf16.msra.mxu0 %v723
      %902 = vmatpush.bf16.msra.mxu0 %v721
      %903 = vmatpush.bf16.msra.mxu0 %v719
      %904 = vmatpush.bf16.msra.mxu0 %v717
      %905 = vmatpush.bf16.msra.mxu0 %v715
      %906 = vmatmul.bf16.gmra.mxu0 %v433
      %v907 = vpop.f32.mrf.mxu0
      %v908 = vadd.f32 %v879, %v907
      %v909 = vpop.f32.mrf.mxu0
      %v910 = vadd.f32 %v881, %v909
      %911 = vmatmul.bf16.gmra.mxu0 %v438
      %v912 = vpop.f32.mrf.mxu0
      %v913 = vadd.f32 %v884, %v912
      %v914 = vpop.f32.mrf.mxu0
      %v915 = vadd.f32 %v886, %v914
      %916 = vmatmul.bf16.gmra.mxu0 %v443
      %v917 = vpop.f32.mrf.mxu0
      %v918 = vadd.f32 %v889, %v917
      %v919 = vpop.f32.mrf.mxu0
      %v920 = vadd.f32 %v891, %v919
      %921 = vmatmul.bf16.gmra.mxu0 %v448
      %v922 = vpop.f32.mrf.mxu0
      %v923 = vadd.f32 %v894, %v922
      %v924 = vpop.f32.mrf.mxu0
      %v925 = vadd.f32 %v896, %v924
      %926 = vdwg.mxu0
      %927 = vmatpush.bf16.msra.mxu0 %v745
      %928 = vmatpush.bf16.msra.mxu0 %v743
      %929 = vmatpush.bf16.msra.mxu0 %v741
      %930 = vmatpush.bf16.msra.mxu0 %v739
      %931 = vmatpush.bf16.msra.mxu0 %v737
      %932 = vmatpush.bf16.msra.mxu0 %v735
      %933 = vmatpush.bf16.msra.mxu0 %v733
      %934 = vmatpush.bf16.msra.mxu0 %v731
      %935 = vmatmul.bf16.gmra.mxu0 %v434
      %v936 = vpop.f32.mrf.mxu0
      %v937 = vadd.f32 %v908, %v936
      %v938 = vpop.f32.mrf.mxu0
      %v939 = vadd.f32 %v910, %v938
      %940 = vmatmul.bf16.gmra.mxu0 %v439
      %v941 = vpop.f32.mrf.mxu0
      %v942 = vadd.f32 %v913, %v941
      %v943 = vpop.f32.mrf.mxu0
      %v944 = vadd.f32 %v915, %v943
      %945 = vmatmul.bf16.gmra.mxu0 %v444
      %v946 = vpop.f32.mrf.mxu0
      %v947 = vadd.f32 %v918, %v946
      %v948 = vpop.f32.mrf.mxu0
      %v949 = vadd.f32 %v920, %v948
      %950 = vmatmul.bf16.gmra.mxu0 %v449
      %v951 = vpop.f32.mrf.mxu0
      %v952 = vadd.f32 %v923, %v951
      %v953 = vpop.f32.mrf.mxu0
      %v954 = vadd.f32 %v925, %v953
      %955 = vdwg.mxu0
      %956 = vmatpush.bf16.msra.mxu0 0
      %957 = vmatpush.bf16.msra.mxu0 0
      %958 = vmatpush.bf16.msra.mxu0 0
      %959 = vmatpush.bf16.msra.mxu0 0
      %960 = vmatpush.bf16.msra.mxu0 %v753
      %961 = vmatpush.bf16.msra.mxu0 %v751
      %962 = vmatpush.bf16.msra.mxu0 %v749
      %963 = vmatpush.bf16.msra.mxu0 %v747
      %964 = vmatmul.bf16.gmra.mxu0 %v829
      %v965 = vpop.f32.mrf.mxu0
      %v966 = vadd.f32 %v937, %v965
      %v967 = vpop.f32.mrf.mxu0
      %v968 = vadd.f32 %v939, %v967
      %969 = vmatmul.bf16.gmra.mxu0 %v832
      %v970 = vpop.f32.mrf.mxu0
      %v971 = vadd.f32 %v942, %v970
      %v972 = vpop.f32.mrf.mxu0
      %v973 = vadd.f32 %v944, %v972
      %974 = vmatmul.bf16.gmra.mxu0 %v835
      %v975 = vpop.f32.mrf.mxu0
      %v976 = vadd.f32 %v947, %v975
      %v977 = vpop.f32.mrf.mxu0
      %v978 = vadd.f32 %v949, %v977
      %979 = vmatmul.bf16.gmra.mxu0 %v838
      %v980 = vpop.f32.mrf.mxu0
      %v981 = vadd.f32 %v952, %v980
      %v982 = vpop.f32.mrf.mxu0
      %v983 = vadd.f32 %v954, %v982
      %984 = vdwg.mxu0
      %985 = vmatpush.bf16.msra.mxu0 %v698
      %986 = vmatpush.bf16.msra.mxu0 %v696
      %987 = vmatpush.bf16.msra.mxu0 %v694
      %988 = vmatpush.bf16.msra.mxu0 %v692
      %989 = vmatpush.bf16.msra.mxu0 %v690
      %990 = vmatpush.bf16.msra.mxu0 %v688
      %991 = vmatpush.bf16.msra.mxu0 %v686
      %992 = vmatpush.bf16.msra.mxu0 %v684
      %993 = vmatmul.bf16.gmra.mxu0 %v431
      %v994 = vpop.f32.mrf.mxu0
      %v995 = vadd.f32 %v364, %v994
      %v996 = vpop.f32.mrf.mxu0
      %v997 = vadd.f32 %v364, %v996
      %998 = vmatmul.bf16.gmra.mxu0 %v436
      %v999 = vpop.f32.mrf.mxu0
      %v1000 = vadd.f32 %v364, %v999
      %v1001 = vpop.f32.mrf.mxu0
      %v1002 = vadd.f32 %v364, %v1001
      %1003 = vmatmul.bf16.gmra.mxu0 %v441
      %v1004 = vpop.f32.mrf.mxu0
      %v1005 = vadd.f32 %v364, %v1004
      %v1006 = vpop.f32.mrf.mxu0
      %v1007 = vadd.f32 %v364, %v1006
      %1008 = vmatmul.bf16.gmra.mxu0 %v446
      %v1009 = vpop.f32.mrf.mxu0
      %v1010 = vadd.f32 %v364, %v1009
      %v1011 = vpop.f32.mrf.mxu0
      %v1012 = vadd.f32 %v364, %v1011
      %1013 = vdwg.mxu0
      %1014 = vmatpush.bf16.msra.mxu0 %v714
      %1015 = vmatpush.bf16.msra.mxu0 %v712
      %1016 = vmatpush.bf16.msra.mxu0 %v710
      %1017 = vmatpush.bf16.msra.mxu0 %v708
      %1018 = vmatpush.bf16.msra.mxu0 %v706
      %1019 = vmatpush.bf16.msra.mxu0 %v704
      %1020 = vmatpush.bf16.msra.mxu0 %v702
      %1021 = vmatpush.bf16.msra.mxu0 %v700
      %1022 = vmatmul.bf16.gmra.mxu0 %v432
      %v1023 = vpop.f32.mrf.mxu0
      %v1024 = vadd.f32 %v995, %v1023
      %v1025 = vpop.f32.mrf.mxu0
      %v1026 = vadd.f32 %v997, %v1025
      %1027 = vmatmul.bf16.gmra.mxu0 %v437
      %v1028 = vpop.f32.mrf.mxu0
      %v1029 = vadd.f32 %v1000, %v1028
      %v1030 = vpop.f32.mrf.mxu0
      %v1031 = vadd.f32 %v1002, %v1030
      %1032 = vmatmul.bf16.gmra.mxu0 %v442
      %v1033 = vpop.f32.mrf.mxu0
      %v1034 = vadd.f32 %v1005, %v1033
      %v1035 = vpop.f32.mrf.mxu0
      %v1036 = vadd.f32 %v1007, %v1035
      %1037 = vmatmul.bf16.gmra.mxu0 %v447
      %v1038 = vpop.f32.mrf.mxu0
      %v1039 = vadd.f32 %v1010, %v1038
      %v1040 = vpop.f32.mrf.mxu0
      %v1041 = vadd.f32 %v1012, %v1040
      %1042 = vdwg.mxu0
      %1043 = vmatpush.bf16.msra.mxu0 %v730
      %1044 = vmatpush.bf16.msra.mxu0 %v728
      %1045 = vmatpush.bf16.msra.mxu0 %v726
      %1046 = vmatpush.bf16.msra.mxu0 %v724
      %1047 = vmatpush.bf16.msra.mxu0 %v722
      %1048 = vmatpush.bf16.msra.mxu0 %v720
      %1049 = vmatpush.bf16.msra.mxu0 %v718
      %1050 = vmatpush.bf16.msra.mxu0 %v716
      %1051 = vmatmul.bf16.gmra.mxu0 %v433
      %v1052 = vpop.f32.mrf.mxu0
      %v1053 = vadd.f32 %v1024, %v1052
      %v1054 = vpop.f32.mrf.mxu0
      %v1055 = vadd.f32 %v1026, %v1054
      %1056 = vmatmul.bf16.gmra.mxu0 %v438
      %v1057 = vpop.f32.mrf.mxu0
      %v1058 = vadd.f32 %v1029, %v1057
      %v1059 = vpop.f32.mrf.mxu0
      %v1060 = vadd.f32 %v1031, %v1059
      %1061 = vmatmul.bf16.gmra.mxu0 %v443
      %v1062 = vpop.f32.mrf.mxu0
      %v1063 = vadd.f32 %v1034, %v1062
      %v1064 = vpop.f32.mrf.mxu0
      %v1065 = vadd.f32 %v1036, %v1064
      %1066 = vmatmul.bf16.gmra.mxu0 %v448
      %v1067 = vpop.f32.mrf.mxu0
      %v1068 = vadd.f32 %v1039, %v1067
      %v1069 = vpop.f32.mrf.mxu0
      %v1070 = vadd.f32 %v1041, %v1069
      %1071 = vdwg.mxu0
      %1072 = vmatpush.bf16.msra.mxu0 %v746
      %1073 = vmatpush.bf16.msra.mxu0 %v744
      %1074 = vmatpush.bf16.msra.mxu0 %v742
      %1075 = vmatpush.bf16.msra.mxu0 %v740
      %1076 = vmatpush.bf16.msra.mxu0 %v738
      %1077 = vmatpush.bf16.msra.mxu0 %v736
      %1078 = vmatpush.bf16.msra.mxu0 %v734
      %1079 = vmatpush.bf16.msra.mxu0 %v732
      %1080 = vmatmul.bf16.gmra.mxu0 %v434
      %v1081 = vpop.f32.mrf.mxu0
      %v1082 = vadd.f32 %v1053, %v1081
      %v1083 = vpop.f32.mrf.mxu0
      %v1084 = vadd.f32 %v1055, %v1083
      %1085 = vmatmul.bf16.gmra.mxu0 %v439
      %v1086 = vpop.f32.mrf.mxu0
      %v1087 = vadd.f32 %v1058, %v1086
      %v1088 = vpop.f32.mrf.mxu0
      %v1089 = vadd.f32 %v1060, %v1088
      %1090 = vmatmul.bf16.gmra.mxu0 %v444
      %v1091 = vpop.f32.mrf.mxu0
      %v1092 = vadd.f32 %v1063, %v1091
      %v1093 = vpop.f32.mrf.mxu0
      %v1094 = vadd.f32 %v1065, %v1093
      %1095 = vmatmul.bf16.gmra.mxu0 %v449
      %v1096 = vpop.f32.mrf.mxu0
      %v1097 = vadd.f32 %v1068, %v1096
      %v1098 = vpop.f32.mrf.mxu0
      %v1099 = vadd.f32 %v1070, %v1098
      %1100 = vdwg.mxu0
      %1101 = vmatpush.bf16.msra.mxu0 0
      %1102 = vmatpush.bf16.msra.mxu0 0
      %1103 = vmatpush.bf16.msra.mxu0 0
      %1104 = vmatpush.bf16.msra.mxu0 0
      %1105 = vmatpush.bf16.msra.mxu0 %v754
      %1106 = vmatpush.bf16.msra.mxu0 %v752
      %1107 = vmatpush.bf16.msra.mxu0 %v750
      %1108 = vmatpush.bf16.msra.mxu0 %v748
      %1109 = vmatmul.bf16.gmra.mxu0 %v829
      %v1110 = vpop.f32.mrf.mxu0
      %v1111 = vadd.f32 %v1082, %v1110
      %v1112 = vpop.f32.mrf.mxu0
      %v1113 = vadd.f32 %v1084, %v1112
      %1114 = vmatmul.bf16.gmra.mxu0 %v832
      %v1115 = vpop.f32.mrf.mxu0
      %v1116 = vadd.f32 %v1087, %v1115
      %v1117 = vpop.f32.mrf.mxu0
      %v1118 = vadd.f32 %v1089, %v1117
      %1119 = vmatmul.bf16.gmra.mxu0 %v835
      %v1120 = vpop.f32.mrf.mxu0
      %v1121 = vadd.f32 %v1092, %v1120
      %v1122 = vpop.f32.mrf.mxu0
      %v1123 = vadd.f32 %v1094, %v1122
      %1124 = vmatmul.bf16.gmra.mxu0 %v838
      %v1125 = vpop.f32.mrf.mxu0
      %v1126 = vadd.f32 %v1097, %v1125
      %v1127 = vpop.f32.mrf.mxu0
      %v1128 = vadd.f32 %v1099, %v1127
      %1129 = vdwg.mxu0
      %v1130 = vld [vmem:[%s252] sm:$0xff]
      %v1131 = vld [vmem:[%s252 + $0x8] sm:$0xff]
      %v1132 = vld [vmem:[%s252 + $0x10] sm:$0xff]
      %v1133 = vld [vmem:[%s252 + $0x18] sm:$0xff]
      %v1134 = vld [vmem:[%s252 + $0x20] sm:$0xff]
      %v1135 = vld [vmem:[%s252 + $0x28] sm:$0xff]
      %v1136 = vld [vmem:[%s252 + $0x30] sm:$0xff]
      %v1137 = vld [vmem:[%s252 + $0x38] sm:$0xff]
      %1139 = vset.pattern.permute.xlu0 0
      %1140 = vperm.xlu0 %1139, %v1130
      %v1141 = vpop.permute.xlu0 %1140
      %1144 = vset.pattern.permute.xlu0 0
      %1145 = vperm.xlu0 %1144, %v1131
      %v1146 = vpop.permute.xlu0 %1145
      %1149 = vset.pattern.permute.xlu0 0
      %1150 = vperm.xlu0 %1149, %v1132
      %v1151 = vpop.permute.xlu0 %1150
      %1154 = vset.pattern.permute.xlu0 0
      %1155 = vperm.xlu0 %1154, %v1133
      %v1156 = vpop.permute.xlu0 %1155
      %1159 = vset.pattern.permute.xlu0 0
      %1160 = vperm.xlu0 %1159, %v1134
      %v1161 = vpop.permute.xlu0 %1160
      %1164 = vset.pattern.permute.xlu0 0
      %1165 = vperm.xlu0 %1164, %v1135
      %v1166 = vpop.permute.xlu0 %1165
      %1169 = vset.pattern.permute.xlu0 0
      %1170 = vperm.xlu0 %1169, %v1136
      %v1171 = vpop.permute.xlu0 %1170
      %1174 = vset.pattern.permute.xlu0 0
      %1175 = vperm.xlu0 %1174, %v1137
      %v1176 = vpop.permute.xlu0 %1175
      %v1178 = vmul.f32 %v1141, %v966
      %v1179 = vmul.f32 %v1146, %v968
      %v1180 = vmul.f32 %v1151, %v971
      %v1181 = vmul.f32 %v1156, %v973
      %v1182 = vmul.f32 %v1161, %v976
      %v1183 = vmul.f32 %v1166, %v978
      %v1184 = vmul.f32 %v1171, %v981
      %v1185 = vmul.f32 %v1176, %v983
      %1186 = vset.pattern.permute.xlu0 1
      %1187 = vperm.xlu0 %1186, %v1130
      %v1188 = vpop.permute.xlu0 %1187
      %1190 = vset.pattern.permute.xlu0 1
      %1191 = vperm.xlu0 %1190, %v1131
      %v1192 = vpop.permute.xlu0 %1191
      %1194 = vset.pattern.permute.xlu0 1
      %1195 = vperm.xlu0 %1194, %v1132
      %v1196 = vpop.permute.xlu0 %1195
      %1198 = vset.pattern.permute.xlu0 1
      %1199 = vperm.xlu0 %1198, %v1133
      %v1200 = vpop.permute.xlu0 %1199
      %1202 = vset.pattern.permute.xlu0 1
      %1203 = vperm.xlu0 %1202, %v1134
      %v1204 = vpop.permute.xlu0 %1203
      %1206 = vset.pattern.permute.xlu0 1
      %1207 = vperm.xlu0 %1206, %v1135
      %v1208 = vpop.permute.xlu0 %1207
      %1210 = vset.pattern.permute.xlu0 1
      %1211 = vperm.xlu0 %1210, %v1136
      %v1212 = vpop.permute.xlu0 %1211
      %1214 = vset.pattern.permute.xlu0 1
      %1215 = vperm.xlu0 %1214, %v1137
      %v1216 = vpop.permute.xlu0 %1215
      %v1218 = vmul.f32 %v1188, %v966
      %v1219 = vmul.f32 %v1192, %v968
      %v1220 = vmul.f32 %v1196, %v971
      %v1221 = vmul.f32 %v1200, %v973
      %v1222 = vmul.f32 %v1204, %v976
      %v1223 = vmul.f32 %v1208, %v978
      %v1224 = vmul.f32 %v1212, %v981
      %v1225 = vmul.f32 %v1216, %v983
      %1234 = vrot.lane.b32.xlu0 %v1218, 64
      %v1235 = vpop.permute.xlu0 %1234
      %1236 = vrot.lane.b32.xlu0 %v1219, 64
      %v1237 = vpop.permute.xlu0 %1236
      %1238 = vrot.lane.b32.xlu0 %v1220, 64
      %v1239 = vpop.permute.xlu0 %1238
      %1240 = vrot.lane.b32.xlu0 %v1221, 64
      %v1241 = vpop.permute.xlu0 %1240
      %1242 = vrot.lane.b32.xlu0 %v1222, 64
      %v1243 = vpop.permute.xlu0 %1242
      %1244 = vrot.lane.b32.xlu0 %v1223, 64
      %v1245 = vpop.permute.xlu0 %1244
      %1246 = vrot.lane.b32.xlu0 %v1224, 64
      %v1247 = vpop.permute.xlu0 %1246
      %1248 = vrot.lane.b32.xlu0 %v1225, 64
      %v1249 = vpop.permute.xlu0 %1248
      %v1258 = vadd.f32 %v1178, %v1235
      %v1259 = vadd.f32 %v1179, %v1237
      %v1260 = vadd.f32 %v1180, %v1239
      %v1261 = vadd.f32 %v1181, %v1241
      %v1262 = vadd.f32 %v1182, %v1243
      %v1263 = vadd.f32 %v1183, %v1245
      %v1264 = vadd.f32 %v1184, %v1247
      %v1265 = vadd.f32 %v1185, %v1249
      %1266 = vset.pattern.permute.xlu0 2
      %1267 = vperm.xlu0 %1266, %v1130
      %v1268 = vpop.permute.xlu0 %1267
      %1270 = vset.pattern.permute.xlu0 2
      %1271 = vperm.xlu0 %1270, %v1131
      %v1272 = vpop.permute.xlu0 %1271
      %1274 = vset.pattern.permute.xlu0 2
      %1275 = vperm.xlu0 %1274, %v1132
      %v1276 = vpop.permute.xlu0 %1275
      %1278 = vset.pattern.permute.xlu0 2
      %1279 = vperm.xlu0 %1278, %v1133
      %v1280 = vpop.permute.xlu0 %1279
      %1282 = vset.pattern.permute.xlu0 2
      %1283 = vperm.xlu0 %1282, %v1134
      %v1284 = vpop.permute.xlu0 %1283
      %1286 = vset.pattern.permute.xlu0 2
      %1287 = vperm.xlu0 %1286, %v1135
      %v1288 = vpop.permute.xlu0 %1287
      %1290 = vset.pattern.permute.xlu0 2
      %1291 = vperm.xlu0 %1290, %v1136
      %v1292 = vpop.permute.xlu0 %1291
      %1294 = vset.pattern.permute.xlu0 2
      %1295 = vperm.xlu0 %1294, %v1137
      %v1296 = vpop.permute.xlu0 %1295
      %v1298 = vmul.f32 %v1268, %v1111
      %v1299 = vmul.f32 %v1272, %v1113
      %v1300 = vmul.f32 %v1276, %v1116
      %v1301 = vmul.f32 %v1280, %v1118
      %v1302 = vmul.f32 %v1284, %v1121
      %v1303 = vmul.f32 %v1288, %v1123
      %v1304 = vmul.f32 %v1292, %v1126
      %v1305 = vmul.f32 %v1296, %v1128
      %v1306 = vadd.f32 %v1258, %v1298
      %v1307 = vadd.f32 %v1259, %v1299
      %v1308 = vadd.f32 %v1260, %v1300
      %v1309 = vadd.f32 %v1261, %v1301
      %v1310 = vadd.f32 %v1262, %v1302
      %v1311 = vadd.f32 %v1263, %v1303
      %v1312 = vadd.f32 %v1264, %v1304
      %v1313 = vadd.f32 %v1265, %v1305
      %1314 = vset.pattern.permute.xlu0 3
      %1315 = vperm.xlu0 %1314, %v1130
      %v1316 = vpop.permute.xlu0 %1315
      %1318 = vset.pattern.permute.xlu0 3
      %1319 = vperm.xlu0 %1318, %v1131
      %v1320 = vpop.permute.xlu0 %1319
      %1322 = vset.pattern.permute.xlu0 3
      %1323 = vperm.xlu0 %1322, %v1132
      %v1324 = vpop.permute.xlu0 %1323
      %1326 = vset.pattern.permute.xlu0 3
      %1327 = vperm.xlu0 %1326, %v1133
      %v1328 = vpop.permute.xlu0 %1327
      %1330 = vset.pattern.permute.xlu0 3
      %1331 = vperm.xlu0 %1330, %v1134
      %v1332 = vpop.permute.xlu0 %1331
      %1334 = vset.pattern.permute.xlu0 3
      %1335 = vperm.xlu0 %1334, %v1135
      %v1336 = vpop.permute.xlu0 %1335
      %1338 = vset.pattern.permute.xlu0 3
      %1339 = vperm.xlu0 %1338, %v1136
      %v1340 = vpop.permute.xlu0 %1339
      %1342 = vset.pattern.permute.xlu0 3
      %1343 = vperm.xlu0 %1342, %v1137
      %v1344 = vpop.permute.xlu0 %1343
      %v1346 = vmul.f32 %v1316, %v1111
      %v1347 = vmul.f32 %v1320, %v1113
      %v1348 = vmul.f32 %v1324, %v1116
      %v1349 = vmul.f32 %v1328, %v1118
      %v1350 = vmul.f32 %v1332, %v1121
      %v1351 = vmul.f32 %v1336, %v1123
      %v1352 = vmul.f32 %v1340, %v1126
      %v1353 = vmul.f32 %v1344, %v1128
      %1362 = vrot.lane.b32.xlu0 %v1346, 64
      %v1363 = vpop.permute.xlu0 %1362
      %1364 = vrot.lane.b32.xlu0 %v1347, 64
      %v1365 = vpop.permute.xlu0 %1364
      %1366 = vrot.lane.b32.xlu0 %v1348, 64
      %v1367 = vpop.permute.xlu0 %1366
      %1368 = vrot.lane.b32.xlu0 %v1349, 64
      %v1369 = vpop.permute.xlu0 %1368
      %1370 = vrot.lane.b32.xlu0 %v1350, 64
      %v1371 = vpop.permute.xlu0 %1370
      %1372 = vrot.lane.b32.xlu0 %v1351, 64
      %v1373 = vpop.permute.xlu0 %1372
      %1374 = vrot.lane.b32.xlu0 %v1352, 64
      %v1375 = vpop.permute.xlu0 %1374
      %1376 = vrot.lane.b32.xlu0 %v1353, 64
      %v1377 = vpop.permute.xlu0 %1376
      %v1386 = vadd.f32 %v1306, %v1363
      %v1387 = vadd.f32 %v1307, %v1365
      %v1388 = vadd.f32 %v1308, %v1367
      %v1389 = vadd.f32 %v1309, %v1369
      %v1390 = vadd.f32 %v1310, %v1371
      %v1391 = vadd.f32 %v1311, %v1373
      %v1392 = vadd.f32 %v1312, %v1375
      %v1393 = vadd.f32 %v1313, %v1377
      %v1394 = vpack.c.bf16 %v1386, %v1386
      %v1395 = vpack.c.bf16 %v1387, %v1387
      %v1396 = vpack.c.bf16 %v1388, %v1388
      %v1397 = vpack.c.bf16 %v1389, %v1389
      %v1398 = vpack.c.bf16 %v1390, %v1390
      %v1399 = vpack.c.bf16 %v1391, %v1391
      %v1400 = vpack.c.bf16 %v1392, %v1392
      %v1401 = vpack.c.bf16 %v1393, %v1393
      %vm1402 = vcmask 519168
      %1403 = vst.msk [vmem:[%s258] sm:$0xf] %vm1402, %v1394
      %1404 = vst.msk [vmem:[%s258 + $0x4] sm:$0xf] %vm1402, %v1395
      %1405 = vst.msk [vmem:[%s258 + $0x8] sm:$0xf] %vm1402, %v1396
      %1406 = vst.msk [vmem:[%s258 + $0xc] sm:$0xf] %vm1402, %v1397
      %1407 = vst.msk [vmem:[%s258 + $0x10] sm:$0xf] %vm1402, %v1398
      %1408 = vst.msk [vmem:[%s258 + $0x14] sm:$0xf] %vm1402, %v1399
      %1409 = vst.msk [vmem:[%s258 + $0x18] sm:$0xf] %vm1402, %v1400
      %1410 = vst.msk [vmem:[%s258 + $0x1c] sm:$0xf] %vm1402, %v1401
      %v1411 = vsel %vm827, %v1386, 0.0
      %v1412 = vsel %vm827, %v1387, 0.0
      %v1413 = vadd.f32 %v1411, %v1412
      %v1414 = vsel %vm827, %v1388, 0.0
      %v1415 = vadd.f32 %v1413, %v1414
      %v1416 = vsel %vm827, %v1389, 0.0
      %v1417 = vadd.f32 %v1415, %v1416
      %v1418 = vsel %vm827, %v1390, 0.0
      %v1419 = vadd.f32 %v1417, %v1418
      %v1420 = vsel %vm827, %v1391, 0.0
      %v1421 = vadd.f32 %v1419, %v1420
      %v1422 = vsel %vm827, %v1392, 0.0
      %v1423 = vadd.f32 %v1421, %v1422
      %v1424 = vsel %vm827, %v1393, 0.0
      %v1425 = vadd.f32 %v1423, %v1424
      %v1426 = vrot.slane %v1425, 4
      %v1427 = vadd.f32 %v1425, %v1426
      %v1428 = vrot.slane %v1427, 2
      %v1429 = vadd.f32 %v1427, %v1428
      %v1430 = vrot.slane %v1429, 1
      %v1431 = vadd.f32 %v1429, %v1430
      %v1432 = vmul.f32 %v1386, %v1386
      %v1433 = vmul.f32 %v1387, %v1387
      %v1434 = vmul.f32 %v1388, %v1388
      %v1435 = vmul.f32 %v1389, %v1389
      %v1436 = vmul.f32 %v1390, %v1390
      %v1437 = vmul.f32 %v1391, %v1391
      %v1438 = vmul.f32 %v1392, %v1392
      %v1439 = vmul.f32 %v1393, %v1393
      %v1440 = vsel %vm827, %v1432, 0.0
      %v1441 = vsel %vm827, %v1433, 0.0
      %v1442 = vadd.f32 %v1440, %v1441
      %v1443 = vsel %vm827, %v1434, 0.0
      %v1444 = vadd.f32 %v1442, %v1443
      %v1445 = vsel %vm827, %v1435, 0.0
      %v1446 = vadd.f32 %v1444, %v1445
      %v1447 = vsel %vm827, %v1436, 0.0
      %v1448 = vadd.f32 %v1446, %v1447
      %v1449 = vsel %vm827, %v1437, 0.0
      %v1450 = vadd.f32 %v1448, %v1449
      %v1451 = vsel %vm827, %v1438, 0.0
      %v1452 = vadd.f32 %v1450, %v1451
      %v1453 = vsel %vm827, %v1439, 0.0
      %v1454 = vadd.f32 %v1452, %v1453
      %v1455 = vrot.slane %v1454, 4
      %v1456 = vadd.f32 %v1454, %v1455
      %v1457 = vrot.slane %v1456, 2
      %v1458 = vadd.f32 %v1456, %v1457
      %v1459 = vrot.slane %v1458, 1
      %v1460 = vadd.f32 %v1458, %v1459
      %vm1461 = vcmask 1040384
      %v1462 = vsel %vm1461, %v1431, %v1460
      %vm1463 = vcmask 517120
      %1464 = vst.msk [vmem:[%s263] sm:$0x3] %vm1463, %v1462
      %s1465 = smul.u32 8, %s17
      %p1466 = scmp.lt.s32.totalorder %s1465, 15
      %s1467 = scalar_select %p1466, %s1465, 15
      %s1468 = smul.addr %s1467, 4
      %s1469 = scalar_lea.vmem %s4, %s1468
      %p1470 = scmp.lt.s32.totalorder %s17, 1
      %s1471 = scalar_select %p1470, %s17, 1
      %s1472 = smul.addr %s1471, 2
      %s1473 = scalar_lea.vmem %s5, %s1472
      // Predicated region
      $region37: #{cnn_forward.14} parent=35 // pred_check
        %p1474 = pneg %p129
      $region38: #{cnn_forward.14} parent=35 // pred_check_branch
        %1476 = sbr.rel (%p1474) target = $region40
      $region39: #{cnn_forward.14} parent=35 // pred_region
        %s1477 = smul.u32 8, %s17
      $region40: #{cnn_forward.14} parent=35 // pred_fallthru
        _
      // Predicated region
      $region41: #{cnn_forward.14} parent=35 // pred_check
        %p1478 = pneg %p155
      $region42: #{cnn_forward.14} parent=35 // pred_check_branch
        %1480 = sbr.rel (%p1478) target = $region44
      $region43: #{cnn_forward.14} parent=35 // pred_region
        _
      $region44: #{cnn_forward.14} parent=35 // pred_fallthru
        _
    $region36: #{cnn_forward.14} parent=5 // pred_fallthru
      _
    %p1481 = scmp.le.s32.totalorder 2, %s12
    // Predicated region
    $region45: #{cnn_forward.14} parent=5 // pred_check
      %p1482 = pneg %p1481
    $region46: #{cnn_forward.14} parent=5 // pred_check_branch
      %1484 = sbr.rel (%p1482) target = $region48
    $region47: #{cnn_forward.14} parent=5 // pred_region
      %s1485 = ssub.s32 %s12, 2
      // Predicated region
      $region49: #{cnn_forward.14} parent=47 // pred_check
        %p1486 = pneg %p135
      $region50: #{cnn_forward.14} parent=47 // pred_check_branch
        %1488 = sbr.rel (%p1486) target = $region52
      $region51: #{cnn_forward.14} parent=47 // pred_region
        %s1489 = smul.u32 8, %s18
        %p1490 = scmp.lt.s32.totalorder %s1489, 15
        %s1491 = scalar_select %p1490, %s1489, 15
        %s1492 = smul.addr %s1491, 4
        %s1493 = scalar_lea.vmem %s4, %s1492
      $region52: #{cnn_forward.14} parent=47 // pred_fallthru
        _
      // Predicated region
      $region53: #{cnn_forward.14} parent=47 // pred_check
        %p1494 = pneg %p161
      $region54: #{cnn_forward.14} parent=47 // pred_check_branch
        %1496 = sbr.rel (%p1494) target = $region56
      $region55: #{cnn_forward.14} parent=47 // pred_region
        %p1497 = scmp.lt.s32.totalorder %s18, 1
        %s1498 = scalar_select %p1497, %s18, 1
        %s1499 = smul.addr %s1498, 2
        %s1500 = scalar_lea.vmem %s5, %s1499
      $region56: #{cnn_forward.14} parent=47 // pred_fallthru
        _
    $region48: #{cnn_forward.14} parent=5 // pred_fallthru
      _
  $region6: #{cnn_forward.14} parent=0 // loop_footer
    %s16 = sadd.s32 1, %s12
  $region7: #{cnn_forward.14} parent=0 // loop_footer_branch
    %11 = sbr.rel target = $region3
  $region8: #{cnn_forward.14} parent=0 // loop_exit
    _

</llo_original>
